<compile_context>
chip_gen: v7x
topology: tpu7x:2x2x1
jax: 0.10.0
libtpu: 0.0.40
codegen_flags: <defaults>
</compile_context>

<pallas_src>
import jax
import jax.numpy as jnp
import numpy as np
from jax import lax
from jax.experimental import pallas as pl
from jax.experimental.pallas import tpu as pltpu

BN_EPS = 1e-5
CPAD = 8                                   # channel padding (sublane multiple)
VMEM_LIMIT = 32 * 1024 * 1024              # explicit (v5e default is 16 MiB; <=48 MiB for v7x)
TAPS = [(kd - 1, kh - 1, kw - 1)
        for kd in range(3) for kh in range(3) for kw in range(3)]


def _mask_rows(dd, dh, dw):
    rows = []
    if dd == -1: rows.append(0)
    if dd == 1:  rows.append(1)
    if dh == -1: rows.append(2)
    if dh == 1:  rows.append(3)
    if dw == -1: rows.append(4)
    if dw == 1:  rows.append(5)
    return rows


def _compiler_params(semantics):
    return pltpu.CompilerParams(dimension_semantics=semantics,
                                vmem_limit_bytes=VMEM_LIMIT)


# ------------------------- Pallas kernels -------------------------

def _make_conv_kernel(n_src, act_flags, offs, mt, pad, h, w):
    """3x3x3 conv (padding=1) over CM-layout sources + per-tile BN partial stats.

    offs[s] = static column where real data begins inside source s (its halo width).
    Taps are streamed into a VMEM scratch kstack (one tap live at a time), then a
    single f32 MXU dot per source accumulates into `acc`.
    """
    hw = h * w
    win = mt + 2 * pad                                    # roll window width

    def kernel(*refs):
        i = pl.program_id(0)
        k = 0
        src_refs = refs[k:k + n_src]; k += n_src
        act_refs = []
        for f in act_flags:
            if f:
                act_refs.append((refs[k], refs[k + 1])); k += 2
            else:
                act_refs.append(None)
        w_ref = refs[k]
        mask_ref = refs[k + 1]
        out_ref = refs[k + 2]
        stats_ref = refs[k + 3]
        kstack = refs[k + 4]                              # VMEM scratch (27*CPAD, mt) f32

        mrows = mask_ref[...] > 0.5                       # (CPAD, mt) bool boundary rows

        acc = jnp.zeros((CPAD, mt), jnp.float32)
        for s in range(n_src):
            lo = pl.multiple_of(offs[s] - pad + i * mt, 128)
            blk = src_refs[s][:, pl.ds(lo, win)].astype(jnp.float32)
            if act_flags[s]:
                # fused previous-layer BatchNorm (affine) + ELU, in f32
                sc = act_refs[s][0][...]                  # (CPAD, 1)
                sh = act_refs[s][1][...]
                y = blk * sc + sh
                blk = jnp.where(y > 0.0, y,
                                jnp.exp(jnp.minimum(y, 0.0)) - 1.0)
            for t_idx, (dd, dh, dw) in enumerate(TAPS):
                delta = dd * hw + dh * w + dw
                if delta == 0:
                    sl = blk[:, pad:pad + mt]
                else:
                    rolled = pltpu.roll(blk, (-delta) % win, axis=1)
                    sl = rolled[:, pad:pad + mt]          # aligned static slice
                rows = _mask_rows(dd, dh, dw)
                if rows:
                    cm = mrows[rows[0]:rows[0] + 1, :]
                    for r in rows[1:]:
                        cm = jnp.logical_and(cm, mrows[r:r + 1, :])
                    # select (not multiply): halo garbage / NaN can never leak in
                    sl = jnp.where(cm, sl, 0.0)
                kstack[t_idx * CPAD:(t_idx + 1) * CPAD, :] = sl
            d = jnp.dot(w_ref[s], kstack[...],
                        preferred_element_type=jnp.float32)
            acc = d if s == 0 else acc + d

        out_ref[...] = acc.astype(out_ref.dtype)
        # per-tile (sum, M2-about-tile-mean) partials -> Chan combine in JAX
        s1 = jnp.sum(acc, axis=1, keepdims=True)          # (CPAD, 1)
        mu = s1 * (1.0 / mt)
        dv = acc - mu
        m2 = jnp.sum(dv * dv, axis=1, keepdims=True)
        stats_ref[0, :, :] = jnp.concatenate([s1, m2], axis=1)

    return kernel


def _make_bn_elu_kernel(c_keep):
    def kernel(x_ref, sc_ref, sh_ref, o_ref):
        y = x_ref[...].astype(jnp.float32) * sc_ref[...] + sh_ref[...]
        y = jnp.where(y > 0.0, y, jnp.exp(jnp.minimum(y, 0.0)) - 1.0)
        o_ref[...] = y[:c_keep, :]                        # write only the real rows
    return kernel


def _gemm_kernel(a_ref, b_ref, o_ref):
    o_ref[...] = jnp.dot(a_ref[...], b_ref[...],
                         preferred_element_type=jnp.float32)


# ------------------------- Pallas call wrappers -------------------------

def pallas_gemm(a, b):
    """(R, K) @ (K, M) -> (R, M) f32, lane-tiled over M with a parallel grid."""
    r, k = a.shape
    _, m_ = b.shape
    rp = -(-r // 8) * 8
    kp = -(-k // 8) * 8
    mp = -(-m_ // 128) * 128
    a = jnp.pad(a, ((0, rp - r), (0, kp - k)))
    b = jnp.pad(b, ((0, kp - k), (0, mp - m_)))
    tn = mp
    for cand in (2048, 1024, 512, 256, 128):
        if mp % cand == 0 and mp // cand >= 2:
            tn = cand
            break
    out = pl.pallas_call(
        _gemm_kernel,
        grid=(mp // tn,),
        in_specs=[pl.BlockSpec((rp, kp), lambda i: (0, 0)),
                  pl.BlockSpec((kp, tn), lambda i: (0, i))],
        out_specs=pl.BlockSpec((rp, tn), lambda i: (0, i)),
        out_shape=jax.ShapeDtypeStruct((rp, mp), jnp.float32),
        compiler_params=_compiler_params(("parallel",)),
    )(a, b)
    return out[:r, :m_]


def conv_layer(sources, acts, w_all, masks, m, mt, pad, h, w, offs, halo_out):
    """Fused multi-source 3^3 conv.

    Returns (raw conv output [bf16], per-tile BN partials). With halo_out=True the
    output buffer is (CPAD, m + 2*mt) and real data starts at column mt, so the next
    conv layer can read it in place (no XLA pad round trip); halo blocks stay unwritten.
    """
    t = m // mt
    n_src = len(sources)
    flags = tuple(a is not None for a in acts)
    kernel = _make_conv_kernel(n_src, flags, offs, mt, pad, h, w)

    in_specs = []
    args = []
    for src in sources:
        in_specs.append(pl.BlockSpec(src.shape, lambda i: (0, 0)))   # full-resident
        args.append(src)
    for s in range(n_src):
        if flags[s]:
            in_specs += [pl.BlockSpec((CPAD, 1), lambda i: (0, 0)),
                         pl.BlockSpec((CPAD, 1), lambda i: (0, 0))]
            args += [acts[s][0], acts[s][1]]
    in_specs += [pl.BlockSpec(w_all.shape, lambda i: (0, 0, 0)),
                 pl.BlockSpec((CPAD, mt), lambda i: (0, i))]
    args += [w_all, masks]

    if halo_out:
        out_w = m + 2 * mt
        out_map = lambda i: (0, i + 1)
    else:
        out_w = m
        out_map = lambda i: (0, i)

    raw, stats = pl.pallas_call(
        kernel,
        grid=(t,),
        in_specs=in_specs,
        out_specs=[pl.BlockSpec((CPAD, mt), out_map),
                   pl.BlockSpec((1, CPAD, 2), lambda i: (i, 0, 0))],
        out_shape=[jax.ShapeDtypeStruct((CPAD, out_w), jnp.bfloat16),
                   jax.ShapeDtypeStruct((t, CPAD, 2), jnp.float32)],
        scratch_shapes=[pltpu.VMEM((27 * CPAD, mt), jnp.float32)],
        compiler_params=_compiler_params(("parallel",)),
    )(*args)
    return raw, stats


def bn_elu_apply(raw, scale, shift, c_out, m, mt):
    t = m // mt
    return pl.pallas_call(
        _make_bn_elu_kernel(c_out),
        grid=(t,),
        in_specs=[pl.BlockSpec((CPAD, mt), lambda i: (0, i)),
                  pl.BlockSpec((CPAD, 1), lambda i: (0, 0)),
                  pl.BlockSpec((CPAD, 1), lambda i: (0, 0))],
        out_specs=pl.BlockSpec((c_out, mt), lambda i: (0, i)),
        out_shape=jax.ShapeDtypeStruct((c_out, m), jnp.float32),
        compiler_params=_compiler_params(("parallel",)),
    )(raw, scale, shift)


# ------------------------- plain-JAX glue -------------------------

def _to_cm(x_ncdhw):
    n, c, d, h, w = x_ncdhw.shape
    return jnp.transpose(x_ncdhw, (1, 0, 2, 3, 4)).reshape(c, n * d * h * w)


def _pad_cm(x_cm, pad):
    c, _ = x_cm.shape
    return jnp.pad(x_cm, ((0, CPAD - c), (pad, pad)))


def _build_masks(n, d, h, w):
    p = jnp.arange(n * d * h * w)
    di = (p // (h * w)) % d
    hi = (p // w) % h
    wi = p % w
    z = jnp.zeros_like(p, dtype=jnp.bool_)
    rows = [di > 0, di < d - 1, hi > 0, hi < h - 1, wi > 0, wi < w - 1, z, z]
    return jnp.stack(rows).astype(jnp.float32)               # (CPAD, M)


def _prep_conv_weight(w_block):
    # (Cout, Cin, 3, 3, 3) -> (CPAD, 27*CPAD), K ordered tap-major (matches TAPS)
    cout, cin = w_block.shape[:2]
    cols = []
    for dd, dh, dw in TAPS:
        wt = w_block[:, :, dd + 1, dh + 1, dw + 1]
        cols.append(jnp.pad(wt, ((0, CPAD - cout), (0, CPAD - cin))))
    return jnp.concatenate(cols, axis=1)


def _bn_affine(stats, gamma, beta, mt, count):
    """Chan's parallel combine of per-tile (sum, M2) -> training-mode BN affine."""
    s = jnp.sum(stats[:, :, 0], axis=0)                       # (CPAD,)
    mean = s / count
    mu_t = stats[:, :, 0] / mt                                 # (t, CPAD)
    m2 = jnp.sum(stats[:, :, 1], axis=0) \
        + mt * jnp.sum((mu_t - mean[None, :]) ** 2, axis=0)
    var = jnp.maximum(m2 / count, 0.0)                         # biased (training mode)
    g = jnp.pad(gamma, (0, CPAD - gamma.shape[0]))
    b = jnp.pad(beta, (0, CPAD - beta.shape[0]))
    scale = g * lax.rsqrt(var + BN_EPS)
    shift = b - mean * scale
    return scale.reshape(CPAD, 1), shift.reshape(CPAD, 1)


def upsample_subpixel(x_ncdhw, w_up, out_spatial, stride=2, k=3):
    """ConvTranspose3d(k=3, s=2, pad=0, bias=False) with explicit output size, as a
    stride^3 sub-pixel decomposition (skips the 7/8 zero voxels of the dilated input)."""
    n, cin = x_ncdhw.shape[:2]
    in_sp = x_ncdhw.shape[2:]
    cout = w_up.shape[1]
    for o, i_ in zip(out_spatial, in_sp):
        op = o - ((i_ - 1) * stride + k)
        assert 0 <= op < stride, "output size incompatible with ConvTranspose3d"
    mh = tuple((o + 1) // 2 for o in out_spatial)

    x = jnp.transpose(x_ncdhw, (0, 2, 3, 4, 1))               # NDHWC
    xp = jnp.pad(x, ((0, 0), (1, 1), (1, 1), (1, 1), (0, 0)))

    # phase-independent 2x2x2 tap patches (tap slot t -> slice start 1-t)
    taps = []
    for td in (0, 1):
        for th in (0, 1):
            for tw in (0, 1):
                sd, sh, sw = 1 - td, 1 - th, 1 - tw
                taps.append(xp[:, sd:sd + mh[0], sh:sh + mh[1], sw:sw + mh[2], :])
    p_sub = jnp.stack(taps, axis=0)                           # (8, N, md, mh, mw, Cin)
    p_sub = jnp.transpose(p_sub, (0, 5, 1, 2, 3, 4))
    p_sub = p_sub.reshape(8 * cin, n * mh[0] * mh[1] * mh[2])

    # per-phase weights: phase p=0 -> taps j={0,2}; p=1 -> tap j=1 (other slot zeroed)
    wrows = []
    for pd in (0, 1):
        for ph in (0, 1):
            for pw in (0, 1):
                tapw = []
                for td in (0, 1):
                    for th in (0, 1):
                        for tw in (0, 1):
                            js, valid = [], True
                            for pp, tt in ((pd, td), (ph, th), (pw, tw)):
                                if pp == 0:
                                    js.append(0 if tt == 0 else 2)
                                elif tt == 0:
                                    js.append(1)
                                else:
                                    valid = False
                            if valid:
                                tapw.append(w_up[:, :, js[0], js[1], js[2]])
                            else:
                                tapw.append(jnp.zeros((cin, cout), w_up.dtype))
                wb = jnp.stack(tapw, axis=0)                   # (8, Cin, Cout)
                wb = jnp.transpose(wb, (2, 0, 1)).reshape(cout, 8 * cin)
                wrows.append(wb)
    w_all = jnp.concatenate(wrows, axis=0)                     # (8*Cout, 8*Cin)

    out_phase = pallas_gemm(w_all, p_sub)                      # (8*Cout, N*prod(mh))
    o = out_phase.reshape(2, 2, 2, cout, n, mh[0], mh[1], mh[2])
    o = jnp.transpose(o, (3, 4, 5, 0, 6, 1, 7, 2))
    o = o.reshape(cout, n, 2 * mh[0], 2 * mh[1], 2 * mh[2])
    o = o[:, :, :out_spatial[0], :out_spatial[1], :out_spatial[2]]
    return o.reshape(cout, n * out_spatial[0] * out_spatial[1] * out_spatial[2])


def single_decoder3d_forward(params, encoder_features_ncdhw, x_ncdhw):
    n, c_enc, d, h, w = encoder_features_ncdhw.shape
    c_up = x_ncdhw.shape[1]
    c_out = params["w1"].shape[0]
    assert c_out <= CPAD
    m = n * d * h * w
    assert m % 128 == 0, "flat spatial size must be a multiple of 128"
    pad = max(128, -(-(h * w + w + 1) // 128) * 128)           # flat halo (>= max tap shift)
    assert pad >= h * w + w + 1

    # M-tile: as large as possible, but prefer >= 2 tiles so the "parallel" grid
    # shards across v7x's two TensorCores.
    mt = None
    for cand in (2048, 1024, 512, 256, 128):
        if m % cand == 0 and m // cand >= 2:
            mt = cand
            break
    if mt is None:
        for cand in (2048, 1024, 512, 256, 128):
            if m % cand == 0:
                mt = cand
                break
    assert mt is not None and m % mt == 0 and mt % 128 == 0
    assert mt >= pad, "tile must cover the halo for the fused conv1->conv2 handoff"

    masks = _build_masks(n, d, h, w)

    # upsample branch (ConvTranspose3d), produced directly in CM layout
    up_cm = upsample_subpixel(x_ncdhw, params["w_up"], (d, h, w))
    enc_cm = _to_cm(encoder_features_ncdhw)

    # conv1: torch.cat fused by packing all real input channels into ONE CPAD block
    # (halves rolls / masks / kstack / dot work); falls back to K-split sources.
    if c_enc + c_up <= CPAD:
        sources1 = [_pad_cm(jnp.concatenate([enc_cm, up_cm], axis=0), pad)]
        acts1 = [None]
        offs1 = (pad,)
        w1_all = _prep_conv_weight(params["w1"])[None]
    else:
        sources1 = [_pad_cm(enc_cm, pad), _pad_cm(up_cm, pad)]
        acts1 = [None, None]
        offs1 = (pad, pad)
        w1_all = jnp.stack([_prep_conv_weight(params["w1"][:, :c_enc]),
                            _prep_conv_weight(params["w1"][:, c_enc:])], axis=0)

    raw1, st1 = conv_layer(sources1, acts1, w1_all, masks, m, mt, pad, h, w,
                           offs1, halo_out=True)               # (CPAD, m+2*mt) bf16
    sc1, sh1 = _bn_affine(st1, params["g1"], params["b1"], mt, m)

    # conv2: reads conv1's bf16 output IN PLACE (halo blocks are never consumed);
    # conv1's BatchNorm+ELU applied in-kernel to the loaded block in f32.
    w2_all = _prep_conv_weight(params["w2"])[None]
    raw2, st2 = conv_layer([raw1], [(sc1, sh1)], w2_all, masks, m, mt, pad, h, w,
                           (mt,), halo_out=False)              # (CPAD, m) bf16
    sc2, sh2 = _bn_affine(st2, params["g2"], params["b2"], mt, m)

    # final BatchNorm + ELU (lane-dense, tiled, parallel), writes only c_out rows
    out_cm = bn_elu_apply(raw2, sc2, sh2, c_out, m, mt)        # (c_out, m) f32
    out = out_cm.reshape(c_out, n, d, h, w)
    return jnp.transpose(out, (1, 0, 2, 3, 4))                 # back to NCDHW


# ------------------------- pure-JAX reference (self-check) -------------------------

def _ref_single_conv(x, w, g, b):
    y = lax.conv_general_dilated(x, w, (1, 1, 1), [(1, 1)] * 3,
                                 dimension_numbers=("NCDHW", "OIDHW", "NCDHW"),
                                 precision=lax.Precision.HIGHEST)
    mean = jnp.mean(y, axis=(0, 2, 3, 4), keepdims=True)
    var = jnp.mean((y - mean) ** 2, axis=(0, 2, 3, 4), keepdims=True)
    yn = (y - mean) * lax.rsqrt(var + BN_EPS) * g.reshape(1, -1, 1, 1, 1) \
        + b.reshape(1, -1, 1, 1, 1)
    return jnp.where(yn > 0, yn, jnp.exp(yn) - 1.0)


def ref_forward(params, enc, x, stride=2, k=3, pad=0):
    de, he, we = enc.shape[2:]
    d, h, w = x.shape[2:]
    ops = tuple(o - ((i - 1) * stride - 2 * pad + k)
                for o, i in zip((de, he, we), (d, h, w)))
    w_eq = jnp.transpose(jnp.flip(params["w_up"], axis=(2, 3, 4)), (1, 0, 2, 3, 4))
    lo = k - 1 - pad
    up = lax.conv_general_dilated(x, w_eq, (1, 1, 1),
                                  [(lo, lo + ops[0]), (lo, lo + ops[1]), (lo, lo + ops[2])],
                                  lhs_dilation=(stride,) * 3,
                                  dimension_numbers=("NCDHW", "OIDHW", "NCDHW"),
                                  precision=lax.Precision.HIGHEST)
    cat = jnp.concatenate([enc, up], axis=1)
    hh = _ref_single_conv(cat, params["w1"], params["g1"], params["b1"])
    hh = _ref_single_conv(hh, params["w2"], params["g2"], params["b2"])
    return hh


# ------------------------- main -------------------------

if __name__ == "__main__":
    in_ch, out_ch = 6, 4
    up_ch = in_ch - out_ch                 # channels of `x` (the deeper feature map)
    N = 2
    De = He = We = 8                       # encoder spatial size
    d = h = w = 3                          # (d-1)*2 + 3 = 7 -> output size 8

    key = jax.random.PRNGKey(0)
    keys = jax.random.split(key, 9)
    params = dict(
        w_up=0.2 * jax.random.normal(keys[0], (up_ch, up_ch, 3, 3, 3), jnp.float32),
        w1=0.1 * jax.random.normal(keys[1], (out_ch, in_ch, 3, 3, 3), jnp.float32),
        g1=1.0 + 0.1 * jax.random.normal(keys[2], (out_ch,), jnp.float32),
        b1=0.1 * jax.random.normal(keys[3], (out_ch,), jnp.float32),
        w2=0.1 * jax.random.normal(keys[4], (out_ch, out_ch, 3, 3, 3), jnp.float32),
        g2=1.0 + 0.1 * jax.random.normal(keys[5], (out_ch,), jnp.float32),
        b2=0.1 * jax.random.normal(keys[6], (out_ch,), jnp.float32),
    )
    encoder_features = jax.random.normal(keys[7], (N, out_ch, De, He, We), jnp.float32)
    x = jax.random.normal(keys[8], (N, up_ch, d, h, w), jnp.float32)

    out = jax.jit(single_decoder3d_forward)(params, encoder_features, x)
    out = jax.block_until_ready(out)
    assert out.shape == (N, out_ch, De, He, We), out.shape

    ref = ref_forward(params, encoder_features, x)
    np.testing.assert_allclose(np.asarray(out), np.asarray(ref), rtol=3e-2, atol=3e-2)

    print("KERNEL_OK")
</pallas_src>

<mosaic_0001>
module attributes {stable_mosaic.version = 11 : i64} {
  func.func @_gemm_kernel(%arg0: i32, %arg1: memref<16x16xf32, #tpu.memory_space<vmem>>, %arg2: memref<16x128xf32, #tpu.memory_space<vmem>>, %arg3: memref<16x128xf32, #tpu.memory_space<vmem>>) attributes {dimension_semantics = [#tpu.dimension_semantics<parallel>], iteration_bounds = array<i64: 1>, scalar_prefetch = 0 : i64, scratch_operands = 0 : i64, tpu.core_type = #tpu.core_type<tc>, window_params = [{pipeline_mode = #tpu.pipeline_mode<synchronous>, transform_indices = @transform_0, window_bounds = array<i64: 16, 16>}, {transform_indices = @transform_1, window_bounds = array<i64: 16, 128>}, {transform_indices = @transform_2, window_bounds = array<i64: 16, 128>}]} {
    %c0 = arith.constant 0 : index
    %c0_0 = arith.constant 0 : index
    %0 = vector.load %arg1[%c0, %c0_0] : memref<16x16xf32, #tpu.memory_space<vmem>>, vector<16x16xf32>
    %c0_1 = arith.constant 0 : index
    %c0_2 = arith.constant 0 : index
    %1 = vector.load %arg2[%c0_1, %c0_2] : memref<16x128xf32, #tpu.memory_space<vmem>>, vector<16x128xf32>
    %cst = arith.constant dense<0.000000e+00> : vector<16x128xf32>
    %2 = tpu.matmul %0, %1, %cst {dimension_numbers = #tpu.dot_dimension_numbers<[1], [0], [0], [1], [0, 0, 1, 1], [], []>} : vector<16x16xf32>, vector<16x128xf32>, vector<16x128xf32> -> vector<16x128xf32>
    %c0_3 = arith.constant 0 : index
    %c0_4 = arith.constant 0 : index
    %3 = vector.load %arg3[%c0_3, %c0_4] : memref<16x128xf32, #tpu.memory_space<vmem>>, vector<16x128xf32>
    tpu.vector_store %arg3[%c0_3, %c0_4], %2 {strides = array<i32>} : memref<16x128xf32, #tpu.memory_space<vmem>>, vector<16x128xf32>,
    return
  }
  func.func @transform_0(%arg0: i32) -> (i32, i32) {
    %c0_i32 = arith.constant 0 : i32
    %c0_i32_0 = arith.constant 0 : i32
    %c0_i32_1 = arith.constant 0 : i32
    return %c0_i32, %c0_i32_0 : i32, i32
  }
  func.func @transform_1(%arg0: i32) -> (i32, i32) {
    %c0_i32 = arith.constant 0 : i32
    %c0_i32_0 = arith.constant 0 : i32
    return %c0_i32, %arg0 : i32, i32
  }
  func.func @transform_2(%arg0: i32) -> (i32, i32) {
    %c0_i32 = arith.constant 0 : i32
    %c0_i32_0 = arith.constant 0 : i32
    return %c0_i32, %arg0 : i32, i32
  }
}

module attributes {stable_mosaic.version = 11 : i64} {
  func.func @kernel(%arg0: i32, %arg1: memref<8x1280xf32, #tpu.memory_space<vmem>>, %arg2: memref<1x8x216xf32, #tpu.memory_space<vmem>>, %arg3: memref<8x512xf32, #tpu.memory_space<vmem>>, %arg4: memref<8x512xbf16, #tpu.memory_space<vmem>>, %arg5: memref<1x8x2xf32, #tpu.memory_space<vmem>>, %arg6: memref<216x512xf32, #tpu.memory_space<vmem>>) attributes {dimension_semantics = [#tpu.dimension_semantics<parallel>], iteration_bounds = array<i64: 2>, scalar_prefetch = 0 : i64, scratch_operands = 1 : i64, tpu.core_type = #tpu.core_type<tc>, window_params = [{pipeline_mode = #tpu.pipeline_mode<synchronous>, transform_indices = @transform_0, window_bounds = array<i64: 8, 1280>}, {pipeline_mode = #tpu.pipeline_mode<synchronous>, transform_indices = @transform_1, window_bounds = array<i64: 1, 8, 216>}, {transform_indices = @transform_2, window_bounds = array<i64: 8, 512>}, {transform_indices = @transform_3, window_bounds = array<i64: 8, 512>}, {transform_indices = @transform_4, window_bounds = array<i64: 1, 8, 2>}]} {
    %c0 = arith.constant 0 : index
    %c0_0 = arith.constant 0 : index
    %0 = vector.load %arg3[%c0, %c0_0] : memref<8x512xf32, #tpu.memory_space<vmem>>, vector<8x512xf32>
    %cst = arith.constant 5.000000e-01 : f32
    %1 = vector.broadcast %cst : f32 to vector<8x512xf32>
    %2 = arith.cmpf ogt, %0, %1 : vector<8x512xf32>
    %c512_i32 = arith.constant 512 : i32
    %3 = arith.muli %arg0, %c512_i32 : i32
    %c0_i32 = arith.constant 0 : i32
    %4 = arith.addi %c0_i32, %3 : i32
    %5 = tpu.assume_multiple %4, 128 : i32
    %c0_1 = arith.constant 0 : index
    %6 = arith.index_cast %5 : i32 to index
    %7 = vector.load %arg1[%c0_1, %6] : memref<8x1280xf32, #tpu.memory_space<vmem>>, vector<8x768xf32>
    %c73_i32 = arith.constant 73 : i32
    %8 = tpu.dynamic_rotate %7 by %c73_i32 dim 1 : vector<8x768xf32>, i32 -> vector<8x768xf32>
    %9 = vector.extract_strided_slice %8 {offsets = [0, 128], sizes = [8, 512], strides = [1, 1]} : vector<8x768xf32> to vector<8x512xf32>
    %10 = vector.extract_strided_slice %2 {offsets = [0, 0], sizes = [1, 512], strides = [1, 1]} : vector<8x512xi1> to vector<1x512xi1>
    %11 = vector.extract_strided_slice %2 {offsets = [2, 0], sizes = [1, 512], strides = [1, 1]} : vector<8x512xi1> to vector<1x512xi1>
    %12 = arith.andi %10, %11 : vector<1x512xi1>
    %13 = vector.extract_strided_slice %2 {offsets = [4, 0], sizes = [1, 512], strides = [1, 1]} : vector<8x512xi1> to vector<1x512xi1>
    %14 = arith.andi %12, %13 : vector<1x512xi1>
    %cst_2 = arith.constant 0.000000e+00 : f32
    %15 = vector.shape_cast %14 : vector<1x512xi1> to vector<1x512xi1>
    %16 = vector.broadcast %15 : vector<1x512xi1> to vector<8x512xi1>
    %17 = vector.broadcast %cst_2 : f32 to vector<8x512xf32>
    %18 = arith.select %16, %9, %17 : vector<8x512xi1>, vector<8x512xf32>
    %c0_3 = arith.constant 0 : index
    %c0_4 = arith.constant 0 : index
    %19 = vector.load %arg6[%c0_3, %c0_4] : memref<216x512xf32, #tpu.memory_space<vmem>>, vector<8x512xf32>
    tpu.vector_store %arg6[%c0_3, %c0_4], %18 {strides = array<i32>} : memref<216x512xf32, #tpu.memory_space<vmem>>, vector<8x512xf32>,
    %c72_i32 = arith.constant 72 : i32
    %20 = tpu.dynamic_rotate %7 by %c72_i32 dim 1 : vector<8x768xf32>, i32 -> vector<8x768xf32>
    %21 = vector.extract_strided_slice %20 {offsets = [0, 128], sizes = [8, 512], strides = [1, 1]} : vector<8x768xf32> to vector<8x512xf32>
    %22 = vector.extract_strided_slice %2 {offsets = [0, 0], sizes = [1, 512], strides = [1, 1]} : vector<8x512xi1> to vector<1x512xi1>
    %23 = vector.extract_strided_slice %2 {offsets = [2, 0], sizes = [1, 512], strides = [1, 1]} : vector<8x512xi1> to vector<1x512xi1>
    %24 = arith.andi %22, %23 : vector<1x512xi1>
    %cst_5 = arith.constant 0.000000e+00 : f32
    %25 = vector.shape_cast %24 : vector<1x512xi1> to vector<1x512xi1>
    %26 = vector.broadcast %25 : vector<1x512xi1> to vector<8x512xi1>
    %27 = vector.broadcast %cst_5 : f32 to vector<8x512xf32>
    %28 = arith.select %26, %21, %27 : vector<8x512xi1>, vector<8x512xf32>
    %c8 = arith.constant 8 : index
    %c0_6 = arith.constant 0 : index
    %29 = vector.load %arg6[%c8, %c0_6] : memref<216x512xf32, #tpu.memory_space<vmem>>, vector<8x512xf32>
    tpu.vector_store %arg6[%c8, %c0_6], %28 {strides = array<i32>} : memref<216x512xf32, #tpu.memory_space<vmem>>, vector<8x512xf32>,
    %c71_i32 = arith.constant 71 : i32
    %30 = tpu.dynamic_rotate %7 by %c71_i32 dim 1 : vector<8x768xf32>, i32 -> vector<8x768xf32>
    %31 = vector.extract_strided_slice %30 {offsets = [0, 128], sizes = [8, 512], strides = [1, 1]} : vector<8x768xf32> to vector<8x512xf32>
    %32 = vector.extract_strided_slice %2 {offsets = [0, 0], sizes = [1, 512], strides = [1, 1]} : vector<8x512xi1> to vector<1x512xi1>
    %33 = vector.extract_strided_slice %2 {offsets = [2, 0], sizes = [1, 512], strides = [1, 1]} : vector<8x512xi1> to vector<1x512xi1>
    %34 = arith.andi %32, %33 : vector<1x512xi1>
    %35 = vector.extract_strided_slice %2 {offsets = [5, 0], sizes = [1, 512], strides = [1, 1]} : vector<8x512xi1> to vector<1x512xi1>
    %36 = arith.andi %34, %35 : vector<1x512xi1>
    %cst_7 = arith.constant 0.000000e+00 : f32
    %37 = vector.shape_cast %36 : vector<1x512xi1> to vector<1x512xi1>
    %38 = vector.broadcast %37 : vector<1x512xi1> to vector<8x512xi1>
    %39 = vector.broadcast %cst_7 : f32 to vector<8x512xf32>
    %40 = arith.select %38, %31, %39 : vector<8x512xi1>, vector<8x512xf32>
    %c16 = arith.constant 16 : index
    %c0_8 = arith.constant 0 : index
    %41 = vector.load %arg6[%c16, %c0_8] : memref<216x512xf32, #tpu.memory_space<vmem>>, vector<8x512xf32>
    tpu.vector_store %arg6[%c16, %c0_8], %40 {strides = array<i32>} : memref<216x512xf32, #tpu.memory_space<vmem>>, vector<8x512xf32>,
    %c65_i32 = arith.constant 65 : i32
    %42 = tpu.dynamic_rotate %7 by %c65_i32 dim 1 : vector<8x768xf32>, i32 -> vector<8x768xf32>
    %43 = vector.extract_strided_slice %42 {offsets = [0, 128], sizes = [8, 512], strides = [1, 1]} : vector<8x768xf32> to vector<8x512xf32>
    %44 = vector.extract_strided_slice %2 {offsets = [0, 0], sizes = [1, 512], strides = [1, 1]} : vector<8x512xi1> to vector<1x512xi1>
    %45 = vector.extract_strided_slice %2 {offsets = [4, 0], sizes = [1, 512], strides = [1, 1]} : vector<8x512xi1> to vector<1x512xi1>
    %46 = arith.andi %44, %45 : vector<1x512xi1>
    %cst_9 = arith.constant 0.000000e+00 : f32
    %47 = vector.shape_cast %46 : vector<1x512xi1> to vector<1x512xi1>
    %48 = vector.broadcast %47 : vector<1x512xi1> to vector<8x512xi1>
    %49 = vector.broadcast %cst_9 : f32 to vector<8x512xf32>
    %50 = arith.select %48, %43, %49 : vector<8x512xi1>, vector<8x512xf32>
    %c24 = arith.constant 24 : index
    %c0_10 = arith.constant 0 : index
    %51 = vector.load %arg6[%c24, %c0_10] : memref<216x512xf32, #tpu.memory_space<vmem>>, vector<8x512xf32>
    tpu.vector_store %arg6[%c24, %c0_10], %50 {strides = array<i32>} : memref<216x512xf32, #tpu.memory_space<vmem>>, vector<8x512xf32>,
    %c64_i32 = arith.constant 64 : i32
    %52 = tpu.dynamic_rotate %7 by %c64_i32 dim 1 : vector<8x768xf32>, i32 -> vector<8x768xf32>
    %53 = vector.extract_strided_slice %52 {offsets = [0, 128], sizes = [8, 512], strides = [1, 1]} : vector<8x768xf32> to vector<8x512xf32>
    %54 = vector.extract_strided_slice %2 {offsets = [0, 0], sizes = [1, 512], strides = [1, 1]} : vector<8x512xi1> to vector<1x512xi1>
    %cst_11 = arith.constant 0.000000e+00 : f32
    %55 = vector.shape_cast %54 : vector<1x512xi1> to vector<1x512xi1>
    %56 = vector.broadcast %55 : vector<1x512xi1> to vector<8x512xi1>
    %57 = vector.broadcast %cst_11 : f32 to vector<8x512xf32>
    %58 = arith.select %56, %53, %57 : vector<8x512xi1>, vector<8x512xf32>
    %c32 = arith.constant 32 : index
    %c0_12 = arith.constant 0 : index
    %59 = vector.load %arg6[%c32, %c0_12] : memref<216x512xf32, #tpu.memory_space<vmem>>, vector<8x512xf32>
    tpu.vector_store %arg6[%c32, %c0_12], %58 {strides = array<i32>} : memref<216x512xf32, #tpu.memory_space<vmem>>, vector<8x512xf32>,
    %c63_i32 = arith.constant 63 : i32
    %60 = tpu.dynamic_rotate %7 by %c63_i32 dim 1 : vector<8x768xf32>, i32 -> vector<8x768xf32>
    %61 = vector.extract_strided_slice %60 {offsets = [0, 128], sizes = [8, 512], strides = [1, 1]} : vector<8x768xf32> to vector<8x512xf32>
    %62 = vector.extract_strided_slice %2 {offsets = [0, 0], sizes = [1, 512], strides = [1, 1]} : vector<8x512xi1> to vector<1x512xi1>
    %63 = vector.extract_strided_slice %2 {offsets = [5, 0], sizes = [1, 512], strides = [1, 1]} : vector<8x512xi1> to vector<1x512xi1>
    %64 = arith.andi %62, %63 : vector<1x512xi1>
    %cst_13 = arith.constant 0.000000e+00 : f32
    %65 = vector.shape_cast %64 : vector<1x512xi1> to vector<1x512xi1>
    %66 = vector.broadcast %65 : vector<1x512xi1> to vector<8x512xi1>
    %67 = vector.broadcast %cst_13 : f32 to vector<8x512xf32>
    %68 = arith.select %66, %61, %67 : vector<8x512xi1>, vector<8x512xf32>
    %c40 = arith.constant 40 : index
    %c0_14 = arith.constant 0 : index
    %69 = vector.load %arg6[%c40, %c0_14] : memref<216x512xf32, #tpu.memory_space<vmem>>, vector<8x512xf32>
    tpu.vector_store %arg6[%c40, %c0_14], %68 {strides = array<i32>} : memref<216x512xf32, #tpu.memory_space<vmem>>, vector<8x512xf32>,
    %c57_i32 = arith.constant 57 : i32
    %70 = tpu.dynamic_rotate %7 by %c57_i32 dim 1 : vector<8x768xf32>, i32 -> vector<8x768xf32>
    %71 = vector.extract_strided_slice %70 {offsets = [0, 128], sizes = [8, 512], strides = [1, 1]} : vector<8x768xf32> to vector<8x512xf32>
    %72 = vector.extract_strided_slice %2 {offsets = [0, 0], sizes = [1, 512], strides = [1, 1]} : vector<8x512xi1> to vector<1x512xi1>
    %73 = vector.extract_strided_slice %2 {offsets = [3, 0], sizes = [1, 512], strides = [1, 1]} : vector<8x512xi1> to vector<1x512xi1>
    %74 = arith.andi %72, %73 : vector<1x512xi1>
    %75 = vector.extract_strided_slice %2 {offsets = [4, 0], sizes = [1, 512], strides = [1, 1]} : vector<8x512xi1> to vector<1x512xi1>
    %76 = arith.andi %74, %75 : vector<1x512xi1>
    %cst_15 = arith.constant 0.000000e+00 : f32
    %77 = vector.shape_cast %76 : vector<1x512xi1> to vector<1x512xi1>
    %78 = vector.broadcast %77 : vector<1x512xi1> to vector<8x512xi1>
    %79 = vector.broadcast %cst_15 : f32 to vector<8x512xf32>
    %80 = arith.select %78, %71, %79 : vector<8x512xi1>, vector<8x512xf32>
    %c48 = arith.constant 48 : index
    %c0_16 = arith.constant 0 : index
    %81 = vector.load %arg6[%c48, %c0_16] : memref<216x512xf32, #tpu.memory_space<vmem>>, vector<8x512xf32>
    tpu.vector_store %arg6[%c48, %c0_16], %80 {strides = array<i32>} : memref<216x512xf32, #tpu.memory_space<vmem>>, vector<8x512xf32>,
    %c56_i32 = arith.constant 56 : i32
    %82 = tpu.dynamic_rotate %7 by %c56_i32 dim 1 : vector<8x768xf32>, i32 -> vector<8x768xf32>
    %83 = vector.extract_strided_slice %82 {offsets = [0, 128], sizes = [8, 512], strides = [1, 1]} : vector<8x768xf32> to vector<8x512xf32>
    %84 = vector.extract_strided_slice %2 {offsets = [0, 0], sizes = [1, 512], strides = [1, 1]} : vector<8x512xi1> to vector<1x512xi1>
    %85 = vector.extract_strided_slice %2 {offsets = [3, 0], sizes = [1, 512], strides = [1, 1]} : vector<8x512xi1> to vector<1x512xi1>
    %86 = arith.andi %84, %85 : vector<1x512xi1>
    %cst_17 = arith.constant 0.000000e+00 : f32
    %87 = vector.shape_cast %86 : vector<1x512xi1> to vector<1x512xi1>
    %88 = vector.broadcast %87 : vector<1x512xi1> to vector<8x512xi1>
    %89 = vector.broadcast %cst_17 : f32 to vector<8x512xf32>
    %90 = arith.select %88, %83, %89 : vector<8x512xi1>, vector<8x512xf32>
    %c56 = arith.constant 56 : index
    %c0_18 = arith.constant 0 : index
    %91 = vector.load %arg6[%c56, %c0_18] : memref<216x512xf32, #tpu.memory_space<vmem>>, vector<8x512xf32>
    tpu.vector_store %arg6[%c56, %c0_18], %90 {strides = array<i32>} : memref<216x512xf32, #tpu.memory_space<vmem>>, vector<8x512xf32>,
    %c55_i32 = arith.constant 55 : i32
    %92 = tpu.dynamic_rotate %7 by %c55_i32 dim 1 : vector<8x768xf32>, i32 -> vector<8x768xf32>
    %93 = vector.extract_strided_slice %92 {offsets = [0, 128], sizes = [8, 512], strides = [1, 1]} : vector<8x768xf32> to vector<8x512xf32>
    %94 = vector.extract_strided_slice %2 {offsets = [0, 0], sizes = [1, 512], strides = [1, 1]} : vector<8x512xi1> to vector<1x512xi1>
    %95 = vector.extract_strided_slice %2 {offsets = [3, 0], sizes = [1, 512], strides = [1, 1]} : vector<8x512xi1> to vector<1x512xi1>
    %96 = arith.andi %94, %95 : vector<1x512xi1>
    %97 = vector.extract_strided_slice %2 {offsets = [5, 0], sizes = [1, 512], strides = [1, 1]} : vector<8x512xi1> to vector<1x512xi1>
    %98 = arith.andi %96, %97 : vector<1x512xi1>
    %cst_19 = arith.constant 0.000000e+00 : f32
    %99 = vector.shape_cast %98 : vector<1x512xi1> to vector<1x512xi1>
    %100 = vector.broadcast %99 : vector<1x512xi1> to vector<8x512xi1>
    %101 = vector.broadcast %cst_19 : f32 to vector<8x512xf32>
    %102 = arith.select %100, %93, %101 : vector<8x512xi1>, vector<8x512xf32>
    %c64 = arith.constant 64 : index
    %c0_20 = arith.constant 0 : index
    %103 = vector.load %arg6[%c64, %c0_20] : memref<216x512xf32, #tpu.memory_space<vmem>>, vector<8x512xf32>
    tpu.vector_store %arg6[%c64, %c0_20], %102 {strides = array<i32>} : memref<216x512xf32, #tpu.memory_space<vmem>>, vector<8x512xf32>,
    %c9_i32 = arith.constant 9 : i32
    %104 = tpu.dynamic_rotate %7 by %c9_i32 dim 1 : vector<8x768xf32>, i32 -> vector<8x768xf32>
    %105 = vector.extract_strided_slice %104 {offsets = [0, 128], sizes = [8, 512], strides = [1, 1]} : vector<8x768xf32> to vector<8x512xf32>
    %106 = vector.extract_strided_slice %2 {offsets = [2, 0], sizes = [1, 512], strides = [1, 1]} : vector<8x512xi1> to vector<1x512xi1>
    %107 = vector.extract_strided_slice %2 {offsets = [4, 0], sizes = [1, 512], strides = [1, 1]} : vector<8x512xi1> to vector<1x512xi1>
    %108 = arith.andi %106, %107 : vector<1x512xi1>
    %cst_21 = arith.constant 0.000000e+00 : f32
    %109 = vector.shape_cast %108 : vector<1x512xi1> to vector<1x512xi1>
    %110 = vector.broadcast %109 : vector<1x512xi1> to vector<8x512xi1>
    %111 = vector.broadcast %cst_21 : f32 to vector<8x512xf32>
    %112 = arith.select %110, %105, %111 : vector<8x512xi1>, vector<8x512xf32>
    %c72 = arith.constant 72 : index
    %c0_22 = arith.constant 0 : index
    %113 = vector.load %arg6[%c72, %c0_22] : memref<216x512xf32, #tpu.memory_space<vmem>>, vector<8x512xf32>
    tpu.vector_store %arg6[%c72, %c0_22], %112 {strides = array<i32>} : memref<216x512xf32, #tpu.memory_space<vmem>>, vector<8x512xf32>,
    %c8_i32 = arith.constant 8 : i32
    %114 = tpu.dynamic_rotate %7 by %c8_i32 dim 1 : vector<8x768xf32>, i32 -> vector<8x768xf32>
    %115 = vector.extract_strided_slice %114 {offsets = [0, 128], sizes = [8, 512], strides = [1, 1]} : vector<8x768xf32> to vector<8x512xf32>
    %116 = vector.extract_strided_slice %2 {offsets = [2, 0], sizes = [1, 512], strides = [1, 1]} : vector<8x512xi1> to vector<1x512xi1>
    %cst_23 = arith.constant 0.000000e+00 : f32
    %117 = vector.shape_cast %116 : vector<1x512xi1> to vector<1x512xi1>
    %118 = vector.broadcast %117 : vector<1x512xi1> to vector<8x512xi1>
    %119 = vector.broadcast %cst_23 : f32 to vector<8x512xf32>
    %120 = arith.select %118, %115, %119 : vector<8x512xi1>, vector<8x512xf32>
    %c80 = arith.constant 80 : index
    %c0_24 = arith.constant 0 : index
    %121 = vector.load %arg6[%c80, %c0_24] : memref<216x512xf32, #tpu.memory_space<vmem>>, vector<8x512xf32>
    tpu.vector_store %arg6[%c80, %c0_24], %120 {strides = array<i32>} : memref<216x512xf32, #tpu.memory_space<vmem>>, vector<8x512xf32>,
    %c7_i32 = arith.constant 7 : i32
    %122 = tpu.dynamic_rotate %7 by %c7_i32 dim 1 : vector<8x768xf32>, i32 -> vector<8x768xf32>
    %123 = vector.extract_strided_slice %122 {offsets = [0, 128], sizes = [8, 512], strides = [1, 1]} : vector<8x768xf32> to vector<8x512xf32>
    %124 = vector.extract_strided_slice %2 {offsets = [2, 0], sizes = [1, 512], strides = [1, 1]} : vector<8x512xi1> to vector<1x512xi1>
    %125 = vector.extract_strided_slice %2 {offsets = [5, 0], sizes = [1, 512], strides = [1, 1]} : vector<8x512xi1> to vector<1x512xi1>
    %126 = arith.andi %124, %125 : vector<1x512xi1>
    %cst_25 = arith.constant 0.000000e+00 : f32
    %127 = vector.shape_cast %126 : vector<1x512xi1> to vector<1x512xi1>
    %128 = vector.broadcast %127 : vector<1x512xi1> to vector<8x512xi1>
    %129 = vector.broadcast %cst_25 : f32 to vector<8x512xf32>
    %130 = arith.select %128, %123, %129 : vector<8x512xi1>, vector<8x512xf32>
    %c88 = arith.constant 88 : index
    %c0_26 = arith.constant 0 : index
    %131 = vector.load %arg6[%c88, %c0_26] : memref<216x512xf32, #tpu.memory_space<vmem>>, vector<8x512xf32>
    tpu.vector_store %arg6[%c88, %c0_26], %130 {strides = array<i32>} : memref<216x512xf32, #tpu.memory_space<vmem>>, vector<8x512xf32>,
    %c1_i32 = arith.constant 1 : i32
    %132 = tpu.dynamic_rotate %7 by %c1_i32 dim 1 : vector<8x768xf32>, i32 -> vector<8x768xf32>
    %133 = vector.extract_strided_slice %132 {offsets = [0, 128], sizes = [8, 512], strides = [1, 1]} : vector<8x768xf32> to vector<8x512xf32>
    %134 = vector.extract_strided_slice %2 {offsets = [4, 0], sizes = [1, 512], strides = [1, 1]} : vector<8x512xi1> to vector<1x512xi1>
    %cst_27 = arith.constant 0.000000e+00 : f32
    %135 = vector.shape_cast %134 : vector<1x512xi1> to vector<1x512xi1>
    %136 = vector.broadcast %135 : vector<1x512xi1> to vector<8x512xi1>
    %137 = vector.broadcast %cst_27 : f32 to vector<8x512xf32>
    %138 = arith.select %136, %133, %137 : vector<8x512xi1>, vector<8x512xf32>
    %c96 = arith.constant 96 : index
    %c0_28 = arith.constant 0 : index
    %139 = vector.load %arg6[%c96, %c0_28] : memref<216x512xf32, #tpu.memory_space<vmem>>, vector<8x512xf32>
    tpu.vector_store %arg6[%c96, %c0_28], %138 {strides = array<i32>} : memref<216x512xf32, #tpu.memory_space<vmem>>, vector<8x512xf32>,
    %140 = vector.extract_strided_slice %7 {offsets = [0, 128], sizes = [8, 512], strides = [1, 1]} : vector<8x768xf32> to vector<8x512xf32>
    %c104 = arith.constant 104 : index
    %c0_29 = arith.constant 0 : index
    %141 = vector.load %arg6[%c104, %c0_29] : memref<216x512xf32, #tpu.memory_space<vmem>>, vector<8x512xf32>
    tpu.vector_store %arg6[%c104, %c0_29], %140 {strides = array<i32>} : memref<216x512xf32, #tpu.memory_space<vmem>>, vector<8x512xf32>,
    %c767_i32 = arith.constant 767 : i32
    %142 = tpu.dynamic_rotate %7 by %c767_i32 dim 1 : vector<8x768xf32>, i32 -> vector<8x768xf32>
    %143 = vector.extract_strided_slice %142 {offsets = [0, 128], sizes = [8, 512], strides = [1, 1]} : vector<8x768xf32> to vector<8x512xf32>
    %144 = vector.extract_strided_slice %2 {offsets = [5, 0], sizes = [1, 512], strides = [1, 1]} : vector<8x512xi1> to vector<1x512xi1>
    %cst_30 = arith.constant 0.000000e+00 : f32
    %145 = vector.shape_cast %144 : vector<1x512xi1> to vector<1x512xi1>
    %146 = vector.broadcast %145 : vector<1x512xi1> to vector<8x512xi1>
    %147 = vector.broadcast %cst_30 : f32 to vector<8x512xf32>
    %148 = arith.select %146, %143, %147 : vector<8x512xi1>, vector<8x512xf32>
    %c112 = arith.constant 112 : index
    %c0_31 = arith.constant 0 : index
    %149 = vector.load %arg6[%c112, %c0_31] : memref<216x512xf32, #tpu.memory_space<vmem>>, vector<8x512xf32>
    tpu.vector_store %arg6[%c112, %c0_31], %148 {strides = array<i32>} : memref<216x512xf32, #tpu.memory_space<vmem>>, vector<8x512xf32>,
    %c761_i32 = arith.constant 761 : i32
    %150 = tpu.dynamic_rotate %7 by %c761_i32 dim 1 : vector<8x768xf32>, i32 -> vector<8x768xf32>
    %151 = vector.extract_strided_slice %150 {offsets = [0, 128], sizes = [8, 512], strides = [1, 1]} : vector<8x768xf32> to vector<8x512xf32>
    %152 = vector.extract_strided_slice %2 {offsets = [3, 0], sizes = [1, 512], strides = [1, 1]} : vector<8x512xi1> to vector<1x512xi1>
    %153 = vector.extract_strided_slice %2 {offsets = [4, 0], sizes = [1, 512], strides = [1, 1]} : vector<8x512xi1> to vector<1x512xi1>
    %154 = arith.andi %152, %153 : vector<1x512xi1>
    %cst_32 = arith.constant 0.000000e+00 : f32
    %155 = vector.shape_cast %154 : vector<1x512xi1> to vector<1x512xi1>
    %156 = vector.broadcast %155 : vector<1x512xi1> to vector<8x512xi1>
    %157 = vector.broadcast %cst_32 : f32 to vector<8x512xf32>
    %158 = arith.select %156, %151, %157 : vector<8x512xi1>, vector<8x512xf32>
    %c120 = arith.constant 120 : index
    %c0_33 = arith.constant 0 : index
    %159 = vector.load %arg6[%c120, %c0_33] : memref<216x512xf32, #tpu.memory_space<vmem>>, vector<8x512xf32>
    tpu.vector_store %arg6[%c120, %c0_33], %158 {strides = array<i32>} : memref<216x512xf32, #tpu.memory_space<vmem>>, vector<8x512xf32>,
    %c760_i32 = arith.constant 760 : i32
    %160 = tpu.dynamic_rotate %7 by %c760_i32 dim 1 : vector<8x768xf32>, i32 -> vector<8x768xf32>
    %161 = vector.extract_strided_slice %160 {offsets = [0, 128], sizes = [8, 512], strides = [1, 1]} : vector<8x768xf32> to vector<8x512xf32>
    %162 = vector.extract_strided_slice %2 {offsets = [3, 0], sizes = [1, 512], strides = [1, 1]} : vector<8x512xi1> to vector<1x512xi1>
    %cst_34 = arith.constant 0.000000e+00 : f32
    %163 = vector.shape_cast %162 : vector<1x512xi1> to vector<1x512xi1>
    %164 = vector.broadcast %163 : vector<1x512xi1> to vector<8x512xi1>
    %165 = vector.broadcast %cst_34 : f32 to vector<8x512xf32>
    %166 = arith.select %164, %161, %165 : vector<8x512xi1>, vector<8x512xf32>
    %c128 = arith.constant 128 : index
    %c0_35 = arith.constant 0 : index
    %167 = vector.load %arg6[%c128, %c0_35] : memref<216x512xf32, #tpu.memory_space<vmem>>, vector<8x512xf32>
    tpu.vector_store %arg6[%c128, %c0_35], %166 {strides = array<i32>} : memref<216x512xf32, #tpu.memory_space<vmem>>, vector<8x512xf32>,
    %c759_i32 = arith.constant 759 : i32
    %168 = tpu.dynamic_rotate %7 by %c759_i32 dim 1 : vector<8x768xf32>, i32 -> vector<8x768xf32>
    %169 = vector.extract_strided_slice %168 {offsets = [0, 128], sizes = [8, 512], strides = [1, 1]} : vector<8x768xf32> to vector<8x512xf32>
    %170 = vector.extract_strided_slice %2 {offsets = [3, 0], sizes = [1, 512], strides = [1, 1]} : vector<8x512xi1> to vector<1x512xi1>
    %171 = vector.extract_strided_slice %2 {offsets = [5, 0], sizes = [1, 512], strides = [1, 1]} : vector<8x512xi1> to vector<1x512xi1>
    %172 = arith.andi %170, %171 : vector<1x512xi1>
    %cst_36 = arith.constant 0.000000e+00 : f32
    %173 = vector.shape_cast %172 : vector<1x512xi1> to vector<1x512xi1>
    %174 = vector.broadcast %173 : vector<1x512xi1> to vector<8x512xi1>
    %175 = vector.broadcast %cst_36 : f32 to vector<8x512xf32>
    %176 = arith.select %174, %169, %175 : vector<8x512xi1>, vector<8x512xf32>
    %c136 = arith.constant 136 : index
    %c0_37 = arith.constant 0 : index
    %177 = vector.load %arg6[%c136, %c0_37] : memref<216x512xf32, #tpu.memory_space<vmem>>, vector<8x512xf32>
    tpu.vector_store %arg6[%c136, %c0_37], %176 {strides = array<i32>} : memref<216x512xf32, #tpu.memory_space<vmem>>, vector<8x512xf32>,
    %c713_i32 = arith.constant 713 : i32
    %178 = tpu.dynamic_rotate %7 by %c713_i32 dim 1 : vector<8x768xf32>, i32 -> vector<8x768xf32>
    %179 = vector.extract_strided_slice %178 {offsets = [0, 128], sizes = [8, 512], strides = [1, 1]} : vector<8x768xf32> to vector<8x512xf32>
    %180 = vector.extract_strided_slice %2 {offsets = [1, 0], sizes = [1, 512], strides = [1, 1]} : vector<8x512xi1> to vector<1x512xi1>
    %181 = vector.extract_strided_slice %2 {offsets = [2, 0], sizes = [1, 512], strides = [1, 1]} : vector<8x512xi1> to vector<1x512xi1>
    %182 = arith.andi %180, %181 : vector<1x512xi1>
    %183 = vector.extract_strided_slice %2 {offsets = [4, 0], sizes = [1, 512], strides = [1, 1]} : vector<8x512xi1> to vector<1x512xi1>
    %184 = arith.andi %182, %183 : vector<1x512xi1>
    %cst_38 = arith.constant 0.000000e+00 : f32
    %185 = vector.shape_cast %184 : vector<1x512xi1> to vector<1x512xi1>
    %186 = vector.broadcast %185 : vector<1x512xi1> to vector<8x512xi1>
    %187 = vector.broadcast %cst_38 : f32 to vector<8x512xf32>
    %188 = arith.select %186, %179, %187 : vector<8x512xi1>, vector<8x512xf32>
    %c144 = arith.constant 144 : index
    %c0_39 = arith.constant 0 : index
    %189 = vector.load %arg6[%c144, %c0_39] : memref<216x512xf32, #tpu.memory_space<vmem>>, vector<8x512xf32>
    tpu.vector_store %arg6[%c144, %c0_39], %188 {strides = array<i32>} : memref<216x512xf32, #tpu.memory_space<vmem>>, vector<8x512xf32>,
    %c712_i32 = arith.constant 712 : i32
    %190 = tpu.dynamic_rotate %7 by %c712_i32 dim 1 : vector<8x768xf32>, i32 -> vector<8x768xf32>
    %191 = vector.extract_strided_slice %190 {offsets = [0, 128], sizes = [8, 512], strides = [1, 1]} : vector<8x768xf32> to vector<8x512xf32>
    %192 = vector.extract_strided_slice %2 {offsets = [1, 0], sizes = [1, 512], strides = [1, 1]} : vector<8x512xi1> to vector<1x512xi1>
    %193 = vector.extract_strided_slice %2 {offsets = [2, 0], sizes = [1, 512], strides = [1, 1]} : vector<8x512xi1> to vector<1x512xi1>
    %194 = arith.andi %192, %193 : vector<1x512xi1>
    %cst_40 = arith.constant 0.000000e+00 : f32
    %195 = vector.shape_cast %194 : vector<1x512xi1> to vector<1x512xi1>
    %196 = vector.broadcast %195 : vector<1x512xi1> to vector<8x512xi1>
    %197 = vector.broadcast %cst_40 : f32 to vector<8x512xf32>
    %198 = arith.select %196, %191, %197 : vector<8x512xi1>, vector<8x512xf32>
    %c152 = arith.constant 152 : index
    %c0_41 = arith.constant 0 : index
    %199 = vector.load %arg6[%c152, %c0_41] : memref<216x512xf32, #tpu.memory_space<vmem>>, vector<8x512xf32>
    tpu.vector_store %arg6[%c152, %c0_41], %198 {strides = array<i32>} : memref<216x512xf32, #tpu.memory_space<vmem>>, vector<8x512xf32>,
    %c711_i32 = arith.constant 711 : i32
    %200 = tpu.dynamic_rotate %7 by %c711_i32 dim 1 : vector<8x768xf32>, i32 -> vector<8x768xf32>
    %201 = vector.extract_strided_slice %200 {offsets = [0, 128], sizes = [8, 512], strides = [1, 1]} : vector<8x768xf32> to vector<8x512xf32>
    %202 = vector.extract_strided_slice %2 {offsets = [1, 0], sizes = [1, 512], strides = [1, 1]} : vector<8x512xi1> to vector<1x512xi1>
    %203 = vector.extract_strided_slice %2 {offsets = [2, 0], sizes = [1, 512], strides = [1, 1]} : vector<8x512xi1> to vector<1x512xi1>
    %204 = arith.andi %202, %203 : vector<1x512xi1>
    %205 = vector.extract_strided_slice %2 {offsets = [5, 0], sizes = [1, 512], strides = [1, 1]} : vector<8x512xi1> to vector<1x512xi1>
    %206 = arith.andi %204, %205 : vector<1x512xi1>
    %cst_42 = arith.constant 0.000000e+00 : f32
    %207 = vector.shape_cast %206 : vector<1x512xi1> to vector<1x512xi1>
    %208 = vector.broadcast %207 : vector<1x512xi1> to vector<8x512xi1>
    %209 = vector.broadcast %cst_42 : f32 to vector<8x512xf32>
    %210 = arith.select %208, %201, %209 : vector<8x512xi1>, vector<8x512xf32>
    %c160 = arith.constant 160 : index
    %c0_43 = arith.constant 0 : index
    %211 = vector.load %arg6[%c160, %c0_43] : memref<216x512xf32, #tpu.memory_space<vmem>>, vector<8x512xf32>
    tpu.vector_store %arg6[%c160, %c0_43], %210 {strides = array<i32>} : memref<216x512xf32, #tpu.memory_space<vmem>>, vector<8x512xf32>,
    %c705_i32 = arith.constant 705 : i32
    %212 = tpu.dynamic_rotate %7 by %c705_i32 dim 1 : vector<8x768xf32>, i32 -> vector<8x768xf32>
    %213 = vector.extract_strided_slice %212 {offsets = [0, 128], sizes = [8, 512], strides = [1, 1]} : vector<8x768xf32> to vector<8x512xf32>
    %214 = vector.extract_strided_slice %2 {offsets = [1, 0], sizes = [1, 512], strides = [1, 1]} : vector<8x512xi1> to vector<1x512xi1>
    %215 = vector.extract_strided_slice %2 {offsets = [4, 0], sizes = [1, 512], strides = [1, 1]} : vector<8x512xi1> to vector<1x512xi1>
    %216 = arith.andi %214, %215 : vector<1x512xi1>
    %cst_44 = arith.constant 0.000000e+00 : f32
    %217 = vector.shape_cast %216 : vector<1x512xi1> to vector<1x512xi1>
    %218 = vector.broadcast %217 : vector<1x512xi1> to vector<8x512xi1>
    %219 = vector.broadcast %cst_44 : f32 to vector<8x512xf32>
    %220 = arith.select %218, %213, %219 : vector<8x512xi1>, vector<8x512xf32>
    %c168 = arith.constant 168 : index
    %c0_45 = arith.constant 0 : index
    %221 = vector.load %arg6[%c168, %c0_45] : memref<216x512xf32, #tpu.memory_space<vmem>>, vector<8x512xf32>
    tpu.vector_store %arg6[%c168, %c0_45], %220 {strides = array<i32>} : memref<216x512xf32, #tpu.memory_space<vmem>>, vector<8x512xf32>,
    %c704_i32 = arith.constant 704 : i32
    %222 = tpu.dynamic_rotate %7 by %c704_i32 dim 1 : vector<8x768xf32>, i32 -> vector<8x768xf32>
    %223 = vector.extract_strided_slice %222 {offsets = [0, 128], sizes = [8, 512], strides = [1, 1]} : vector<8x768xf32> to vector<8x512xf32>
    %224 = vector.extract_strided_slice %2 {offsets = [1, 0], sizes = [1, 512], strides = [1, 1]} : vector<8x512xi1> to vector<1x512xi1>
    %cst_46 = arith.constant 0.000000e+00 : f32
    %225 = vector.shape_cast %224 : vector<1x512xi1> to vector<1x512xi1>
    %226 = vector.broadcast %225 : vector<1x512xi1> to vector<8x512xi1>
    %227 = vector.broadcast %cst_46 : f32 to vector<8x512xf32>
    %228 = arith.select %226, %223, %227 : vector<8x512xi1>, vector<8x512xf32>
    %c176 = arith.constant 176 : index
    %c0_47 = arith.constant 0 : index
    %229 = vector.load %arg6[%c176, %c0_47] : memref<216x512xf32, #tpu.memory_space<vmem>>, vector<8x512xf32>
    tpu.vector_store %arg6[%c176, %c0_47], %228 {strides = array<i32>} : memref<216x512xf32, #tpu.memory_space<vmem>>, vector<8x512xf32>,
    %c703_i32 = arith.constant 703 : i32
    %230 = tpu.dynamic_rotate %7 by %c703_i32 dim 1 : vector<8x768xf32>, i32 -> vector<8x768xf32>
    %231 = vector.extract_strided_slice %230 {offsets = [0, 128], sizes = [8, 512], strides = [1, 1]} : vector<8x768xf32> to vector<8x512xf32>
    %232 = vector.extract_strided_slice %2 {offsets = [1, 0], sizes = [1, 512], strides = [1, 1]} : vector<8x512xi1> to vector<1x512xi1>
    %233 = vector.extract_strided_slice %2 {offsets = [5, 0], sizes = [1, 512], strides = [1, 1]} : vector<8x512xi1> to vector<1x512xi1>
    %234 = arith.andi %232, %233 : vector<1x512xi1>
    %cst_48 = arith.constant 0.000000e+00 : f32
    %235 = vector.shape_cast %234 : vector<1x512xi1> to vector<1x512xi1>
    %236 = vector.broadcast %235 : vector<1x512xi1> to vector<8x512xi1>
    %237 = vector.broadcast %cst_48 : f32 to vector<8x512xf32>
    %238 = arith.select %236, %231, %237 : vector<8x512xi1>, vector<8x512xf32>
    %c184 = arith.constant 184 : index
    %c0_49 = arith.constant 0 : index
    %239 = vector.load %arg6[%c184, %c0_49] : memref<216x512xf32, #tpu.memory_space<vmem>>, vector<8x512xf32>
    tpu.vector_store %arg6[%c184, %c0_49], %238 {strides = array<i32>} : memref<216x512xf32, #tpu.memory_space<vmem>>, vector<8x512xf32>,
    %c697_i32 = arith.constant 697 : i32
    %240 = tpu.dynamic_rotate %7 by %c697_i32 dim 1 : vector<8x768xf32>, i32 -> vector<8x768xf32>
    %241 = vector.extract_strided_slice %240 {offsets = [0, 128], sizes = [8, 512], strides = [1, 1]} : vector<8x768xf32> to vector<8x512xf32>
    %242 = vector.extract_strided_slice %2 {offsets = [1, 0], sizes = [1, 512], strides = [1, 1]} : vector<8x512xi1> to vector<1x512xi1>
    %243 = vector.extract_strided_slice %2 {offsets = [3, 0], sizes = [1, 512], strides = [1, 1]} : vector<8x512xi1> to vector<1x512xi1>
    %244 = arith.andi %242, %243 : vector<1x512xi1>
    %245 = vector.extract_strided_slice %2 {offsets = [4, 0], sizes = [1, 512], strides = [1, 1]} : vector<8x512xi1> to vector<1x512xi1>
    %246 = arith.andi %244, %245 : vector<1x512xi1>
    %cst_50 = arith.constant 0.000000e+00 : f32
    %247 = vector.shape_cast %246 : vector<1x512xi1> to vector<1x512xi1>
    %248 = vector.broadcast %247 : vector<1x512xi1> to vector<8x512xi1>
    %249 = vector.broadcast %cst_50 : f32 to vector<8x512xf32>
    %250 = arith.select %248, %241, %249 : vector<8x512xi1>, vector<8x512xf32>
    %c192 = arith.constant 192 : index
    %c0_51 = arith.constant 0 : index
    %251 = vector.load %arg6[%c192, %c0_51] : memref<216x512xf32, #tpu.memory_space<vmem>>, vector<8x512xf32>
    tpu.vector_store %arg6[%c192, %c0_51], %250 {strides = array<i32>} : memref<216x512xf32, #tpu.memory_space<vmem>>, vector<8x512xf32>,
    %c696_i32 = arith.constant 696 : i32
    %252 = tpu.dynamic_rotate %7 by %c696_i32 dim 1 : vector<8x768xf32>, i32 -> vector<8x768xf32>
    %253 = vector.extract_strided_slice %252 {offsets = [0, 128], sizes = [8, 512], strides = [1, 1]} : vector<8x768xf32> to vector<8x512xf32>
    %254 = vector.extract_strided_slice %2 {offsets = [1, 0], sizes = [1, 512], strides = [1, 1]} : vector<8x512xi1> to vector<1x512xi1>
    %255 = vector.extract_strided_slice %2 {offsets = [3, 0], sizes = [1, 512], strides = [1, 1]} : vector<8x512xi1> to vector<1x512xi1>
    %256 = arith.andi %254, %255 : vector<1x512xi1>
    %cst_52 = arith.constant 0.000000e+00 : f32
    %257 = vector.shape_cast %256 : vector<1x512xi1> to vector<1x512xi1>
    %258 = vector.broadcast %257 : vector<1x512xi1> to vector<8x512xi1>
    %259 = vector.broadcast %cst_52 : f32 to vector<8x512xf32>
    %260 = arith.select %258, %253, %259 : vector<8x512xi1>, vector<8x512xf32>
    %c200 = arith.constant 200 : index
    %c0_53 = arith.constant 0 : index
    %261 = vector.load %arg6[%c200, %c0_53] : memref<216x512xf32, #tpu.memory_space<vmem>>, vector<8x512xf32>
    tpu.vector_store %arg6[%c200, %c0_53], %260 {strides = array<i32>} : memref<216x512xf32, #tpu.memory_space<vmem>>, vector<8x512xf32>,
    %c695_i32 = arith.constant 695 : i32
    %262 = tpu.dynamic_rotate %7 by %c695_i32 dim 1 : vector<8x768xf32>, i32 -> vector<8x768xf32>
    %263 = vector.extract_strided_slice %262 {offsets = [0, 128], sizes = [8, 512], strides = [1, 1]} : vector<8x768xf32> to vector<8x512xf32>
    %264 = vector.extract_strided_slice %2 {offsets = [1, 0], sizes = [1, 512], strides = [1, 1]} : vector<8x512xi1> to vector<1x512xi1>
    %265 = vector.extract_strided_slice %2 {offsets = [3, 0], sizes = [1, 512], strides = [1, 1]} : vector<8x512xi1> to vector<1x512xi1>
    %266 = arith.andi %264, %265 : vector<1x512xi1>
    %267 = vector.extract_strided_slice %2 {offsets = [5, 0], sizes = [1, 512], strides = [1, 1]} : vector<8x512xi1> to vector<1x512xi1>
    %268 = arith.andi %266, %267 : vector<1x512xi1>
    %cst_54 = arith.constant 0.000000e+00 : f32
    %269 = vector.shape_cast %268 : vector<1x512xi1> to vector<1x512xi1>
    %270 = vector.broadcast %269 : vector<1x512xi1> to vector<8x512xi1>
    %271 = vector.broadcast %cst_54 : f32 to vector<8x512xf32>
    %272 = arith.select %270, %263, %271 : vector<8x512xi1>, vector<8x512xf32>
    %c208 = arith.constant 208 : index
    %c0_55 = arith.constant 0 : index
    %273 = vector.load %arg6[%c208, %c0_55] : memref<216x512xf32, #tpu.memory_space<vmem>>, vector<8x512xf32>
    tpu.vector_store %arg6[%c208, %c0_55], %272 {strides = array<i32>} : memref<216x512xf32, #tpu.memory_space<vmem>>, vector<8x512xf32>,
    %c0_56 = arith.constant 0 : index
    %c0_57 = arith.constant 0 : index
    %c0_58 = arith.constant 0 : index
    %274 = vector.load %arg2[%c0_56, %c0_57, %c0_58] : memref<1x8x216xf32, #tpu.memory_space<vmem>>, vector<1x8x216xf32>
    %275 = vector.shape_cast %274 : vector<1x8x216xf32> to vector<8x216xf32>
    %c0_59 = arith.constant 0 : index
    %c0_60 = arith.constant 0 : index
    %276 = vector.load %arg6[%c0_59, %c0_60] : memref<216x512xf32, #tpu.memory_space<vmem>>, vector<216x512xf32>
    %cst_61 = arith.constant dense<0.000000e+00> : vector<8x512xf32>
    %277 = tpu.matmul %275, %276, %cst_61 {dimension_numbers = #tpu.dot_dimension_numbers<[1], [0], [0], [1], [0, 0, 1, 1], [], []>} : vector<8x216xf32>, vector<216x512xf32>, vector<8x512xf32> -> vector<8x512xf32>
    %278 = arith.truncf %277 : vector<8x512xf32> to vector<8x512xbf16>
    %c0_62 = arith.constant 0 : index
    %c0_63 = arith.constant 0 : index
    %279 = vector.load %arg4[%c0_62, %c0_63] : memref<8x512xbf16, #tpu.memory_space<vmem>>, vector<8x512xbf16>
    tpu.vector_store %arg4[%c0_62, %c0_63], %278 {strides = array<i32>} : memref<8x512xbf16, #tpu.memory_space<vmem>>, vector<8x512xbf16>,
    %cst_64 = arith.constant dense<0.000000e+00> : vector<8xf32>
    %280 = vector.multi_reduction <add>, %277, %cst_64 [1] : vector<8x512xf32> to vector<8xf32>
    %281 = vector.shape_cast %280 : vector<8xf32> to vector<8x1xf32>
    %cst_65 = arith.constant 0.001953125 : f32
    %282 = vector.broadcast %cst_65 : f32 to vector<8x1xf32>
    %283 = arith.mulf %281, %282 : vector<8x1xf32>
    %284 = vector.broadcast %283 : vector<8x1xf32> to vector<8x512xf32>
    %285 = arith.subf %277, %284 : vector<8x512xf32>
    %286 = arith.mulf %285, %285 : vector<8x512xf32>
    %cst_66 = arith.constant dense<0.000000e+00> : vector<8xf32>
    %287 = vector.multi_reduction <add>, %286, %cst_66 [1] : vector<8x512xf32> to vector<8xf32>
    %288 = vector.shape_cast %287 : vector<8xf32> to vector<8x1xf32>
    %289 = tpu.concatenate %281, %288 in 1 : vector<8x1xf32>, vector<8x1xf32> -> vector<8x2xf32>
    %c0_67 = arith.constant 0 : index
    %c0_68 = arith.constant 0 : index
    %c0_69 = arith.constant 0 : index
    %290 = vector.load %arg5[%c0_67, %c0_68, %c0_69] : memref<1x8x2xf32, #tpu.memory_space<vmem>>, vector<1x8x2xf32>
    %291 = vector.shape_cast %290 : vector<1x8x2xf32> to vector<8x2xf32>
    %292 = vector.shape_cast %289 : vector<8x2xf32> to vector<1x8x2xf32>
    tpu.vector_store %arg5[%c0_67, %c0_68, %c0_69], %292 {strides = array<i32>} : memref<1x8x2xf32, #tpu.memory_space<vmem>>, vector<1x8x2xf32>,
    return
  }
  func.func @transform_0(%arg0: i32) -> (i32, i32) {
    %c0_i32 = arith.constant 0 : i32
    %c0_i32_0 = arith.constant 0 : i32
    %c0_i32_1 = arith.constant 0 : i32
    return %c0_i32, %c0_i32_0 : i32, i32
  }
  func.func @transform_1(%arg0: i32) -> (i32, i32, i32) {
    %c0_i32 = arith.constant 0 : i32
    %c0_i32_0 = arith.constant 0 : i32
    %c0_i32_1 = arith.constant 0 : i32
    %c0_i32_2 = arith.constant 0 : i32
    return %c0_i32, %c0_i32_0, %c0_i32_1 : i32, i32, i32
  }
  func.func @transform_2(%arg0: i32) -> (i32, i32) {
    %c0_i32 = arith.constant 0 : i32
    %c0_i32_0 = arith.constant 0 : i32
    return %c0_i32, %arg0 : i32, i32
  }
  func.func @transform_3(%arg0: i32) -> (i32, i32) {
    %c1_i32 = arith.constant 1 : i32
    %0 = arith.addi %arg0, %c1_i32 : i32
    %c0_i32 = arith.constant 0 : i32
    %c0_i32_0 = arith.constant 0 : i32
    return %c0_i32, %0 : i32, i32
  }
  func.func @transform_4(%arg0: i32) -> (i32, i32, i32) {
    %c0_i32 = arith.constant 0 : i32
    %c0_i32_0 = arith.constant 0 : i32
    %c0_i32_1 = arith.constant 0 : i32
    return %arg0, %c0_i32, %c0_i32_0 : i32, i32, i32
  }
}

module attributes {stable_mosaic.version = 11 : i64} {
  func.func @kernel(%arg0: i32, %arg1: memref<8x2048xbf16, #tpu.memory_space<vmem>>, %arg2: memref<8x1xf32, #tpu.memory_space<vmem>>, %arg3: memref<8x1xf32, #tpu.memory_space<vmem>>, %arg4: memref<1x8x216xf32, #tpu.memory_space<vmem>>, %arg5: memref<8x512xf32, #tpu.memory_space<vmem>>, %arg6: memref<8x512xbf16, #tpu.memory_space<vmem>>, %arg7: memref<1x8x2xf32, #tpu.memory_space<vmem>>, %arg8: memref<216x512xf32, #tpu.memory_space<vmem>>) attributes {dimension_semantics = [#tpu.dimension_semantics<parallel>], iteration_bounds = array<i64: 2>, scalar_prefetch = 0 : i64, scratch_operands = 1 : i64, tpu.core_type = #tpu.core_type<tc>, window_params = [{pipeline_mode = #tpu.pipeline_mode<synchronous>, transform_indices = @transform_0, window_bounds = array<i64: 8, 2048>}, {pipeline_mode = #tpu.pipeline_mode<synchronous>, transform_indices = @transform_1, window_bounds = array<i64: 8, 1>}, {pipeline_mode = #tpu.pipeline_mode<synchronous>, transform_indices = @transform_2, window_bounds = array<i64: 8, 1>}, {pipeline_mode = #tpu.pipeline_mode<synchronous>, transform_indices = @transform_3, window_bounds = array<i64: 1, 8, 216>}, {transform_indices = @transform_4, window_bounds = array<i64: 8, 512>}, {transform_indices = @transform_5, window_bounds = array<i64: 8, 512>}, {transform_indices = @transform_6, window_bounds = array<i64: 1, 8, 2>}]} {
    %c0 = arith.constant 0 : index
    %c0_0 = arith.constant 0 : index
    %0 = vector.load %arg5[%c0, %c0_0] : memref<8x512xf32, #tpu.memory_space<vmem>>, vector<8x512xf32>
    %cst = arith.constant 5.000000e-01 : f32
    %1 = vector.broadcast %cst : f32 to vector<8x512xf32>
    %2 = arith.cmpf ogt, %0, %1 : vector<8x512xf32>
    %c512_i32 = arith.constant 512 : i32
    %3 = arith.muli %arg0, %c512_i32 : i32
    %c384_i32 = arith.constant 384 : i32
    %4 = arith.addi %c384_i32, %3 : i32
    %5 = tpu.assume_multiple %4, 128 : i32
    %c0_1 = arith.constant 0 : index
    %6 = arith.index_cast %5 : i32 to index
    %7 = vector.load %arg1[%c0_1, %6] : memref<8x2048xbf16, #tpu.memory_space<vmem>>, vector<8x768xbf16>
    %8 = arith.extf %7 : vector<8x768xbf16> to vector<8x768xf32>
    %c0_2 = arith.constant 0 : index
    %c0_3 = arith.constant 0 : index
    %9 = vector.load %arg2[%c0_2, %c0_3] : memref<8x1xf32, #tpu.memory_space<vmem>>, vector<8x1xf32>
    %c0_4 = arith.constant 0 : index
    %c0_5 = arith.constant 0 : index
    %10 = vector.load %arg3[%c0_4, %c0_5] : memref<8x1xf32, #tpu.memory_space<vmem>>, vector<8x1xf32>
    %11 = vector.broadcast %9 : vector<8x1xf32> to vector<8x768xf32>
    %12 = arith.mulf %8, %11 : vector<8x768xf32>
    %13 = vector.broadcast %10 : vector<8x1xf32> to vector<8x768xf32>
    %14 = arith.addf %12, %13 : vector<8x768xf32>
    %cst_6 = arith.constant 0.000000e+00 : f32
    %15 = vector.broadcast %cst_6 : f32 to vector<8x768xf32>
    %16 = arith.cmpf ogt, %14, %15 : vector<8x768xf32>
    %cst_7 = arith.constant 0.000000e+00 : f32
    %17 = vector.broadcast %cst_7 : f32 to vector<8x768xf32>
    %18 = arith.minimumf %14, %17 : vector<8x768xf32>
    %19 = math.exp %18 : vector<8x768xf32>
    %cst_8 = arith.constant 1.000000e+00 : f32
    %20 = vector.broadcast %cst_8 : f32 to vector<8x768xf32>
    %21 = arith.subf %19, %20 : vector<8x768xf32>
    %22 = arith.select %16, %14, %21 : vector<8x768xi1>, vector<8x768xf32>
    %c73_i32 = arith.constant 73 : i32
    %23 = tpu.dynamic_rotate %22 by %c73_i32 dim 1 : vector<8x768xf32>, i32 -> vector<8x768xf32>
    %24 = vector.extract_strided_slice %23 {offsets = [0, 128], sizes = [8, 512], strides = [1, 1]} : vector<8x768xf32> to vector<8x512xf32>
    %25 = vector.extract_strided_slice %2 {offsets = [0, 0], sizes = [1, 512], strides = [1, 1]} : vector<8x512xi1> to vector<1x512xi1>
    %26 = vector.extract_strided_slice %2 {offsets = [2, 0], sizes = [1, 512], strides = [1, 1]} : vector<8x512xi1> to vector<1x512xi1>
    %27 = arith.andi %25, %26 : vector<1x512xi1>
    %28 = vector.extract_strided_slice %2 {offsets = [4, 0], sizes = [1, 512], strides = [1, 1]} : vector<8x512xi1> to vector<1x512xi1>
    %29 = arith.andi %27, %28 : vector<1x512xi1>
    %cst_9 = arith.constant 0.000000e+00 : f32
    %30 = vector.shape_cast %29 : vector<1x512xi1> to vector<1x512xi1>
    %31 = vector.broadcast %30 : vector<1x512xi1> to vector<8x512xi1>
    %32 = vector.broadcast %cst_9 : f32 to vector<8x512xf32>
    %33 = arith.select %31, %24, %32 : vector<8x512xi1>, vector<8x512xf32>
    %c0_10 = arith.constant 0 : index
    %c0_11 = arith.constant 0 : index
    %34 = vector.load %arg8[%c0_10, %c0_11] : memref<216x512xf32, #tpu.memory_space<vmem>>, vector<8x512xf32>
    tpu.vector_store %arg8[%c0_10, %c0_11], %33 {strides = array<i32>} : memref<216x512xf32, #tpu.memory_space<vmem>>, vector<8x512xf32>,
    %c72_i32 = arith.constant 72 : i32
    %35 = tpu.dynamic_rotate %22 by %c72_i32 dim 1 : vector<8x768xf32>, i32 -> vector<8x768xf32>
    %36 = vector.extract_strided_slice %35 {offsets = [0, 128], sizes = [8, 512], strides = [1, 1]} : vector<8x768xf32> to vector<8x512xf32>
    %37 = vector.extract_strided_slice %2 {offsets = [0, 0], sizes = [1, 512], strides = [1, 1]} : vector<8x512xi1> to vector<1x512xi1>
    %38 = vector.extract_strided_slice %2 {offsets = [2, 0], sizes = [1, 512], strides = [1, 1]} : vector<8x512xi1> to vector<1x512xi1>
    %39 = arith.andi %37, %38 : vector<1x512xi1>
    %cst_12 = arith.constant 0.000000e+00 : f32
    %40 = vector.shape_cast %39 : vector<1x512xi1> to vector<1x512xi1>
    %41 = vector.broadcast %40 : vector<1x512xi1> to vector<8x512xi1>
    %42 = vector.broadcast %cst_12 : f32 to vector<8x512xf32>
    %43 = arith.select %41, %36, %42 : vector<8x512xi1>, vector<8x512xf32>
    %c8 = arith.constant 8 : index
    %c0_13 = arith.constant 0 : index
    %44 = vector.load %arg8[%c8, %c0_13] : memref<216x512xf32, #tpu.memory_space<vmem>>, vector<8x512xf32>
    tpu.vector_store %arg8[%c8, %c0_13], %43 {strides = array<i32>} : memref<216x512xf32, #tpu.memory_space<vmem>>, vector<8x512xf32>,
    %c71_i32 = arith.constant 71 : i32
    %45 = tpu.dynamic_rotate %22 by %c71_i32 dim 1 : vector<8x768xf32>, i32 -> vector<8x768xf32>
    %46 = vector.extract_strided_slice %45 {offsets = [0, 128], sizes = [8, 512], strides = [1, 1]} : vector<8x768xf32> to vector<8x512xf32>
    %47 = vector.extract_strided_slice %2 {offsets = [0, 0], sizes = [1, 512], strides = [1, 1]} : vector<8x512xi1> to vector<1x512xi1>
    %48 = vector.extract_strided_slice %2 {offsets = [2, 0], sizes = [1, 512], strides = [1, 1]} : vector<8x512xi1> to vector<1x512xi1>
    %49 = arith.andi %47, %48 : vector<1x512xi1>
    %50 = vector.extract_strided_slice %2 {offsets = [5, 0], sizes = [1, 512], strides = [1, 1]} : vector<8x512xi1> to vector<1x512xi1>
    %51 = arith.andi %49, %50 : vector<1x512xi1>
    %cst_14 = arith.constant 0.000000e+00 : f32
    %52 = vector.shape_cast %51 : vector<1x512xi1> to vector<1x512xi1>
    %53 = vector.broadcast %52 : vector<1x512xi1> to vector<8x512xi1>
    %54 = vector.broadcast %cst_14 : f32 to vector<8x512xf32>
    %55 = arith.select %53, %46, %54 : vector<8x512xi1>, vector<8x512xf32>
    %c16 = arith.constant 16 : index
    %c0_15 = arith.constant 0 : index
    %56 = vector.load %arg8[%c16, %c0_15] : memref<216x512xf32, #tpu.memory_space<vmem>>, vector<8x512xf32>
    tpu.vector_store %arg8[%c16, %c0_15], %55 {strides = array<i32>} : memref<216x512xf32, #tpu.memory_space<vmem>>, vector<8x512xf32>,
    %c65_i32 = arith.constant 65 : i32
    %57 = tpu.dynamic_rotate %22 by %c65_i32 dim 1 : vector<8x768xf32>, i32 -> vector<8x768xf32>
    %58 = vector.extract_strided_slice %57 {offsets = [0, 128], sizes = [8, 512], strides = [1, 1]} : vector<8x768xf32> to vector<8x512xf32>
    %59 = vector.extract_strided_slice %2 {offsets = [0, 0], sizes = [1, 512], strides = [1, 1]} : vector<8x512xi1> to vector<1x512xi1>
    %60 = vector.extract_strided_slice %2 {offsets = [4, 0], sizes = [1, 512], strides = [1, 1]} : vector<8x512xi1> to vector<1x512xi1>
    %61 = arith.andi %59, %60 : vector<1x512xi1>
    %cst_16 = arith.constant 0.000000e+00 : f32
    %62 = vector.shape_cast %61 : vector<1x512xi1> to vector<1x512xi1>
    %63 = vector.broadcast %62 : vector<1x512xi1> to vector<8x512xi1>
    %64 = vector.broadcast %cst_16 : f32 to vector<8x512xf32>
    %65 = arith.select %63, %58, %64 : vector<8x512xi1>, vector<8x512xf32>
    %c24 = arith.constant 24 : index
    %c0_17 = arith.constant 0 : index
    %66 = vector.load %arg8[%c24, %c0_17] : memref<216x512xf32, #tpu.memory_space<vmem>>, vector<8x512xf32>
    tpu.vector_store %arg8[%c24, %c0_17], %65 {strides = array<i32>} : memref<216x512xf32, #tpu.memory_space<vmem>>, vector<8x512xf32>,
    %c64_i32 = arith.constant 64 : i32
    %67 = tpu.dynamic_rotate %22 by %c64_i32 dim 1 : vector<8x768xf32>, i32 -> vector<8x768xf32>
    %68 = vector.extract_strided_slice %67 {offsets = [0, 128], sizes = [8, 512], strides = [1, 1]} : vector<8x768xf32> to vector<8x512xf32>
    %69 = vector.extract_strided_slice %2 {offsets = [0, 0], sizes = [1, 512], strides = [1, 1]} : vector<8x512xi1> to vector<1x512xi1>
    %cst_18 = arith.constant 0.000000e+00 : f32
    %70 = vector.shape_cast %69 : vector<1x512xi1> to vector<1x512xi1>
    %71 = vector.broadcast %70 : vector<1x512xi1> to vector<8x512xi1>
    %72 = vector.broadcast %cst_18 : f32 to vector<8x512xf32>
    %73 = arith.select %71, %68, %72 : vector<8x512xi1>, vector<8x512xf32>
    %c32 = arith.constant 32 : index
    %c0_19 = arith.constant 0 : index
    %74 = vector.load %arg8[%c32, %c0_19] : memref<216x512xf32, #tpu.memory_space<vmem>>, vector<8x512xf32>
    tpu.vector_store %arg8[%c32, %c0_19], %73 {strides = array<i32>} : memref<216x512xf32, #tpu.memory_space<vmem>>, vector<8x512xf32>,
    %c63_i32 = arith.constant 63 : i32
    %75 = tpu.dynamic_rotate %22 by %c63_i32 dim 1 : vector<8x768xf32>, i32 -> vector<8x768xf32>
    %76 = vector.extract_strided_slice %75 {offsets = [0, 128], sizes = [8, 512], strides = [1, 1]} : vector<8x768xf32> to vector<8x512xf32>
    %77 = vector.extract_strided_slice %2 {offsets = [0, 0], sizes = [1, 512], strides = [1, 1]} : vector<8x512xi1> to vector<1x512xi1>
    %78 = vector.extract_strided_slice %2 {offsets = [5, 0], sizes = [1, 512], strides = [1, 1]} : vector<8x512xi1> to vector<1x512xi1>
    %79 = arith.andi %77, %78 : vector<1x512xi1>
    %cst_20 = arith.constant 0.000000e+00 : f32
    %80 = vector.shape_cast %79 : vector<1x512xi1> to vector<1x512xi1>
    %81 = vector.broadcast %80 : vector<1x512xi1> to vector<8x512xi1>
    %82 = vector.broadcast %cst_20 : f32 to vector<8x512xf32>
    %83 = arith.select %81, %76, %82 : vector<8x512xi1>, vector<8x512xf32>
    %c40 = arith.constant 40 : index
    %c0_21 = arith.constant 0 : index
    %84 = vector.load %arg8[%c40, %c0_21] : memref<216x512xf32, #tpu.memory_space<vmem>>, vector<8x512xf32>
    tpu.vector_store %arg8[%c40, %c0_21], %83 {strides = array<i32>} : memref<216x512xf32, #tpu.memory_space<vmem>>, vector<8x512xf32>,
    %c57_i32 = arith.constant 57 : i32
    %85 = tpu.dynamic_rotate %22 by %c57_i32 dim 1 : vector<8x768xf32>, i32 -> vector<8x768xf32>
    %86 = vector.extract_strided_slice %85 {offsets = [0, 128], sizes = [8, 512], strides = [1, 1]} : vector<8x768xf32> to vector<8x512xf32>
    %87 = vector.extract_strided_slice %2 {offsets = [0, 0], sizes = [1, 512], strides = [1, 1]} : vector<8x512xi1> to vector<1x512xi1>
    %88 = vector.extract_strided_slice %2 {offsets = [3, 0], sizes = [1, 512], strides = [1, 1]} : vector<8x512xi1> to vector<1x512xi1>
    %89 = arith.andi %87, %88 : vector<1x512xi1>
    %90 = vector.extract_strided_slice %2 {offsets = [4, 0], sizes = [1, 512], strides = [1, 1]} : vector<8x512xi1> to vector<1x512xi1>
    %91 = arith.andi %89, %90 : vector<1x512xi1>
    %cst_22 = arith.constant 0.000000e+00 : f32
    %92 = vector.shape_cast %91 : vector<1x512xi1> to vector<1x512xi1>
    %93 = vector.broadcast %92 : vector<1x512xi1> to vector<8x512xi1>
    %94 = vector.broadcast %cst_22 : f32 to vector<8x512xf32>
    %95 = arith.select %93, %86, %94 : vector<8x512xi1>, vector<8x512xf32>
    %c48 = arith.constant 48 : index
    %c0_23 = arith.constant 0 : index
    %96 = vector.load %arg8[%c48, %c0_23] : memref<216x512xf32, #tpu.memory_space<vmem>>, vector<8x512xf32>
    tpu.vector_store %arg8[%c48, %c0_23], %95 {strides = array<i32>} : memref<216x512xf32, #tpu.memory_space<vmem>>, vector<8x512xf32>,
    %c56_i32 = arith.constant 56 : i32
    %97 = tpu.dynamic_rotate %22 by %c56_i32 dim 1 : vector<8x768xf32>, i32 -> vector<8x768xf32>
    %98 = vector.extract_strided_slice %97 {offsets = [0, 128], sizes = [8, 512], strides = [1, 1]} : vector<8x768xf32> to vector<8x512xf32>
    %99 = vector.extract_strided_slice %2 {offsets = [0, 0], sizes = [1, 512], strides = [1, 1]} : vector<8x512xi1> to vector<1x512xi1>
    %100 = vector.extract_strided_slice %2 {offsets = [3, 0], sizes = [1, 512], strides = [1, 1]} : vector<8x512xi1> to vector<1x512xi1>
    %101 = arith.andi %99, %100 : vector<1x512xi1>
    %cst_24 = arith.constant 0.000000e+00 : f32
    %102 = vector.shape_cast %101 : vector<1x512xi1> to vector<1x512xi1>
    %103 = vector.broadcast %102 : vector<1x512xi1> to vector<8x512xi1>
    %104 = vector.broadcast %cst_24 : f32 to vector<8x512xf32>
    %105 = arith.select %103, %98, %104 : vector<8x512xi1>, vector<8x512xf32>
    %c56 = arith.constant 56 : index
    %c0_25 = arith.constant 0 : index
    %106 = vector.load %arg8[%c56, %c0_25] : memref<216x512xf32, #tpu.memory_space<vmem>>, vector<8x512xf32>
    tpu.vector_store %arg8[%c56, %c0_25], %105 {strides = array<i32>} : memref<216x512xf32, #tpu.memory_space<vmem>>, vector<8x512xf32>,
    %c55_i32 = arith.constant 55 : i32
    %107 = tpu.dynamic_rotate %22 by %c55_i32 dim 1 : vector<8x768xf32>, i32 -> vector<8x768xf32>
    %108 = vector.extract_strided_slice %107 {offsets = [0, 128], sizes = [8, 512], strides = [1, 1]} : vector<8x768xf32> to vector<8x512xf32>
    %109 = vector.extract_strided_slice %2 {offsets = [0, 0], sizes = [1, 512], strides = [1, 1]} : vector<8x512xi1> to vector<1x512xi1>
    %110 = vector.extract_strided_slice %2 {offsets = [3, 0], sizes = [1, 512], strides = [1, 1]} : vector<8x512xi1> to vector<1x512xi1>
    %111 = arith.andi %109, %110 : vector<1x512xi1>
    %112 = vector.extract_strided_slice %2 {offsets = [5, 0], sizes = [1, 512], strides = [1, 1]} : vector<8x512xi1> to vector<1x512xi1>
    %113 = arith.andi %111, %112 : vector<1x512xi1>
    %cst_26 = arith.constant 0.000000e+00 : f32
    %114 = vector.shape_cast %113 : vector<1x512xi1> to vector<1x512xi1>
    %115 = vector.broadcast %114 : vector<1x512xi1> to vector<8x512xi1>
    %116 = vector.broadcast %cst_26 : f32 to vector<8x512xf32>
    %117 = arith.select %115, %108, %116 : vector<8x512xi1>, vector<8x512xf32>
    %c64 = arith.constant 64 : index
    %c0_27 = arith.constant 0 : index
    %118 = vector.load %arg8[%c64, %c0_27] : memref<216x512xf32, #tpu.memory_space<vmem>>, vector<8x512xf32>
    tpu.vector_store %arg8[%c64, %c0_27], %117 {strides = array<i32>} : memref<216x512xf32, #tpu.memory_space<vmem>>, vector<8x512xf32>,
    %c9_i32 = arith.constant 9 : i32
    %119 = tpu.dynamic_rotate %22 by %c9_i32 dim 1 : vector<8x768xf32>, i32 -> vector<8x768xf32>
    %120 = vector.extract_strided_slice %119 {offsets = [0, 128], sizes = [8, 512], strides = [1, 1]} : vector<8x768xf32> to vector<8x512xf32>
    %121 = vector.extract_strided_slice %2 {offsets = [2, 0], sizes = [1, 512], strides = [1, 1]} : vector<8x512xi1> to vector<1x512xi1>
    %122 = vector.extract_strided_slice %2 {offsets = [4, 0], sizes = [1, 512], strides = [1, 1]} : vector<8x512xi1> to vector<1x512xi1>
    %123 = arith.andi %121, %122 : vector<1x512xi1>
    %cst_28 = arith.constant 0.000000e+00 : f32
    %124 = vector.shape_cast %123 : vector<1x512xi1> to vector<1x512xi1>
    %125 = vector.broadcast %124 : vector<1x512xi1> to vector<8x512xi1>
    %126 = vector.broadcast %cst_28 : f32 to vector<8x512xf32>
    %127 = arith.select %125, %120, %126 : vector<8x512xi1>, vector<8x512xf32>
    %c72 = arith.constant 72 : index
    %c0_29 = arith.constant 0 : index
    %128 = vector.load %arg8[%c72, %c0_29] : memref<216x512xf32, #tpu.memory_space<vmem>>, vector<8x512xf32>
    tpu.vector_store %arg8[%c72, %c0_29], %127 {strides = array<i32>} : memref<216x512xf32, #tpu.memory_space<vmem>>, vector<8x512xf32>,
    %c8_i32 = arith.constant 8 : i32
    %129 = tpu.dynamic_rotate %22 by %c8_i32 dim 1 : vector<8x768xf32>, i32 -> vector<8x768xf32>
    %130 = vector.extract_strided_slice %129 {offsets = [0, 128], sizes = [8, 512], strides = [1, 1]} : vector<8x768xf32> to vector<8x512xf32>
    %131 = vector.extract_strided_slice %2 {offsets = [2, 0], sizes = [1, 512], strides = [1, 1]} : vector<8x512xi1> to vector<1x512xi1>
    %cst_30 = arith.constant 0.000000e+00 : f32
    %132 = vector.shape_cast %131 : vector<1x512xi1> to vector<1x512xi1>
    %133 = vector.broadcast %132 : vector<1x512xi1> to vector<8x512xi1>
    %134 = vector.broadcast %cst_30 : f32 to vector<8x512xf32>
    %135 = arith.select %133, %130, %134 : vector<8x512xi1>, vector<8x512xf32>
    %c80 = arith.constant 80 : index
    %c0_31 = arith.constant 0 : index
    %136 = vector.load %arg8[%c80, %c0_31] : memref<216x512xf32, #tpu.memory_space<vmem>>, vector<8x512xf32>
    tpu.vector_store %arg8[%c80, %c0_31], %135 {strides = array<i32>} : memref<216x512xf32, #tpu.memory_space<vmem>>, vector<8x512xf32>,
    %c7_i32 = arith.constant 7 : i32
    %137 = tpu.dynamic_rotate %22 by %c7_i32 dim 1 : vector<8x768xf32>, i32 -> vector<8x768xf32>
    %138 = vector.extract_strided_slice %137 {offsets = [0, 128], sizes = [8, 512], strides = [1, 1]} : vector<8x768xf32> to vector<8x512xf32>
    %139 = vector.extract_strided_slice %2 {offsets = [2, 0], sizes = [1, 512], strides = [1, 1]} : vector<8x512xi1> to vector<1x512xi1>
    %140 = vector.extract_strided_slice %2 {offsets = [5, 0], sizes = [1, 512], strides = [1, 1]} : vector<8x512xi1> to vector<1x512xi1>
    %141 = arith.andi %139, %140 : vector<1x512xi1>
    %cst_32 = arith.constant 0.000000e+00 : f32
    %142 = vector.shape_cast %141 : vector<1x512xi1> to vector<1x512xi1>
    %143 = vector.broadcast %142 : vector<1x512xi1> to vector<8x512xi1>
    %144 = vector.broadcast %cst_32 : f32 to vector<8x512xf32>
    %145 = arith.select %143, %138, %144 : vector<8x512xi1>, vector<8x512xf32>
    %c88 = arith.constant 88 : index
    %c0_33 = arith.constant 0 : index
    %146 = vector.load %arg8[%c88, %c0_33] : memref<216x512xf32, #tpu.memory_space<vmem>>, vector<8x512xf32>
    tpu.vector_store %arg8[%c88, %c0_33], %145 {strides = array<i32>} : memref<216x512xf32, #tpu.memory_space<vmem>>, vector<8x512xf32>,
    %c1_i32 = arith.constant 1 : i32
    %147 = tpu.dynamic_rotate %22 by %c1_i32 dim 1 : vector<8x768xf32>, i32 -> vector<8x768xf32>
    %148 = vector.extract_strided_slice %147 {offsets = [0, 128], sizes = [8, 512], strides = [1, 1]} : vector<8x768xf32> to vector<8x512xf32>
    %149 = vector.extract_strided_slice %2 {offsets = [4, 0], sizes = [1, 512], strides = [1, 1]} : vector<8x512xi1> to vector<1x512xi1>
    %cst_34 = arith.constant 0.000000e+00 : f32
    %150 = vector.shape_cast %149 : vector<1x512xi1> to vector<1x512xi1>
    %151 = vector.broadcast %150 : vector<1x512xi1> to vector<8x512xi1>
    %152 = vector.broadcast %cst_34 : f32 to vector<8x512xf32>
    %153 = arith.select %151, %148, %152 : vector<8x512xi1>, vector<8x512xf32>
    %c96 = arith.constant 96 : index
    %c0_35 = arith.constant 0 : index
    %154 = vector.load %arg8[%c96, %c0_35] : memref<216x512xf32, #tpu.memory_space<vmem>>, vector<8x512xf32>
    tpu.vector_store %arg8[%c96, %c0_35], %153 {strides = array<i32>} : memref<216x512xf32, #tpu.memory_space<vmem>>, vector<8x512xf32>,
    %155 = vector.extract_strided_slice %22 {offsets = [0, 128], sizes = [8, 512], strides = [1, 1]} : vector<8x768xf32> to vector<8x512xf32>
    %c104 = arith.constant 104 : index
    %c0_36 = arith.constant 0 : index
    %156 = vector.load %arg8[%c104, %c0_36] : memref<216x512xf32, #tpu.memory_space<vmem>>, vector<8x512xf32>
    tpu.vector_store %arg8[%c104, %c0_36], %155 {strides = array<i32>} : memref<216x512xf32, #tpu.memory_space<vmem>>, vector<8x512xf32>,
    %c767_i32 = arith.constant 767 : i32
    %157 = tpu.dynamic_rotate %22 by %c767_i32 dim 1 : vector<8x768xf32>, i32 -> vector<8x768xf32>
    %158 = vector.extract_strided_slice %157 {offsets = [0, 128], sizes = [8, 512], strides = [1, 1]} : vector<8x768xf32> to vector<8x512xf32>
    %159 = vector.extract_strided_slice %2 {offsets = [5, 0], sizes = [1, 512], strides = [1, 1]} : vector<8x512xi1> to vector<1x512xi1>
    %cst_37 = arith.constant 0.000000e+00 : f32
    %160 = vector.shape_cast %159 : vector<1x512xi1> to vector<1x512xi1>
    %161 = vector.broadcast %160 : vector<1x512xi1> to vector<8x512xi1>
    %162 = vector.broadcast %cst_37 : f32 to vector<8x512xf32>
    %163 = arith.select %161, %158, %162 : vector<8x512xi1>, vector<8x512xf32>
    %c112 = arith.constant 112 : index
    %c0_38 = arith.constant 0 : index
    %164 = vector.load %arg8[%c112, %c0_38] : memref<216x512xf32, #tpu.memory_space<vmem>>, vector<8x512xf32>
    tpu.vector_store %arg8[%c112, %c0_38], %163 {strides = array<i32>} : memref<216x512xf32, #tpu.memory_space<vmem>>, vector<8x512xf32>,
    %c761_i32 = arith.constant 761 : i32
    %165 = tpu.dynamic_rotate %22 by %c761_i32 dim 1 : vector<8x768xf32>, i32 -> vector<8x768xf32>
    %166 = vector.extract_strided_slice %165 {offsets = [0, 128], sizes = [8, 512], strides = [1, 1]} : vector<8x768xf32> to vector<8x512xf32>
    %167 = vector.extract_strided_slice %2 {offsets = [3, 0], sizes = [1, 512], strides = [1, 1]} : vector<8x512xi1> to vector<1x512xi1>
    %168 = vector.extract_strided_slice %2 {offsets = [4, 0], sizes = [1, 512], strides = [1, 1]} : vector<8x512xi1> to vector<1x512xi1>
    %169 = arith.andi %167, %168 : vector<1x512xi1>
    %cst_39 = arith.constant 0.000000e+00 : f32
    %170 = vector.shape_cast %169 : vector<1x512xi1> to vector<1x512xi1>
    %171 = vector.broadcast %170 : vector<1x512xi1> to vector<8x512xi1>
    %172 = vector.broadcast %cst_39 : f32 to vector<8x512xf32>
    %173 = arith.select %171, %166, %172 : vector<8x512xi1>, vector<8x512xf32>
    %c120 = arith.constant 120 : index
    %c0_40 = arith.constant 0 : index
    %174 = vector.load %arg8[%c120, %c0_40] : memref<216x512xf32, #tpu.memory_space<vmem>>, vector<8x512xf32>
    tpu.vector_store %arg8[%c120, %c0_40], %173 {strides = array<i32>} : memref<216x512xf32, #tpu.memory_space<vmem>>, vector<8x512xf32>,
    %c760_i32 = arith.constant 760 : i32
    %175 = tpu.dynamic_rotate %22 by %c760_i32 dim 1 : vector<8x768xf32>, i32 -> vector<8x768xf32>
    %176 = vector.extract_strided_slice %175 {offsets = [0, 128], sizes = [8, 512], strides = [1, 1]} : vector<8x768xf32> to vector<8x512xf32>
    %177 = vector.extract_strided_slice %2 {offsets = [3, 0], sizes = [1, 512], strides = [1, 1]} : vector<8x512xi1> to vector<1x512xi1>
    %cst_41 = arith.constant 0.000000e+00 : f32
    %178 = vector.shape_cast %177 : vector<1x512xi1> to vector<1x512xi1>
    %179 = vector.broadcast %178 : vector<1x512xi1> to vector<8x512xi1>
    %180 = vector.broadcast %cst_41 : f32 to vector<8x512xf32>
    %181 = arith.select %179, %176, %180 : vector<8x512xi1>, vector<8x512xf32>
    %c128 = arith.constant 128 : index
    %c0_42 = arith.constant 0 : index
    %182 = vector.load %arg8[%c128, %c0_42] : memref<216x512xf32, #tpu.memory_space<vmem>>, vector<8x512xf32>
    tpu.vector_store %arg8[%c128, %c0_42], %181 {strides = array<i32>} : memref<216x512xf32, #tpu.memory_space<vmem>>, vector<8x512xf32>,
    %c759_i32 = arith.constant 759 : i32
    %183 = tpu.dynamic_rotate %22 by %c759_i32 dim 1 : vector<8x768xf32>, i32 -> vector<8x768xf32>
    %184 = vector.extract_strided_slice %183 {offsets = [0, 128], sizes = [8, 512], strides = [1, 1]} : vector<8x768xf32> to vector<8x512xf32>
    %185 = vector.extract_strided_slice %2 {offsets = [3, 0], sizes = [1, 512], strides = [1, 1]} : vector<8x512xi1> to vector<1x512xi1>
    %186 = vector.extract_strided_slice %2 {offsets = [5, 0], sizes = [1, 512], strides = [1, 1]} : vector<8x512xi1> to vector<1x512xi1>
    %187 = arith.andi %185, %186 : vector<1x512xi1>
    %cst_43 = arith.constant 0.000000e+00 : f32
    %188 = vector.shape_cast %187 : vector<1x512xi1> to vector<1x512xi1>
    %189 = vector.broadcast %188 : vector<1x512xi1> to vector<8x512xi1>
    %190 = vector.broadcast %cst_43 : f32 to vector<8x512xf32>
    %191 = arith.select %189, %184, %190 : vector<8x512xi1>, vector<8x512xf32>
    %c136 = arith.constant 136 : index
    %c0_44 = arith.constant 0 : index
    %192 = vector.load %arg8[%c136, %c0_44] : memref<216x512xf32, #tpu.memory_space<vmem>>, vector<8x512xf32>
    tpu.vector_store %arg8[%c136, %c0_44], %191 {strides = array<i32>} : memref<216x512xf32, #tpu.memory_space<vmem>>, vector<8x512xf32>,
    %c713_i32 = arith.constant 713 : i32
    %193 = tpu.dynamic_rotate %22 by %c713_i32 dim 1 : vector<8x768xf32>, i32 -> vector<8x768xf32>
    %194 = vector.extract_strided_slice %193 {offsets = [0, 128], sizes = [8, 512], strides = [1, 1]} : vector<8x768xf32> to vector<8x512xf32>
    %195 = vector.extract_strided_slice %2 {offsets = [1, 0], sizes = [1, 512], strides = [1, 1]} : vector<8x512xi1> to vector<1x512xi1>
    %196 = vector.extract_strided_slice %2 {offsets = [2, 0], sizes = [1, 512], strides = [1, 1]} : vector<8x512xi1> to vector<1x512xi1>
    %197 = arith.andi %195, %196 : vector<1x512xi1>
    %198 = vector.extract_strided_slice %2 {offsets = [4, 0], sizes = [1, 512], strides = [1, 1]} : vector<8x512xi1> to vector<1x512xi1>
    %199 = arith.andi %197, %198 : vector<1x512xi1>
    %cst_45 = arith.constant 0.000000e+00 : f32
    %200 = vector.shape_cast %199 : vector<1x512xi1> to vector<1x512xi1>
    %201 = vector.broadcast %200 : vector<1x512xi1> to vector<8x512xi1>
    %202 = vector.broadcast %cst_45 : f32 to vector<8x512xf32>
    %203 = arith.select %201, %194, %202 : vector<8x512xi1>, vector<8x512xf32>
    %c144 = arith.constant 144 : index
    %c0_46 = arith.constant 0 : index
    %204 = vector.load %arg8[%c144, %c0_46] : memref<216x512xf32, #tpu.memory_space<vmem>>, vector<8x512xf32>
    tpu.vector_store %arg8[%c144, %c0_46], %203 {strides = array<i32>} : memref<216x512xf32, #tpu.memory_space<vmem>>, vector<8x512xf32>,
    %c712_i32 = arith.constant 712 : i32
    %205 = tpu.dynamic_rotate %22 by %c712_i32 dim 1 : vector<8x768xf32>, i32 -> vector<8x768xf32>
    %206 = vector.extract_strided_slice %205 {offsets = [0, 128], sizes = [8, 512], strides = [1, 1]} : vector<8x768xf32> to vector<8x512xf32>
    %207 = vector.extract_strided_slice %2 {offsets = [1, 0], sizes = [1, 512], strides = [1, 1]} : vector<8x512xi1> to vector<1x512xi1>
    %208 = vector.extract_strided_slice %2 {offsets = [2, 0], sizes = [1, 512], strides = [1, 1]} : vector<8x512xi1> to vector<1x512xi1>
    %209 = arith.andi %207, %208 : vector<1x512xi1>
    %cst_47 = arith.constant 0.000000e+00 : f32
    %210 = vector.shape_cast %209 : vector<1x512xi1> to vector<1x512xi1>
    %211 = vector.broadcast %210 : vector<1x512xi1> to vector<8x512xi1>
    %212 = vector.broadcast %cst_47 : f32 to vector<8x512xf32>
    %213 = arith.select %211, %206, %212 : vector<8x512xi1>, vector<8x512xf32>
    %c152 = arith.constant 152 : index
    %c0_48 = arith.constant 0 : index
    %214 = vector.load %arg8[%c152, %c0_48] : memref<216x512xf32, #tpu.memory_space<vmem>>, vector<8x512xf32>
    tpu.vector_store %arg8[%c152, %c0_48], %213 {strides = array<i32>} : memref<216x512xf32, #tpu.memory_space<vmem>>, vector<8x512xf32>,
    %c711_i32 = arith.constant 711 : i32
    %215 = tpu.dynamic_rotate %22 by %c711_i32 dim 1 : vector<8x768xf32>, i32 -> vector<8x768xf32>
    %216 = vector.extract_strided_slice %215 {offsets = [0, 128], sizes = [8, 512], strides = [1, 1]} : vector<8x768xf32> to vector<8x512xf32>
    %217 = vector.extract_strided_slice %2 {offsets = [1, 0], sizes = [1, 512], strides = [1, 1]} : vector<8x512xi1> to vector<1x512xi1>
    %218 = vector.extract_strided_slice %2 {offsets = [2, 0], sizes = [1, 512], strides = [1, 1]} : vector<8x512xi1> to vector<1x512xi1>
    %219 = arith.andi %217, %218 : vector<1x512xi1>
    %220 = vector.extract_strided_slice %2 {offsets = [5, 0], sizes = [1, 512], strides = [1, 1]} : vector<8x512xi1> to vector<1x512xi1>
    %221 = arith.andi %219, %220 : vector<1x512xi1>
    %cst_49 = arith.constant 0.000000e+00 : f32
    %222 = vector.shape_cast %221 : vector<1x512xi1> to vector<1x512xi1>
    %223 = vector.broadcast %222 : vector<1x512xi1> to vector<8x512xi1>
    %224 = vector.broadcast %cst_49 : f32 to vector<8x512xf32>
    %225 = arith.select %223, %216, %224 : vector<8x512xi1>, vector<8x512xf32>
    %c160 = arith.constant 160 : index
    %c0_50 = arith.constant 0 : index
    %226 = vector.load %arg8[%c160, %c0_50] : memref<216x512xf32, #tpu.memory_space<vmem>>, vector<8x512xf32>
    tpu.vector_store %arg8[%c160, %c0_50], %225 {strides = array<i32>} : memref<216x512xf32, #tpu.memory_space<vmem>>, vector<8x512xf32>,
    %c705_i32 = arith.constant 705 : i32
    %227 = tpu.dynamic_rotate %22 by %c705_i32 dim 1 : vector<8x768xf32>, i32 -> vector<8x768xf32>
    %228 = vector.extract_strided_slice %227 {offsets = [0, 128], sizes = [8, 512], strides = [1, 1]} : vector<8x768xf32> to vector<8x512xf32>
    %229 = vector.extract_strided_slice %2 {offsets = [1, 0], sizes = [1, 512], strides = [1, 1]} : vector<8x512xi1> to vector<1x512xi1>
    %230 = vector.extract_strided_slice %2 {offsets = [4, 0], sizes = [1, 512], strides = [1, 1]} : vector<8x512xi1> to vector<1x512xi1>
    %231 = arith.andi %229, %230 : vector<1x512xi1>
    %cst_51 = arith.constant 0.000000e+00 : f32
    %232 = vector.shape_cast %231 : vector<1x512xi1> to vector<1x512xi1>
    %233 = vector.broadcast %232 : vector<1x512xi1> to vector<8x512xi1>
    %234 = vector.broadcast %cst_51 : f32 to vector<8x512xf32>
    %235 = arith.select %233, %228, %234 : vector<8x512xi1>, vector<8x512xf32>
    %c168 = arith.constant 168 : index
    %c0_52 = arith.constant 0 : index
    %236 = vector.load %arg8[%c168, %c0_52] : memref<216x512xf32, #tpu.memory_space<vmem>>, vector<8x512xf32>
    tpu.vector_store %arg8[%c168, %c0_52], %235 {strides = array<i32>} : memref<216x512xf32, #tpu.memory_space<vmem>>, vector<8x512xf32>,
    %c704_i32 = arith.constant 704 : i32
    %237 = tpu.dynamic_rotate %22 by %c704_i32 dim 1 : vector<8x768xf32>, i32 -> vector<8x768xf32>
    %238 = vector.extract_strided_slice %237 {offsets = [0, 128], sizes = [8, 512], strides = [1, 1]} : vector<8x768xf32> to vector<8x512xf32>
    %239 = vector.extract_strided_slice %2 {offsets = [1, 0], sizes = [1, 512], strides = [1, 1]} : vector<8x512xi1> to vector<1x512xi1>
    %cst_53 = arith.constant 0.000000e+00 : f32
    %240 = vector.shape_cast %239 : vector<1x512xi1> to vector<1x512xi1>
    %241 = vector.broadcast %240 : vector<1x512xi1> to vector<8x512xi1>
    %242 = vector.broadcast %cst_53 : f32 to vector<8x512xf32>
    %243 = arith.select %241, %238, %242 : vector<8x512xi1>, vector<8x512xf32>
    %c176 = arith.constant 176 : index
    %c0_54 = arith.constant 0 : index
    %244 = vector.load %arg8[%c176, %c0_54] : memref<216x512xf32, #tpu.memory_space<vmem>>, vector<8x512xf32>
    tpu.vector_store %arg8[%c176, %c0_54], %243 {strides = array<i32>} : memref<216x512xf32, #tpu.memory_space<vmem>>, vector<8x512xf32>,
    %c703_i32 = arith.constant 703 : i32
    %245 = tpu.dynamic_rotate %22 by %c703_i32 dim 1 : vector<8x768xf32>, i32 -> vector<8x768xf32>
    %246 = vector.extract_strided_slice %245 {offsets = [0, 128], sizes = [8, 512], strides = [1, 1]} : vector<8x768xf32> to vector<8x512xf32>
    %247 = vector.extract_strided_slice %2 {offsets = [1, 0], sizes = [1, 512], strides = [1, 1]} : vector<8x512xi1> to vector<1x512xi1>
    %248 = vector.extract_strided_slice %2 {offsets = [5, 0], sizes = [1, 512], strides = [1, 1]} : vector<8x512xi1> to vector<1x512xi1>
    %249 = arith.andi %247, %248 : vector<1x512xi1>
    %cst_55 = arith.constant 0.000000e+00 : f32
    %250 = vector.shape_cast %249 : vector<1x512xi1> to vector<1x512xi1>
    %251 = vector.broadcast %250 : vector<1x512xi1> to vector<8x512xi1>
    %252 = vector.broadcast %cst_55 : f32 to vector<8x512xf32>
    %253 = arith.select %251, %246, %252 : vector<8x512xi1>, vector<8x512xf32>
    %c184 = arith.constant 184 : index
    %c0_56 = arith.constant 0 : index
    %254 = vector.load %arg8[%c184, %c0_56] : memref<216x512xf32, #tpu.memory_space<vmem>>, vector<8x512xf32>
    tpu.vector_store %arg8[%c184, %c0_56], %253 {strides = array<i32>} : memref<216x512xf32, #tpu.memory_space<vmem>>, vector<8x512xf32>,
    %c697_i32 = arith.constant 697 : i32
    %255 = tpu.dynamic_rotate %22 by %c697_i32 dim 1 : vector<8x768xf32>, i32 -> vector<8x768xf32>
    %256 = vector.extract_strided_slice %255 {offsets = [0, 128], sizes = [8, 512], strides = [1, 1]} : vector<8x768xf32> to vector<8x512xf32>
    %257 = vector.extract_strided_slice %2 {offsets = [1, 0], sizes = [1, 512], strides = [1, 1]} : vector<8x512xi1> to vector<1x512xi1>
    %258 = vector.extract_strided_slice %2 {offsets = [3, 0], sizes = [1, 512], strides = [1, 1]} : vector<8x512xi1> to vector<1x512xi1>
    %259 = arith.andi %257, %258 : vector<1x512xi1>
    %260 = vector.extract_strided_slice %2 {offsets = [4, 0], sizes = [1, 512], strides = [1, 1]} : vector<8x512xi1> to vector<1x512xi1>
    %261 = arith.andi %259, %260 : vector<1x512xi1>
    %cst_57 = arith.constant 0.000000e+00 : f32
    %262 = vector.shape_cast %261 : vector<1x512xi1> to vector<1x512xi1>
    %263 = vector.broadcast %262 : vector<1x512xi1> to vector<8x512xi1>
    %264 = vector.broadcast %cst_57 : f32 to vector<8x512xf32>
    %265 = arith.select %263, %256, %264 : vector<8x512xi1>, vector<8x512xf32>
    %c192 = arith.constant 192 : index
    %c0_58 = arith.constant 0 : index
    %266 = vector.load %arg8[%c192, %c0_58] : memref<216x512xf32, #tpu.memory_space<vmem>>, vector<8x512xf32>
    tpu.vector_store %arg8[%c192, %c0_58], %265 {strides = array<i32>} : memref<216x512xf32, #tpu.memory_space<vmem>>, vector<8x512xf32>,
    %c696_i32 = arith.constant 696 : i32
    %267 = tpu.dynamic_rotate %22 by %c696_i32 dim 1 : vector<8x768xf32>, i32 -> vector<8x768xf32>
    %268 = vector.extract_strided_slice %267 {offsets = [0, 128], sizes = [8, 512], strides = [1, 1]} : vector<8x768xf32> to vector<8x512xf32>
    %269 = vector.extract_strided_slice %2 {offsets = [1, 0], sizes = [1, 512], strides = [1, 1]} : vector<8x512xi1> to vector<1x512xi1>
    %270 = vector.extract_strided_slice %2 {offsets = [3, 0], sizes = [1, 512], strides = [1, 1]} : vector<8x512xi1> to vector<1x512xi1>
    %271 = arith.andi %269, %270 : vector<1x512xi1>
    %cst_59 = arith.constant 0.000000e+00 : f32
    %272 = vector.shape_cast %271 : vector<1x512xi1> to vector<1x512xi1>
    %273 = vector.broadcast %272 : vector<1x512xi1> to vector<8x512xi1>
    %274 = vector.broadcast %cst_59 : f32 to vector<8x512xf32>
    %275 = arith.select %273, %268, %274 : vector<8x512xi1>, vector<8x512xf32>
    %c200 = arith.constant 200 : index
    %c0_60 = arith.constant 0 : index
    %276 = vector.load %arg8[%c200, %c0_60] : memref<216x512xf32, #tpu.memory_space<vmem>>, vector<8x512xf32>
    tpu.vector_store %arg8[%c200, %c0_60], %275 {strides = array<i32>} : memref<216x512xf32, #tpu.memory_space<vmem>>, vector<8x512xf32>,
    %c695_i32 = arith.constant 695 : i32
    %277 = tpu.dynamic_rotate %22 by %c695_i32 dim 1 : vector<8x768xf32>, i32 -> vector<8x768xf32>
    %278 = vector.extract_strided_slice %277 {offsets = [0, 128], sizes = [8, 512], strides = [1, 1]} : vector<8x768xf32> to vector<8x512xf32>
    %279 = vector.extract_strided_slice %2 {offsets = [1, 0], sizes = [1, 512], strides = [1, 1]} : vector<8x512xi1> to vector<1x512xi1>
    %280 = vector.extract_strided_slice %2 {offsets = [3, 0], sizes = [1, 512], strides = [1, 1]} : vector<8x512xi1> to vector<1x512xi1>
    %281 = arith.andi %279, %280 : vector<1x512xi1>
    %282 = vector.extract_strided_slice %2 {offsets = [5, 0], sizes = [1, 512], strides = [1, 1]} : vector<8x512xi1> to vector<1x512xi1>
    %283 = arith.andi %281, %282 : vector<1x512xi1>
    %cst_61 = arith.constant 0.000000e+00 : f32
    %284 = vector.shape_cast %283 : vector<1x512xi1> to vector<1x512xi1>
    %285 = vector.broadcast %284 : vector<1x512xi1> to vector<8x512xi1>
    %286 = vector.broadcast %cst_61 : f32 to vector<8x512xf32>
    %287 = arith.select %285, %278, %286 : vector<8x512xi1>, vector<8x512xf32>
    %c208 = arith.constant 208 : index
    %c0_62 = arith.constant 0 : index
    %288 = vector.load %arg8[%c208, %c0_62] : memref<216x512xf32, #tpu.memory_space<vmem>>, vector<8x512xf32>
    tpu.vector_store %arg8[%c208, %c0_62], %287 {strides = array<i32>} : memref<216x512xf32, #tpu.memory_space<vmem>>, vector<8x512xf32>,
    %c0_63 = arith.constant 0 : index
    %c0_64 = arith.constant 0 : index
    %c0_65 = arith.constant 0 : index
    %289 = vector.load %arg4[%c0_63, %c0_64, %c0_65] : memref<1x8x216xf32, #tpu.memory_space<vmem>>, vector<1x8x216xf32>
    %290 = vector.shape_cast %289 : vector<1x8x216xf32> to vector<8x216xf32>
    %c0_66 = arith.constant 0 : index
    %c0_67 = arith.constant 0 : index
    %291 = vector.load %arg8[%c0_66, %c0_67] : memref<216x512xf32, #tpu.memory_space<vmem>>, vector<216x512xf32>
    %cst_68 = arith.constant dense<0.000000e+00> : vector<8x512xf32>
    %292 = tpu.matmul %290, %291, %cst_68 {dimension_numbers = #tpu.dot_dimension_numbers<[1], [0], [0], [1], [0, 0, 1, 1], [], []>} : vector<8x216xf32>, vector<216x512xf32>, vector<8x512xf32> -> vector<8x512xf32>
    %293 = arith.truncf %292 : vector<8x512xf32> to vector<8x512xbf16>
    %c0_69 = arith.constant 0 : index
    %c0_70 = arith.constant 0 : index
    %294 = vector.load %arg6[%c0_69, %c0_70] : memref<8x512xbf16, #tpu.memory_space<vmem>>, vector<8x512xbf16>
    tpu.vector_store %arg6[%c0_69, %c0_70], %293 {strides = array<i32>} : memref<8x512xbf16, #tpu.memory_space<vmem>>, vector<8x512xbf16>,
    %cst_71 = arith.constant dense<0.000000e+00> : vector<8xf32>
    %295 = vector.multi_reduction <add>, %292, %cst_71 [1] : vector<8x512xf32> to vector<8xf32>
    %296 = vector.shape_cast %295 : vector<8xf32> to vector<8x1xf32>
    %cst_72 = arith.constant 0.001953125 : f32
    %297 = vector.broadcast %cst_72 : f32 to vector<8x1xf32>
    %298 = arith.mulf %296, %297 : vector<8x1xf32>
    %299 = vector.broadcast %298 : vector<8x1xf32> to vector<8x512xf32>
    %300 = arith.subf %292, %299 : vector<8x512xf32>
    %301 = arith.mulf %300, %300 : vector<8x512xf32>
    %cst_73 = arith.constant dense<0.000000e+00> : vector<8xf32>
    %302 = vector.multi_reduction <add>, %301, %cst_73 [1] : vector<8x512xf32> to vector<8xf32>
    %303 = vector.shape_cast %302 : vector<8xf32> to vector<8x1xf32>
    %304 = tpu.concatenate %296, %303 in 1 : vector<8x1xf32>, vector<8x1xf32> -> vector<8x2xf32>
    %c0_74 = arith.constant 0 : index
    %c0_75 = arith.constant 0 : index
    %c0_76 = arith.constant 0 : index
    %305 = vector.load %arg7[%c0_74, %c0_75, %c0_76] : memref<1x8x2xf32, #tpu.memory_space<vmem>>, vector<1x8x2xf32>
    %306 = vector.shape_cast %305 : vector<1x8x2xf32> to vector<8x2xf32>
    %307 = vector.shape_cast %304 : vector<8x2xf32> to vector<1x8x2xf32>
    tpu.vector_store %arg7[%c0_74, %c0_75, %c0_76], %307 {strides = array<i32>} : memref<1x8x2xf32, #tpu.memory_space<vmem>>, vector<1x8x2xf32>,
    return
  }
  func.func @transform_0(%arg0: i32) -> (i32, i32) {
    %c0_i32 = arith.constant 0 : i32
    %c0_i32_0 = arith.constant 0 : i32
    %c0_i32_1 = arith.constant 0 : i32
    return %c0_i32, %c0_i32_0 : i32, i32
  }
  func.func @transform_1(%arg0: i32) -> (i32, i32) {
    %c0_i32 = arith.constant 0 : i32
    %c0_i32_0 = arith.constant 0 : i32
    %c0_i32_1 = arith.constant 0 : i32
    return %c0_i32, %c0_i32_0 : i32, i32
  }
  func.func @transform_2(%arg0: i32) -> (i32, i32) {
    %c0_i32 = arith.constant 0 : i32
    %c0_i32_0 = arith.constant 0 : i32
    %c0_i32_1 = arith.constant 0 : i32
    return %c0_i32, %c0_i32_0 : i32, i32
  }
  func.func @transform_3(%arg0: i32) -> (i32, i32, i32) {
    %c0_i32 = arith.constant 0 : i32
    %c0_i32_0 = arith.constant 0 : i32
    %c0_i32_1 = arith.constant 0 : i32
    %c0_i32_2 = arith.constant 0 : i32
    return %c0_i32, %c0_i32_0, %c0_i32_1 : i32, i32, i32
  }
  func.func @transform_4(%arg0: i32) -> (i32, i32) {
    %c0_i32 = arith.constant 0 : i32
    %c0_i32_0 = arith.constant 0 : i32
    return %c0_i32, %arg0 : i32, i32
  }
  func.func @transform_5(%arg0: i32) -> (i32, i32) {
    %c0_i32 = arith.constant 0 : i32
    %c0_i32_0 = arith.constant 0 : i32
    return %c0_i32, %arg0 : i32, i32
  }
  func.func @transform_6(%arg0: i32) -> (i32, i32, i32) {
    %c0_i32 = arith.constant 0 : i32
    %c0_i32_0 = arith.constant 0 : i32
    %c0_i32_1 = arith.constant 0 : i32
    return %arg0, %c0_i32, %c0_i32_0 : i32, i32, i32
  }
}

module attributes {stable_mosaic.version = 11 : i64} {
  func.func @kernel(%arg0: i32, %arg1: memref<8x512xbf16, #tpu.memory_space<vmem>>, %arg2: memref<8x1xf32, #tpu.memory_space<vmem>>, %arg3: memref<8x1xf32, #tpu.memory_space<vmem>>, %arg4: memref<4x512xf32, #tpu.memory_space<vmem>>) attributes {dimension_semantics = [#tpu.dimension_semantics<parallel>], iteration_bounds = array<i64: 2>, scalar_prefetch = 0 : i64, scratch_operands = 0 : i64, tpu.core_type = #tpu.core_type<tc>, window_params = [{transform_indices = @transform_0, window_bounds = array<i64: 8, 512>}, {pipeline_mode = #tpu.pipeline_mode<synchronous>, transform_indices = @transform_1, window_bounds = array<i64: 8, 1>}, {pipeline_mode = #tpu.pipeline_mode<synchronous>, transform_indices = @transform_2, window_bounds = array<i64: 8, 1>}, {transform_indices = @transform_3, window_bounds = array<i64: 4, 512>}]} {
    %c0 = arith.constant 0 : index
    %c0_0 = arith.constant 0 : index
    %0 = vector.load %arg1[%c0, %c0_0] : memref<8x512xbf16, #tpu.memory_space<vmem>>, vector<8x512xbf16>
    %1 = arith.extf %0 : vector<8x512xbf16> to vector<8x512xf32>
    %c0_1 = arith.constant 0 : index
    %c0_2 = arith.constant 0 : index
    %2 = vector.load %arg2[%c0_1, %c0_2] : memref<8x1xf32, #tpu.memory_space<vmem>>, vector<8x1xf32>
    %3 = vector.broadcast %2 : vector<8x1xf32> to vector<8x512xf32>
    %4 = arith.mulf %1, %3 : vector<8x512xf32>
    %c0_3 = arith.constant 0 : index
    %c0_4 = arith.constant 0 : index
    %5 = vector.load %arg3[%c0_3, %c0_4] : memref<8x1xf32, #tpu.memory_space<vmem>>, vector<8x1xf32>
    %6 = vector.broadcast %5 : vector<8x1xf32> to vector<8x512xf32>
    %7 = arith.addf %4, %6 : vector<8x512xf32>
    %cst = arith.constant 0.000000e+00 : f32
    %8 = vector.broadcast %cst : f32 to vector<8x512xf32>
    %9 = arith.cmpf ogt, %7, %8 : vector<8x512xf32>
    %cst_5 = arith.constant 0.000000e+00 : f32
    %10 = vector.broadcast %cst_5 : f32 to vector<8x512xf32>
    %11 = arith.minimumf %7, %10 : vector<8x512xf32>
    %12 = math.exp %11 : vector<8x512xf32>
    %cst_6 = arith.constant 1.000000e+00 : f32
    %13 = vector.broadcast %cst_6 : f32 to vector<8x512xf32>
    %14 = arith.subf %12, %13 : vector<8x512xf32>
    %15 = arith.select %9, %7, %14 : vector<8x512xi1>, vector<8x512xf32>
    %16 = vector.extract_strided_slice %15 {offsets = [0, 0], sizes = [4, 512], strides = [1, 1]} : vector<8x512xf32> to vector<4x512xf32>
    %c0_7 = arith.constant 0 : index
    %c0_8 = arith.constant 0 : index
    %17 = vector.load %arg4[%c0_7, %c0_8] : memref<4x512xf32, #tpu.memory_space<vmem>>, vector<4x512xf32>
    tpu.vector_store %arg4[%c0_7, %c0_8], %16 {strides = array<i32>} : memref<4x512xf32, #tpu.memory_space<vmem>>, vector<4x512xf32>,
    return
  }
  func.func @transform_0(%arg0: i32) -> (i32, i32) {
    %c0_i32 = arith.constant 0 : i32
    %c0_i32_0 = arith.constant 0 : i32
    return %c0_i32, %arg0 : i32, i32
  }
  func.func @transform_1(%arg0: i32) -> (i32, i32) {
    %c0_i32 = arith.constant 0 : i32
    %c0_i32_0 = arith.constant 0 : i32
    %c0_i32_1 = arith.constant 0 : i32
    return %c0_i32, %c0_i32_0 : i32, i32
  }
  func.func @transform_2(%arg0: i32) -> (i32, i32) {
    %c0_i32 = arith.constant 0 : i32
    %c0_i32_0 = arith.constant 0 : i32
    %c0_i32_1 = arith.constant 0 : i32
    return %c0_i32, %c0_i32_0 : i32, i32
  }
  func.func @transform_3(%arg0: i32) -> (i32, i32) {
    %c0_i32 = arith.constant 0 : i32
    %c0_i32_0 = arith.constant 0 : i32
    return %c0_i32, %arg0 : i32, i32
  }
}

</mosaic_0001>

<llo_original>
// kernel: single_decoder3d_forward.4
$region0: #{single_decoder3d_forward.4}
  #allocation0 [shape = 'u32[]', space=smem, size = 0x4, offset = 0x4, fixed_abs, tag = 'smem constant byte address 0x4 - core index']
  #allocation1 [shape = 'u32[144,128]{1,0:T(1,128)}', space=vmem, size = 0x12000, scoped, tag = 'internal scratch']
  %s0 = inlined_call_operand.vmem [shape: f32[16,16], index: 0, kind: input, shape index: {}]
  %s1 = inlined_call_operand.vmem [shape: f32[16,128], index: 1, kind: input, shape index: {}]
  %s2 = inlined_call_operand.vmem [shape: f32[16,128], index: 2, kind: output, shape index: {}]
  %s3 = sld [smem:[#allocation0]]
  $region18: #{single_decoder3d_forward.4} parent=0
    _
  %s5 = ssub.s32 1, %s3
  %s6 = scalar_select 0, %s5, %s3
  // Predicated region
  $region2: #{single_decoder3d_forward.4} parent=0 // pred_check
    _
  $region3: #{single_decoder3d_forward.4} parent=0 // pred_check_branch
    %8 = sbr.rel (0) target = $region5
  $region4: #{single_decoder3d_forward.4} parent=0 // pred_region
    _
  $region5: #{single_decoder3d_forward.4} parent=0 // pred_fallthru
    _
  // Predicated region
  $region6: #{single_decoder3d_forward.4} parent=0 // pred_check
    _
  $region7: #{single_decoder3d_forward.4} parent=0 // pred_check_branch
    %10 = sbr.rel (0) target = $region9
  $region8: #{single_decoder3d_forward.4} parent=0 // pred_region
    _
  $region9: #{single_decoder3d_forward.4} parent=0 // pred_fallthru
    _
  %v11 = vld [vmem:[%s0] sm:$0xff]
  %v12 = vld [vmem:[%s0 + $0x8] sm:$0xff]
  %v13 = vld [vmem:[%s1] sm:$0xff]
  %v14 = vld [vmem:[%s1 + $0x8] sm:$0xff]
  %vm15 = vcmask 130048
  %v17 = vsel %vm15, %v11, 0
  %v20 = vsel %vm15, %v12, 0
  %22 = vmatprep.subr.mxu0 0.0
  %23 = vmatpush1.msra.mxu0 %v13
  %24 = vmatprep.subr.mxu0 0.0
  %25 = vmatpush1.msra.mxu0 %v14
  %26 = vmatprep.subr.mxu0 0.0
  %27 = vmatpush1.msra.mxu0 0.0
  %28 = vmatprep.subr.mxu0 0.0
  %29 = vmatpush1.msra.mxu0 0.0
  %30 = vmatprep.subr.mxu0 0.0
  %31 = vmatpush1.msra.mxu0 0.0
  %32 = vmatprep.subr.mxu0 0.0
  %33 = vmatpush1.msra.mxu0 0.0
  %34 = vmatprep.subr.mxu0 0.0
  %35 = vmatpush1.msra.mxu0 0.0
  %36 = vmatprep.subr.mxu0 0.0
  %37 = vmatpush1.msra.mxu0 0.0
  %38 = vmatprep.subr.mxu0 0.0
  %39 = vmatpush1.msra.mxu0 0.0
  %40 = vmatprep.subr.mxu0 0.0
  %41 = vmatpush1.msra.mxu0 0.0
  %42 = vmatprep.subr.mxu0 0.0
  %43 = vmatpush1.msra.mxu0 0.0
  %44 = vmatprep.subr.mxu0 0.0
  %45 = vmatpush1.msra.mxu0 0.0
  %46 = vmatprep.subr.mxu0 0.0
  %47 = vmatpush1.msra.mxu0 0.0
  %48 = vmatprep.subr.mxu0 0.0
  %49 = vmatpush1.msra.mxu0 0.0
  %50 = vmatprep.subr.mxu0 0.0
  %51 = vmatpush1.msra.mxu0 0.0
  %52 = vmatprep.subr.mxu0 0.0
  %53 = vmatpush1.msra.mxu0 0.0
  %54 = vmatprep.subr.mxu0 0.0
  %55 = vmatpush1.msra.mxu0 0.0
  %56 = vmatprep.subr.mxu0 0.0
  %57 = vmatpush1.msra.mxu0 0.0
  %58 = vmatprep.subr.mxu0 0.0
  %59 = vmatpush1.msra.mxu0 0.0
  %60 = vmatprep.subr.mxu0 0.0
  %61 = vmatpush1.msra.mxu0 0.0
  %62 = vmatprep.subr.mxu0 0.0
  %63 = vmatpush1.msra.mxu0 0.0
  %64 = vmatprep.subr.mxu0 0.0
  %65 = vmatpush1.msra.mxu0 0.0
  %66 = vmatprep.subr.mxu0 0.0
  %67 = vmatpush1.msra.mxu0 0.0
  %68 = vmatprep.subr.mxu0 0.0
  %69 = vmatpush1.msra.mxu0 0.0
  %70 = vmatprep.subr.mxu0 0.0
  %71 = vmatpush1.msra.mxu0 0.0
  %72 = vmatprep.subr.mxu0 0.0
  %73 = vmatpush1.msra.mxu0 0.0
  %74 = vmatprep.subr.mxu0 0.0
  %75 = vmatpush1.msra.mxu0 0.0
  %76 = vmatprep.subr.mxu0 0.0
  %77 = vmatpush1.msra.mxu0 0.0
  %78 = vmatprep.subr.mxu0 0.0
  %79 = vmatpush1.msra.mxu0 0.0
  %80 = vmatprep.subr.mxu0 0.0
  %81 = vmatpush1.msra.mxu0 0.0
  %82 = vmatprep.subr.mxu0 0.0
  %83 = vmatpush1.msra.mxu0 0.0
  %84 = vmatprep.subr.mxu0 0.0
  %85 = vmatpush1.msra.mxu0 0.0
  %86 = vmatprep.mubr.f32.mxu0 0.0
  %87 = vmatmul.mubr.f32.gmra.mrb[0].mxu0 %v17
  %v88 = vpop.f32.mrb[0].mxu0
  %v89 = vadd.f32 0.0, %v88
  %v90 = vpop.f32.mrb[0].mxu0
  %91 = vmatprep.mubr.f32.mxu0 0.0
  %92 = vmatmul.mubr.f32.gmra.mrb[0].mxu0 %v20
  %v93 = vpop.f32.mrb[0].mxu0
  %v94 = vadd.f32 0.0, %v93
  %v95 = vpop.f32.mrb[0].mxu0
  %96 = vdwg.mxu0
  %97 = vst [vmem:[%s2] sm:$0xff] %v89
  %98 = vst [vmem:[%s2 + $0x8] sm:$0xff] %v94
  // Predicated region
  $region10: #{single_decoder3d_forward.4} parent=0 // pred_check
    _
  $region11: #{single_decoder3d_forward.4} parent=0 // pred_check_branch
    %100 = sbr.rel (0) target = $region13
  $region12: #{single_decoder3d_forward.4} parent=0 // pred_region
    _
  $region13: #{single_decoder3d_forward.4} parent=0 // pred_fallthru
    _
  // Predicated region
  $region14: #{single_decoder3d_forward.4} parent=0 // pred_check
    _
  $region15: #{single_decoder3d_forward.4} parent=0 // pred_check_branch
    %102 = sbr.rel (0) target = $region17
  $region16: #{single_decoder3d_forward.4} parent=0 // pred_region
    _
  $region17: #{single_decoder3d_forward.4} parent=0 // pred_fallthru
    _

// kernel: single_decoder3d_forward.5
$region0: #{single_decoder3d_forward.5}
  #allocation0 [shape = 'u32[]', space=smem, size = 0x4, offset = 0x4, fixed_abs, tag = 'smem constant byte address 0x4 - core index']
  #allocation1 [shape = 'u32[144,128]{1,0:T(1,128)}', space=vmem, size = 0x12000, scoped, tag = 'internal scratch']
  #allocation2 [shape = 'f32[216,512]{1,0:T(8,128)}', space=vmem, size = 0x6c000, scoped, tag = 'scratch operand']
  %s0 = inlined_call_operand.vmem [shape: f32[8,1280], index: 0, kind: input, shape index: {}]
  %s1 = inlined_call_operand.vmem [shape: f32[1,8,216], index: 1, kind: input, shape index: {}]
  %s2 = inlined_call_operand.vmem [shape: f32[8,1024], index: 2, kind: input, shape index: {}]
  %s3 = inlined_call_operand.vmem [shape: bf16[8,2048], index: 3, kind: output, shape index: {0}]
  %s4 = inlined_call_operand.vmem [shape: f32[2,8,2], index: 4, kind: output, shape index: {1}]
  %5 = xla_tuple %s3, %s4
  %s6 = sld [smem:[#allocation0]]
  $region53: #{single_decoder3d_forward.5} parent=0
    _
  %s8 = ssub.s32 1, %s6
  %s9 = scalar_select 0, %s8, %s6
  loop: start=0, step=1, limit=4
  $region2: #{single_decoder3d_forward.5} parent=0 // loop_pre_header
    _
  $region3: #{single_decoder3d_forward.5} parent=0 // loop_header
    %s11 = sphi 0, %s15
    %p12 = scmp.ge.s32.totalorder %s11, 4
    %s19 = sphi 0, %s19
    %s21 = sphi 0, %s19
    %s22 = sphi 0, %s21
    %s36 = sphi 0, %s22
    %s40 = sphi 0, %s40
    %s42 = sphi 0, %s40
    %s43 = sphi 0, %s42
    %s57 = sphi 0, %s43
    %s63 = sphi 0, %s65
    %s66 = sphi 0, %s63
    %s67 = sphi 0, %s66
    %s83 = sphi 0, %s67
    %s91 = sphi 0, %s93
    %s94 = sphi 0, %s91
    %s95 = sphi 0, %s94
    %s111 = sphi 0, %s95
    %s117 = sphi 0, %s119
    %s120 = sphi 0, %s117
    %s121 = sphi 0, %s120
    %s137 = sphi 0, %s121
  $region4: #{single_decoder3d_forward.5} parent=0 // loop_header_branch
    %14 = sbr.rel (%p12) target = $region8
  $region5: #{single_decoder3d_forward.5} parent=0 // loop_body
    %s16 = ssub.s32 %s11, 1
    %s17 = ssub.s32 %s11, 2
    %s18 = sadd.s32 %s11, 1
    %s20 = sadd.s32 %s19, 1
    %p23 = scmp.eq.s32.totalorder %s11, 1
    %p24 = scmp.ne.s32.totalorder %s19, %s21
    %p25 = scmp.eq.s32.totalorder %s11, 0
    %p26 = por %p24, %p25
    %p27 = scmp.ne.s32.totalorder %s19, %s21
    %p28 = scmp.eq.s32.totalorder %s16, 1
    %p29 = por %p27, %p28
    %p30 = scmp.ne.s32.totalorder %s21, %s22
    %p31 = scmp.eq.s32.totalorder %s16, 0
    %p32 = por %p30, %p31
    %p33 = scmp.ne.s32.totalorder %s21, %s22
    %p34 = scmp.eq.s32.totalorder %s17, 1
    %p35 = por %p33, %p34
    %p37 = scmp.ne.s32.totalorder %s22, %s36
    %p38 = scmp.eq.s32.totalorder %s17, 0
    %p39 = por %p37, %p38
    %s41 = sadd.s32 %s40, 1
    %p44 = scmp.eq.s32.totalorder %s11, 1
    %p45 = scmp.ne.s32.totalorder %s40, %s42
    %p46 = scmp.eq.s32.totalorder %s11, 0
    %p47 = por %p45, %p46
    %p48 = scmp.ne.s32.totalorder %s40, %s42
    %p49 = scmp.eq.s32.totalorder %s16, 1
    %p50 = por %p48, %p49
    %p51 = scmp.ne.s32.totalorder %s42, %s43
    %p52 = scmp.eq.s32.totalorder %s16, 0
    %p53 = por %p51, %p52
    %p54 = scmp.ne.s32.totalorder %s42, %s43
    %p55 = scmp.eq.s32.totalorder %s17, 1
    %p56 = por %p54, %p55
    %p58 = scmp.ne.s32.totalorder %s43, %s57
    %p59 = scmp.eq.s32.totalorder %s17, 0
    %p60 = por %p58, %p59
    %s61 = ssub.s32 %s11, %s18
    %p62 = scmp.eq.s32.totalorder %s61, 0
    %s64 = sadd.s32 %s63, 1
    %s65 = scalar_select %p62, %s63, %s64
    %p68 = pneg %p62
    %p69 = scmp.eq.s32.totalorder %s11, 1
    %p70 = por %p68, %p69
    %p71 = scmp.ne.s32.totalorder %s63, %s66
    %p72 = scmp.eq.s32.totalorder %s11, 0
    %p73 = por %p71, %p72
    %p74 = scmp.ne.s32.totalorder %s63, %s66
    %p75 = scmp.eq.s32.totalorder %s16, 1
    %p76 = por %p74, %p75
    %p77 = scmp.ne.s32.totalorder %s66, %s67
    %p78 = scmp.eq.s32.totalorder %s16, 0
    %p79 = por %p77, %p78
    %p80 = scmp.ne.s32.totalorder %s66, %s67
    %p81 = scmp.eq.s32.totalorder %s17, 1
    %p82 = por %p80, %p81
    %p84 = scmp.ne.s32.totalorder %s67, %s83
    %p85 = scmp.eq.s32.totalorder %s17, 0
    %p86 = por %p84, %p85
    %s87 = sadd.s32 %s11, 1
    %s88 = sadd.s32 %s18, 1
    %s89 = ssub.s32 %s87, %s88
    %p90 = scmp.eq.s32.totalorder %s89, 0
    %s92 = sadd.s32 %s91, 1
    %s93 = scalar_select %p90, %s91, %s92
    %p96 = pneg %p90
    %p97 = scmp.eq.s32.totalorder %s11, 1
    %p98 = por %p96, %p97
    %p99 = scmp.ne.s32.totalorder %s91, %s94
    %p100 = scmp.eq.s32.totalorder %s11, 0
    %p101 = por %p99, %p100
    %p102 = scmp.ne.s32.totalorder %s91, %s94
    %p103 = scmp.eq.s32.totalorder %s16, 1
    %p104 = por %p102, %p103
    %p105 = scmp.ne.s32.totalorder %s94, %s95
    %p106 = scmp.eq.s32.totalorder %s16, 0
    %p107 = por %p105, %p106
    %p108 = scmp.ne.s32.totalorder %s94, %s95
    %p109 = scmp.eq.s32.totalorder %s17, 1
    %p110 = por %p108, %p109
    %p112 = scmp.ne.s32.totalorder %s95, %s111
    %p113 = scmp.eq.s32.totalorder %s17, 0
    %p114 = por %p112, %p113
    %s115 = ssub.s32 %s11, %s18
    %p116 = scmp.eq.s32.totalorder %s115, 0
    %s118 = sadd.s32 %s117, 1
    %s119 = scalar_select %p116, %s117, %s118
    %p122 = pneg %p116
    %p123 = scmp.eq.s32.totalorder %s11, 1
    %p124 = por %p122, %p123
    %p125 = scmp.ne.s32.totalorder %s117, %s120
    %p126 = scmp.eq.s32.totalorder %s11, 0
    %p127 = por %p125, %p126
    %p128 = scmp.ne.s32.totalorder %s117, %s120
    %p129 = scmp.eq.s32.totalorder %s16, 1
    %p130 = por %p128, %p129
    %p131 = scmp.ne.s32.totalorder %s120, %s121
    %p132 = scmp.eq.s32.totalorder %s16, 0
    %p133 = por %p131, %p132
    %p134 = scmp.ne.s32.totalorder %s120, %s121
    %p135 = scmp.eq.s32.totalorder %s17, 1
    %p136 = por %p134, %p135
    %p138 = scmp.ne.s32.totalorder %s121, %s137
    %p139 = scmp.eq.s32.totalorder %s17, 0
    %p140 = por %p138, %p139
    %p141 = scmp.le.s32.totalorder 1, %s11
    %p142 = scmp.lt.s32.totalorder %s11, 3
    %p143 = pnand %p141, %p142
    %p144 = pneg %p143
    // Predicated region
    $region9: #{single_decoder3d_forward.5} parent=5 // pred_check
      _
    $region10: #{single_decoder3d_forward.5} parent=5 // pred_check_branch
      %146 = sbr.rel (%p143) target = $region12
    $region11: #{single_decoder3d_forward.5} parent=5 // pred_region
      %s147 = ssub.s32 %s11, 1
      // Predicated region
      $region13: #{single_decoder3d_forward.5} parent=11 // pred_check
        %p148 = pneg %p32
      $region14: #{single_decoder3d_forward.5} parent=11 // pred_check_branch
        %150 = sbr.rel (%p148) target = $region16
      $region15: #{single_decoder3d_forward.5} parent=11 // pred_region
        _
      $region16: #{single_decoder3d_forward.5} parent=11 // pred_fallthru
        _
      // Predicated region
      $region17: #{single_decoder3d_forward.5} parent=11 // pred_check
        %p151 = pneg %p53
      $region18: #{single_decoder3d_forward.5} parent=11 // pred_check_branch
        %153 = sbr.rel (%p151) target = $region20
      $region19: #{single_decoder3d_forward.5} parent=11 // pred_region
        _
      $region20: #{single_decoder3d_forward.5} parent=11 // pred_fallthru
        _
    $region12: #{single_decoder3d_forward.5} parent=5 // pred_fallthru
      _
    %p154 = scmp.lt.s32.totalorder %s11, 2
    // Predicated region
    $region21: #{single_decoder3d_forward.5} parent=5 // pred_check
      %p155 = pneg %p154
    $region22: #{single_decoder3d_forward.5} parent=5 // pred_check_branch
      %157 = sbr.rel (%p155) target = $region24
    $region23: #{single_decoder3d_forward.5} parent=5 // pred_region
      // Predicated region
      $region25: #{single_decoder3d_forward.5} parent=23 // pred_check
        %p158 = pneg %p73
      $region26: #{single_decoder3d_forward.5} parent=23 // pred_check_branch
        %160 = sbr.rel (%p158) target = $region28
      $region27: #{single_decoder3d_forward.5} parent=23 // pred_region
        %s161 = smul.u32 4, %s11
        %p162 = scmp.lt.s32.totalorder %s161, 7
        %s163 = scalar_select %p162, %s161, 7
        %s164 = smul.addr %s163, 8
        %s165 = scalar_lea.vmem %s2, %s164
        %s166 = smul.u32 4, %s11
      $region28: #{single_decoder3d_forward.5} parent=23 // pred_fallthru
        _
    $region24: #{single_decoder3d_forward.5} parent=5 // pred_fallthru
      _
    %p167 = scmp.le.s32.totalorder 1, %s11
    %p168 = scmp.lt.s32.totalorder %s11, 3
    %p169 = pnand %p167, %p168
    %p170 = pneg %p169
    // Predicated region
    $region29: #{single_decoder3d_forward.5} parent=5 // pred_check
      _
    $region30: #{single_decoder3d_forward.5} parent=5 // pred_check_branch
      %172 = sbr.rel (%p169) target = $region32
    $region31: #{single_decoder3d_forward.5} parent=5 // pred_region
      %s173 = ssub.s32 %s11, 1
      %p174 = pneg %p32
      %p175 = pneg %p29
      %p176 = pneg %p53
      %p177 = pneg %p50
      %s178 = smul.u32 4, %s16
      %p179 = scmp.lt.s32.totalorder %s178, 7
      %s180 = scalar_select %p179, %s178, 7
      %s181 = smul.addr %s180, 8
      %s182 = scalar_lea.vmem %s2, %s181
      %p183 = pneg %p79
      %p184 = pneg %p76
      %p185 = pneg %p107
      %p186 = pneg %p104
      %s187 = sadd.s32 %s16, 1
      %s188 = smul.u32 4, %s187
      %p189 = scmp.lt.s32.totalorder %s188, 15
      %s190 = scalar_select %p189, %s188, 15
      %s191 = smul.addr %s190, 4
      %s192 = scalar_lea.vmem %s3, %s191
      %p193 = pneg %p133
      %p194 = pneg %p130
      %p195 = scmp.lt.s32.totalorder %s16, 1
      %s196 = scalar_select %p195, %s16, 1
      %s197 = smul.addr %s196, 8
      %s198 = scalar_lea.vmem %s4, %s197
      %s199 = smul.u32 4, %s16
      %p200 = scmp.lt.s32.totalorder %s199, 7
      %s201 = scalar_select %p200, %s199, 7
      %s202 = smul.addr %s201, 8
      %s203 = scalar_lea.vmem %s2, %s202
      %s204 = smul.u32 4, %s16
      %s205 = sadd.s32 %s16, 1
      %s206 = smul.u32 4, %s205
      %p207 = scmp.lt.s32.totalorder %s206, 15
      %s208 = scalar_select %p207, %s206, 15
      %s209 = smul.addr %s208, 4
      %s210 = scalar_lea.vmem %s3, %s209
      %s211 = sadd.s32 %s16, 1
      %s212 = smul.u32 4, %s211
      %p213 = scmp.lt.s32.totalorder %s16, 1
      %s214 = scalar_select %p213, %s16, 1
      %s215 = smul.addr %s214, 8
      %s216 = scalar_lea.vmem %s4, %s215
      %v217 = vld [vmem:[%s203] sm:$0xff]
      %v218 = vld [vmem:[%s203 + $0x8] sm:$0xff]
      %v219 = vld [vmem:[%s203 + $0x10] sm:$0xff]
      %v220 = vld [vmem:[%s203 + $0x18] sm:$0xff]
      %vm221 = vcmp.gt.f32.partialorder %v217, 0.5
      %vm222 = vcmp.gt.f32.partialorder %v218, 0.5
      %vm223 = vcmp.gt.f32.partialorder %v219, 0.5
      %vm224 = vcmp.gt.f32.partialorder %v220, 0.5
      %s225 = smul.u32 %s16, 512
      %s226 = sshra.s32 %s225, 7
      %s227 = sand.u32 %s225, 127
      %s228 = smul.addr %s226, 8
      %s229 = scalar_lea.vmem %s0, %s228
      %v230 = vld [vmem:[%s229] sm:$0xff]
      %v231 = vld [vmem:[%s229 + $0x8] sm:$0xff]
      %v232 = vld [vmem:[%s229 + $0x10] sm:$0xff]
      %v233 = vld [vmem:[%s229 + $0x18] sm:$0xff]
      %v234 = vld [vmem:[%s229 + $0x20] sm:$0xff]
      %v235 = vld [vmem:[%s229 + $0x28] sm:$0xff]
      %236 = vrot.lane.b32.xlu0 %v230, 73
      %v237 = vpop.permute.xlu0 %236
      %238 = vrot.lane.b32.xlu0 %v231, 73
      %v239 = vpop.permute.xlu0 %238
      %240 = vrot.lane.b32.xlu0 %v232, 73
      %v241 = vpop.permute.xlu0 %240
      %242 = vrot.lane.b32.xlu0 %v233, 73
      %v243 = vpop.permute.xlu0 %242
      %244 = vrot.lane.b32.xlu0 %v234, 73
      %v245 = vpop.permute.xlu0 %244
      %v246 = vlaneseq
      %v247 = vand.u32 %v246, 127
      %vm248 = vcmp.lt.s32.totalorder %v247, 73
      %v249 = vsel %vm248, %v243, %v245
      %v250 = vsel %vm248, %v241, %v243
      %v251 = vsel %vm248, %v239, %v241
      %v252 = vsel %vm248, %v237, %v239
      %v253 = vsel %vm221, 1, 0
      %v254 = vsel %vm222, 1, 0
      %v255 = vsel %vm223, 1, 0
      %v256 = vsel %vm224, 1, 0
      %v257 = vrot.slane %v253, 2
      %v258 = vrot.slane %v254, 2
      %v259 = vrot.slane %v255, 2
      %v260 = vrot.slane %v256, 2
      %vm261 = vcmp.ne.s32.totalorder %v257, 0
      %vm262 = vcmp.ne.s32.totalorder %v258, 0
      %vm263 = vcmp.ne.s32.totalorder %v259, 0
      %vm264 = vcmp.ne.s32.totalorder %v260, 0
      %vm265 = vmand %vm221, %vm261
      %vm266 = vmand %vm222, %vm262
      %vm267 = vmand %vm223, %vm263
      %vm268 = vmand %vm224, %vm264
      %v269 = vrot.slane %v253, 4
      %v270 = vrot.slane %v254, 4
      %v271 = vrot.slane %v255, 4
      %v272 = vrot.slane %v256, 4
      %vm273 = vcmp.ne.s32.totalorder %v269, 0
      %vm274 = vcmp.ne.s32.totalorder %v270, 0
      %vm275 = vcmp.ne.s32.totalorder %v271, 0
      %vm276 = vcmp.ne.s32.totalorder %v272, 0
      %vm277 = vmand %vm265, %vm273
      %vm278 = vmand %vm266, %vm274
      %vm279 = vmand %vm267, %vm275
      %vm280 = vmand %vm268, %vm276
      %v281 = vsel %vm277, 1, 0
      %v282 = vsel %vm278, 1, 0
      %v283 = vsel %vm279, 1, 0
      %v284 = vsel %vm280, 1, 0
      %v285 = vlaneseq
      %v286 = vshrl.u32 %v285, 7
      %v287 = vsub.s32 0, %v286
      %v288 = vrot.slane %v281, %v287
      %v289 = vlaneseq
      %v290 = vshrl.u32 %v289, 7
      %v291 = vsub.s32 0, %v290
      %v292 = vrot.slane %v282, %v291
      %v293 = vlaneseq
      %v294 = vshrl.u32 %v293, 7
      %v295 = vsub.s32 0, %v294
      %v296 = vrot.slane %v283, %v295
      %v297 = vlaneseq
      %v298 = vshrl.u32 %v297, 7
      %v299 = vsub.s32 0, %v298
      %v300 = vrot.slane %v284, %v299
      %vm301 = vcmp.eq.s32.totalorder %v288, 1
      %vm302 = vcmp.eq.s32.totalorder %v292, 1
      %vm303 = vcmp.eq.s32.totalorder %v296, 1
      %vm304 = vcmp.eq.s32.totalorder %v300, 1
      %v305 = vsel %vm301, %v252, 0.0
      %v306 = vsel %vm302, %v251, 0.0
      %v307 = vsel %vm303, %v250, 0.0
      %v308 = vsel %vm304, %v249, 0.0
      %309 = vst [vmem:[#allocation2] sm:$0xff] %v305
      %310 = vst [vmem:[#allocation2 + $0x8] sm:$0xff] %v306
      %311 = vst [vmem:[#allocation2 + $0x10] sm:$0xff] %v307
      %312 = vst [vmem:[#allocation2 + $0x18] sm:$0xff] %v308
      %313 = vrot.lane.b32.xlu0 %v230, 72
      %v314 = vpop.permute.xlu0 %313
      %315 = vrot.lane.b32.xlu0 %v231, 72
      %v316 = vpop.permute.xlu0 %315
      %317 = vrot.lane.b32.xlu0 %v232, 72
      %v318 = vpop.permute.xlu0 %317
      %319 = vrot.lane.b32.xlu0 %v233, 72
      %v320 = vpop.permute.xlu0 %319
      %321 = vrot.lane.b32.xlu0 %v234, 72
      %v322 = vpop.permute.xlu0 %321
      %vm323 = vcmp.lt.s32.totalorder %v247, 72
      %v324 = vsel %vm323, %v320, %v322
      %v325 = vsel %vm323, %v318, %v320
      %v326 = vsel %vm323, %v316, %v318
      %v327 = vsel %vm323, %v314, %v316
      %v328 = vsel %vm265, 1, 0
      %v329 = vsel %vm266, 1, 0
      %v330 = vsel %vm267, 1, 0
      %v331 = vsel %vm268, 1, 0
      %v332 = vlaneseq
      %v333 = vshrl.u32 %v332, 7
      %v334 = vsub.s32 0, %v333
      %v335 = vrot.slane %v328, %v334
      %v336 = vlaneseq
      %v337 = vshrl.u32 %v336, 7
      %v338 = vsub.s32 0, %v337
      %v339 = vrot.slane %v329, %v338
      %v340 = vlaneseq
      %v341 = vshrl.u32 %v340, 7
      %v342 = vsub.s32 0, %v341
      %v343 = vrot.slane %v330, %v342
      %v344 = vlaneseq
      %v345 = vshrl.u32 %v344, 7
      %v346 = vsub.s32 0, %v345
      %v347 = vrot.slane %v331, %v346
      %vm348 = vcmp.eq.s32.totalorder %v335, 1
      %vm349 = vcmp.eq.s32.totalorder %v339, 1
      %vm350 = vcmp.eq.s32.totalorder %v343, 1
      %vm351 = vcmp.eq.s32.totalorder %v347, 1
      %v352 = vsel %vm348, %v327, 0.0
      %v353 = vsel %vm349, %v326, 0.0
      %v354 = vsel %vm350, %v325, 0.0
      %v355 = vsel %vm351, %v324, 0.0
      %356 = vst [vmem:[#allocation2 + $0x20] sm:$0xff] %v352
      %357 = vst [vmem:[#allocation2 + $0x28] sm:$0xff] %v353
      %358 = vst [vmem:[#allocation2 + $0x30] sm:$0xff] %v354
      %359 = vst [vmem:[#allocation2 + $0x38] sm:$0xff] %v355
      %360 = vrot.lane.b32.xlu0 %v230, 71
      %v361 = vpop.permute.xlu0 %360
      %362 = vrot.lane.b32.xlu0 %v231, 71
      %v363 = vpop.permute.xlu0 %362
      %364 = vrot.lane.b32.xlu0 %v232, 71
      %v365 = vpop.permute.xlu0 %364
      %366 = vrot.lane.b32.xlu0 %v233, 71
      %v367 = vpop.permute.xlu0 %366
      %368 = vrot.lane.b32.xlu0 %v234, 71
      %v369 = vpop.permute.xlu0 %368
      %vm370 = vcmp.lt.s32.totalorder %v247, 71
      %v371 = vsel %vm370, %v367, %v369
      %v372 = vsel %vm370, %v365, %v367
      %v373 = vsel %vm370, %v363, %v365
      %v374 = vsel %vm370, %v361, %v363
      %v375 = vrot.slane %v253, 5
      %v376 = vrot.slane %v254, 5
      %v377 = vrot.slane %v255, 5
      %v378 = vrot.slane %v256, 5
      %vm379 = vcmp.ne.s32.totalorder %v375, 0
      %vm380 = vcmp.ne.s32.totalorder %v376, 0
      %vm381 = vcmp.ne.s32.totalorder %v377, 0
      %vm382 = vcmp.ne.s32.totalorder %v378, 0
      %vm383 = vmand %vm265, %vm379
      %vm384 = vmand %vm266, %vm380
      %vm385 = vmand %vm267, %vm381
      %vm386 = vmand %vm268, %vm382
      %v387 = vsel %vm383, 1, 0
      %v388 = vsel %vm384, 1, 0
      %v389 = vsel %vm385, 1, 0
      %v390 = vsel %vm386, 1, 0
      %v391 = vlaneseq
      %v392 = vshrl.u32 %v391, 7
      %v393 = vsub.s32 0, %v392
      %v394 = vrot.slane %v387, %v393
      %v395 = vlaneseq
      %v396 = vshrl.u32 %v395, 7
      %v397 = vsub.s32 0, %v396
      %v398 = vrot.slane %v388, %v397
      %v399 = vlaneseq
      %v400 = vshrl.u32 %v399, 7
      %v401 = vsub.s32 0, %v400
      %v402 = vrot.slane %v389, %v401
      %v403 = vlaneseq
      %v404 = vshrl.u32 %v403, 7
      %v405 = vsub.s32 0, %v404
      %v406 = vrot.slane %v390, %v405
      %vm407 = vcmp.eq.s32.totalorder %v394, 1
      %vm408 = vcmp.eq.s32.totalorder %v398, 1
      %vm409 = vcmp.eq.s32.totalorder %v402, 1
      %vm410 = vcmp.eq.s32.totalorder %v406, 1
      %v411 = vsel %vm407, %v374, 0.0
      %v412 = vsel %vm408, %v373, 0.0
      %v413 = vsel %vm409, %v372, 0.0
      %v414 = vsel %vm410, %v371, 0.0
      %415 = vst [vmem:[#allocation2 + $0x40] sm:$0xff] %v411
      %416 = vst [vmem:[#allocation2 + $0x48] sm:$0xff] %v412
      %417 = vst [vmem:[#allocation2 + $0x50] sm:$0xff] %v413
      %418 = vst [vmem:[#allocation2 + $0x58] sm:$0xff] %v414
      %419 = vrot.lane.b32.xlu0 %v230, 65
      %v420 = vpop.permute.xlu0 %419
      %421 = vrot.lane.b32.xlu0 %v231, 65
      %v422 = vpop.permute.xlu0 %421
      %423 = vrot.lane.b32.xlu0 %v232, 65
      %v424 = vpop.permute.xlu0 %423
      %425 = vrot.lane.b32.xlu0 %v233, 65
      %v426 = vpop.permute.xlu0 %425
      %427 = vrot.lane.b32.xlu0 %v234, 65
      %v428 = vpop.permute.xlu0 %427
      %vm429 = vcmp.lt.s32.totalorder %v247, 65
      %v430 = vsel %vm429, %v426, %v428
      %v431 = vsel %vm429, %v424, %v426
      %v432 = vsel %vm429, %v422, %v424
      %v433 = vsel %vm429, %v420, %v422
      %vm434 = vmand %vm221, %vm273
      %vm435 = vmand %vm222, %vm274
      %vm436 = vmand %vm223, %vm275
      %vm437 = vmand %vm224, %vm276
      %v438 = vsel %vm434, 1, 0
      %v439 = vsel %vm435, 1, 0
      %v440 = vsel %vm436, 1, 0
      %v441 = vsel %vm437, 1, 0
      %v442 = vlaneseq
      %v443 = vshrl.u32 %v442, 7
      %v444 = vsub.s32 0, %v443
      %v445 = vrot.slane %v438, %v444
      %v446 = vlaneseq
      %v447 = vshrl.u32 %v446, 7
      %v448 = vsub.s32 0, %v447
      %v449 = vrot.slane %v439, %v448
      %v450 = vlaneseq
      %v451 = vshrl.u32 %v450, 7
      %v452 = vsub.s32 0, %v451
      %v453 = vrot.slane %v440, %v452
      %v454 = vlaneseq
      %v455 = vshrl.u32 %v454, 7
      %v456 = vsub.s32 0, %v455
      %v457 = vrot.slane %v441, %v456
      %vm458 = vcmp.eq.s32.totalorder %v445, 1
      %vm459 = vcmp.eq.s32.totalorder %v449, 1
      %vm460 = vcmp.eq.s32.totalorder %v453, 1
      %vm461 = vcmp.eq.s32.totalorder %v457, 1
      %v462 = vsel %vm458, %v433, 0.0
      %v463 = vsel %vm459, %v432, 0.0
      %v464 = vsel %vm460, %v431, 0.0
      %v465 = vsel %vm461, %v430, 0.0
      %466 = vst [vmem:[#allocation2 + $0x60] sm:$0xff] %v462
      %467 = vst [vmem:[#allocation2 + $0x68] sm:$0xff] %v463
      %468 = vst [vmem:[#allocation2 + $0x70] sm:$0xff] %v464
      %469 = vst [vmem:[#allocation2 + $0x78] sm:$0xff] %v465
      %470 = vrot.lane.b32.xlu0 %v230, 64
      %v471 = vpop.permute.xlu0 %470
      %472 = vrot.lane.b32.xlu0 %v231, 64
      %v473 = vpop.permute.xlu0 %472
      %474 = vrot.lane.b32.xlu0 %v232, 64
      %v475 = vpop.permute.xlu0 %474
      %476 = vrot.lane.b32.xlu0 %v233, 64
      %v477 = vpop.permute.xlu0 %476
      %478 = vrot.lane.b32.xlu0 %v234, 64
      %v479 = vpop.permute.xlu0 %478
      %vm480 = vcmp.lt.s32.totalorder %v247, 64
      %v481 = vsel %vm480, %v477, %v479
      %v482 = vsel %vm480, %v475, %v477
      %v483 = vsel %vm480, %v473, %v475
      %v484 = vsel %vm480, %v471, %v473
      %vm485 = vcmp.eq.s32.totalorder %v253, 1
      %vm486 = vcmp.eq.s32.totalorder %v254, 1
      %vm487 = vcmp.eq.s32.totalorder %v255, 1
      %vm488 = vcmp.eq.s32.totalorder %v256, 1
      %v493 = vrot.slane %v484, 1
      %v494 = vrot.slane %v483, 1
      %v495 = vrot.slane %v482, 1
      %v496 = vrot.slane %v481, 1
      %v497 = vrot.slane %v484, 2
      %v498 = vrot.slane %v483, 2
      %v499 = vrot.slane %v482, 2
      %v500 = vrot.slane %v481, 2
      %v501 = vrot.slane %v484, 3
      %v502 = vrot.slane %v483, 3
      %v503 = vrot.slane %v482, 3
      %v504 = vrot.slane %v481, 3
      %v505 = vrot.slane %v484, 4
      %v506 = vrot.slane %v483, 4
      %v507 = vrot.slane %v482, 4
      %v508 = vrot.slane %v481, 4
      %v509 = vrot.slane %v484, 5
      %v510 = vrot.slane %v483, 5
      %v511 = vrot.slane %v482, 5
      %v512 = vrot.slane %v481, 5
      %v513 = vrot.slane %v484, 6
      %v514 = vrot.slane %v483, 6
      %v515 = vrot.slane %v482, 6
      %v516 = vrot.slane %v481, 6
      %v517 = vrot.slane %v484, 7
      %v518 = vrot.slane %v483, 7
      %v519 = vrot.slane %v482, 7
      %v520 = vrot.slane %v481, 7
      %v553 = vsel %vm485, %v484, 0.0
      %v554 = vsel %vm486, %v483, 0.0
      %v555 = vsel %vm487, %v482, 0.0
      %v556 = vsel %vm488, %v481, 0.0
      %v557 = vsel %vm485, %v493, 0.0
      %v558 = vsel %vm486, %v494, 0.0
      %v559 = vsel %vm487, %v495, 0.0
      %v560 = vsel %vm488, %v496, 0.0
      %v561 = vsel %vm485, %v497, 0.0
      %v562 = vsel %vm486, %v498, 0.0
      %v563 = vsel %vm487, %v499, 0.0
      %v564 = vsel %vm488, %v500, 0.0
      %v565 = vsel %vm485, %v501, 0.0
      %v566 = vsel %vm486, %v502, 0.0
      %v567 = vsel %vm487, %v503, 0.0
      %v568 = vsel %vm488, %v504, 0.0
      %v569 = vsel %vm485, %v505, 0.0
      %v570 = vsel %vm486, %v506, 0.0
      %v571 = vsel %vm487, %v507, 0.0
      %v572 = vsel %vm488, %v508, 0.0
      %v573 = vsel %vm485, %v509, 0.0
      %v574 = vsel %vm486, %v510, 0.0
      %v575 = vsel %vm487, %v511, 0.0
      %v576 = vsel %vm488, %v512, 0.0
      %v577 = vsel %vm485, %v513, 0.0
      %v578 = vsel %vm486, %v514, 0.0
      %v579 = vsel %vm487, %v515, 0.0
      %v580 = vsel %vm488, %v516, 0.0
      %v581 = vsel %vm485, %v517, 0.0
      %v582 = vsel %vm486, %v518, 0.0
      %v583 = vsel %vm487, %v519, 0.0
      %v584 = vsel %vm488, %v520, 0.0
      %v617 = vrot.slane %v557, 7
      %vm618 = vcmask 1041409
      %v619 = vsel %vm618, %v617, %v553
      %v620 = vrot.slane %v561, 6
      %vm621 = vcmask 1042434
      %v622 = vsel %vm621, %v620, %v619
      %v623 = vrot.slane %v565, 5
      %vm624 = vcmask 1043459
      %v625 = vsel %vm624, %v623, %v622
      %v626 = vrot.slane %v569, 4
      %vm627 = vcmask 1044484
      %v628 = vsel %vm627, %v626, %v625
      %v629 = vrot.slane %v573, 3
      %vm630 = vcmask 1045509
      %v631 = vsel %vm630, %v629, %v628
      %v632 = vrot.slane %v577, 2
      %vm633 = vcmask 1046534
      %v634 = vsel %vm633, %v632, %v631
      %v635 = vrot.slane %v581, 1
      %vm636 = vcmask 1047559
      %v637 = vsel %vm636, %v635, %v634
      %v638 = vrot.slane %v558, 7
      %v639 = vsel %vm618, %v638, %v554
      %v640 = vrot.slane %v562, 6
      %v641 = vsel %vm621, %v640, %v639
      %v642 = vrot.slane %v566, 5
      %v643 = vsel %vm624, %v642, %v641
      %v644 = vrot.slane %v570, 4
      %v645 = vsel %vm627, %v644, %v643
      %v646 = vrot.slane %v574, 3
      %v647 = vsel %vm630, %v646, %v645
      %v648 = vrot.slane %v578, 2
      %v649 = vsel %vm633, %v648, %v647
      %v650 = vrot.slane %v582, 1
      %v651 = vsel %vm636, %v650, %v649
      %v652 = vrot.slane %v559, 7
      %v653 = vsel %vm618, %v652, %v555
      %v654 = vrot.slane %v563, 6
      %v655 = vsel %vm621, %v654, %v653
      %v656 = vrot.slane %v567, 5
      %v657 = vsel %vm624, %v656, %v655
      %v658 = vrot.slane %v571, 4
      %v659 = vsel %vm627, %v658, %v657
      %v660 = vrot.slane %v575, 3
      %v661 = vsel %vm630, %v660, %v659
      %v662 = vrot.slane %v579, 2
      %v663 = vsel %vm633, %v662, %v661
      %v664 = vrot.slane %v583, 1
      %v665 = vsel %vm636, %v664, %v663
      %v666 = vrot.slane %v560, 7
      %v667 = vsel %vm618, %v666, %v556
      %v668 = vrot.slane %v564, 6
      %v669 = vsel %vm621, %v668, %v667
      %v670 = vrot.slane %v568, 5
      %v671 = vsel %vm624, %v670, %v669
      %v672 = vrot.slane %v572, 4
      %v673 = vsel %vm627, %v672, %v671
      %v674 = vrot.slane %v576, 3
      %v675 = vsel %vm630, %v674, %v673
      %v676 = vrot.slane %v580, 2
      %v677 = vsel %vm633, %v676, %v675
      %v678 = vrot.slane %v584, 1
      %v679 = vsel %vm636, %v678, %v677
      %684 = vst [vmem:[#allocation2 + $0x80] sm:$0xff] %v637
      %685 = vst [vmem:[#allocation2 + $0x88] sm:$0xff] %v651
      %686 = vst [vmem:[#allocation2 + $0x90] sm:$0xff] %v665
      %687 = vst [vmem:[#allocation2 + $0x98] sm:$0xff] %v679
      %688 = vrot.lane.b32.xlu0 %v230, 63
      %v689 = vpop.permute.xlu0 %688
      %690 = vrot.lane.b32.xlu0 %v231, 63
      %v691 = vpop.permute.xlu0 %690
      %692 = vrot.lane.b32.xlu0 %v232, 63
      %v693 = vpop.permute.xlu0 %692
      %694 = vrot.lane.b32.xlu0 %v233, 63
      %v695 = vpop.permute.xlu0 %694
      %696 = vrot.lane.b32.xlu0 %v234, 63
      %v697 = vpop.permute.xlu0 %696
      %vm698 = vcmp.lt.s32.totalorder %v247, 63
      %v699 = vsel %vm698, %v695, %v697
      %v700 = vsel %vm698, %v693, %v695
      %v701 = vsel %vm698, %v691, %v693
      %v702 = vsel %vm698, %v689, %v691
      %vm703 = vmand %vm221, %vm379
      %vm704 = vmand %vm222, %vm380
      %vm705 = vmand %vm223, %vm381
      %vm706 = vmand %vm224, %vm382
      %v707 = vsel %vm703, 1, 0
      %v708 = vsel %vm704, 1, 0
      %v709 = vsel %vm705, 1, 0
      %v710 = vsel %vm706, 1, 0
      %v711 = vlaneseq
      %v712 = vshrl.u32 %v711, 7
      %v713 = vsub.s32 0, %v712
      %v714 = vrot.slane %v707, %v713
      %v715 = vlaneseq
      %v716 = vshrl.u32 %v715, 7
      %v717 = vsub.s32 0, %v716
      %v718 = vrot.slane %v708, %v717
      %v719 = vlaneseq
      %v720 = vshrl.u32 %v719, 7
      %v721 = vsub.s32 0, %v720
      %v722 = vrot.slane %v709, %v721
      %v723 = vlaneseq
      %v724 = vshrl.u32 %v723, 7
      %v725 = vsub.s32 0, %v724
      %v726 = vrot.slane %v710, %v725
      %vm727 = vcmp.eq.s32.totalorder %v714, 1
      %vm728 = vcmp.eq.s32.totalorder %v718, 1
      %vm729 = vcmp.eq.s32.totalorder %v722, 1
      %vm730 = vcmp.eq.s32.totalorder %v726, 1
      %v731 = vsel %vm727, %v702, 0.0
      %v732 = vsel %vm728, %v701, 0.0
      %v733 = vsel %vm729, %v700, 0.0
      %v734 = vsel %vm730, %v699, 0.0
      %735 = vst [vmem:[#allocation2 + $0xa0] sm:$0xff] %v731
      %736 = vst [vmem:[#allocation2 + $0xa8] sm:$0xff] %v732
      %737 = vst [vmem:[#allocation2 + $0xb0] sm:$0xff] %v733
      %738 = vst [vmem:[#allocation2 + $0xb8] sm:$0xff] %v734
      %739 = vrot.lane.b32.xlu0 %v230, 57
      %v740 = vpop.permute.xlu0 %739
      %741 = vrot.lane.b32.xlu0 %v231, 57
      %v742 = vpop.permute.xlu0 %741
      %743 = vrot.lane.b32.xlu0 %v232, 57
      %v744 = vpop.permute.xlu0 %743
      %745 = vrot.lane.b32.xlu0 %v233, 57
      %v746 = vpop.permute.xlu0 %745
      %747 = vrot.lane.b32.xlu0 %v234, 57
      %v748 = vpop.permute.xlu0 %747
      %vm749 = vcmp.lt.s32.totalorder %v247, 57
      %v750 = vsel %vm749, %v746, %v748
      %v751 = vsel %vm749, %v744, %v746
      %v752 = vsel %vm749, %v742, %v744
      %v753 = vsel %vm749, %v740, %v742
      %v754 = vrot.slane %v253, 3
      %v755 = vrot.slane %v254, 3
      %v756 = vrot.slane %v255, 3
      %v757 = vrot.slane %v256, 3
      %vm758 = vcmp.ne.s32.totalorder %v754, 0
      %vm759 = vcmp.ne.s32.totalorder %v755, 0
      %vm760 = vcmp.ne.s32.totalorder %v756, 0
      %vm761 = vcmp.ne.s32.totalorder %v757, 0
      %vm762 = vmand %vm221, %vm758
      %vm763 = vmand %vm222, %vm759
      %vm764 = vmand %vm223, %vm760
      %vm765 = vmand %vm224, %vm761
      %vm766 = vmand %vm762, %vm273
      %vm767 = vmand %vm763, %vm274
      %vm768 = vmand %vm764, %vm275
      %vm769 = vmand %vm765, %vm276
      %v770 = vsel %vm766, 1, 0
      %v771 = vsel %vm767, 1, 0
      %v772 = vsel %vm768, 1, 0
      %v773 = vsel %vm769, 1, 0
      %v774 = vlaneseq
      %v775 = vshrl.u32 %v774, 7
      %v776 = vsub.s32 0, %v775
      %v777 = vrot.slane %v770, %v776
      %v778 = vlaneseq
      %v779 = vshrl.u32 %v778, 7
      %v780 = vsub.s32 0, %v779
      %v781 = vrot.slane %v771, %v780
      %v782 = vlaneseq
      %v783 = vshrl.u32 %v782, 7
      %v784 = vsub.s32 0, %v783
      %v785 = vrot.slane %v772, %v784
      %v786 = vlaneseq
      %v787 = vshrl.u32 %v786, 7
      %v788 = vsub.s32 0, %v787
      %v789 = vrot.slane %v773, %v788
      %vm790 = vcmp.eq.s32.totalorder %v777, 1
      %vm791 = vcmp.eq.s32.totalorder %v781, 1
      %vm792 = vcmp.eq.s32.totalorder %v785, 1
      %vm793 = vcmp.eq.s32.totalorder %v789, 1
      %v794 = vsel %vm790, %v753, 0.0
      %v795 = vsel %vm791, %v752, 0.0
      %v796 = vsel %vm792, %v751, 0.0
      %v797 = vsel %vm793, %v750, 0.0
      %798 = vst [vmem:[#allocation2 + $0xc0] sm:$0xff] %v794
      %799 = vst [vmem:[#allocation2 + $0xc8] sm:$0xff] %v795
      %800 = vst [vmem:[#allocation2 + $0xd0] sm:$0xff] %v796
      %801 = vst [vmem:[#allocation2 + $0xd8] sm:$0xff] %v797
      %802 = vrot.lane.b32.xlu0 %v230, 56
      %v803 = vpop.permute.xlu0 %802
      %804 = vrot.lane.b32.xlu0 %v231, 56
      %v805 = vpop.permute.xlu0 %804
      %806 = vrot.lane.b32.xlu0 %v232, 56
      %v807 = vpop.permute.xlu0 %806
      %808 = vrot.lane.b32.xlu0 %v233, 56
      %v809 = vpop.permute.xlu0 %808
      %810 = vrot.lane.b32.xlu0 %v234, 56
      %v811 = vpop.permute.xlu0 %810
      %vm812 = vcmp.lt.s32.totalorder %v247, 56
      %v813 = vsel %vm812, %v809, %v811
      %v814 = vsel %vm812, %v807, %v809
      %v815 = vsel %vm812, %v805, %v807
      %v816 = vsel %vm812, %v803, %v805
      %v817 = vsel %vm762, 1, 0
      %v818 = vsel %vm763, 1, 0
      %v819 = vsel %vm764, 1, 0
      %v820 = vsel %vm765, 1, 0
      %v821 = vlaneseq
      %v822 = vshrl.u32 %v821, 7
      %v823 = vsub.s32 0, %v822
      %v824 = vrot.slane %v817, %v823
      %v825 = vlaneseq
      %v826 = vshrl.u32 %v825, 7
      %v827 = vsub.s32 0, %v826
      %v828 = vrot.slane %v818, %v827
      %v829 = vlaneseq
      %v830 = vshrl.u32 %v829, 7
      %v831 = vsub.s32 0, %v830
      %v832 = vrot.slane %v819, %v831
      %v833 = vlaneseq
      %v834 = vshrl.u32 %v833, 7
      %v835 = vsub.s32 0, %v834
      %v836 = vrot.slane %v820, %v835
      %vm837 = vcmp.eq.s32.totalorder %v824, 1
      %vm838 = vcmp.eq.s32.totalorder %v828, 1
      %vm839 = vcmp.eq.s32.totalorder %v832, 1
      %vm840 = vcmp.eq.s32.totalorder %v836, 1
      %v841 = vsel %vm837, %v816, 0.0
      %v842 = vsel %vm838, %v815, 0.0
      %v843 = vsel %vm839, %v814, 0.0
      %v844 = vsel %vm840, %v813, 0.0
      %845 = vst [vmem:[#allocation2 + $0xe0] sm:$0xff] %v841
      %846 = vst [vmem:[#allocation2 + $0xe8] sm:$0xff] %v842
      %847 = vst [vmem:[#allocation2 + $0xf0] sm:$0xff] %v843
      %848 = vst [vmem:[#allocation2 + $0xf8] sm:$0xff] %v844
      %849 = vrot.lane.b32.xlu0 %v230, 55
      %v850 = vpop.permute.xlu0 %849
      %851 = vrot.lane.b32.xlu0 %v231, 55
      %v852 = vpop.permute.xlu0 %851
      %853 = vrot.lane.b32.xlu0 %v232, 55
      %v854 = vpop.permute.xlu0 %853
      %855 = vrot.lane.b32.xlu0 %v233, 55
      %v856 = vpop.permute.xlu0 %855
      %857 = vrot.lane.b32.xlu0 %v234, 55
      %v858 = vpop.permute.xlu0 %857
      %vm859 = vcmp.lt.s32.totalorder %v247, 55
      %v860 = vsel %vm859, %v856, %v858
      %v861 = vsel %vm859, %v854, %v856
      %v862 = vsel %vm859, %v852, %v854
      %v863 = vsel %vm859, %v850, %v852
      %vm864 = vmand %vm762, %vm379
      %vm865 = vmand %vm763, %vm380
      %vm866 = vmand %vm764, %vm381
      %vm867 = vmand %vm765, %vm382
      %v868 = vsel %vm864, 1, 0
      %v869 = vsel %vm865, 1, 0
      %v870 = vsel %vm866, 1, 0
      %v871 = vsel %vm867, 1, 0
      %v872 = vlaneseq
      %v873 = vshrl.u32 %v872, 7
      %v874 = vsub.s32 0, %v873
      %v875 = vrot.slane %v868, %v874
      %v876 = vlaneseq
      %v877 = vshrl.u32 %v876, 7
      %v878 = vsub.s32 0, %v877
      %v879 = vrot.slane %v869, %v878
      %v880 = vlaneseq
      %v881 = vshrl.u32 %v880, 7
      %v882 = vsub.s32 0, %v881
      %v883 = vrot.slane %v870, %v882
      %v884 = vlaneseq
      %v885 = vshrl.u32 %v884, 7
      %v886 = vsub.s32 0, %v885
      %v887 = vrot.slane %v871, %v886
      %vm888 = vcmp.eq.s32.totalorder %v875, 1
      %vm889 = vcmp.eq.s32.totalorder %v879, 1
      %vm890 = vcmp.eq.s32.totalorder %v883, 1
      %vm891 = vcmp.eq.s32.totalorder %v887, 1
      %v892 = vsel %vm888, %v863, 0.0
      %v893 = vsel %vm889, %v862, 0.0
      %v894 = vsel %vm890, %v861, 0.0
      %v895 = vsel %vm891, %v860, 0.0
      %896 = vst [vmem:[#allocation2 + $0x100] sm:$0xff] %v892
      %897 = vst [vmem:[#allocation2 + $0x108] sm:$0xff] %v893
      %898 = vst [vmem:[#allocation2 + $0x110] sm:$0xff] %v894
      %899 = vst [vmem:[#allocation2 + $0x118] sm:$0xff] %v895
      %900 = vrot.lane.b32.xlu0 %v230, 9
      %v901 = vpop.permute.xlu0 %900
      %902 = vrot.lane.b32.xlu0 %v231, 9
      %v903 = vpop.permute.xlu0 %902
      %904 = vrot.lane.b32.xlu0 %v232, 9
      %v905 = vpop.permute.xlu0 %904
      %906 = vrot.lane.b32.xlu0 %v233, 9
      %v907 = vpop.permute.xlu0 %906
      %908 = vrot.lane.b32.xlu0 %v234, 9
      %v909 = vpop.permute.xlu0 %908
      %vm910 = vcmp.lt.s32.totalorder %v247, 9
      %v911 = vsel %vm910, %v907, %v909
      %v912 = vsel %vm910, %v905, %v907
      %v913 = vsel %vm910, %v903, %v905
      %v914 = vsel %vm910, %v901, %v903
      %v915 = vlaneseq
      %v916 = vshrl.u32 %v915, 7
      %v917 = vsub.s32 2, %v916
      %v918 = vrot.slane %v328, %v917
      %v919 = vlaneseq
      %v920 = vshrl.u32 %v919, 7
      %v921 = vsub.s32 2, %v920
      %v922 = vrot.slane %v329, %v921
      %v923 = vlaneseq
      %v924 = vshrl.u32 %v923, 7
      %v925 = vsub.s32 2, %v924
      %v926 = vrot.slane %v330, %v925
      %v927 = vlaneseq
      %v928 = vshrl.u32 %v927, 7
      %v929 = vsub.s32 2, %v928
      %v930 = vrot.slane %v331, %v929
      %vm931 = vcmp.eq.s32.totalorder %v918, 1
      %vm932 = vcmp.eq.s32.totalorder %v922, 1
      %vm933 = vcmp.eq.s32.totalorder %v926, 1
      %vm934 = vcmp.eq.s32.totalorder %v930, 1
      %v935 = vsel %vm931, %v914, 0.0
      %v936 = vsel %vm932, %v913, 0.0
      %v937 = vsel %vm933, %v912, 0.0
      %v938 = vsel %vm934, %v911, 0.0
      %939 = vst [vmem:[#allocation2 + $0x120] sm:$0xff] %v935
      %940 = vst [vmem:[#allocation2 + $0x128] sm:$0xff] %v936
      %941 = vst [vmem:[#allocation2 + $0x130] sm:$0xff] %v937
      %942 = vst [vmem:[#allocation2 + $0x138] sm:$0xff] %v938
      %943 = vrot.lane.b32.xlu0 %v230, 8
      %v944 = vpop.permute.xlu0 %943
      %945 = vrot.lane.b32.xlu0 %v231, 8
      %v946 = vpop.permute.xlu0 %945
      %947 = vrot.lane.b32.xlu0 %v232, 8
      %v948 = vpop.permute.xlu0 %947
      %949 = vrot.lane.b32.xlu0 %v233, 8
      %v950 = vpop.permute.xlu0 %949
      %951 = vrot.lane.b32.xlu0 %v234, 8
      %v952 = vpop.permute.xlu0 %951
      %vm953 = vcmp.lt.s32.totalorder %v247, 8
      %v954 = vsel %vm953, %v950, %v952
      %v955 = vsel %vm953, %v948, %v950
      %v956 = vsel %vm953, %v946, %v948
      %v957 = vsel %vm953, %v944, %v946
      %v962 = vrot.slane %v957, 6
      %v963 = vrot.slane %v956, 6
      %v964 = vrot.slane %v955, 6
      %v965 = vrot.slane %v954, 6
      %v966 = vrot.slane %v957, 7
      %v967 = vrot.slane %v956, 7
      %v968 = vrot.slane %v955, 7
      %v969 = vrot.slane %v954, 7
      %v970 = vrot.slane %v957, 1
      %v971 = vrot.slane %v956, 1
      %v972 = vrot.slane %v955, 1
      %v973 = vrot.slane %v954, 1
      %v974 = vrot.slane %v957, 2
      %v975 = vrot.slane %v956, 2
      %v976 = vrot.slane %v955, 2
      %v977 = vrot.slane %v954, 2
      %v978 = vrot.slane %v957, 3
      %v979 = vrot.slane %v956, 3
      %v980 = vrot.slane %v955, 3
      %v981 = vrot.slane %v954, 3
      %v982 = vrot.slane %v957, 4
      %v983 = vrot.slane %v956, 4
      %v984 = vrot.slane %v955, 4
      %v985 = vrot.slane %v954, 4
      %v986 = vrot.slane %v957, 5
      %v987 = vrot.slane %v956, 5
      %v988 = vrot.slane %v955, 5
      %v989 = vrot.slane %v954, 5
      %v1022 = vsel %vm485, %v962, 0.0
      %v1023 = vsel %vm486, %v963, 0.0
      %v1024 = vsel %vm487, %v964, 0.0
      %v1025 = vsel %vm488, %v965, 0.0
      %v1026 = vsel %vm485, %v966, 0.0
      %v1027 = vsel %vm486, %v967, 0.0
      %v1028 = vsel %vm487, %v968, 0.0
      %v1029 = vsel %vm488, %v969, 0.0
      %v1030 = vsel %vm485, %v957, 0.0
      %v1031 = vsel %vm486, %v956, 0.0
      %v1032 = vsel %vm487, %v955, 0.0
      %v1033 = vsel %vm488, %v954, 0.0
      %v1034 = vsel %vm485, %v970, 0.0
      %v1035 = vsel %vm486, %v971, 0.0
      %v1036 = vsel %vm487, %v972, 0.0
      %v1037 = vsel %vm488, %v973, 0.0
      %v1038 = vsel %vm485, %v974, 0.0
      %v1039 = vsel %vm486, %v975, 0.0
      %v1040 = vsel %vm487, %v976, 0.0
      %v1041 = vsel %vm488, %v977, 0.0
      %v1042 = vsel %vm485, %v978, 0.0
      %v1043 = vsel %vm486, %v979, 0.0
      %v1044 = vsel %vm487, %v980, 0.0
      %v1045 = vsel %vm488, %v981, 0.0
      %v1046 = vsel %vm485, %v982, 0.0
      %v1047 = vsel %vm486, %v983, 0.0
      %v1048 = vsel %vm487, %v984, 0.0
      %v1049 = vsel %vm488, %v985, 0.0
      %v1050 = vsel %vm485, %v986, 0.0
      %v1051 = vsel %vm486, %v987, 0.0
      %v1052 = vsel %vm487, %v988, 0.0
      %v1053 = vsel %vm488, %v989, 0.0
      %v1086 = vrot.slane %v1022, 2
      %v1087 = vrot.slane %v1026, 1
      %v1088 = vsel %vm618, %v1087, %v1086
      %v1089 = vsel %vm621, %v1030, %v1088
      %v1090 = vrot.slane %v1034, 7
      %v1091 = vsel %vm624, %v1090, %v1089
      %v1092 = vrot.slane %v1038, 6
      %v1093 = vsel %vm627, %v1092, %v1091
      %v1094 = vrot.slane %v1042, 5
      %v1095 = vsel %vm630, %v1094, %v1093
      %v1096 = vrot.slane %v1046, 4
      %v1097 = vsel %vm633, %v1096, %v1095
      %v1098 = vrot.slane %v1050, 3
      %v1099 = vsel %vm636, %v1098, %v1097
      %v1100 = vrot.slane %v1023, 2
      %v1101 = vrot.slane %v1027, 1
      %v1102 = vsel %vm618, %v1101, %v1100
      %v1103 = vsel %vm621, %v1031, %v1102
      %v1104 = vrot.slane %v1035, 7
      %v1105 = vsel %vm624, %v1104, %v1103
      %v1106 = vrot.slane %v1039, 6
      %v1107 = vsel %vm627, %v1106, %v1105
      %v1108 = vrot.slane %v1043, 5
      %v1109 = vsel %vm630, %v1108, %v1107
      %v1110 = vrot.slane %v1047, 4
      %v1111 = vsel %vm633, %v1110, %v1109
      %v1112 = vrot.slane %v1051, 3
      %v1113 = vsel %vm636, %v1112, %v1111
      %v1114 = vrot.slane %v1024, 2
      %v1115 = vrot.slane %v1028, 1
      %v1116 = vsel %vm618, %v1115, %v1114
      %v1117 = vsel %vm621, %v1032, %v1116
      %v1118 = vrot.slane %v1036, 7
      %v1119 = vsel %vm624, %v1118, %v1117
      %v1120 = vrot.slane %v1040, 6
      %v1121 = vsel %vm627, %v1120, %v1119
      %v1122 = vrot.slane %v1044, 5
      %v1123 = vsel %vm630, %v1122, %v1121
      %v1124 = vrot.slane %v1048, 4
      %v1125 = vsel %vm633, %v1124, %v1123
      %v1126 = vrot.slane %v1052, 3
      %v1127 = vsel %vm636, %v1126, %v1125
      %v1128 = vrot.slane %v1025, 2
      %v1129 = vrot.slane %v1029, 1
      %v1130 = vsel %vm618, %v1129, %v1128
      %v1131 = vsel %vm621, %v1033, %v1130
      %v1132 = vrot.slane %v1037, 7
      %v1133 = vsel %vm624, %v1132, %v1131
      %v1134 = vrot.slane %v1041, 6
      %v1135 = vsel %vm627, %v1134, %v1133
      %v1136 = vrot.slane %v1045, 5
      %v1137 = vsel %vm630, %v1136, %v1135
      %v1138 = vrot.slane %v1049, 4
      %v1139 = vsel %vm633, %v1138, %v1137
      %v1140 = vrot.slane %v1053, 3
      %v1141 = vsel %vm636, %v1140, %v1139
      %1146 = vst [vmem:[#allocation2 + $0x140] sm:$0xff] %v1099
      %1147 = vst [vmem:[#allocation2 + $0x148] sm:$0xff] %v1113
      %1148 = vst [vmem:[#allocation2 + $0x150] sm:$0xff] %v1127
      %1149 = vst [vmem:[#allocation2 + $0x158] sm:$0xff] %v1141
      %1150 = vrot.lane.b32.xlu0 %v230, 7
      %v1151 = vpop.permute.xlu0 %1150
      %1152 = vrot.lane.b32.xlu0 %v231, 7
      %v1153 = vpop.permute.xlu0 %1152
      %1154 = vrot.lane.b32.xlu0 %v232, 7
      %v1155 = vpop.permute.xlu0 %1154
      %1156 = vrot.lane.b32.xlu0 %v233, 7
      %v1157 = vpop.permute.xlu0 %1156
      %1158 = vrot.lane.b32.xlu0 %v234, 7
      %v1159 = vpop.permute.xlu0 %1158
      %vm1160 = vcmp.lt.s32.totalorder %v247, 7
      %v1161 = vsel %vm1160, %v1157, %v1159
      %v1162 = vsel %vm1160, %v1155, %v1157
      %v1163 = vsel %vm1160, %v1153, %v1155
      %v1164 = vsel %vm1160, %v1151, %v1153
      %v1165 = vlaneseq
      %v1166 = vshrl.u32 %v1165, 7
      %v1167 = vsub.s32 2, %v1166
      %v1168 = vrot.slane %v817, %v1167
      %v1169 = vlaneseq
      %v1170 = vshrl.u32 %v1169, 7
      %v1171 = vsub.s32 2, %v1170
      %v1172 = vrot.slane %v818, %v1171
      %v1173 = vlaneseq
      %v1174 = vshrl.u32 %v1173, 7
      %v1175 = vsub.s32 2, %v1174
      %v1176 = vrot.slane %v819, %v1175
      %v1177 = vlaneseq
      %v1178 = vshrl.u32 %v1177, 7
      %v1179 = vsub.s32 2, %v1178
      %v1180 = vrot.slane %v820, %v1179
      %vm1181 = vcmp.eq.s32.totalorder %v1168, 1
      %vm1182 = vcmp.eq.s32.totalorder %v1172, 1
      %vm1183 = vcmp.eq.s32.totalorder %v1176, 1
      %vm1184 = vcmp.eq.s32.totalorder %v1180, 1
      %v1185 = vsel %vm1181, %v1164, 0.0
      %v1186 = vsel %vm1182, %v1163, 0.0
      %v1187 = vsel %vm1183, %v1162, 0.0
      %v1188 = vsel %vm1184, %v1161, 0.0
      %1189 = vst [vmem:[#allocation2 + $0x160] sm:$0xff] %v1185
      %1190 = vst [vmem:[#allocation2 + $0x168] sm:$0xff] %v1186
      %1191 = vst [vmem:[#allocation2 + $0x170] sm:$0xff] %v1187
      %1192 = vst [vmem:[#allocation2 + $0x178] sm:$0xff] %v1188
      %1193 = vrot.lane.b32.xlu0 %v230, 1
      %v1194 = vpop.permute.xlu0 %1193
      %1195 = vrot.lane.b32.xlu0 %v231, 1
      %v1196 = vpop.permute.xlu0 %1195
      %1197 = vrot.lane.b32.xlu0 %v232, 1
      %v1198 = vpop.permute.xlu0 %1197
      %1199 = vrot.lane.b32.xlu0 %v233, 1
      %v1200 = vpop.permute.xlu0 %1199
      %1201 = vrot.lane.b32.xlu0 %v234, 1
      %v1202 = vpop.permute.xlu0 %1201
      %vm1203 = vcmp.lt.s32.totalorder %v247, 1
      %v1204 = vsel %vm1203, %v1200, %v1202
      %v1205 = vsel %vm1203, %v1198, %v1200
      %v1206 = vsel %vm1203, %v1196, %v1198
      %v1207 = vsel %vm1203, %v1194, %v1196
      %v1212 = vrot.slane %v1207, 4
      %v1213 = vrot.slane %v1206, 4
      %v1214 = vrot.slane %v1205, 4
      %v1215 = vrot.slane %v1204, 4
      %v1216 = vrot.slane %v1207, 5
      %v1217 = vrot.slane %v1206, 5
      %v1218 = vrot.slane %v1205, 5
      %v1219 = vrot.slane %v1204, 5
      %v1220 = vrot.slane %v1207, 6
      %v1221 = vrot.slane %v1206, 6
      %v1222 = vrot.slane %v1205, 6
      %v1223 = vrot.slane %v1204, 6
      %v1224 = vrot.slane %v1207, 7
      %v1225 = vrot.slane %v1206, 7
      %v1226 = vrot.slane %v1205, 7
      %v1227 = vrot.slane %v1204, 7
      %v1228 = vrot.slane %v1207, 1
      %v1229 = vrot.slane %v1206, 1
      %v1230 = vrot.slane %v1205, 1
      %v1231 = vrot.slane %v1204, 1
      %v1232 = vrot.slane %v1207, 2
      %v1233 = vrot.slane %v1206, 2
      %v1234 = vrot.slane %v1205, 2
      %v1235 = vrot.slane %v1204, 2
      %v1236 = vrot.slane %v1207, 3
      %v1237 = vrot.slane %v1206, 3
      %v1238 = vrot.slane %v1205, 3
      %v1239 = vrot.slane %v1204, 3
      %v1272 = vsel %vm485, %v1212, 0.0
      %v1273 = vsel %vm486, %v1213, 0.0
      %v1274 = vsel %vm487, %v1214, 0.0
      %v1275 = vsel %vm488, %v1215, 0.0
      %v1276 = vsel %vm485, %v1216, 0.0
      %v1277 = vsel %vm486, %v1217, 0.0
      %v1278 = vsel %vm487, %v1218, 0.0
      %v1279 = vsel %vm488, %v1219, 0.0
      %v1280 = vsel %vm485, %v1220, 0.0
      %v1281 = vsel %vm486, %v1221, 0.0
      %v1282 = vsel %vm487, %v1222, 0.0
      %v1283 = vsel %vm488, %v1223, 0.0
      %v1284 = vsel %vm485, %v1224, 0.0
      %v1285 = vsel %vm486, %v1225, 0.0
      %v1286 = vsel %vm487, %v1226, 0.0
      %v1287 = vsel %vm488, %v1227, 0.0
      %v1288 = vsel %vm485, %v1207, 0.0
      %v1289 = vsel %vm486, %v1206, 0.0
      %v1290 = vsel %vm487, %v1205, 0.0
      %v1291 = vsel %vm488, %v1204, 0.0
      %v1292 = vsel %vm485, %v1228, 0.0
      %v1293 = vsel %vm486, %v1229, 0.0
      %v1294 = vsel %vm487, %v1230, 0.0
      %v1295 = vsel %vm488, %v1231, 0.0
      %v1296 = vsel %vm485, %v1232, 0.0
      %v1297 = vsel %vm486, %v1233, 0.0
      %v1298 = vsel %vm487, %v1234, 0.0
      %v1299 = vsel %vm488, %v1235, 0.0
      %v1300 = vsel %vm485, %v1236, 0.0
      %v1301 = vsel %vm486, %v1237, 0.0
      %v1302 = vsel %vm487, %v1238, 0.0
      %v1303 = vsel %vm488, %v1239, 0.0
      %v1336 = vrot.slane %v1272, 4
      %v1337 = vrot.slane %v1276, 3
      %v1338 = vsel %vm618, %v1337, %v1336
      %v1339 = vrot.slane %v1280, 2
      %v1340 = vsel %vm621, %v1339, %v1338
      %v1341 = vrot.slane %v1284, 1
      %v1342 = vsel %vm624, %v1341, %v1340
      %v1343 = vsel %vm627, %v1288, %v1342
      %v1344 = vrot.slane %v1292, 7
      %v1345 = vsel %vm630, %v1344, %v1343
      %v1346 = vrot.slane %v1296, 6
      %v1347 = vsel %vm633, %v1346, %v1345
      %v1348 = vrot.slane %v1300, 5
      %v1349 = vsel %vm636, %v1348, %v1347
      %v1350 = vrot.slane %v1273, 4
      %v1351 = vrot.slane %v1277, 3
      %v1352 = vsel %vm618, %v1351, %v1350
      %v1353 = vrot.slane %v1281, 2
      %v1354 = vsel %vm621, %v1353, %v1352
      %v1355 = vrot.slane %v1285, 1
      %v1356 = vsel %vm624, %v1355, %v1354
      %v1357 = vsel %vm627, %v1289, %v1356
      %v1358 = vrot.slane %v1293, 7
      %v1359 = vsel %vm630, %v1358, %v1357
      %v1360 = vrot.slane %v1297, 6
      %v1361 = vsel %vm633, %v1360, %v1359
      %v1362 = vrot.slane %v1301, 5
      %v1363 = vsel %vm636, %v1362, %v1361
      %v1364 = vrot.slane %v1274, 4
      %v1365 = vrot.slane %v1278, 3
      %v1366 = vsel %vm618, %v1365, %v1364
      %v1367 = vrot.slane %v1282, 2
      %v1368 = vsel %vm621, %v1367, %v1366
      %v1369 = vrot.slane %v1286, 1
      %v1370 = vsel %vm624, %v1369, %v1368
      %v1371 = vsel %vm627, %v1290, %v1370
      %v1372 = vrot.slane %v1294, 7
      %v1373 = vsel %vm630, %v1372, %v1371
      %v1374 = vrot.slane %v1298, 6
      %v1375 = vsel %vm633, %v1374, %v1373
      %v1376 = vrot.slane %v1302, 5
      %v1377 = vsel %vm636, %v1376, %v1375
      %v1378 = vrot.slane %v1275, 4
      %v1379 = vrot.slane %v1279, 3
      %v1380 = vsel %vm618, %v1379, %v1378
      %v1381 = vrot.slane %v1283, 2
      %v1382 = vsel %vm621, %v1381, %v1380
      %v1383 = vrot.slane %v1287, 1
      %v1384 = vsel %vm624, %v1383, %v1382
      %v1385 = vsel %vm627, %v1291, %v1384
      %v1386 = vrot.slane %v1295, 7
      %v1387 = vsel %vm630, %v1386, %v1385
      %v1388 = vrot.slane %v1299, 6
      %v1389 = vsel %vm633, %v1388, %v1387
      %v1390 = vrot.slane %v1303, 5
      %v1391 = vsel %vm636, %v1390, %v1389
      %1396 = vst [vmem:[#allocation2 + $0x180] sm:$0xff] %v1349
      %1397 = vst [vmem:[#allocation2 + $0x188] sm:$0xff] %v1363
      %1398 = vst [vmem:[#allocation2 + $0x190] sm:$0xff] %v1377
      %1399 = vst [vmem:[#allocation2 + $0x198] sm:$0xff] %v1391
      %1400 = vst [vmem:[#allocation2 + $0x1a0] sm:$0xff] %v231
      %1401 = vst [vmem:[#allocation2 + $0x1a8] sm:$0xff] %v232
      %1402 = vst [vmem:[#allocation2 + $0x1b0] sm:$0xff] %v233
      %1403 = vst [vmem:[#allocation2 + $0x1b8] sm:$0xff] %v234
      %1404 = vrot.lane.b32.xlu0 %v231, 127
      %v1405 = vpop.permute.xlu0 %1404
      %1406 = vrot.lane.b32.xlu0 %v232, 127
      %v1407 = vpop.permute.xlu0 %1406
      %1408 = vrot.lane.b32.xlu0 %v233, 127
      %v1409 = vpop.permute.xlu0 %1408
      %1410 = vrot.lane.b32.xlu0 %v234, 127
      %v1411 = vpop.permute.xlu0 %1410
      %1412 = vrot.lane.b32.xlu0 %v235, 127
      %v1413 = vpop.permute.xlu0 %1412
      %vm1414 = vcmp.lt.s32.totalorder %v247, 127
      %v1415 = vsel %vm1414, %v1411, %v1413
      %v1416 = vsel %vm1414, %v1409, %v1411
      %v1417 = vsel %vm1414, %v1407, %v1409
      %v1418 = vsel %vm1414, %v1405, %v1407
      %v1423 = vrot.slane %v1418, 3
      %v1424 = vrot.slane %v1417, 3
      %v1425 = vrot.slane %v1416, 3
      %v1426 = vrot.slane %v1415, 3
      %v1427 = vrot.slane %v1418, 4
      %v1428 = vrot.slane %v1417, 4
      %v1429 = vrot.slane %v1416, 4
      %v1430 = vrot.slane %v1415, 4
      %v1431 = vrot.slane %v1418, 5
      %v1432 = vrot.slane %v1417, 5
      %v1433 = vrot.slane %v1416, 5
      %v1434 = vrot.slane %v1415, 5
      %v1435 = vrot.slane %v1418, 6
      %v1436 = vrot.slane %v1417, 6
      %v1437 = vrot.slane %v1416, 6
      %v1438 = vrot.slane %v1415, 6
      %v1439 = vrot.slane %v1418, 7
      %v1440 = vrot.slane %v1417, 7
      %v1441 = vrot.slane %v1416, 7
      %v1442 = vrot.slane %v1415, 7
      %v1443 = vrot.slane %v1418, 1
      %v1444 = vrot.slane %v1417, 1
      %v1445 = vrot.slane %v1416, 1
      %v1446 = vrot.slane %v1415, 1
      %v1447 = vrot.slane %v1418, 2
      %v1448 = vrot.slane %v1417, 2
      %v1449 = vrot.slane %v1416, 2
      %v1450 = vrot.slane %v1415, 2
      %v1483 = vsel %vm485, %v1423, 0.0
      %v1484 = vsel %vm486, %v1424, 0.0
      %v1485 = vsel %vm487, %v1425, 0.0
      %v1486 = vsel %vm488, %v1426, 0.0
      %v1487 = vsel %vm485, %v1427, 0.0
      %v1488 = vsel %vm486, %v1428, 0.0
      %v1489 = vsel %vm487, %v1429, 0.0
      %v1490 = vsel %vm488, %v1430, 0.0
      %v1491 = vsel %vm485, %v1431, 0.0
      %v1492 = vsel %vm486, %v1432, 0.0
      %v1493 = vsel %vm487, %v1433, 0.0
      %v1494 = vsel %vm488, %v1434, 0.0
      %v1495 = vsel %vm485, %v1435, 0.0
      %v1496 = vsel %vm486, %v1436, 0.0
      %v1497 = vsel %vm487, %v1437, 0.0
      %v1498 = vsel %vm488, %v1438, 0.0
      %v1499 = vsel %vm485, %v1439, 0.0
      %v1500 = vsel %vm486, %v1440, 0.0
      %v1501 = vsel %vm487, %v1441, 0.0
      %v1502 = vsel %vm488, %v1442, 0.0
      %v1503 = vsel %vm485, %v1418, 0.0
      %v1504 = vsel %vm486, %v1417, 0.0
      %v1505 = vsel %vm487, %v1416, 0.0
      %v1506 = vsel %vm488, %v1415, 0.0
      %v1507 = vsel %vm485, %v1443, 0.0
      %v1508 = vsel %vm486, %v1444, 0.0
      %v1509 = vsel %vm487, %v1445, 0.0
      %v1510 = vsel %vm488, %v1446, 0.0
      %v1511 = vsel %vm485, %v1447, 0.0
      %v1512 = vsel %vm486, %v1448, 0.0
      %v1513 = vsel %vm487, %v1449, 0.0
      %v1514 = vsel %vm488, %v1450, 0.0
      %v1547 = vrot.slane %v1483, 5
      %v1548 = vrot.slane %v1487, 4
      %v1549 = vsel %vm618, %v1548, %v1547
      %v1550 = vrot.slane %v1491, 3
      %v1551 = vsel %vm621, %v1550, %v1549
      %v1552 = vrot.slane %v1495, 2
      %v1553 = vsel %vm624, %v1552, %v1551
      %v1554 = vrot.slane %v1499, 1
      %v1555 = vsel %vm627, %v1554, %v1553
      %v1556 = vsel %vm630, %v1503, %v1555
      %v1557 = vrot.slane %v1507, 7
      %v1558 = vsel %vm633, %v1557, %v1556
      %v1559 = vrot.slane %v1511, 6
      %v1560 = vsel %vm636, %v1559, %v1558
      %v1561 = vrot.slane %v1484, 5
      %v1562 = vrot.slane %v1488, 4
      %v1563 = vsel %vm618, %v1562, %v1561
      %v1564 = vrot.slane %v1492, 3
      %v1565 = vsel %vm621, %v1564, %v1563
      %v1566 = vrot.slane %v1496, 2
      %v1567 = vsel %vm624, %v1566, %v1565
      %v1568 = vrot.slane %v1500, 1
      %v1569 = vsel %vm627, %v1568, %v1567
      %v1570 = vsel %vm630, %v1504, %v1569
      %v1571 = vrot.slane %v1508, 7
      %v1572 = vsel %vm633, %v1571, %v1570
      %v1573 = vrot.slane %v1512, 6
      %v1574 = vsel %vm636, %v1573, %v1572
      %v1575 = vrot.slane %v1485, 5
      %v1576 = vrot.slane %v1489, 4
      %v1577 = vsel %vm618, %v1576, %v1575
      %v1578 = vrot.slane %v1493, 3
      %v1579 = vsel %vm621, %v1578, %v1577
      %v1580 = vrot.slane %v1497, 2
      %v1581 = vsel %vm624, %v1580, %v1579
      %v1582 = vrot.slane %v1501, 1
      %v1583 = vsel %vm627, %v1582, %v1581
      %v1584 = vsel %vm630, %v1505, %v1583
      %v1585 = vrot.slane %v1509, 7
      %v1586 = vsel %vm633, %v1585, %v1584
      %v1587 = vrot.slane %v1513, 6
      %v1588 = vsel %vm636, %v1587, %v1586
      %v1589 = vrot.slane %v1486, 5
      %v1590 = vrot.slane %v1490, 4
      %v1591 = vsel %vm618, %v1590, %v1589
      %v1592 = vrot.slane %v1494, 3
      %v1593 = vsel %vm621, %v1592, %v1591
      %v1594 = vrot.slane %v1498, 2
      %v1595 = vsel %vm624, %v1594, %v1593
      %v1596 = vrot.slane %v1502, 1
      %v1597 = vsel %vm627, %v1596, %v1595
      %v1598 = vsel %vm630, %v1506, %v1597
      %v1599 = vrot.slane %v1510, 7
      %v1600 = vsel %vm633, %v1599, %v1598
      %v1601 = vrot.slane %v1514, 6
      %v1602 = vsel %vm636, %v1601, %v1600
      %1607 = vst [vmem:[#allocation2 + $0x1c0] sm:$0xff] %v1560
      %1608 = vst [vmem:[#allocation2 + $0x1c8] sm:$0xff] %v1574
      %1609 = vst [vmem:[#allocation2 + $0x1d0] sm:$0xff] %v1588
      %1610 = vst [vmem:[#allocation2 + $0x1d8] sm:$0xff] %v1602
      %1611 = vrot.lane.b32.xlu0 %v231, 121
      %v1612 = vpop.permute.xlu0 %1611
      %1613 = vrot.lane.b32.xlu0 %v232, 121
      %v1614 = vpop.permute.xlu0 %1613
      %1615 = vrot.lane.b32.xlu0 %v233, 121
      %v1616 = vpop.permute.xlu0 %1615
      %1617 = vrot.lane.b32.xlu0 %v234, 121
      %v1618 = vpop.permute.xlu0 %1617
      %1619 = vrot.lane.b32.xlu0 %v235, 121
      %v1620 = vpop.permute.xlu0 %1619
      %vm1621 = vcmp.lt.s32.totalorder %v247, 121
      %v1622 = vsel %vm1621, %v1618, %v1620
      %v1623 = vsel %vm1621, %v1616, %v1618
      %v1624 = vsel %vm1621, %v1614, %v1616
      %v1625 = vsel %vm1621, %v1612, %v1614
      %v1626 = vrot.slane %v253, 1
      %v1627 = vrot.slane %v254, 1
      %v1628 = vrot.slane %v255, 1
      %v1629 = vrot.slane %v256, 1
      %vm1630 = vcmp.ne.s32.totalorder %v1626, 0
      %vm1631 = vcmp.ne.s32.totalorder %v1627, 0
      %vm1632 = vcmp.ne.s32.totalorder %v1628, 0
      %vm1633 = vcmp.ne.s32.totalorder %v1629, 0
      %vm1634 = vmand %vm221, %vm1630
      %vm1635 = vmand %vm222, %vm1631
      %vm1636 = vmand %vm223, %vm1632
      %vm1637 = vmand %vm224, %vm1633
      %v1638 = vsel %vm1634, 1, 0
      %v1639 = vsel %vm1635, 1, 0
      %v1640 = vsel %vm1636, 1, 0
      %v1641 = vsel %vm1637, 1, 0
      %v1642 = vlaneseq
      %v1643 = vshrl.u32 %v1642, 7
      %v1644 = vsub.s32 3, %v1643
      %v1645 = vrot.slane %v1638, %v1644
      %v1646 = vlaneseq
      %v1647 = vshrl.u32 %v1646, 7
      %v1648 = vsub.s32 3, %v1647
      %v1649 = vrot.slane %v1639, %v1648
      %v1650 = vlaneseq
      %v1651 = vshrl.u32 %v1650, 7
      %v1652 = vsub.s32 3, %v1651
      %v1653 = vrot.slane %v1640, %v1652
      %v1654 = vlaneseq
      %v1655 = vshrl.u32 %v1654, 7
      %v1656 = vsub.s32 3, %v1655
      %v1657 = vrot.slane %v1641, %v1656
      %vm1658 = vcmp.eq.s32.totalorder %v1645, 1
      %vm1659 = vcmp.eq.s32.totalorder %v1649, 1
      %vm1660 = vcmp.eq.s32.totalorder %v1653, 1
      %vm1661 = vcmp.eq.s32.totalorder %v1657, 1
      %v1662 = vsel %vm1658, %v1625, 0.0
      %v1663 = vsel %vm1659, %v1624, 0.0
      %v1664 = vsel %vm1660, %v1623, 0.0
      %v1665 = vsel %vm1661, %v1622, 0.0
      %1666 = vst [vmem:[#allocation2 + $0x1e0] sm:$0xff] %v1662
      %1667 = vst [vmem:[#allocation2 + $0x1e8] sm:$0xff] %v1663
      %1668 = vst [vmem:[#allocation2 + $0x1f0] sm:$0xff] %v1664
      %1669 = vst [vmem:[#allocation2 + $0x1f8] sm:$0xff] %v1665
      %1670 = vrot.lane.b32.xlu0 %v231, 120
      %v1671 = vpop.permute.xlu0 %1670
      %1672 = vrot.lane.b32.xlu0 %v232, 120
      %v1673 = vpop.permute.xlu0 %1672
      %1674 = vrot.lane.b32.xlu0 %v233, 120
      %v1675 = vpop.permute.xlu0 %1674
      %1676 = vrot.lane.b32.xlu0 %v234, 120
      %v1677 = vpop.permute.xlu0 %1676
      %1678 = vrot.lane.b32.xlu0 %v235, 120
      %v1679 = vpop.permute.xlu0 %1678
      %vm1680 = vcmp.lt.s32.totalorder %v247, 120
      %v1681 = vsel %vm1680, %v1677, %v1679
      %v1682 = vsel %vm1680, %v1675, %v1677
      %v1683 = vsel %vm1680, %v1673, %v1675
      %v1684 = vsel %vm1680, %v1671, %v1673
      %v1689 = vrot.slane %v1684, 5
      %v1690 = vrot.slane %v1683, 5
      %v1691 = vrot.slane %v1682, 5
      %v1692 = vrot.slane %v1681, 5
      %v1693 = vrot.slane %v1684, 6
      %v1694 = vrot.slane %v1683, 6
      %v1695 = vrot.slane %v1682, 6
      %v1696 = vrot.slane %v1681, 6
      %v1697 = vrot.slane %v1684, 7
      %v1698 = vrot.slane %v1683, 7
      %v1699 = vrot.slane %v1682, 7
      %v1700 = vrot.slane %v1681, 7
      %v1701 = vrot.slane %v1684, 1
      %v1702 = vrot.slane %v1683, 1
      %v1703 = vrot.slane %v1682, 1
      %v1704 = vrot.slane %v1681, 1
      %v1705 = vrot.slane %v1684, 2
      %v1706 = vrot.slane %v1683, 2
      %v1707 = vrot.slane %v1682, 2
      %v1708 = vrot.slane %v1681, 2
      %v1709 = vrot.slane %v1684, 3
      %v1710 = vrot.slane %v1683, 3
      %v1711 = vrot.slane %v1682, 3
      %v1712 = vrot.slane %v1681, 3
      %v1713 = vrot.slane %v1684, 4
      %v1714 = vrot.slane %v1683, 4
      %v1715 = vrot.slane %v1682, 4
      %v1716 = vrot.slane %v1681, 4
      %v1749 = vsel %vm485, %v1689, 0.0
      %v1750 = vsel %vm486, %v1690, 0.0
      %v1751 = vsel %vm487, %v1691, 0.0
      %v1752 = vsel %vm488, %v1692, 0.0
      %v1753 = vsel %vm485, %v1693, 0.0
      %v1754 = vsel %vm486, %v1694, 0.0
      %v1755 = vsel %vm487, %v1695, 0.0
      %v1756 = vsel %vm488, %v1696, 0.0
      %v1757 = vsel %vm485, %v1697, 0.0
      %v1758 = vsel %vm486, %v1698, 0.0
      %v1759 = vsel %vm487, %v1699, 0.0
      %v1760 = vsel %vm488, %v1700, 0.0
      %v1761 = vsel %vm485, %v1684, 0.0
      %v1762 = vsel %vm486, %v1683, 0.0
      %v1763 = vsel %vm487, %v1682, 0.0
      %v1764 = vsel %vm488, %v1681, 0.0
      %v1765 = vsel %vm485, %v1701, 0.0
      %v1766 = vsel %vm486, %v1702, 0.0
      %v1767 = vsel %vm487, %v1703, 0.0
      %v1768 = vsel %vm488, %v1704, 0.0
      %v1769 = vsel %vm485, %v1705, 0.0
      %v1770 = vsel %vm486, %v1706, 0.0
      %v1771 = vsel %vm487, %v1707, 0.0
      %v1772 = vsel %vm488, %v1708, 0.0
      %v1773 = vsel %vm485, %v1709, 0.0
      %v1774 = vsel %vm486, %v1710, 0.0
      %v1775 = vsel %vm487, %v1711, 0.0
      %v1776 = vsel %vm488, %v1712, 0.0
      %v1777 = vsel %vm485, %v1713, 0.0
      %v1778 = vsel %vm486, %v1714, 0.0
      %v1779 = vsel %vm487, %v1715, 0.0
      %v1780 = vsel %vm488, %v1716, 0.0
      %v1813 = vrot.slane %v1749, 3
      %v1814 = vrot.slane %v1753, 2
      %v1815 = vsel %vm618, %v1814, %v1813
      %v1816 = vrot.slane %v1757, 1
      %v1817 = vsel %vm621, %v1816, %v1815
      %v1818 = vsel %vm624, %v1761, %v1817
      %v1819 = vrot.slane %v1765, 7
      %v1820 = vsel %vm627, %v1819, %v1818
      %v1821 = vrot.slane %v1769, 6
      %v1822 = vsel %vm630, %v1821, %v1820
      %v1823 = vrot.slane %v1773, 5
      %v1824 = vsel %vm633, %v1823, %v1822
      %v1825 = vrot.slane %v1777, 4
      %v1826 = vsel %vm636, %v1825, %v1824
      %v1827 = vrot.slane %v1750, 3
      %v1828 = vrot.slane %v1754, 2
      %v1829 = vsel %vm618, %v1828, %v1827
      %v1830 = vrot.slane %v1758, 1
      %v1831 = vsel %vm621, %v1830, %v1829
      %v1832 = vsel %vm624, %v1762, %v1831
      %v1833 = vrot.slane %v1766, 7
      %v1834 = vsel %vm627, %v1833, %v1832
      %v1835 = vrot.slane %v1770, 6
      %v1836 = vsel %vm630, %v1835, %v1834
      %v1837 = vrot.slane %v1774, 5
      %v1838 = vsel %vm633, %v1837, %v1836
      %v1839 = vrot.slane %v1778, 4
      %v1840 = vsel %vm636, %v1839, %v1838
      %v1841 = vrot.slane %v1751, 3
      %v1842 = vrot.slane %v1755, 2
      %v1843 = vsel %vm618, %v1842, %v1841
      %v1844 = vrot.slane %v1759, 1
      %v1845 = vsel %vm621, %v1844, %v1843
      %v1846 = vsel %vm624, %v1763, %v1845
      %v1847 = vrot.slane %v1767, 7
      %v1848 = vsel %vm627, %v1847, %v1846
      %v1849 = vrot.slane %v1771, 6
      %v1850 = vsel %vm630, %v1849, %v1848
      %v1851 = vrot.slane %v1775, 5
      %v1852 = vsel %vm633, %v1851, %v1850
      %v1853 = vrot.slane %v1779, 4
      %v1854 = vsel %vm636, %v1853, %v1852
      %v1855 = vrot.slane %v1752, 3
      %v1856 = vrot.slane %v1756, 2
      %v1857 = vsel %vm618, %v1856, %v1855
      %v1858 = vrot.slane %v1760, 1
      %v1859 = vsel %vm621, %v1858, %v1857
      %v1860 = vsel %vm624, %v1764, %v1859
      %v1861 = vrot.slane %v1768, 7
      %v1862 = vsel %vm627, %v1861, %v1860
      %v1863 = vrot.slane %v1772, 6
      %v1864 = vsel %vm630, %v1863, %v1862
      %v1865 = vrot.slane %v1776, 5
      %v1866 = vsel %vm633, %v1865, %v1864
      %v1867 = vrot.slane %v1780, 4
      %v1868 = vsel %vm636, %v1867, %v1866
      %1873 = vst [vmem:[#allocation2 + $0x200] sm:$0xff] %v1826
      %1874 = vst [vmem:[#allocation2 + $0x208] sm:$0xff] %v1840
      %1875 = vst [vmem:[#allocation2 + $0x210] sm:$0xff] %v1854
      %1876 = vst [vmem:[#allocation2 + $0x218] sm:$0xff] %v1868
      %1877 = vrot.lane.b32.xlu0 %v231, 119
      %v1878 = vpop.permute.xlu0 %1877
      %1879 = vrot.lane.b32.xlu0 %v232, 119
      %v1880 = vpop.permute.xlu0 %1879
      %1881 = vrot.lane.b32.xlu0 %v233, 119
      %v1882 = vpop.permute.xlu0 %1881
      %1883 = vrot.lane.b32.xlu0 %v234, 119
      %v1884 = vpop.permute.xlu0 %1883
      %1885 = vrot.lane.b32.xlu0 %v235, 119
      %v1886 = vpop.permute.xlu0 %1885
      %vm1887 = vcmp.lt.s32.totalorder %v247, 119
      %v1888 = vsel %vm1887, %v1884, %v1886
      %v1889 = vsel %vm1887, %v1882, %v1884
      %v1890 = vsel %vm1887, %v1880, %v1882
      %v1891 = vsel %vm1887, %v1878, %v1880
      %v1892 = vlaneseq
      %v1893 = vshrl.u32 %v1892, 7
      %v1894 = vsub.s32 3, %v1893
      %v1895 = vrot.slane %v328, %v1894
      %v1896 = vlaneseq
      %v1897 = vshrl.u32 %v1896, 7
      %v1898 = vsub.s32 3, %v1897
      %v1899 = vrot.slane %v329, %v1898
      %v1900 = vlaneseq
      %v1901 = vshrl.u32 %v1900, 7
      %v1902 = vsub.s32 3, %v1901
      %v1903 = vrot.slane %v330, %v1902
      %v1904 = vlaneseq
      %v1905 = vshrl.u32 %v1904, 7
      %v1906 = vsub.s32 3, %v1905
      %v1907 = vrot.slane %v331, %v1906
      %vm1908 = vcmp.eq.s32.totalorder %v1895, 1
      %vm1909 = vcmp.eq.s32.totalorder %v1899, 1
      %vm1910 = vcmp.eq.s32.totalorder %v1903, 1
      %vm1911 = vcmp.eq.s32.totalorder %v1907, 1
      %v1912 = vsel %vm1908, %v1891, 0.0
      %v1913 = vsel %vm1909, %v1890, 0.0
      %v1914 = vsel %vm1910, %v1889, 0.0
      %v1915 = vsel %vm1911, %v1888, 0.0
      %1916 = vst [vmem:[#allocation2 + $0x220] sm:$0xff] %v1912
      %1917 = vst [vmem:[#allocation2 + $0x228] sm:$0xff] %v1913
      %1918 = vst [vmem:[#allocation2 + $0x230] sm:$0xff] %v1914
      %1919 = vst [vmem:[#allocation2 + $0x238] sm:$0xff] %v1915
      %1920 = vrot.lane.b32.xlu0 %v235, 73
      %v1921 = vpop.permute.xlu0 %1920
      %v1922 = vsel %vm248, %v245, %v1921
      %vm1923 = vmand %vm1634, %vm758
      %vm1924 = vmand %vm1635, %vm759
      %vm1925 = vmand %vm1636, %vm760
      %vm1926 = vmand %vm1637, %vm761
      %v1927 = vsel %vm1923, 1, 0
      %v1928 = vsel %vm1924, 1, 0
      %v1929 = vsel %vm1925, 1, 0
      %v1930 = vsel %vm1926, 1, 0
      %v1931 = vlaneseq
      %v1932 = vshrl.u32 %v1931, 7
      %v1933 = vsub.s32 1, %v1932
      %v1934 = vrot.slane %v1927, %v1933
      %v1935 = vlaneseq
      %v1936 = vshrl.u32 %v1935, 7
      %v1937 = vsub.s32 1, %v1936
      %v1938 = vrot.slane %v1928, %v1937
      %v1939 = vlaneseq
      %v1940 = vshrl.u32 %v1939, 7
      %v1941 = vsub.s32 1, %v1940
      %v1942 = vrot.slane %v1929, %v1941
      %v1943 = vlaneseq
      %v1944 = vshrl.u32 %v1943, 7
      %v1945 = vsub.s32 1, %v1944
      %v1946 = vrot.slane %v1930, %v1945
      %vm1947 = vcmp.eq.s32.totalorder %v1934, 1
      %vm1948 = vcmp.eq.s32.totalorder %v1938, 1
      %vm1949 = vcmp.eq.s32.totalorder %v1942, 1
      %vm1950 = vcmp.eq.s32.totalorder %v1946, 1
      %v1951 = vsel %vm1947, %v251, 0.0
      %v1952 = vsel %vm1948, %v250, 0.0
      %v1953 = vsel %vm1949, %v249, 0.0
      %v1954 = vsel %vm1950, %v1922, 0.0
      %1955 = vst [vmem:[#allocation2 + $0x240] sm:$0xff] %v1951
      %1956 = vst [vmem:[#allocation2 + $0x248] sm:$0xff] %v1952
      %1957 = vst [vmem:[#allocation2 + $0x250] sm:$0xff] %v1953
      %1958 = vst [vmem:[#allocation2 + $0x258] sm:$0xff] %v1954
      %1959 = vrot.lane.b32.xlu0 %v235, 72
      %v1960 = vpop.permute.xlu0 %1959
      %v1961 = vsel %vm323, %v322, %v1960
      %v1962 = vlaneseq
      %v1963 = vshrl.u32 %v1962, 7
      %v1964 = vsub.s32 1, %v1963
      %v1965 = vrot.slane %v1638, %v1964
      %v1966 = vlaneseq
      %v1967 = vshrl.u32 %v1966, 7
      %v1968 = vsub.s32 1, %v1967
      %v1969 = vrot.slane %v1639, %v1968
      %v1970 = vlaneseq
      %v1971 = vshrl.u32 %v1970, 7
      %v1972 = vsub.s32 1, %v1971
      %v1973 = vrot.slane %v1640, %v1972
      %v1974 = vlaneseq
      %v1975 = vshrl.u32 %v1974, 7
      %v1976 = vsub.s32 1, %v1975
      %v1977 = vrot.slane %v1641, %v1976
      %vm1978 = vcmp.eq.s32.totalorder %v1965, 1
      %vm1979 = vcmp.eq.s32.totalorder %v1969, 1
      %vm1980 = vcmp.eq.s32.totalorder %v1973, 1
      %vm1981 = vcmp.eq.s32.totalorder %v1977, 1
      %v1982 = vsel %vm1978, %v326, 0.0
      %v1983 = vsel %vm1979, %v325, 0.0
      %v1984 = vsel %vm1980, %v324, 0.0
      %v1985 = vsel %vm1981, %v1961, 0.0
      %1986 = vst [vmem:[#allocation2 + $0x260] sm:$0xff] %v1982
      %1987 = vst [vmem:[#allocation2 + $0x268] sm:$0xff] %v1983
      %1988 = vst [vmem:[#allocation2 + $0x270] sm:$0xff] %v1984
      %1989 = vst [vmem:[#allocation2 + $0x278] sm:$0xff] %v1985
      %1990 = vrot.lane.b32.xlu0 %v235, 71
      %v1991 = vpop.permute.xlu0 %1990
      %v1992 = vsel %vm370, %v369, %v1991
      %vm1993 = vmand %vm1634, %vm273
      %vm1994 = vmand %vm1635, %vm274
      %vm1995 = vmand %vm1636, %vm275
      %vm1996 = vmand %vm1637, %vm276
      %v1997 = vsel %vm1993, 1, 0
      %v1998 = vsel %vm1994, 1, 0
      %v1999 = vsel %vm1995, 1, 0
      %v2000 = vsel %vm1996, 1, 0
      %v2001 = vlaneseq
      %v2002 = vshrl.u32 %v2001, 7
      %v2003 = vsub.s32 1, %v2002
      %v2004 = vrot.slane %v1997, %v2003
      %v2005 = vlaneseq
      %v2006 = vshrl.u32 %v2005, 7
      %v2007 = vsub.s32 1, %v2006
      %v2008 = vrot.slane %v1998, %v2007
      %v2009 = vlaneseq
      %v2010 = vshrl.u32 %v2009, 7
      %v2011 = vsub.s32 1, %v2010
      %v2012 = vrot.slane %v1999, %v2011
      %v2013 = vlaneseq
      %v2014 = vshrl.u32 %v2013, 7
      %v2015 = vsub.s32 1, %v2014
      %v2016 = vrot.slane %v2000, %v2015
      %vm2017 = vcmp.eq.s32.totalorder %v2004, 1
      %vm2018 = vcmp.eq.s32.totalorder %v2008, 1
      %vm2019 = vcmp.eq.s32.totalorder %v2012, 1
      %vm2020 = vcmp.eq.s32.totalorder %v2016, 1
      %v2021 = vsel %vm2017, %v373, 0.0
      %v2022 = vsel %vm2018, %v372, 0.0
      %v2023 = vsel %vm2019, %v371, 0.0
      %v2024 = vsel %vm2020, %v1992, 0.0
      %2025 = vst [vmem:[#allocation2 + $0x280] sm:$0xff] %v2021
      %2026 = vst [vmem:[#allocation2 + $0x288] sm:$0xff] %v2022
      %2027 = vst [vmem:[#allocation2 + $0x290] sm:$0xff] %v2023
      %2028 = vst [vmem:[#allocation2 + $0x298] sm:$0xff] %v2024
      %2029 = vrot.lane.b32.xlu0 %v235, 65
      %v2030 = vpop.permute.xlu0 %2029
      %v2031 = vsel %vm429, %v428, %v2030
      %v2032 = vlaneseq
      %v2033 = vshrl.u32 %v2032, 7
      %v2034 = vsub.s32 1, %v2033
      %v2035 = vrot.slane %v817, %v2034
      %v2036 = vlaneseq
      %v2037 = vshrl.u32 %v2036, 7
      %v2038 = vsub.s32 1, %v2037
      %v2039 = vrot.slane %v818, %v2038
      %v2040 = vlaneseq
      %v2041 = vshrl.u32 %v2040, 7
      %v2042 = vsub.s32 1, %v2041
      %v2043 = vrot.slane %v819, %v2042
      %v2044 = vlaneseq
      %v2045 = vshrl.u32 %v2044, 7
      %v2046 = vsub.s32 1, %v2045
      %v2047 = vrot.slane %v820, %v2046
      %vm2048 = vcmp.eq.s32.totalorder %v2035, 1
      %vm2049 = vcmp.eq.s32.totalorder %v2039, 1
      %vm2050 = vcmp.eq.s32.totalorder %v2043, 1
      %vm2051 = vcmp.eq.s32.totalorder %v2047, 1
      %v2052 = vsel %vm2048, %v432, 0.0
      %v2053 = vsel %vm2049, %v431, 0.0
      %v2054 = vsel %vm2050, %v430, 0.0
      %v2055 = vsel %vm2051, %v2031, 0.0
      %2056 = vst [vmem:[#allocation2 + $0x2a0] sm:$0xff] %v2052
      %2057 = vst [vmem:[#allocation2 + $0x2a8] sm:$0xff] %v2053
      %2058 = vst [vmem:[#allocation2 + $0x2b0] sm:$0xff] %v2054
      %2059 = vst [vmem:[#allocation2 + $0x2b8] sm:$0xff] %v2055
      %2060 = vrot.lane.b32.xlu0 %v235, 64
      %v2061 = vpop.permute.xlu0 %2060
      %v2062 = vsel %vm480, %v479, %v2061
      %v2064 = vrot.slane %v2062, 7
      %v2065 = vrot.slane %v2062, 1
      %v2066 = vrot.slane %v2062, 2
      %v2067 = vrot.slane %v2062, 3
      %v2068 = vrot.slane %v2062, 4
      %v2069 = vrot.slane %v2062, 5
      %v2070 = vrot.slane %v2062, 6
      %v2079 = vsel %vm485, %v518, 0.0
      %v2080 = vsel %vm486, %v519, 0.0
      %v2081 = vsel %vm487, %v520, 0.0
      %v2082 = vsel %vm488, %v2064, 0.0
      %v2083 = vsel %vm485, %v483, 0.0
      %v2084 = vsel %vm486, %v482, 0.0
      %v2085 = vsel %vm487, %v481, 0.0
      %v2086 = vsel %vm488, %v2062, 0.0
      %v2087 = vsel %vm485, %v494, 0.0
      %v2088 = vsel %vm486, %v495, 0.0
      %v2089 = vsel %vm487, %v496, 0.0
      %v2090 = vsel %vm488, %v2065, 0.0
      %v2091 = vsel %vm485, %v498, 0.0
      %v2092 = vsel %vm486, %v499, 0.0
      %v2093 = vsel %vm487, %v500, 0.0
      %v2094 = vsel %vm488, %v2066, 0.0
      %v2095 = vsel %vm485, %v502, 0.0
      %v2096 = vsel %vm486, %v503, 0.0
      %v2097 = vsel %vm487, %v504, 0.0
      %v2098 = vsel %vm488, %v2067, 0.0
      %v2099 = vsel %vm485, %v506, 0.0
      %v2100 = vsel %vm486, %v507, 0.0
      %v2101 = vsel %vm487, %v508, 0.0
      %v2102 = vsel %vm488, %v2068, 0.0
      %v2103 = vsel %vm485, %v510, 0.0
      %v2104 = vsel %vm486, %v511, 0.0
      %v2105 = vsel %vm487, %v512, 0.0
      %v2106 = vsel %vm488, %v2069, 0.0
      %v2107 = vsel %vm485, %v514, 0.0
      %v2108 = vsel %vm486, %v515, 0.0
      %v2109 = vsel %vm487, %v516, 0.0
      %v2110 = vsel %vm488, %v2070, 0.0
      %v2143 = vrot.slane %v2079, 1
      %v2144 = vsel %vm618, %v2083, %v2143
      %v2145 = vrot.slane %v2087, 7
      %v2146 = vsel %vm621, %v2145, %v2144
      %v2147 = vrot.slane %v2091, 6
      %v2148 = vsel %vm624, %v2147, %v2146
      %v2149 = vrot.slane %v2095, 5
      %v2150 = vsel %vm627, %v2149, %v2148
      %v2151 = vrot.slane %v2099, 4
      %v2152 = vsel %vm630, %v2151, %v2150
      %v2153 = vrot.slane %v2103, 3
      %v2154 = vsel %vm633, %v2153, %v2152
      %v2155 = vrot.slane %v2107, 2
      %v2156 = vsel %vm636, %v2155, %v2154
      %v2157 = vrot.slane %v2080, 1
      %v2158 = vsel %vm618, %v2084, %v2157
      %v2159 = vrot.slane %v2088, 7
      %v2160 = vsel %vm621, %v2159, %v2158
      %v2161 = vrot.slane %v2092, 6
      %v2162 = vsel %vm624, %v2161, %v2160
      %v2163 = vrot.slane %v2096, 5
      %v2164 = vsel %vm627, %v2163, %v2162
      %v2165 = vrot.slane %v2100, 4
      %v2166 = vsel %vm630, %v2165, %v2164
      %v2167 = vrot.slane %v2104, 3
      %v2168 = vsel %vm633, %v2167, %v2166
      %v2169 = vrot.slane %v2108, 2
      %v2170 = vsel %vm636, %v2169, %v2168
      %v2171 = vrot.slane %v2081, 1
      %v2172 = vsel %vm618, %v2085, %v2171
      %v2173 = vrot.slane %v2089, 7
      %v2174 = vsel %vm621, %v2173, %v2172
      %v2175 = vrot.slane %v2093, 6
      %v2176 = vsel %vm624, %v2175, %v2174
      %v2177 = vrot.slane %v2097, 5
      %v2178 = vsel %vm627, %v2177, %v2176
      %v2179 = vrot.slane %v2101, 4
      %v2180 = vsel %vm630, %v2179, %v2178
      %v2181 = vrot.slane %v2105, 3
      %v2182 = vsel %vm633, %v2181, %v2180
      %v2183 = vrot.slane %v2109, 2
      %v2184 = vsel %vm636, %v2183, %v2182
      %v2185 = vrot.slane %v2082, 1
      %v2186 = vsel %vm618, %v2086, %v2185
      %v2187 = vrot.slane %v2090, 7
      %v2188 = vsel %vm621, %v2187, %v2186
      %v2189 = vrot.slane %v2094, 6
      %v2190 = vsel %vm624, %v2189, %v2188
      %v2191 = vrot.slane %v2098, 5
      %v2192 = vsel %vm627, %v2191, %v2190
      %v2193 = vrot.slane %v2102, 4
      %v2194 = vsel %vm630, %v2193, %v2192
      %v2195 = vrot.slane %v2106, 3
      %v2196 = vsel %vm633, %v2195, %v2194
      %v2197 = vrot.slane %v2110, 2
      %v2198 = vsel %vm636, %v2197, %v2196
      %2203 = vst [vmem:[#allocation2 + $0x2c0] sm:$0xff] %v2156
      %2204 = vst [vmem:[#allocation2 + $0x2c8] sm:$0xff] %v2170
      %2205 = vst [vmem:[#allocation2 + $0x2d0] sm:$0xff] %v2184
      %2206 = vst [vmem:[#allocation2 + $0x2d8] sm:$0xff] %v2198
      %2207 = vrot.lane.b32.xlu0 %v235, 63
      %v2208 = vpop.permute.xlu0 %2207
      %v2209 = vsel %vm698, %v697, %v2208
      %v2210 = vlaneseq
      %v2211 = vshrl.u32 %v2210, 7
      %v2212 = vsub.s32 1, %v2211
      %v2213 = vrot.slane %v438, %v2212
      %v2214 = vlaneseq
      %v2215 = vshrl.u32 %v2214, 7
      %v2216 = vsub.s32 1, %v2215
      %v2217 = vrot.slane %v439, %v2216
      %v2218 = vlaneseq
      %v2219 = vshrl.u32 %v2218, 7
      %v2220 = vsub.s32 1, %v2219
      %v2221 = vrot.slane %v440, %v2220
      %v2222 = vlaneseq
      %v2223 = vshrl.u32 %v2222, 7
      %v2224 = vsub.s32 1, %v2223
      %v2225 = vrot.slane %v441, %v2224
      %vm2226 = vcmp.eq.s32.totalorder %v2213, 1
      %vm2227 = vcmp.eq.s32.totalorder %v2217, 1
      %vm2228 = vcmp.eq.s32.totalorder %v2221, 1
      %vm2229 = vcmp.eq.s32.totalorder %v2225, 1
      %v2230 = vsel %vm2226, %v701, 0.0
      %v2231 = vsel %vm2227, %v700, 0.0
      %v2232 = vsel %vm2228, %v699, 0.0
      %v2233 = vsel %vm2229, %v2209, 0.0
      %2234 = vst [vmem:[#allocation2 + $0x2e0] sm:$0xff] %v2230
      %2235 = vst [vmem:[#allocation2 + $0x2e8] sm:$0xff] %v2231
      %2236 = vst [vmem:[#allocation2 + $0x2f0] sm:$0xff] %v2232
      %2237 = vst [vmem:[#allocation2 + $0x2f8] sm:$0xff] %v2233
      %2238 = vrot.lane.b32.xlu0 %v235, 57
      %v2239 = vpop.permute.xlu0 %2238
      %v2240 = vsel %vm749, %v748, %v2239
      %vm2241 = vmand %vm265, %vm758
      %vm2242 = vmand %vm266, %vm759
      %vm2243 = vmand %vm267, %vm760
      %vm2244 = vmand %vm268, %vm761
      %v2245 = vsel %vm2241, 1, 0
      %v2246 = vsel %vm2242, 1, 0
      %v2247 = vsel %vm2243, 1, 0
      %v2248 = vsel %vm2244, 1, 0
      %v2249 = vlaneseq
      %v2250 = vshrl.u32 %v2249, 7
      %v2251 = vsub.s32 1, %v2250
      %v2252 = vrot.slane %v2245, %v2251
      %v2253 = vlaneseq
      %v2254 = vshrl.u32 %v2253, 7
      %v2255 = vsub.s32 1, %v2254
      %v2256 = vrot.slane %v2246, %v2255
      %v2257 = vlaneseq
      %v2258 = vshrl.u32 %v2257, 7
      %v2259 = vsub.s32 1, %v2258
      %v2260 = vrot.slane %v2247, %v2259
      %v2261 = vlaneseq
      %v2262 = vshrl.u32 %v2261, 7
      %v2263 = vsub.s32 1, %v2262
      %v2264 = vrot.slane %v2248, %v2263
      %vm2265 = vcmp.eq.s32.totalorder %v2252, 1
      %vm2266 = vcmp.eq.s32.totalorder %v2256, 1
      %vm2267 = vcmp.eq.s32.totalorder %v2260, 1
      %vm2268 = vcmp.eq.s32.totalorder %v2264, 1
      %v2269 = vsel %vm2265, %v752, 0.0
      %v2270 = vsel %vm2266, %v751, 0.0
      %v2271 = vsel %vm2267, %v750, 0.0
      %v2272 = vsel %vm2268, %v2240, 0.0
      %2273 = vst [vmem:[#allocation2 + $0x300] sm:$0xff] %v2269
      %2274 = vst [vmem:[#allocation2 + $0x308] sm:$0xff] %v2270
      %2275 = vst [vmem:[#allocation2 + $0x310] sm:$0xff] %v2271
      %2276 = vst [vmem:[#allocation2 + $0x318] sm:$0xff] %v2272
      %2277 = vrot.lane.b32.xlu0 %v235, 56
      %v2278 = vpop.permute.xlu0 %2277
      %v2279 = vsel %vm812, %v811, %v2278
      %v2280 = vlaneseq
      %v2281 = vshrl.u32 %v2280, 7
      %v2282 = vsub.s32 1, %v2281
      %v2283 = vrot.slane %v328, %v2282
      %v2284 = vlaneseq
      %v2285 = vshrl.u32 %v2284, 7
      %v2286 = vsub.s32 1, %v2285
      %v2287 = vrot.slane %v329, %v2286
      %v2288 = vlaneseq
      %v2289 = vshrl.u32 %v2288, 7
      %v2290 = vsub.s32 1, %v2289
      %v2291 = vrot.slane %v330, %v2290
      %v2292 = vlaneseq
      %v2293 = vshrl.u32 %v2292, 7
      %v2294 = vsub.s32 1, %v2293
      %v2295 = vrot.slane %v331, %v2294
      %vm2296 = vcmp.eq.s32.totalorder %v2283, 1
      %vm2297 = vcmp.eq.s32.totalorder %v2287, 1
      %vm2298 = vcmp.eq.s32.totalorder %v2291, 1
      %vm2299 = vcmp.eq.s32.totalorder %v2295, 1
      %v2300 = vsel %vm2296, %v815, 0.0
      %v2301 = vsel %vm2297, %v814, 0.0
      %v2302 = vsel %vm2298, %v813, 0.0
      %v2303 = vsel %vm2299, %v2279, 0.0
      %2304 = vst [vmem:[#allocation2 + $0x320] sm:$0xff] %v2300
      %2305 = vst [vmem:[#allocation2 + $0x328] sm:$0xff] %v2301
      %2306 = vst [vmem:[#allocation2 + $0x330] sm:$0xff] %v2302
      %2307 = vst [vmem:[#allocation2 + $0x338] sm:$0xff] %v2303
      %2308 = vrot.lane.b32.xlu0 %v235, 55
      %v2309 = vpop.permute.xlu0 %2308
      %v2310 = vsel %vm859, %v858, %v2309
      %v2311 = vlaneseq
      %v2312 = vshrl.u32 %v2311, 7
      %v2313 = vsub.s32 1, %v2312
      %v2314 = vrot.slane %v281, %v2313
      %v2315 = vlaneseq
      %v2316 = vshrl.u32 %v2315, 7
      %v2317 = vsub.s32 1, %v2316
      %v2318 = vrot.slane %v282, %v2317
      %v2319 = vlaneseq
      %v2320 = vshrl.u32 %v2319, 7
      %v2321 = vsub.s32 1, %v2320
      %v2322 = vrot.slane %v283, %v2321
      %v2323 = vlaneseq
      %v2324 = vshrl.u32 %v2323, 7
      %v2325 = vsub.s32 1, %v2324
      %v2326 = vrot.slane %v284, %v2325
      %vm2327 = vcmp.eq.s32.totalorder %v2314, 1
      %vm2328 = vcmp.eq.s32.totalorder %v2318, 1
      %vm2329 = vcmp.eq.s32.totalorder %v2322, 1
      %vm2330 = vcmp.eq.s32.totalorder %v2326, 1
      %v2331 = vsel %vm2327, %v862, 0.0
      %v2332 = vsel %vm2328, %v861, 0.0
      %v2333 = vsel %vm2329, %v860, 0.0
      %v2334 = vsel %vm2330, %v2310, 0.0
      %2335 = vst [vmem:[#allocation2 + $0x340] sm:$0xff] %v2331
      %2336 = vst [vmem:[#allocation2 + $0x348] sm:$0xff] %v2332
      %2337 = vst [vmem:[#allocation2 + $0x350] sm:$0xff] %v2333
      %2338 = vst [vmem:[#allocation2 + $0x358] sm:$0xff] %v2334
      %v2339 = vld [vmem:[%s1] sm:$0xff]
      %v2340 = vld [vmem:[%s1 + $0x8] sm:$0xff]
      %v2341 = vld [vmem:[#allocation2] sm:$0xff]
      %v2342 = vld [vmem:[#allocation2 + $0x8] sm:$0xff]
      %v2343 = vld [vmem:[#allocation2 + $0x10] sm:$0xff]
      %v2344 = vld [vmem:[#allocation2 + $0x18] sm:$0xff]
      %v2345 = vld [vmem:[#allocation2 + $0x20] sm:$0xff]
      %v2346 = vld [vmem:[#allocation2 + $0x28] sm:$0xff]
      %v2347 = vld [vmem:[#allocation2 + $0x30] sm:$0xff]
      %v2348 = vld [vmem:[#allocation2 + $0x38] sm:$0xff]
      %v2349 = vld [vmem:[#allocation2 + $0x40] sm:$0xff]
      %v2350 = vld [vmem:[#allocation2 + $0x48] sm:$0xff]
      %v2351 = vld [vmem:[#allocation2 + $0x50] sm:$0xff]
      %v2352 = vld [vmem:[#allocation2 + $0x58] sm:$0xff]
      %v2353 = vld [vmem:[#allocation2 + $0x60] sm:$0xff]
      %v2354 = vld [vmem:[#allocation2 + $0x68] sm:$0xff]
      %v2355 = vld [vmem:[#allocation2 + $0x70] sm:$0xff]
      %v2356 = vld [vmem:[#allocation2 + $0x78] sm:$0xff]
      %v2357 = vld [vmem:[#allocation2 + $0x80] sm:$0xff]
      %v2358 = vld [vmem:[#allocation2 + $0x88] sm:$0xff]
      %v2359 = vld [vmem:[#allocation2 + $0x90] sm:$0xff]
      %v2360 = vld [vmem:[#allocation2 + $0x98] sm:$0xff]
      %v2361 = vld [vmem:[#allocation2 + $0xa0] sm:$0xff]
      %v2362 = vld [vmem:[#allocation2 + $0xa8] sm:$0xff]
      %v2363 = vld [vmem:[#allocation2 + $0xb0] sm:$0xff]
      %v2364 = vld [vmem:[#allocation2 + $0xb8] sm:$0xff]
      %v2365 = vld [vmem:[#allocation2 + $0xc0] sm:$0xff]
      %v2366 = vld [vmem:[#allocation2 + $0xc8] sm:$0xff]
      %v2367 = vld [vmem:[#allocation2 + $0xd0] sm:$0xff]
      %v2368 = vld [vmem:[#allocation2 + $0xd8] sm:$0xff]
      %v2369 = vld [vmem:[#allocation2 + $0xe0] sm:$0xff]
      %v2370 = vld [vmem:[#allocation2 + $0xe8] sm:$0xff]
      %v2371 = vld [vmem:[#allocation2 + $0xf0] sm:$0xff]
      %v2372 = vld [vmem:[#allocation2 + $0xf8] sm:$0xff]
      %v2373 = vld [vmem:[#allocation2 + $0x100] sm:$0xff]
      %v2374 = vld [vmem:[#allocation2 + $0x108] sm:$0xff]
      %v2375 = vld [vmem:[#allocation2 + $0x110] sm:$0xff]
      %v2376 = vld [vmem:[#allocation2 + $0x118] sm:$0xff]
      %v2377 = vld [vmem:[#allocation2 + $0x120] sm:$0xff]
      %v2378 = vld [vmem:[#allocation2 + $0x128] sm:$0xff]
      %v2379 = vld [vmem:[#allocation2 + $0x130] sm:$0xff]
      %v2380 = vld [vmem:[#allocation2 + $0x138] sm:$0xff]
      %v2381 = vld [vmem:[#allocation2 + $0x140] sm:$0xff]
      %v2382 = vld [vmem:[#allocation2 + $0x148] sm:$0xff]
      %v2383 = vld [vmem:[#allocation2 + $0x150] sm:$0xff]
      %v2384 = vld [vmem:[#allocation2 + $0x158] sm:$0xff]
      %v2385 = vld [vmem:[#allocation2 + $0x160] sm:$0xff]
      %v2386 = vld [vmem:[#allocation2 + $0x168] sm:$0xff]
      %v2387 = vld [vmem:[#allocation2 + $0x170] sm:$0xff]
      %v2388 = vld [vmem:[#allocation2 + $0x178] sm:$0xff]
      %v2389 = vld [vmem:[#allocation2 + $0x180] sm:$0xff]
      %v2390 = vld [vmem:[#allocation2 + $0x188] sm:$0xff]
      %v2391 = vld [vmem:[#allocation2 + $0x190] sm:$0xff]
      %v2392 = vld [vmem:[#allocation2 + $0x198] sm:$0xff]
      %v2393 = vld [vmem:[#allocation2 + $0x1a0] sm:$0xff]
      %v2394 = vld [vmem:[#allocation2 + $0x1a8] sm:$0xff]
      %v2395 = vld [vmem:[#allocation2 + $0x1b0] sm:$0xff]
      %v2396 = vld [vmem:[#allocation2 + $0x1b8] sm:$0xff]
      %v2397 = vld [vmem:[#allocation2 + $0x1c0] sm:$0xff]
      %v2398 = vld [vmem:[#allocation2 + $0x1c8] sm:$0xff]
      %v2399 = vld [vmem:[#allocation2 + $0x1d0] sm:$0xff]
      %v2400 = vld [vmem:[#allocation2 + $0x1d8] sm:$0xff]
      %v2401 = vld [vmem:[#allocation2 + $0x1e0] sm:$0xff]
      %v2402 = vld [vmem:[#allocation2 + $0x1e8] sm:$0xff]
      %v2403 = vld [vmem:[#allocation2 + $0x1f0] sm:$0xff]
      %v2404 = vld [vmem:[#allocation2 + $0x1f8] sm:$0xff]
      %v2405 = vld [vmem:[#allocation2 + $0x200] sm:$0xff]
      %v2406 = vld [vmem:[#allocation2 + $0x208] sm:$0xff]
      %v2407 = vld [vmem:[#allocation2 + $0x210] sm:$0xff]
      %v2408 = vld [vmem:[#allocation2 + $0x218] sm:$0xff]
      %v2409 = vld [vmem:[#allocation2 + $0x220] sm:$0xff]
      %v2410 = vld [vmem:[#allocation2 + $0x228] sm:$0xff]
      %v2411 = vld [vmem:[#allocation2 + $0x230] sm:$0xff]
      %v2412 = vld [vmem:[#allocation2 + $0x238] sm:$0xff]
      %v2413 = vld [vmem:[#allocation2 + $0x240] sm:$0xff]
      %v2414 = vld [vmem:[#allocation2 + $0x248] sm:$0xff]
      %v2415 = vld [vmem:[#allocation2 + $0x250] sm:$0xff]
      %v2416 = vld [vmem:[#allocation2 + $0x258] sm:$0xff]
      %v2417 = vld [vmem:[#allocation2 + $0x260] sm:$0xff]
      %v2418 = vld [vmem:[#allocation2 + $0x268] sm:$0xff]
      %v2419 = vld [vmem:[#allocation2 + $0x270] sm:$0xff]
      %v2420 = vld [vmem:[#allocation2 + $0x278] sm:$0xff]
      %v2421 = vld [vmem:[#allocation2 + $0x280] sm:$0xff]
      %v2422 = vld [vmem:[#allocation2 + $0x288] sm:$0xff]
      %v2423 = vld [vmem:[#allocation2 + $0x290] sm:$0xff]
      %v2424 = vld [vmem:[#allocation2 + $0x298] sm:$0xff]
      %v2425 = vld [vmem:[#allocation2 + $0x2a0] sm:$0xff]
      %v2426 = vld [vmem:[#allocation2 + $0x2a8] sm:$0xff]
      %v2427 = vld [vmem:[#allocation2 + $0x2b0] sm:$0xff]
      %v2428 = vld [vmem:[#allocation2 + $0x2b8] sm:$0xff]
      %v2429 = vld [vmem:[#allocation2 + $0x2c0] sm:$0xff]
      %v2430 = vld [vmem:[#allocation2 + $0x2c8] sm:$0xff]
      %v2431 = vld [vmem:[#allocation2 + $0x2d0] sm:$0xff]
      %v2432 = vld [vmem:[#allocation2 + $0x2d8] sm:$0xff]
      %v2433 = vld [vmem:[#allocation2 + $0x2e0] sm:$0xff]
      %v2434 = vld [vmem:[#allocation2 + $0x2e8] sm:$0xff]
      %v2435 = vld [vmem:[#allocation2 + $0x2f0] sm:$0xff]
      %v2436 = vld [vmem:[#allocation2 + $0x2f8] sm:$0xff]
      %v2437 = vld [vmem:[#allocation2 + $0x300] sm:$0xff]
      %v2438 = vld [vmem:[#allocation2 + $0x308] sm:$0xff]
      %v2439 = vld [vmem:[#allocation2 + $0x310] sm:$0xff]
      %v2440 = vld [vmem:[#allocation2 + $0x318] sm:$0xff]
      %v2441 = vld [vmem:[#allocation2 + $0x320] sm:$0xff]
      %v2442 = vld [vmem:[#allocation2 + $0x328] sm:$0xff]
      %v2443 = vld [vmem:[#allocation2 + $0x330] sm:$0xff]
      %v2444 = vld [vmem:[#allocation2 + $0x338] sm:$0xff]
      %v2445 = vld [vmem:[#allocation2 + $0x340] sm:$0xff]
      %v2446 = vld [vmem:[#allocation2 + $0x348] sm:$0xff]
      %v2447 = vld [vmem:[#allocation2 + $0x350] sm:$0xff]
      %v2448 = vld [vmem:[#allocation2 + $0x358] sm:$0xff]
      %vm2449 = vcmask 719872
      %v2451 = vsel %vm2449, %v2340, 0
      %2453 = vmatprep.subr.mxu0 %v2342
      %2454 = vmatpush1.msra.mxu0 %v2341
      %2455 = vmatprep.subr.mxu0 %v2346
      %2456 = vmatpush1.msra.mxu0 %v2345
      %2457 = vmatprep.subr.mxu0 %v2350
      %2458 = vmatpush1.msra.mxu0 %v2349
      %2459 = vmatprep.subr.mxu0 %v2354
      %2460 = vmatpush1.msra.mxu0 %v2353
      %2461 = vmatprep.subr.mxu0 %v2358
      %2462 = vmatpush1.msra.mxu0 %v2357
      %2463 = vmatprep.subr.mxu0 %v2362
      %2464 = vmatpush1.msra.mxu0 %v2361
      %2465 = vmatprep.subr.mxu0 %v2366
      %2466 = vmatpush1.msra.mxu0 %v2365
      %2467 = vmatprep.subr.mxu0 %v2370
      %2468 = vmatpush1.msra.mxu0 %v2369
      %2469 = vmatprep.subr.mxu0 %v2374
      %2470 = vmatpush1.msra.mxu0 %v2373
      %2471 = vmatprep.subr.mxu0 %v2378
      %2472 = vmatpush1.msra.mxu0 %v2377
      %2473 = vmatprep.subr.mxu0 %v2382
      %2474 = vmatpush1.msra.mxu0 %v2381
      %2475 = vmatprep.subr.mxu0 %v2386
      %2476 = vmatpush1.msra.mxu0 %v2385
      %2477 = vmatprep.subr.mxu0 %v2390
      %2478 = vmatpush1.msra.mxu0 %v2389
      %2479 = vmatprep.subr.mxu0 %v2394
      %2480 = vmatpush1.msra.mxu0 %v2393
      %2481 = vmatprep.subr.mxu0 %v2398
      %2482 = vmatpush1.msra.mxu0 %v2397
      %2483 = vmatprep.subr.mxu0 %v2402
      %2484 = vmatpush1.msra.mxu0 %v2401
      %2485 = vmatprep.subr.mxu0 %v2406
      %2486 = vmatpush1.msra.mxu0 %v2405
      %2487 = vmatprep.subr.mxu0 %v2410
      %2488 = vmatpush1.msra.mxu0 %v2409
      %2489 = vmatprep.subr.mxu0 %v2414
      %2490 = vmatpush1.msra.mxu0 %v2413
      %2491 = vmatprep.subr.mxu0 %v2418
      %2492 = vmatpush1.msra.mxu0 %v2417
      %2493 = vmatprep.subr.mxu0 %v2422
      %2494 = vmatpush1.msra.mxu0 %v2421
      %2495 = vmatprep.subr.mxu0 %v2426
      %2496 = vmatpush1.msra.mxu0 %v2425
      %2497 = vmatprep.subr.mxu0 %v2430
      %2498 = vmatpush1.msra.mxu0 %v2429
      %2499 = vmatprep.subr.mxu0 %v2434
      %2500 = vmatpush1.msra.mxu0 %v2433
      %2501 = vmatprep.subr.mxu0 %v2438
      %2502 = vmatpush1.msra.mxu0 %v2437
      %2503 = vmatprep.subr.mxu0 %v2442
      %2504 = vmatpush1.msra.mxu0 %v2441
      %2505 = vmatprep.subr.mxu0 %v2446
      %2506 = vmatpush1.msra.mxu0 %v2445
      %2507 = vmatprep.subr.mxu0 0.0
      %2508 = vmatpush1.msra.mxu0 0.0
      %2509 = vmatprep.subr.mxu0 0.0
      %2510 = vmatpush1.msra.mxu0 0.0
      %2511 = vmatprep.subr.mxu0 0.0
      %2512 = vmatpush1.msra.mxu0 0.0
      %2513 = vmatprep.subr.mxu0 0.0
      %2514 = vmatpush1.msra.mxu0 0.0
      %2515 = vmatprep.subr.mxu0 0.0
      %2516 = vmatpush1.msra.mxu0 0.0
      %2517 = vmatprep.mubr.f32.mxu0 %v2451
      %2518 = vmatmul.mubr.f32.gmra.mrb[0].mxu0 %v2339
      %v2519 = vpop.f32.mrb[0].mxu0
      %v2520 = vadd.f32 0.0, %v2519
      %v2521 = vpop.f32.mrb[0].mxu0
      %v2522 = vadd.f32 0.0, %v2521
      %2523 = vdwg.mxu0
      %2524 = vmatprep.subr.mxu0 %v2344
      %2525 = vmatpush1.msra.mxu0 %v2343
      %2526 = vmatprep.subr.mxu0 %v2348
      %2527 = vmatpush1.msra.mxu0 %v2347
      %2528 = vmatprep.subr.mxu0 %v2352
      %2529 = vmatpush1.msra.mxu0 %v2351
      %2530 = vmatprep.subr.mxu0 %v2356
      %2531 = vmatpush1.msra.mxu0 %v2355
      %2532 = vmatprep.subr.mxu0 %v2360
      %2533 = vmatpush1.msra.mxu0 %v2359
      %2534 = vmatprep.subr.mxu0 %v2364
      %2535 = vmatpush1.msra.mxu0 %v2363
      %2536 = vmatprep.subr.mxu0 %v2368
      %2537 = vmatpush1.msra.mxu0 %v2367
      %2538 = vmatprep.subr.mxu0 %v2372
      %2539 = vmatpush1.msra.mxu0 %v2371
      %2540 = vmatprep.subr.mxu0 %v2376
      %2541 = vmatpush1.msra.mxu0 %v2375
      %2542 = vmatprep.subr.mxu0 %v2380
      %2543 = vmatpush1.msra.mxu0 %v2379
      %2544 = vmatprep.subr.mxu0 %v2384
      %2545 = vmatpush1.msra.mxu0 %v2383
      %2546 = vmatprep.subr.mxu0 %v2388
      %2547 = vmatpush1.msra.mxu0 %v2387
      %2548 = vmatprep.subr.mxu0 %v2392
      %2549 = vmatpush1.msra.mxu0 %v2391
      %2550 = vmatprep.subr.mxu0 %v2396
      %2551 = vmatpush1.msra.mxu0 %v2395
      %2552 = vmatprep.subr.mxu0 %v2400
      %2553 = vmatpush1.msra.mxu0 %v2399
      %2554 = vmatprep.subr.mxu0 %v2404
      %2555 = vmatpush1.msra.mxu0 %v2403
      %2556 = vmatprep.subr.mxu0 %v2408
      %2557 = vmatpush1.msra.mxu0 %v2407
      %2558 = vmatprep.subr.mxu0 %v2412
      %2559 = vmatpush1.msra.mxu0 %v2411
      %2560 = vmatprep.subr.mxu0 %v2416
      %2561 = vmatpush1.msra.mxu0 %v2415
      %2562 = vmatprep.subr.mxu0 %v2420
      %2563 = vmatpush1.msra.mxu0 %v2419
      %2564 = vmatprep.subr.mxu0 %v2424
      %2565 = vmatpush1.msra.mxu0 %v2423
      %2566 = vmatprep.subr.mxu0 %v2428
      %2567 = vmatpush1.msra.mxu0 %v2427
      %2568 = vmatprep.subr.mxu0 %v2432
      %2569 = vmatpush1.msra.mxu0 %v2431
      %2570 = vmatprep.subr.mxu0 %v2436
      %2571 = vmatpush1.msra.mxu0 %v2435
      %2572 = vmatprep.subr.mxu0 %v2440
      %2573 = vmatpush1.msra.mxu0 %v2439
      %2574 = vmatprep.subr.mxu0 %v2444
      %2575 = vmatpush1.msra.mxu0 %v2443
      %2576 = vmatprep.subr.mxu0 %v2448
      %2577 = vmatpush1.msra.mxu0 %v2447
      %2578 = vmatprep.subr.mxu0 0.0
      %2579 = vmatpush1.msra.mxu0 0.0
      %2580 = vmatprep.subr.mxu0 0.0
      %2581 = vmatpush1.msra.mxu0 0.0
      %2582 = vmatprep.subr.mxu0 0.0
      %2583 = vmatpush1.msra.mxu0 0.0
      %2584 = vmatprep.subr.mxu0 0.0
      %2585 = vmatpush1.msra.mxu0 0.0
      %2586 = vmatprep.subr.mxu0 0.0
      %2587 = vmatpush1.msra.mxu0 0.0
      %2588 = vmatprep.mubr.f32.mxu0 %v2451
      %2589 = vmatmul.mubr.f32.gmra.mrb[0].mxu0 %v2339
      %v2590 = vpop.f32.mrb[0].mxu0
      %v2591 = vadd.f32 0.0, %v2590
      %v2592 = vpop.f32.mrb[0].mxu0
      %v2593 = vadd.f32 0.0, %v2592
      %2594 = vdwg.mxu0
      %v2595 = vpack.c.bf16 %v2520, %v2520
      %v2596 = vpack.c.bf16 %v2522, %v2522
      %v2597 = vpack.c.bf16 %v2591, %v2591
      %v2598 = vpack.c.bf16 %v2593, %v2593
      %v2603 = vunpack.c.l.b16 %v2595
      %v2604 = vunpack.c.l.b16 %v2596
      %v2605 = vunpack.c.l.b16 %v2597
      %v2606 = vunpack.c.l.b16 %v2598
      %v2607 = vpack.c.b16 %v2604, %v2603
      %v2608 = vpack.c.b16 %v2606, %v2605
      %2611 = vst [vmem:[%s210] sm:$0xff] %v2607
      %2612 = vst [vmem:[%s210 + $0x8] sm:$0xff] %v2608
      %v2613 = vadd.f32 %v2520, %v2522
      %v2614 = vadd.f32 %v2613, %v2591
      %v2615 = vadd.f32 %v2614, %v2593
      %2616 = vadd.xlane.f32.xlu0 %v2615
      %v2617 = vpop.xlane.xlu0 %2616
      %v2618 = vmul.f32 %v2617, 0.001953125
      %v2619 = vsub.f32 %v2520, %v2618
      %v2620 = vsub.f32 %v2522, %v2618
      %v2621 = vsub.f32 %v2591, %v2618
      %v2622 = vsub.f32 %v2593, %v2618
      %v2623 = vmul.f32 %v2619, %v2619
      %v2624 = vmul.f32 %v2620, %v2620
      %v2625 = vmul.f32 %v2621, %v2621
      %v2626 = vmul.f32 %v2622, %v2622
      %v2627 = vadd.f32 %v2623, %v2624
      %v2628 = vadd.f32 %v2627, %v2625
      %v2629 = vadd.f32 %v2628, %v2626
      %2630 = vadd.xlane.f32.xlu0 %v2629
      %v2631 = vpop.xlane.xlu0 %2630
      %vm2632 = vcmask 7168
      %v2633 = vsel %vm2632, %v2617, %v2631
      %vm2634 = vcmask 15360
      %2635 = vst.msk [vmem:[%s216] sm:$0xff] %vm2634, %v2633
      %s2636 = sadd.s32 %s16, 1
      %s2637 = smul.u32 4, %s2636
      %p2638 = scmp.lt.s32.totalorder %s2637, 15
      %s2639 = scalar_select %p2638, %s2637, 15
      %s2640 = smul.addr %s2639, 4
      %s2641 = scalar_lea.vmem %s3, %s2640
      %p2642 = scmp.lt.s32.totalorder %s16, 1
      %s2643 = scalar_select %p2642, %s16, 1
      %s2644 = smul.addr %s2643, 8
      %s2645 = scalar_lea.vmem %s4, %s2644
      // Predicated region
      $region33: #{single_decoder3d_forward.5} parent=31 // pred_check
        %p2646 = pneg %p104
      $region34: #{single_decoder3d_forward.5} parent=31 // pred_check_branch
        %2648 = sbr.rel (%p2646) target = $region36
      $region35: #{single_decoder3d_forward.5} parent=31 // pred_region
        %s2649 = sadd.s32 %s16, 1
        %s2650 = smul.u32 4, %s2649
      $region36: #{single_decoder3d_forward.5} parent=31 // pred_fallthru
        _
      // Predicated region
      $region37: #{single_decoder3d_forward.5} parent=31 // pred_check
        %p2651 = pneg %p130
      $region38: #{single_decoder3d_forward.5} parent=31 // pred_check_branch
        %2653 = sbr.rel (%p2651) target = $region40
      $region39: #{single_decoder3d_forward.5} parent=31 // pred_region
        _
      $region40: #{single_decoder3d_forward.5} parent=31 // pred_fallthru
        _
    $region32: #{single_decoder3d_forward.5} parent=5 // pred_fallthru
      _
    %p2654 = scmp.le.s32.totalorder 2, %s11
    // Predicated region
    $region41: #{single_decoder3d_forward.5} parent=5 // pred_check
      %p2655 = pneg %p2654
    $region42: #{single_decoder3d_forward.5} parent=5 // pred_check_branch
      %2657 = sbr.rel (%p2655) target = $region44
    $region43: #{single_decoder3d_forward.5} parent=5 // pred_region
      %s2658 = ssub.s32 %s11, 2
      // Predicated region
      $region45: #{single_decoder3d_forward.5} parent=43 // pred_check
        %p2659 = pneg %p110
      $region46: #{single_decoder3d_forward.5} parent=43 // pred_check_branch
        %2661 = sbr.rel (%p2659) target = $region48
      $region47: #{single_decoder3d_forward.5} parent=43 // pred_region
        %s2662 = sadd.s32 %s17, 1
        %s2663 = smul.u32 4, %s2662
        %p2664 = scmp.lt.s32.totalorder %s2663, 15
        %s2665 = scalar_select %p2664, %s2663, 15
        %s2666 = smul.addr %s2665, 4
        %s2667 = scalar_lea.vmem %s3, %s2666
      $region48: #{single_decoder3d_forward.5} parent=43 // pred_fallthru
        _
      // Predicated region
      $region49: #{single_decoder3d_forward.5} parent=43 // pred_check
        %p2668 = pneg %p136
      $region50: #{single_decoder3d_forward.5} parent=43 // pred_check_branch
        %2670 = sbr.rel (%p2668) target = $region52
      $region51: #{single_decoder3d_forward.5} parent=43 // pred_region
        %p2671 = scmp.lt.s32.totalorder %s17, 1
        %s2672 = scalar_select %p2671, %s17, 1
        %s2673 = smul.addr %s2672, 8
        %s2674 = scalar_lea.vmem %s4, %s2673
      $region52: #{single_decoder3d_forward.5} parent=43 // pred_fallthru
        _
    $region44: #{single_decoder3d_forward.5} parent=5 // pred_fallthru
      _
  $region6: #{single_decoder3d_forward.5} parent=0 // loop_footer
    %s15 = sadd.s32 1, %s11
  $region7: #{single_decoder3d_forward.5} parent=0 // loop_footer_branch
    %10 = sbr.rel target = $region3
  $region8: #{single_decoder3d_forward.5} parent=0 // loop_exit
    _

// kernel: single_decoder3d_forward.7
$region0: #{single_decoder3d_forward.7}
  #allocation0 [shape = 'u32[]', space=smem, size = 0x4, offset = 0x4, fixed_abs, tag = 'smem constant byte address 0x4 - core index']
  #allocation1 [shape = 'u32[144,128]{1,0:T(1,128)}', space=vmem, size = 0x12000, scoped, tag = 'internal scratch']
  %s0 = inlined_call_operand.vmem [shape: bf16[8,1024], index: 0, kind: input, shape index: {}]
  %s1 = inlined_call_operand.vmem [shape: f32[8,1], index: 1, kind: input, shape index: {}]
  %s2 = inlined_call_operand.vmem [shape: f32[8,1], index: 2, kind: input, shape index: {}]
  %s3 = inlined_call_operand.vmem [shape: f32[4,1024], index: 3, kind: output, shape index: {}]
  %s4 = sld [smem:[#allocation0]]
  $region45: #{single_decoder3d_forward.7} parent=0
    _
  %s6 = ssub.s32 1, %s4
  %s7 = scalar_select 0, %s6, %s4
  loop: start=0, step=1, limit=4
  $region2: #{single_decoder3d_forward.7} parent=0 // loop_pre_header
    _
  $region3: #{single_decoder3d_forward.7} parent=0 // loop_header
    %s9 = sphi 0, %s13
    %p10 = scmp.ge.s32.totalorder %s9, 4
    %s19 = sphi 0, %s21
    %s22 = sphi 0, %s19
    %s23 = sphi 0, %s22
    %s39 = sphi 0, %s23
    %s43 = sphi 0, %s43
    %s45 = sphi 0, %s43
    %s46 = sphi 0, %s45
    %s60 = sphi 0, %s46
    %s64 = sphi 0, %s64
    %s66 = sphi 0, %s64
    %s67 = sphi 0, %s66
    %s81 = sphi 0, %s67
    %s87 = sphi 0, %s89
    %s90 = sphi 0, %s87
    %s91 = sphi 0, %s90
    %s107 = sphi 0, %s91
  $region4: #{single_decoder3d_forward.7} parent=0 // loop_header_branch
    %12 = sbr.rel (%p10) target = $region8
  $region5: #{single_decoder3d_forward.7} parent=0 // loop_body
    %s14 = ssub.s32 %s9, 1
    %s15 = ssub.s32 %s9, 2
    %s16 = sadd.s32 %s9, 1
    %s17 = ssub.s32 %s9, %s16
    %p18 = scmp.eq.s32.totalorder %s17, 0
    %s20 = sadd.s32 %s19, 1
    %s21 = scalar_select %p18, %s19, %s20
    %p24 = pneg %p18
    %p25 = scmp.eq.s32.totalorder %s9, 1
    %p26 = por %p24, %p25
    %p27 = scmp.ne.s32.totalorder %s19, %s22
    %p28 = scmp.eq.s32.totalorder %s9, 0
    %p29 = por %p27, %p28
    %p30 = scmp.ne.s32.totalorder %s19, %s22
    %p31 = scmp.eq.s32.totalorder %s14, 1
    %p32 = por %p30, %p31
    %p33 = scmp.ne.s32.totalorder %s22, %s23
    %p34 = scmp.eq.s32.totalorder %s14, 0
    %p35 = por %p33, %p34
    %p36 = scmp.ne.s32.totalorder %s22, %s23
    %p37 = scmp.eq.s32.totalorder %s15, 1
    %p38 = por %p36, %p37
    %p40 = scmp.ne.s32.totalorder %s23, %s39
    %p41 = scmp.eq.s32.totalorder %s15, 0
    %p42 = por %p40, %p41
    %s44 = sadd.s32 %s43, 1
    %p47 = scmp.eq.s32.totalorder %s9, 1
    %p48 = scmp.ne.s32.totalorder %s43, %s45
    %p49 = scmp.eq.s32.totalorder %s9, 0
    %p50 = por %p48, %p49
    %p51 = scmp.ne.s32.totalorder %s43, %s45
    %p52 = scmp.eq.s32.totalorder %s14, 1
    %p53 = por %p51, %p52
    %p54 = scmp.ne.s32.totalorder %s45, %s46
    %p55 = scmp.eq.s32.totalorder %s14, 0
    %p56 = por %p54, %p55
    %p57 = scmp.ne.s32.totalorder %s45, %s46
    %p58 = scmp.eq.s32.totalorder %s15, 1
    %p59 = por %p57, %p58
    %p61 = scmp.ne.s32.totalorder %s46, %s60
    %p62 = scmp.eq.s32.totalorder %s15, 0
    %p63 = por %p61, %p62
    %s65 = sadd.s32 %s64, 1
    %p68 = scmp.eq.s32.totalorder %s9, 1
    %p69 = scmp.ne.s32.totalorder %s64, %s66
    %p70 = scmp.eq.s32.totalorder %s9, 0
    %p71 = por %p69, %p70
    %p72 = scmp.ne.s32.totalorder %s64, %s66
    %p73 = scmp.eq.s32.totalorder %s14, 1
    %p74 = por %p72, %p73
    %p75 = scmp.ne.s32.totalorder %s66, %s67
    %p76 = scmp.eq.s32.totalorder %s14, 0
    %p77 = por %p75, %p76
    %p78 = scmp.ne.s32.totalorder %s66, %s67
    %p79 = scmp.eq.s32.totalorder %s15, 1
    %p80 = por %p78, %p79
    %p82 = scmp.ne.s32.totalorder %s67, %s81
    %p83 = scmp.eq.s32.totalorder %s15, 0
    %p84 = por %p82, %p83
    %s85 = ssub.s32 %s9, %s16
    %p86 = scmp.eq.s32.totalorder %s85, 0
    %s88 = sadd.s32 %s87, 1
    %s89 = scalar_select %p86, %s87, %s88
    %p92 = pneg %p86
    %p93 = scmp.eq.s32.totalorder %s9, 1
    %p94 = por %p92, %p93
    %p95 = scmp.ne.s32.totalorder %s87, %s90
    %p96 = scmp.eq.s32.totalorder %s9, 0
    %p97 = por %p95, %p96
    %p98 = scmp.ne.s32.totalorder %s87, %s90
    %p99 = scmp.eq.s32.totalorder %s14, 1
    %p100 = por %p98, %p99
    %p101 = scmp.ne.s32.totalorder %s90, %s91
    %p102 = scmp.eq.s32.totalorder %s14, 0
    %p103 = por %p101, %p102
    %p104 = scmp.ne.s32.totalorder %s90, %s91
    %p105 = scmp.eq.s32.totalorder %s15, 1
    %p106 = por %p104, %p105
    %p108 = scmp.ne.s32.totalorder %s91, %s107
    %p109 = scmp.eq.s32.totalorder %s15, 0
    %p110 = por %p108, %p109
    %p111 = scmp.le.s32.totalorder 1, %s9
    %p112 = scmp.lt.s32.totalorder %s9, 3
    %p113 = pnand %p111, %p112
    %p114 = pneg %p113
    // Predicated region
    $region9: #{single_decoder3d_forward.7} parent=5 // pred_check
      _
    $region10: #{single_decoder3d_forward.7} parent=5 // pred_check_branch
      %116 = sbr.rel (%p113) target = $region12
    $region11: #{single_decoder3d_forward.7} parent=5 // pred_region
      %s117 = ssub.s32 %s9, 1
      // Predicated region
      $region13: #{single_decoder3d_forward.7} parent=11 // pred_check
        %p118 = pneg %p56
      $region14: #{single_decoder3d_forward.7} parent=11 // pred_check_branch
        %120 = sbr.rel (%p118) target = $region16
      $region15: #{single_decoder3d_forward.7} parent=11 // pred_region
        _
      $region16: #{single_decoder3d_forward.7} parent=11 // pred_fallthru
        _
      // Predicated region
      $region17: #{single_decoder3d_forward.7} parent=11 // pred_check
        %p121 = pneg %p77
      $region18: #{single_decoder3d_forward.7} parent=11 // pred_check_branch
        %123 = sbr.rel (%p121) target = $region20
      $region19: #{single_decoder3d_forward.7} parent=11 // pred_region
        _
      $region20: #{single_decoder3d_forward.7} parent=11 // pred_fallthru
        _
    $region12: #{single_decoder3d_forward.7} parent=5 // pred_fallthru
      _
    %p124 = scmp.lt.s32.totalorder %s9, 2
    // Predicated region
    $region21: #{single_decoder3d_forward.7} parent=5 // pred_check
      %p125 = pneg %p124
    $region22: #{single_decoder3d_forward.7} parent=5 // pred_check_branch
      %127 = sbr.rel (%p125) target = $region24
    $region23: #{single_decoder3d_forward.7} parent=5 // pred_region
      // Predicated region
      $region25: #{single_decoder3d_forward.7} parent=23 // pred_check
        %p128 = pneg %p29
      $region26: #{single_decoder3d_forward.7} parent=23 // pred_check_branch
        %130 = sbr.rel (%p128) target = $region28
      $region27: #{single_decoder3d_forward.7} parent=23 // pred_region
        %s131 = smul.u32 4, %s9
        %p132 = scmp.lt.s32.totalorder %s131, 7
        %s133 = scalar_select %p132, %s131, 7
        %s134 = smul.addr %s133, 4
        %s135 = scalar_lea.vmem %s0, %s134
        %s136 = smul.u32 4, %s9
      $region28: #{single_decoder3d_forward.7} parent=23 // pred_fallthru
        _
    $region24: #{single_decoder3d_forward.7} parent=5 // pred_fallthru
      _
    %p137 = scmp.le.s32.totalorder 1, %s9
    %p138 = scmp.lt.s32.totalorder %s9, 3
    %p139 = pnand %p137, %p138
    %p140 = pneg %p139
    // Predicated region
    $region29: #{single_decoder3d_forward.7} parent=5 // pred_check
      _
    $region30: #{single_decoder3d_forward.7} parent=5 // pred_check_branch
      %142 = sbr.rel (%p139) target = $region32
    $region31: #{single_decoder3d_forward.7} parent=5 // pred_region
      %s143 = ssub.s32 %s9, 1
      %s144 = smul.u32 4, %s14
      %p145 = scmp.lt.s32.totalorder %s144, 7
      %s146 = scalar_select %p145, %s144, 7
      %s147 = smul.addr %s146, 4
      %s148 = scalar_lea.vmem %s0, %s147
      %p149 = pneg %p35
      %p150 = pneg %p32
      %p151 = pneg %p56
      %p152 = pneg %p53
      %p153 = pneg %p77
      %p154 = pneg %p74
      %p155 = pneg %p103
      %p156 = pneg %p100
      %s157 = smul.u32 4, %s14
      %p158 = scmp.lt.s32.totalorder %s157, 7
      %s159 = scalar_select %p158, %s157, 7
      %s160 = smul.addr %s159, 4
      %s161 = scalar_lea.vmem %s3, %s160
      %s162 = smul.u32 4, %s14
      %p163 = scmp.lt.s32.totalorder %s162, 7
      %s164 = scalar_select %p163, %s162, 7
      %s165 = smul.addr %s164, 4
      %s166 = scalar_lea.vmem %s0, %s165
      %s167 = smul.u32 4, %s14
      %s168 = smul.u32 4, %s14
      %p169 = scmp.lt.s32.totalorder %s168, 7
      %s170 = scalar_select %p169, %s168, 7
      %s171 = smul.addr %s170, 4
      %s172 = scalar_lea.vmem %s3, %s171
      %s173 = smul.u32 4, %s14
      %v174 = vld [vmem:[%s166] sm:$0xff]
      %v175 = vld [vmem:[%s166 + $0x8] sm:$0xff]
      %v176 = vunpack.c.l.bf16 %v174
      %v177 = vunpack.c.h.bf16 %v174
      %v178 = vunpack.c.l.bf16 %v175
      %v179 = vunpack.c.h.bf16 %v175
      %v180 = vld [vmem:[%s1] sm:$0xff]
      %182 = vset.pattern.permute.xlu0 0
      %183 = vperm.xlu0 %182, %v180
      %v184 = vpop.permute.xlu0 %183
      %v186 = vmul.f32 %v176, %v184
      %v187 = vmul.f32 %v177, %v184
      %v188 = vmul.f32 %v178, %v184
      %v189 = vmul.f32 %v179, %v184
      %v190 = vld [vmem:[%s2] sm:$0xff]
      %192 = vset.pattern.permute.xlu0 0
      %193 = vperm.xlu0 %192, %v190
      %v194 = vpop.permute.xlu0 %193
      %v196 = vadd.f32 %v186, %v194
      %v197 = vadd.f32 %v187, %v194
      %v198 = vadd.f32 %v188, %v194
      %v199 = vadd.f32 %v189, %v194
      %vm200 = vcmp.gt.f32.partialorder %v196, 0.0
      %vm201 = vcmp.gt.f32.partialorder %v197, 0.0
      %vm202 = vcmp.gt.f32.partialorder %v198, 0.0
      %vm203 = vcmp.gt.f32.partialorder %v199, 0.0
      %v204 = vmin.f32 %v196, 0.0
      %v205 = vmin.f32 %v197, 0.0
      %v206 = vmin.f32 %v198, 0.0
      %v207 = vmin.f32 %v199, 0.0
      %v208 = vmul.f32 %v204, 1.442695
      %v209 = vpow.pop %v208
      %v210 = vmul.f32 %v205, 1.442695
      %v211 = vpow.pop %v210
      %v212 = vmul.f32 %v206, 1.442695
      %v213 = vpow.pop %v212
      %v214 = vmul.f32 %v207, 1.442695
      %v215 = vpow.pop %v214
      %v216 = vsub.f32 %v209, 1.0
      %v217 = vsub.f32 %v211, 1.0
      %v218 = vsub.f32 %v213, 1.0
      %v219 = vsub.f32 %v215, 1.0
      %v220 = vsel %vm200, %v196, %v216
      %v221 = vsel %vm201, %v197, %v217
      %v222 = vsel %vm202, %v198, %v218
      %v223 = vsel %vm203, %v199, %v219
      %v228 = vcombine.low %v220, %v221
      %v229 = vcombine.low %v222, %v223
      %232 = vst [vmem:[%s172] sm:$0xff] %v228
      %233 = vst [vmem:[%s172 + $0x8] sm:$0xff] %v229
      %s234 = smul.u32 4, %s14
      %p235 = scmp.lt.s32.totalorder %s234, 7
      %s236 = scalar_select %p235, %s234, 7
      %s237 = smul.addr %s236, 4
      %s238 = scalar_lea.vmem %s3, %s237
      // Predicated region
      $region33: #{single_decoder3d_forward.7} parent=31 // pred_check
        %p239 = pneg %p100
      $region34: #{single_decoder3d_forward.7} parent=31 // pred_check_branch
        %241 = sbr.rel (%p239) target = $region36
      $region35: #{single_decoder3d_forward.7} parent=31 // pred_region
        %s242 = smul.u32 4, %s14
      $region36: #{single_decoder3d_forward.7} parent=31 // pred_fallthru
        _
    $region32: #{single_decoder3d_forward.7} parent=5 // pred_fallthru
      _
    %p243 = scmp.le.s32.totalorder 2, %s9
    // Predicated region
    $region37: #{single_decoder3d_forward.7} parent=5 // pred_check
      %p244 = pneg %p243
    $region38: #{single_decoder3d_forward.7} parent=5 // pred_check_branch
      %246 = sbr.rel (%p244) target = $region40
    $region39: #{single_decoder3d_forward.7} parent=5 // pred_region
      %s247 = ssub.s32 %s9, 2
      // Predicated region
      $region41: #{single_decoder3d_forward.7} parent=39 // pred_check
        %p248 = pneg %p106
      $region42: #{single_decoder3d_forward.7} parent=39 // pred_check_branch
        %250 = sbr.rel (%p248) target = $region44
      $region43: #{single_decoder3d_forward.7} parent=39 // pred_region
        %s251 = smul.u32 4, %s15
        %p252 = scmp.lt.s32.totalorder %s251, 7
        %s253 = scalar_select %p252, %s251, 7
        %s254 = smul.addr %s253, 4
        %s255 = scalar_lea.vmem %s3, %s254
      $region44: #{single_decoder3d_forward.7} parent=39 // pred_fallthru
        _
    $region40: #{single_decoder3d_forward.7} parent=5 // pred_fallthru
      _
  $region6: #{single_decoder3d_forward.7} parent=0 // loop_footer
    %s13 = sadd.s32 1, %s9
  $region7: #{single_decoder3d_forward.7} parent=0 // loop_footer_branch
    %8 = sbr.rel target = $region3
  $region8: #{single_decoder3d_forward.7} parent=0 // loop_exit
    _

// kernel: single_decoder3d_forward.6
$region0: #{single_decoder3d_forward.6}
  #allocation0 [shape = 'u32[]', space=smem, size = 0x4, offset = 0x4, fixed_abs, tag = 'smem constant byte address 0x4 - core index']
  #allocation1 [shape = 'u32[144,128]{1,0:T(1,128)}', space=vmem, size = 0x12000, scoped, tag = 'internal scratch']
  #allocation2 [shape = 'f32[216,512]{1,0:T(8,128)}', space=vmem, size = 0x6c000, scoped, tag = 'scratch operand']
  %s0 = inlined_call_operand.vmem [shape: bf16[8,2048], index: 0, kind: input, shape index: {}]
  %s1 = inlined_call_operand.vmem [shape: f32[8,1], index: 1, kind: input, shape index: {}]
  %s2 = inlined_call_operand.vmem [shape: f32[8,1], index: 2, kind: input, shape index: {}]
  %s3 = inlined_call_operand.vmem [shape: f32[1,8,216], index: 3, kind: input, shape index: {}]
  %s4 = inlined_call_operand.vmem [shape: f32[8,1024], index: 4, kind: input, shape index: {}]
  %s5 = inlined_call_operand.vmem [shape: bf16[8,1024], index: 5, kind: output, shape index: {0}]
  %s6 = inlined_call_operand.vmem [shape: f32[2,8,2], index: 6, kind: output, shape index: {1}]
  %7 = xla_tuple %s5, %s6
  %s8 = sld [smem:[#allocation0]]
  $region61: #{single_decoder3d_forward.6} parent=0
    _
  %s10 = ssub.s32 1, %s8
  %s11 = scalar_select 0, %s10, %s8
  loop: start=0, step=1, limit=4
  $region2: #{single_decoder3d_forward.6} parent=0 // loop_pre_header
    _
  $region3: #{single_decoder3d_forward.6} parent=0 // loop_header
    %s13 = sphi 0, %s17
    %p14 = scmp.ge.s32.totalorder %s13, 4
    %s21 = sphi 0, %s21
    %s23 = sphi 0, %s21
    %s24 = sphi 0, %s23
    %s38 = sphi 0, %s24
    %s42 = sphi 0, %s42
    %s44 = sphi 0, %s42
    %s45 = sphi 0, %s44
    %s59 = sphi 0, %s45
    %s63 = sphi 0, %s63
    %s65 = sphi 0, %s63
    %s66 = sphi 0, %s65
    %s80 = sphi 0, %s66
    %s84 = sphi 0, %s84
    %s86 = sphi 0, %s84
    %s87 = sphi 0, %s86
    %s101 = sphi 0, %s87
    %s107 = sphi 0, %s109
    %s110 = sphi 0, %s107
    %s111 = sphi 0, %s110
    %s127 = sphi 0, %s111
    %s133 = sphi 0, %s135
    %s136 = sphi 0, %s133
    %s137 = sphi 0, %s136
    %s153 = sphi 0, %s137
    %s159 = sphi 0, %s161
    %s162 = sphi 0, %s159
    %s163 = sphi 0, %s162
    %s179 = sphi 0, %s163
  $region4: #{single_decoder3d_forward.6} parent=0 // loop_header_branch
    %16 = sbr.rel (%p14) target = $region8
  $region5: #{single_decoder3d_forward.6} parent=0 // loop_body
    %s18 = ssub.s32 %s13, 1
    %s19 = ssub.s32 %s13, 2
    %s20 = sadd.s32 %s13, 1
    %s22 = sadd.s32 %s21, 1
    %p25 = scmp.eq.s32.totalorder %s13, 1
    %p26 = scmp.ne.s32.totalorder %s21, %s23
    %p27 = scmp.eq.s32.totalorder %s13, 0
    %p28 = por %p26, %p27
    %p29 = scmp.ne.s32.totalorder %s21, %s23
    %p30 = scmp.eq.s32.totalorder %s18, 1
    %p31 = por %p29, %p30
    %p32 = scmp.ne.s32.totalorder %s23, %s24
    %p33 = scmp.eq.s32.totalorder %s18, 0
    %p34 = por %p32, %p33
    %p35 = scmp.ne.s32.totalorder %s23, %s24
    %p36 = scmp.eq.s32.totalorder %s19, 1
    %p37 = por %p35, %p36
    %p39 = scmp.ne.s32.totalorder %s24, %s38
    %p40 = scmp.eq.s32.totalorder %s19, 0
    %p41 = por %p39, %p40
    %s43 = sadd.s32 %s42, 1
    %p46 = scmp.eq.s32.totalorder %s13, 1
    %p47 = scmp.ne.s32.totalorder %s42, %s44
    %p48 = scmp.eq.s32.totalorder %s13, 0
    %p49 = por %p47, %p48
    %p50 = scmp.ne.s32.totalorder %s42, %s44
    %p51 = scmp.eq.s32.totalorder %s18, 1
    %p52 = por %p50, %p51
    %p53 = scmp.ne.s32.totalorder %s44, %s45
    %p54 = scmp.eq.s32.totalorder %s18, 0
    %p55 = por %p53, %p54
    %p56 = scmp.ne.s32.totalorder %s44, %s45
    %p57 = scmp.eq.s32.totalorder %s19, 1
    %p58 = por %p56, %p57
    %p60 = scmp.ne.s32.totalorder %s45, %s59
    %p61 = scmp.eq.s32.totalorder %s19, 0
    %p62 = por %p60, %p61
    %s64 = sadd.s32 %s63, 1
    %p67 = scmp.eq.s32.totalorder %s13, 1
    %p68 = scmp.ne.s32.totalorder %s63, %s65
    %p69 = scmp.eq.s32.totalorder %s13, 0
    %p70 = por %p68, %p69
    %p71 = scmp.ne.s32.totalorder %s63, %s65
    %p72 = scmp.eq.s32.totalorder %s18, 1
    %p73 = por %p71, %p72
    %p74 = scmp.ne.s32.totalorder %s65, %s66
    %p75 = scmp.eq.s32.totalorder %s18, 0
    %p76 = por %p74, %p75
    %p77 = scmp.ne.s32.totalorder %s65, %s66
    %p78 = scmp.eq.s32.totalorder %s19, 1
    %p79 = por %p77, %p78
    %p81 = scmp.ne.s32.totalorder %s66, %s80
    %p82 = scmp.eq.s32.totalorder %s19, 0
    %p83 = por %p81, %p82
    %s85 = sadd.s32 %s84, 1
    %p88 = scmp.eq.s32.totalorder %s13, 1
    %p89 = scmp.ne.s32.totalorder %s84, %s86
    %p90 = scmp.eq.s32.totalorder %s13, 0
    %p91 = por %p89, %p90
    %p92 = scmp.ne.s32.totalorder %s84, %s86
    %p93 = scmp.eq.s32.totalorder %s18, 1
    %p94 = por %p92, %p93
    %p95 = scmp.ne.s32.totalorder %s86, %s87
    %p96 = scmp.eq.s32.totalorder %s18, 0
    %p97 = por %p95, %p96
    %p98 = scmp.ne.s32.totalorder %s86, %s87
    %p99 = scmp.eq.s32.totalorder %s19, 1
    %p100 = por %p98, %p99
    %p102 = scmp.ne.s32.totalorder %s87, %s101
    %p103 = scmp.eq.s32.totalorder %s19, 0
    %p104 = por %p102, %p103
    %s105 = ssub.s32 %s13, %s20
    %p106 = scmp.eq.s32.totalorder %s105, 0
    %s108 = sadd.s32 %s107, 1
    %s109 = scalar_select %p106, %s107, %s108
    %p112 = pneg %p106
    %p113 = scmp.eq.s32.totalorder %s13, 1
    %p114 = por %p112, %p113
    %p115 = scmp.ne.s32.totalorder %s107, %s110
    %p116 = scmp.eq.s32.totalorder %s13, 0
    %p117 = por %p115, %p116
    %p118 = scmp.ne.s32.totalorder %s107, %s110
    %p119 = scmp.eq.s32.totalorder %s18, 1
    %p120 = por %p118, %p119
    %p121 = scmp.ne.s32.totalorder %s110, %s111
    %p122 = scmp.eq.s32.totalorder %s18, 0
    %p123 = por %p121, %p122
    %p124 = scmp.ne.s32.totalorder %s110, %s111
    %p125 = scmp.eq.s32.totalorder %s19, 1
    %p126 = por %p124, %p125
    %p128 = scmp.ne.s32.totalorder %s111, %s127
    %p129 = scmp.eq.s32.totalorder %s19, 0
    %p130 = por %p128, %p129
    %s131 = ssub.s32 %s13, %s20
    %p132 = scmp.eq.s32.totalorder %s131, 0
    %s134 = sadd.s32 %s133, 1
    %s135 = scalar_select %p132, %s133, %s134
    %p138 = pneg %p132
    %p139 = scmp.eq.s32.totalorder %s13, 1
    %p140 = por %p138, %p139
    %p141 = scmp.ne.s32.totalorder %s133, %s136
    %p142 = scmp.eq.s32.totalorder %s13, 0
    %p143 = por %p141, %p142
    %p144 = scmp.ne.s32.totalorder %s133, %s136
    %p145 = scmp.eq.s32.totalorder %s18, 1
    %p146 = por %p144, %p145
    %p147 = scmp.ne.s32.totalorder %s136, %s137
    %p148 = scmp.eq.s32.totalorder %s18, 0
    %p149 = por %p147, %p148
    %p150 = scmp.ne.s32.totalorder %s136, %s137
    %p151 = scmp.eq.s32.totalorder %s19, 1
    %p152 = por %p150, %p151
    %p154 = scmp.ne.s32.totalorder %s137, %s153
    %p155 = scmp.eq.s32.totalorder %s19, 0
    %p156 = por %p154, %p155
    %s157 = ssub.s32 %s13, %s20
    %p158 = scmp.eq.s32.totalorder %s157, 0
    %s160 = sadd.s32 %s159, 1
    %s161 = scalar_select %p158, %s159, %s160
    %p164 = pneg %p158
    %p165 = scmp.eq.s32.totalorder %s13, 1
    %p166 = por %p164, %p165
    %p167 = scmp.ne.s32.totalorder %s159, %s162
    %p168 = scmp.eq.s32.totalorder %s13, 0
    %p169 = por %p167, %p168
    %p170 = scmp.ne.s32.totalorder %s159, %s162
    %p171 = scmp.eq.s32.totalorder %s18, 1
    %p172 = por %p170, %p171
    %p173 = scmp.ne.s32.totalorder %s162, %s163
    %p174 = scmp.eq.s32.totalorder %s18, 0
    %p175 = por %p173, %p174
    %p176 = scmp.ne.s32.totalorder %s162, %s163
    %p177 = scmp.eq.s32.totalorder %s19, 1
    %p178 = por %p176, %p177
    %p180 = scmp.ne.s32.totalorder %s163, %s179
    %p181 = scmp.eq.s32.totalorder %s19, 0
    %p182 = por %p180, %p181
    %p183 = scmp.le.s32.totalorder 1, %s13
    %p184 = scmp.lt.s32.totalorder %s13, 3
    %p185 = pnand %p183, %p184
    %p186 = pneg %p185
    // Predicated region
    $region9: #{single_decoder3d_forward.6} parent=5 // pred_check
      _
    $region10: #{single_decoder3d_forward.6} parent=5 // pred_check_branch
      %188 = sbr.rel (%p185) target = $region12
    $region11: #{single_decoder3d_forward.6} parent=5 // pred_region
      %s189 = ssub.s32 %s13, 1
      // Predicated region
      $region13: #{single_decoder3d_forward.6} parent=11 // pred_check
        %p190 = pneg %p34
      $region14: #{single_decoder3d_forward.6} parent=11 // pred_check_branch
        %192 = sbr.rel (%p190) target = $region16
      $region15: #{single_decoder3d_forward.6} parent=11 // pred_region
        _
      $region16: #{single_decoder3d_forward.6} parent=11 // pred_fallthru
        _
      // Predicated region
      $region17: #{single_decoder3d_forward.6} parent=11 // pred_check
        %p193 = pneg %p55
      $region18: #{single_decoder3d_forward.6} parent=11 // pred_check_branch
        %195 = sbr.rel (%p193) target = $region20
      $region19: #{single_decoder3d_forward.6} parent=11 // pred_region
        _
      $region20: #{single_decoder3d_forward.6} parent=11 // pred_fallthru
        _
      // Predicated region
      $region21: #{single_decoder3d_forward.6} parent=11 // pred_check
        %p196 = pneg %p76
      $region22: #{single_decoder3d_forward.6} parent=11 // pred_check_branch
        %198 = sbr.rel (%p196) target = $region24
      $region23: #{single_decoder3d_forward.6} parent=11 // pred_region
        _
      $region24: #{single_decoder3d_forward.6} parent=11 // pred_fallthru
        _
      // Predicated region
      $region25: #{single_decoder3d_forward.6} parent=11 // pred_check
        %p199 = pneg %p97
      $region26: #{single_decoder3d_forward.6} parent=11 // pred_check_branch
        %201 = sbr.rel (%p199) target = $region28
      $region27: #{single_decoder3d_forward.6} parent=11 // pred_region
        _
      $region28: #{single_decoder3d_forward.6} parent=11 // pred_fallthru
        _
    $region12: #{single_decoder3d_forward.6} parent=5 // pred_fallthru
      _
    %p202 = scmp.lt.s32.totalorder %s13, 2
    // Predicated region
    $region29: #{single_decoder3d_forward.6} parent=5 // pred_check
      %p203 = pneg %p202
    $region30: #{single_decoder3d_forward.6} parent=5 // pred_check_branch
      %205 = sbr.rel (%p203) target = $region32
    $region31: #{single_decoder3d_forward.6} parent=5 // pred_region
      // Predicated region
      $region33: #{single_decoder3d_forward.6} parent=31 // pred_check
        %p206 = pneg %p117
      $region34: #{single_decoder3d_forward.6} parent=31 // pred_check_branch
        %208 = sbr.rel (%p206) target = $region36
      $region35: #{single_decoder3d_forward.6} parent=31 // pred_region
        %s209 = smul.u32 4, %s13
        %p210 = scmp.lt.s32.totalorder %s209, 7
        %s211 = scalar_select %p210, %s209, 7
        %s212 = smul.addr %s211, 8
        %s213 = scalar_lea.vmem %s4, %s212
        %s214 = smul.u32 4, %s13
      $region36: #{single_decoder3d_forward.6} parent=31 // pred_fallthru
        _
    $region32: #{single_decoder3d_forward.6} parent=5 // pred_fallthru
      _
    %p215 = scmp.le.s32.totalorder 1, %s13
    %p216 = scmp.lt.s32.totalorder %s13, 3
    %p217 = pnand %p215, %p216
    %p218 = pneg %p217
    // Predicated region
    $region37: #{single_decoder3d_forward.6} parent=5 // pred_check
      _
    $region38: #{single_decoder3d_forward.6} parent=5 // pred_check_branch
      %220 = sbr.rel (%p217) target = $region40
    $region39: #{single_decoder3d_forward.6} parent=5 // pred_region
      %s221 = ssub.s32 %s13, 1
      %p222 = pneg %p34
      %p223 = pneg %p31
      %p224 = pneg %p55
      %p225 = pneg %p52
      %p226 = pneg %p76
      %p227 = pneg %p73
      %p228 = pneg %p97
      %p229 = pneg %p94
      %s230 = smul.u32 4, %s18
      %p231 = scmp.lt.s32.totalorder %s230, 7
      %s232 = scalar_select %p231, %s230, 7
      %s233 = smul.addr %s232, 8
      %s234 = scalar_lea.vmem %s4, %s233
      %p235 = pneg %p123
      %p236 = pneg %p120
      %p237 = pneg %p149
      %p238 = pneg %p146
      %s239 = smul.u32 4, %s18
      %p240 = scmp.lt.s32.totalorder %s239, 7
      %s241 = scalar_select %p240, %s239, 7
      %s242 = smul.addr %s241, 4
      %s243 = scalar_lea.vmem %s5, %s242
      %p244 = pneg %p175
      %p245 = pneg %p172
      %p246 = scmp.lt.s32.totalorder %s18, 1
      %s247 = scalar_select %p246, %s18, 1
      %s248 = smul.addr %s247, 8
      %s249 = scalar_lea.vmem %s6, %s248
      %s250 = smul.u32 4, %s18
      %p251 = scmp.lt.s32.totalorder %s250, 7
      %s252 = scalar_select %p251, %s250, 7
      %s253 = smul.addr %s252, 8
      %s254 = scalar_lea.vmem %s4, %s253
      %s255 = smul.u32 4, %s18
      %s256 = smul.u32 4, %s18
      %p257 = scmp.lt.s32.totalorder %s256, 7
      %s258 = scalar_select %p257, %s256, 7
      %s259 = smul.addr %s258, 4
      %s260 = scalar_lea.vmem %s5, %s259
      %s261 = smul.u32 4, %s18
      %p262 = scmp.lt.s32.totalorder %s18, 1
      %s263 = scalar_select %p262, %s18, 1
      %s264 = smul.addr %s263, 8
      %s265 = scalar_lea.vmem %s6, %s264
      %v266 = vld [vmem:[%s254] sm:$0xff]
      %v267 = vld [vmem:[%s254 + $0x8] sm:$0xff]
      %v268 = vld [vmem:[%s254 + $0x10] sm:$0xff]
      %v269 = vld [vmem:[%s254 + $0x18] sm:$0xff]
      %vm270 = vcmp.gt.f32.partialorder %v266, 0.5
      %vm271 = vcmp.gt.f32.partialorder %v267, 0.5
      %vm272 = vcmp.gt.f32.partialorder %v268, 0.5
      %vm273 = vcmp.gt.f32.partialorder %v269, 0.5
      %s274 = smul.u32 %s18, 512
      %s275 = sadd.s32 %s274, 384
      %s276 = sshra.s32 %s275, 7
      %s277 = sand.u32 %s275, 127
      %s278 = smul.addr %s276, 4
      %s279 = scalar_lea.vmem %s0, %s278
      %v280 = vld [vmem:[%s279] sm:$0xff]
      %v281 = vld [vmem:[%s279 + $0x8] sm:$0xff]
      %v282 = vld [vmem:[%s279 + $0x10] sm:$0xff]
      %v283 = vunpack.c.l.bf16 %v280
      %v284 = vunpack.c.h.bf16 %v280
      %v285 = vunpack.c.l.bf16 %v281
      %v286 = vunpack.c.h.bf16 %v281
      %v287 = vunpack.c.l.bf16 %v282
      %v288 = vunpack.c.h.bf16 %v282
      %v289 = vld [vmem:[%s1] sm:$0xff]
      %v290 = vld [vmem:[%s2] sm:$0xff]
      %292 = vset.pattern.permute.xlu0 0
      %293 = vperm.xlu0 %292, %v289
      %v294 = vpop.permute.xlu0 %293
      %v296 = vmul.f32 %v283, %v294
      %v297 = vmul.f32 %v284, %v294
      %v298 = vmul.f32 %v285, %v294
      %v299 = vmul.f32 %v286, %v294
      %v300 = vmul.f32 %v287, %v294
      %v301 = vmul.f32 %v288, %v294
      %303 = vset.pattern.permute.xlu0 0
      %304 = vperm.xlu0 %303, %v290
      %v305 = vpop.permute.xlu0 %304
      %v307 = vadd.f32 %v296, %v305
      %v308 = vadd.f32 %v297, %v305
      %v309 = vadd.f32 %v298, %v305
      %v310 = vadd.f32 %v299, %v305
      %v311 = vadd.f32 %v300, %v305
      %v312 = vadd.f32 %v301, %v305
      %vm313 = vcmp.gt.f32.partialorder %v307, 0.0
      %vm314 = vcmp.gt.f32.partialorder %v308, 0.0
      %vm315 = vcmp.gt.f32.partialorder %v309, 0.0
      %vm316 = vcmp.gt.f32.partialorder %v310, 0.0
      %vm317 = vcmp.gt.f32.partialorder %v311, 0.0
      %vm318 = vcmp.gt.f32.partialorder %v312, 0.0
      %v319 = vmin.f32 %v307, 0.0
      %v320 = vmin.f32 %v308, 0.0
      %v321 = vmin.f32 %v309, 0.0
      %v322 = vmin.f32 %v310, 0.0
      %v323 = vmin.f32 %v311, 0.0
      %v324 = vmin.f32 %v312, 0.0
      %v325 = vmul.f32 %v319, 1.442695
      %v326 = vpow.pop %v325
      %v327 = vmul.f32 %v320, 1.442695
      %v328 = vpow.pop %v327
      %v329 = vmul.f32 %v321, 1.442695
      %v330 = vpow.pop %v329
      %v331 = vmul.f32 %v322, 1.442695
      %v332 = vpow.pop %v331
      %v333 = vmul.f32 %v323, 1.442695
      %v334 = vpow.pop %v333
      %v335 = vmul.f32 %v324, 1.442695
      %v336 = vpow.pop %v335
      %v337 = vsub.f32 %v326, 1.0
      %v338 = vsub.f32 %v328, 1.0
      %v339 = vsub.f32 %v330, 1.0
      %v340 = vsub.f32 %v332, 1.0
      %v341 = vsub.f32 %v334, 1.0
      %v342 = vsub.f32 %v336, 1.0
      %v343 = vsel %vm313, %v307, %v337
      %v344 = vsel %vm314, %v308, %v338
      %v345 = vsel %vm315, %v309, %v339
      %v346 = vsel %vm316, %v310, %v340
      %v347 = vsel %vm317, %v311, %v341
      %v348 = vsel %vm318, %v312, %v342
      %349 = vrot.lane.b32.xlu0 %v343, 73
      %v350 = vpop.permute.xlu0 %349
      %351 = vrot.lane.b32.xlu0 %v344, 73
      %v352 = vpop.permute.xlu0 %351
      %353 = vrot.lane.b32.xlu0 %v345, 73
      %v354 = vpop.permute.xlu0 %353
      %355 = vrot.lane.b32.xlu0 %v346, 73
      %v356 = vpop.permute.xlu0 %355
      %357 = vrot.lane.b32.xlu0 %v347, 73
      %v358 = vpop.permute.xlu0 %357
      %v359 = vlaneseq
      %v360 = vand.u32 %v359, 127
      %vm361 = vcmp.lt.s32.totalorder %v360, 73
      %v362 = vsel %vm361, %v356, %v358
      %v363 = vsel %vm361, %v354, %v356
      %v364 = vsel %vm361, %v352, %v354
      %v365 = vsel %vm361, %v350, %v352
      %v366 = vsel %vm270, 1, 0
      %v367 = vsel %vm271, 1, 0
      %v368 = vsel %vm272, 1, 0
      %v369 = vsel %vm273, 1, 0
      %v370 = vrot.slane %v366, 2
      %v371 = vrot.slane %v367, 2
      %v372 = vrot.slane %v368, 2
      %v373 = vrot.slane %v369, 2
      %vm374 = vcmp.ne.s32.totalorder %v370, 0
      %vm375 = vcmp.ne.s32.totalorder %v371, 0
      %vm376 = vcmp.ne.s32.totalorder %v372, 0
      %vm377 = vcmp.ne.s32.totalorder %v373, 0
      %vm378 = vmand %vm270, %vm374
      %vm379 = vmand %vm271, %vm375
      %vm380 = vmand %vm272, %vm376
      %vm381 = vmand %vm273, %vm377
      %v382 = vrot.slane %v366, 4
      %v383 = vrot.slane %v367, 4
      %v384 = vrot.slane %v368, 4
      %v385 = vrot.slane %v369, 4
      %vm386 = vcmp.ne.s32.totalorder %v382, 0
      %vm387 = vcmp.ne.s32.totalorder %v383, 0
      %vm388 = vcmp.ne.s32.totalorder %v384, 0
      %vm389 = vcmp.ne.s32.totalorder %v385, 0
      %vm390 = vmand %vm378, %vm386
      %vm391 = vmand %vm379, %vm387
      %vm392 = vmand %vm380, %vm388
      %vm393 = vmand %vm381, %vm389
      %v394 = vsel %vm390, 1, 0
      %v395 = vsel %vm391, 1, 0
      %v396 = vsel %vm392, 1, 0
      %v397 = vsel %vm393, 1, 0
      %v398 = vlaneseq
      %v399 = vshrl.u32 %v398, 7
      %v400 = vsub.s32 0, %v399
      %v401 = vrot.slane %v394, %v400
      %v402 = vlaneseq
      %v403 = vshrl.u32 %v402, 7
      %v404 = vsub.s32 0, %v403
      %v405 = vrot.slane %v395, %v404
      %v406 = vlaneseq
      %v407 = vshrl.u32 %v406, 7
      %v408 = vsub.s32 0, %v407
      %v409 = vrot.slane %v396, %v408
      %v410 = vlaneseq
      %v411 = vshrl.u32 %v410, 7
      %v412 = vsub.s32 0, %v411
      %v413 = vrot.slane %v397, %v412
      %vm414 = vcmp.eq.s32.totalorder %v401, 1
      %vm415 = vcmp.eq.s32.totalorder %v405, 1
      %vm416 = vcmp.eq.s32.totalorder %v409, 1
      %vm417 = vcmp.eq.s32.totalorder %v413, 1
      %v418 = vsel %vm414, %v365, 0.0
      %v419 = vsel %vm415, %v364, 0.0
      %v420 = vsel %vm416, %v363, 0.0
      %v421 = vsel %vm417, %v362, 0.0
      %422 = vst [vmem:[#allocation2] sm:$0xff] %v418
      %423 = vst [vmem:[#allocation2 + $0x8] sm:$0xff] %v419
      %424 = vst [vmem:[#allocation2 + $0x10] sm:$0xff] %v420
      %425 = vst [vmem:[#allocation2 + $0x18] sm:$0xff] %v421
      %426 = vrot.lane.b32.xlu0 %v343, 72
      %v427 = vpop.permute.xlu0 %426
      %428 = vrot.lane.b32.xlu0 %v344, 72
      %v429 = vpop.permute.xlu0 %428
      %430 = vrot.lane.b32.xlu0 %v345, 72
      %v431 = vpop.permute.xlu0 %430
      %432 = vrot.lane.b32.xlu0 %v346, 72
      %v433 = vpop.permute.xlu0 %432
      %434 = vrot.lane.b32.xlu0 %v347, 72
      %v435 = vpop.permute.xlu0 %434
      %vm436 = vcmp.lt.s32.totalorder %v360, 72
      %v437 = vsel %vm436, %v433, %v435
      %v438 = vsel %vm436, %v431, %v433
      %v439 = vsel %vm436, %v429, %v431
      %v440 = vsel %vm436, %v427, %v429
      %v441 = vsel %vm378, 1, 0
      %v442 = vsel %vm379, 1, 0
      %v443 = vsel %vm380, 1, 0
      %v444 = vsel %vm381, 1, 0
      %v445 = vlaneseq
      %v446 = vshrl.u32 %v445, 7
      %v447 = vsub.s32 0, %v446
      %v448 = vrot.slane %v441, %v447
      %v449 = vlaneseq
      %v450 = vshrl.u32 %v449, 7
      %v451 = vsub.s32 0, %v450
      %v452 = vrot.slane %v442, %v451
      %v453 = vlaneseq
      %v454 = vshrl.u32 %v453, 7
      %v455 = vsub.s32 0, %v454
      %v456 = vrot.slane %v443, %v455
      %v457 = vlaneseq
      %v458 = vshrl.u32 %v457, 7
      %v459 = vsub.s32 0, %v458
      %v460 = vrot.slane %v444, %v459
      %vm461 = vcmp.eq.s32.totalorder %v448, 1
      %vm462 = vcmp.eq.s32.totalorder %v452, 1
      %vm463 = vcmp.eq.s32.totalorder %v456, 1
      %vm464 = vcmp.eq.s32.totalorder %v460, 1
      %v465 = vsel %vm461, %v440, 0.0
      %v466 = vsel %vm462, %v439, 0.0
      %v467 = vsel %vm463, %v438, 0.0
      %v468 = vsel %vm464, %v437, 0.0
      %469 = vst [vmem:[#allocation2 + $0x20] sm:$0xff] %v465
      %470 = vst [vmem:[#allocation2 + $0x28] sm:$0xff] %v466
      %471 = vst [vmem:[#allocation2 + $0x30] sm:$0xff] %v467
      %472 = vst [vmem:[#allocation2 + $0x38] sm:$0xff] %v468
      %473 = vrot.lane.b32.xlu0 %v343, 71
      %v474 = vpop.permute.xlu0 %473
      %475 = vrot.lane.b32.xlu0 %v344, 71
      %v476 = vpop.permute.xlu0 %475
      %477 = vrot.lane.b32.xlu0 %v345, 71
      %v478 = vpop.permute.xlu0 %477
      %479 = vrot.lane.b32.xlu0 %v346, 71
      %v480 = vpop.permute.xlu0 %479
      %481 = vrot.lane.b32.xlu0 %v347, 71
      %v482 = vpop.permute.xlu0 %481
      %vm483 = vcmp.lt.s32.totalorder %v360, 71
      %v484 = vsel %vm483, %v480, %v482
      %v485 = vsel %vm483, %v478, %v480
      %v486 = vsel %vm483, %v476, %v478
      %v487 = vsel %vm483, %v474, %v476
      %v488 = vrot.slane %v366, 5
      %v489 = vrot.slane %v367, 5
      %v490 = vrot.slane %v368, 5
      %v491 = vrot.slane %v369, 5
      %vm492 = vcmp.ne.s32.totalorder %v488, 0
      %vm493 = vcmp.ne.s32.totalorder %v489, 0
      %vm494 = vcmp.ne.s32.totalorder %v490, 0
      %vm495 = vcmp.ne.s32.totalorder %v491, 0
      %vm496 = vmand %vm378, %vm492
      %vm497 = vmand %vm379, %vm493
      %vm498 = vmand %vm380, %vm494
      %vm499 = vmand %vm381, %vm495
      %v500 = vsel %vm496, 1, 0
      %v501 = vsel %vm497, 1, 0
      %v502 = vsel %vm498, 1, 0
      %v503 = vsel %vm499, 1, 0
      %v504 = vlaneseq
      %v505 = vshrl.u32 %v504, 7
      %v506 = vsub.s32 0, %v505
      %v507 = vrot.slane %v500, %v506
      %v508 = vlaneseq
      %v509 = vshrl.u32 %v508, 7
      %v510 = vsub.s32 0, %v509
      %v511 = vrot.slane %v501, %v510
      %v512 = vlaneseq
      %v513 = vshrl.u32 %v512, 7
      %v514 = vsub.s32 0, %v513
      %v515 = vrot.slane %v502, %v514
      %v516 = vlaneseq
      %v517 = vshrl.u32 %v516, 7
      %v518 = vsub.s32 0, %v517
      %v519 = vrot.slane %v503, %v518
      %vm520 = vcmp.eq.s32.totalorder %v507, 1
      %vm521 = vcmp.eq.s32.totalorder %v511, 1
      %vm522 = vcmp.eq.s32.totalorder %v515, 1
      %vm523 = vcmp.eq.s32.totalorder %v519, 1
      %v524 = vsel %vm520, %v487, 0.0
      %v525 = vsel %vm521, %v486, 0.0
      %v526 = vsel %vm522, %v485, 0.0
      %v527 = vsel %vm523, %v484, 0.0
      %528 = vst [vmem:[#allocation2 + $0x40] sm:$0xff] %v524
      %529 = vst [vmem:[#allocation2 + $0x48] sm:$0xff] %v525
      %530 = vst [vmem:[#allocation2 + $0x50] sm:$0xff] %v526
      %531 = vst [vmem:[#allocation2 + $0x58] sm:$0xff] %v527
      %532 = vrot.lane.b32.xlu0 %v343, 65
      %v533 = vpop.permute.xlu0 %532
      %534 = vrot.lane.b32.xlu0 %v344, 65
      %v535 = vpop.permute.xlu0 %534
      %536 = vrot.lane.b32.xlu0 %v345, 65
      %v537 = vpop.permute.xlu0 %536
      %538 = vrot.lane.b32.xlu0 %v346, 65
      %v539 = vpop.permute.xlu0 %538
      %540 = vrot.lane.b32.xlu0 %v347, 65
      %v541 = vpop.permute.xlu0 %540
      %vm542 = vcmp.lt.s32.totalorder %v360, 65
      %v543 = vsel %vm542, %v539, %v541
      %v544 = vsel %vm542, %v537, %v539
      %v545 = vsel %vm542, %v535, %v537
      %v546 = vsel %vm542, %v533, %v535
      %vm547 = vmand %vm270, %vm386
      %vm548 = vmand %vm271, %vm387
      %vm549 = vmand %vm272, %vm388
      %vm550 = vmand %vm273, %vm389
      %v551 = vsel %vm547, 1, 0
      %v552 = vsel %vm548, 1, 0
      %v553 = vsel %vm549, 1, 0
      %v554 = vsel %vm550, 1, 0
      %v555 = vlaneseq
      %v556 = vshrl.u32 %v555, 7
      %v557 = vsub.s32 0, %v556
      %v558 = vrot.slane %v551, %v557
      %v559 = vlaneseq
      %v560 = vshrl.u32 %v559, 7
      %v561 = vsub.s32 0, %v560
      %v562 = vrot.slane %v552, %v561
      %v563 = vlaneseq
      %v564 = vshrl.u32 %v563, 7
      %v565 = vsub.s32 0, %v564
      %v566 = vrot.slane %v553, %v565
      %v567 = vlaneseq
      %v568 = vshrl.u32 %v567, 7
      %v569 = vsub.s32 0, %v568
      %v570 = vrot.slane %v554, %v569
      %vm571 = vcmp.eq.s32.totalorder %v558, 1
      %vm572 = vcmp.eq.s32.totalorder %v562, 1
      %vm573 = vcmp.eq.s32.totalorder %v566, 1
      %vm574 = vcmp.eq.s32.totalorder %v570, 1
      %v575 = vsel %vm571, %v546, 0.0
      %v576 = vsel %vm572, %v545, 0.0
      %v577 = vsel %vm573, %v544, 0.0
      %v578 = vsel %vm574, %v543, 0.0
      %579 = vst [vmem:[#allocation2 + $0x60] sm:$0xff] %v575
      %580 = vst [vmem:[#allocation2 + $0x68] sm:$0xff] %v576
      %581 = vst [vmem:[#allocation2 + $0x70] sm:$0xff] %v577
      %582 = vst [vmem:[#allocation2 + $0x78] sm:$0xff] %v578
      %583 = vrot.lane.b32.xlu0 %v343, 64
      %v584 = vpop.permute.xlu0 %583
      %585 = vrot.lane.b32.xlu0 %v344, 64
      %v586 = vpop.permute.xlu0 %585
      %587 = vrot.lane.b32.xlu0 %v345, 64
      %v588 = vpop.permute.xlu0 %587
      %589 = vrot.lane.b32.xlu0 %v346, 64
      %v590 = vpop.permute.xlu0 %589
      %591 = vrot.lane.b32.xlu0 %v347, 64
      %v592 = vpop.permute.xlu0 %591
      %vm593 = vcmp.lt.s32.totalorder %v360, 64
      %v594 = vsel %vm593, %v590, %v592
      %v595 = vsel %vm593, %v588, %v590
      %v596 = vsel %vm593, %v586, %v588
      %v597 = vsel %vm593, %v584, %v586
      %vm598 = vcmp.eq.s32.totalorder %v366, 1
      %vm599 = vcmp.eq.s32.totalorder %v367, 1
      %vm600 = vcmp.eq.s32.totalorder %v368, 1
      %vm601 = vcmp.eq.s32.totalorder %v369, 1
      %v606 = vrot.slane %v597, 1
      %v607 = vrot.slane %v596, 1
      %v608 = vrot.slane %v595, 1
      %v609 = vrot.slane %v594, 1
      %v610 = vrot.slane %v597, 2
      %v611 = vrot.slane %v596, 2
      %v612 = vrot.slane %v595, 2
      %v613 = vrot.slane %v594, 2
      %v614 = vrot.slane %v597, 3
      %v615 = vrot.slane %v596, 3
      %v616 = vrot.slane %v595, 3
      %v617 = vrot.slane %v594, 3
      %v618 = vrot.slane %v597, 4
      %v619 = vrot.slane %v596, 4
      %v620 = vrot.slane %v595, 4
      %v621 = vrot.slane %v594, 4
      %v622 = vrot.slane %v597, 5
      %v623 = vrot.slane %v596, 5
      %v624 = vrot.slane %v595, 5
      %v625 = vrot.slane %v594, 5
      %v626 = vrot.slane %v597, 6
      %v627 = vrot.slane %v596, 6
      %v628 = vrot.slane %v595, 6
      %v629 = vrot.slane %v594, 6
      %v630 = vrot.slane %v597, 7
      %v631 = vrot.slane %v596, 7
      %v632 = vrot.slane %v595, 7
      %v633 = vrot.slane %v594, 7
      %v666 = vsel %vm598, %v597, 0.0
      %v667 = vsel %vm599, %v596, 0.0
      %v668 = vsel %vm600, %v595, 0.0
      %v669 = vsel %vm601, %v594, 0.0
      %v670 = vsel %vm598, %v606, 0.0
      %v671 = vsel %vm599, %v607, 0.0
      %v672 = vsel %vm600, %v608, 0.0
      %v673 = vsel %vm601, %v609, 0.0
      %v674 = vsel %vm598, %v610, 0.0
      %v675 = vsel %vm599, %v611, 0.0
      %v676 = vsel %vm600, %v612, 0.0
      %v677 = vsel %vm601, %v613, 0.0
      %v678 = vsel %vm598, %v614, 0.0
      %v679 = vsel %vm599, %v615, 0.0
      %v680 = vsel %vm600, %v616, 0.0
      %v681 = vsel %vm601, %v617, 0.0
      %v682 = vsel %vm598, %v618, 0.0
      %v683 = vsel %vm599, %v619, 0.0
      %v684 = vsel %vm600, %v620, 0.0
      %v685 = vsel %vm601, %v621, 0.0
      %v686 = vsel %vm598, %v622, 0.0
      %v687 = vsel %vm599, %v623, 0.0
      %v688 = vsel %vm600, %v624, 0.0
      %v689 = vsel %vm601, %v625, 0.0
      %v690 = vsel %vm598, %v626, 0.0
      %v691 = vsel %vm599, %v627, 0.0
      %v692 = vsel %vm600, %v628, 0.0
      %v693 = vsel %vm601, %v629, 0.0
      %v694 = vsel %vm598, %v630, 0.0
      %v695 = vsel %vm599, %v631, 0.0
      %v696 = vsel %vm600, %v632, 0.0
      %v697 = vsel %vm601, %v633, 0.0
      %v730 = vrot.slane %v670, 7
      %vm731 = vcmask 1041409
      %v732 = vsel %vm731, %v730, %v666
      %v733 = vrot.slane %v674, 6
      %vm734 = vcmask 1042434
      %v735 = vsel %vm734, %v733, %v732
      %v736 = vrot.slane %v678, 5
      %vm737 = vcmask 1043459
      %v738 = vsel %vm737, %v736, %v735
      %v739 = vrot.slane %v682, 4
      %vm740 = vcmask 1044484
      %v741 = vsel %vm740, %v739, %v738
      %v742 = vrot.slane %v686, 3
      %vm743 = vcmask 1045509
      %v744 = vsel %vm743, %v742, %v741
      %v745 = vrot.slane %v690, 2
      %vm746 = vcmask 1046534
      %v747 = vsel %vm746, %v745, %v744
      %v748 = vrot.slane %v694, 1
      %vm749 = vcmask 1047559
      %v750 = vsel %vm749, %v748, %v747
      %v751 = vrot.slane %v671, 7
      %v752 = vsel %vm731, %v751, %v667
      %v753 = vrot.slane %v675, 6
      %v754 = vsel %vm734, %v753, %v752
      %v755 = vrot.slane %v679, 5
      %v756 = vsel %vm737, %v755, %v754
      %v757 = vrot.slane %v683, 4
      %v758 = vsel %vm740, %v757, %v756
      %v759 = vrot.slane %v687, 3
      %v760 = vsel %vm743, %v759, %v758
      %v761 = vrot.slane %v691, 2
      %v762 = vsel %vm746, %v761, %v760
      %v763 = vrot.slane %v695, 1
      %v764 = vsel %vm749, %v763, %v762
      %v765 = vrot.slane %v672, 7
      %v766 = vsel %vm731, %v765, %v668
      %v767 = vrot.slane %v676, 6
      %v768 = vsel %vm734, %v767, %v766
      %v769 = vrot.slane %v680, 5
      %v770 = vsel %vm737, %v769, %v768
      %v771 = vrot.slane %v684, 4
      %v772 = vsel %vm740, %v771, %v770
      %v773 = vrot.slane %v688, 3
      %v774 = vsel %vm743, %v773, %v772
      %v775 = vrot.slane %v692, 2
      %v776 = vsel %vm746, %v775, %v774
      %v777 = vrot.slane %v696, 1
      %v778 = vsel %vm749, %v777, %v776
      %v779 = vrot.slane %v673, 7
      %v780 = vsel %vm731, %v779, %v669
      %v781 = vrot.slane %v677, 6
      %v782 = vsel %vm734, %v781, %v780
      %v783 = vrot.slane %v681, 5
      %v784 = vsel %vm737, %v783, %v782
      %v785 = vrot.slane %v685, 4
      %v786 = vsel %vm740, %v785, %v784
      %v787 = vrot.slane %v689, 3
      %v788 = vsel %vm743, %v787, %v786
      %v789 = vrot.slane %v693, 2
      %v790 = vsel %vm746, %v789, %v788
      %v791 = vrot.slane %v697, 1
      %v792 = vsel %vm749, %v791, %v790
      %797 = vst [vmem:[#allocation2 + $0x80] sm:$0xff] %v750
      %798 = vst [vmem:[#allocation2 + $0x88] sm:$0xff] %v764
      %799 = vst [vmem:[#allocation2 + $0x90] sm:$0xff] %v778
      %800 = vst [vmem:[#allocation2 + $0x98] sm:$0xff] %v792
      %801 = vrot.lane.b32.xlu0 %v343, 63
      %v802 = vpop.permute.xlu0 %801
      %803 = vrot.lane.b32.xlu0 %v344, 63
      %v804 = vpop.permute.xlu0 %803
      %805 = vrot.lane.b32.xlu0 %v345, 63
      %v806 = vpop.permute.xlu0 %805
      %807 = vrot.lane.b32.xlu0 %v346, 63
      %v808 = vpop.permute.xlu0 %807
      %809 = vrot.lane.b32.xlu0 %v347, 63
      %v810 = vpop.permute.xlu0 %809
      %vm811 = vcmp.lt.s32.totalorder %v360, 63
      %v812 = vsel %vm811, %v808, %v810
      %v813 = vsel %vm811, %v806, %v808
      %v814 = vsel %vm811, %v804, %v806
      %v815 = vsel %vm811, %v802, %v804
      %vm816 = vmand %vm270, %vm492
      %vm817 = vmand %vm271, %vm493
      %vm818 = vmand %vm272, %vm494
      %vm819 = vmand %vm273, %vm495
      %v820 = vsel %vm816, 1, 0
      %v821 = vsel %vm817, 1, 0
      %v822 = vsel %vm818, 1, 0
      %v823 = vsel %vm819, 1, 0
      %v824 = vlaneseq
      %v825 = vshrl.u32 %v824, 7
      %v826 = vsub.s32 0, %v825
      %v827 = vrot.slane %v820, %v826
      %v828 = vlaneseq
      %v829 = vshrl.u32 %v828, 7
      %v830 = vsub.s32 0, %v829
      %v831 = vrot.slane %v821, %v830
      %v832 = vlaneseq
      %v833 = vshrl.u32 %v832, 7
      %v834 = vsub.s32 0, %v833
      %v835 = vrot.slane %v822, %v834
      %v836 = vlaneseq
      %v837 = vshrl.u32 %v836, 7
      %v838 = vsub.s32 0, %v837
      %v839 = vrot.slane %v823, %v838
      %vm840 = vcmp.eq.s32.totalorder %v827, 1
      %vm841 = vcmp.eq.s32.totalorder %v831, 1
      %vm842 = vcmp.eq.s32.totalorder %v835, 1
      %vm843 = vcmp.eq.s32.totalorder %v839, 1
      %v844 = vsel %vm840, %v815, 0.0
      %v845 = vsel %vm841, %v814, 0.0
      %v846 = vsel %vm842, %v813, 0.0
      %v847 = vsel %vm843, %v812, 0.0
      %848 = vst [vmem:[#allocation2 + $0xa0] sm:$0xff] %v844
      %849 = vst [vmem:[#allocation2 + $0xa8] sm:$0xff] %v845
      %850 = vst [vmem:[#allocation2 + $0xb0] sm:$0xff] %v846
      %851 = vst [vmem:[#allocation2 + $0xb8] sm:$0xff] %v847
      %852 = vrot.lane.b32.xlu0 %v343, 57
      %v853 = vpop.permute.xlu0 %852
      %854 = vrot.lane.b32.xlu0 %v344, 57
      %v855 = vpop.permute.xlu0 %854
      %856 = vrot.lane.b32.xlu0 %v345, 57
      %v857 = vpop.permute.xlu0 %856
      %858 = vrot.lane.b32.xlu0 %v346, 57
      %v859 = vpop.permute.xlu0 %858
      %860 = vrot.lane.b32.xlu0 %v347, 57
      %v861 = vpop.permute.xlu0 %860
      %vm862 = vcmp.lt.s32.totalorder %v360, 57
      %v863 = vsel %vm862, %v859, %v861
      %v864 = vsel %vm862, %v857, %v859
      %v865 = vsel %vm862, %v855, %v857
      %v866 = vsel %vm862, %v853, %v855
      %v867 = vrot.slane %v366, 3
      %v868 = vrot.slane %v367, 3
      %v869 = vrot.slane %v368, 3
      %v870 = vrot.slane %v369, 3
      %vm871 = vcmp.ne.s32.totalorder %v867, 0
      %vm872 = vcmp.ne.s32.totalorder %v868, 0
      %vm873 = vcmp.ne.s32.totalorder %v869, 0
      %vm874 = vcmp.ne.s32.totalorder %v870, 0
      %vm875 = vmand %vm270, %vm871
      %vm876 = vmand %vm271, %vm872
      %vm877 = vmand %vm272, %vm873
      %vm878 = vmand %vm273, %vm874
      %vm879 = vmand %vm875, %vm386
      %vm880 = vmand %vm876, %vm387
      %vm881 = vmand %vm877, %vm388
      %vm882 = vmand %vm878, %vm389
      %v883 = vsel %vm879, 1, 0
      %v884 = vsel %vm880, 1, 0
      %v885 = vsel %vm881, 1, 0
      %v886 = vsel %vm882, 1, 0
      %v887 = vlaneseq
      %v888 = vshrl.u32 %v887, 7
      %v889 = vsub.s32 0, %v888
      %v890 = vrot.slane %v883, %v889
      %v891 = vlaneseq
      %v892 = vshrl.u32 %v891, 7
      %v893 = vsub.s32 0, %v892
      %v894 = vrot.slane %v884, %v893
      %v895 = vlaneseq
      %v896 = vshrl.u32 %v895, 7
      %v897 = vsub.s32 0, %v896
      %v898 = vrot.slane %v885, %v897
      %v899 = vlaneseq
      %v900 = vshrl.u32 %v899, 7
      %v901 = vsub.s32 0, %v900
      %v902 = vrot.slane %v886, %v901
      %vm903 = vcmp.eq.s32.totalorder %v890, 1
      %vm904 = vcmp.eq.s32.totalorder %v894, 1
      %vm905 = vcmp.eq.s32.totalorder %v898, 1
      %vm906 = vcmp.eq.s32.totalorder %v902, 1
      %v907 = vsel %vm903, %v866, 0.0
      %v908 = vsel %vm904, %v865, 0.0
      %v909 = vsel %vm905, %v864, 0.0
      %v910 = vsel %vm906, %v863, 0.0
      %911 = vst [vmem:[#allocation2 + $0xc0] sm:$0xff] %v907
      %912 = vst [vmem:[#allocation2 + $0xc8] sm:$0xff] %v908
      %913 = vst [vmem:[#allocation2 + $0xd0] sm:$0xff] %v909
      %914 = vst [vmem:[#allocation2 + $0xd8] sm:$0xff] %v910
      %915 = vrot.lane.b32.xlu0 %v343, 56
      %v916 = vpop.permute.xlu0 %915
      %917 = vrot.lane.b32.xlu0 %v344, 56
      %v918 = vpop.permute.xlu0 %917
      %919 = vrot.lane.b32.xlu0 %v345, 56
      %v920 = vpop.permute.xlu0 %919
      %921 = vrot.lane.b32.xlu0 %v346, 56
      %v922 = vpop.permute.xlu0 %921
      %923 = vrot.lane.b32.xlu0 %v347, 56
      %v924 = vpop.permute.xlu0 %923
      %vm925 = vcmp.lt.s32.totalorder %v360, 56
      %v926 = vsel %vm925, %v922, %v924
      %v927 = vsel %vm925, %v920, %v922
      %v928 = vsel %vm925, %v918, %v920
      %v929 = vsel %vm925, %v916, %v918
      %v930 = vsel %vm875, 1, 0
      %v931 = vsel %vm876, 1, 0
      %v932 = vsel %vm877, 1, 0
      %v933 = vsel %vm878, 1, 0
      %v934 = vlaneseq
      %v935 = vshrl.u32 %v934, 7
      %v936 = vsub.s32 0, %v935
      %v937 = vrot.slane %v930, %v936
      %v938 = vlaneseq
      %v939 = vshrl.u32 %v938, 7
      %v940 = vsub.s32 0, %v939
      %v941 = vrot.slane %v931, %v940
      %v942 = vlaneseq
      %v943 = vshrl.u32 %v942, 7
      %v944 = vsub.s32 0, %v943
      %v945 = vrot.slane %v932, %v944
      %v946 = vlaneseq
      %v947 = vshrl.u32 %v946, 7
      %v948 = vsub.s32 0, %v947
      %v949 = vrot.slane %v933, %v948
      %vm950 = vcmp.eq.s32.totalorder %v937, 1
      %vm951 = vcmp.eq.s32.totalorder %v941, 1
      %vm952 = vcmp.eq.s32.totalorder %v945, 1
      %vm953 = vcmp.eq.s32.totalorder %v949, 1
      %v954 = vsel %vm950, %v929, 0.0
      %v955 = vsel %vm951, %v928, 0.0
      %v956 = vsel %vm952, %v927, 0.0
      %v957 = vsel %vm953, %v926, 0.0
      %958 = vst [vmem:[#allocation2 + $0xe0] sm:$0xff] %v954
      %959 = vst [vmem:[#allocation2 + $0xe8] sm:$0xff] %v955
      %960 = vst [vmem:[#allocation2 + $0xf0] sm:$0xff] %v956
      %961 = vst [vmem:[#allocation2 + $0xf8] sm:$0xff] %v957
      %962 = vrot.lane.b32.xlu0 %v343, 55
      %v963 = vpop.permute.xlu0 %962
      %964 = vrot.lane.b32.xlu0 %v344, 55
      %v965 = vpop.permute.xlu0 %964
      %966 = vrot.lane.b32.xlu0 %v345, 55
      %v967 = vpop.permute.xlu0 %966
      %968 = vrot.lane.b32.xlu0 %v346, 55
      %v969 = vpop.permute.xlu0 %968
      %970 = vrot.lane.b32.xlu0 %v347, 55
      %v971 = vpop.permute.xlu0 %970
      %vm972 = vcmp.lt.s32.totalorder %v360, 55
      %v973 = vsel %vm972, %v969, %v971
      %v974 = vsel %vm972, %v967, %v969
      %v975 = vsel %vm972, %v965, %v967
      %v976 = vsel %vm972, %v963, %v965
      %vm977 = vmand %vm875, %vm492
      %vm978 = vmand %vm876, %vm493
      %vm979 = vmand %vm877, %vm494
      %vm980 = vmand %vm878, %vm495
      %v981 = vsel %vm977, 1, 0
      %v982 = vsel %vm978, 1, 0
      %v983 = vsel %vm979, 1, 0
      %v984 = vsel %vm980, 1, 0
      %v985 = vlaneseq
      %v986 = vshrl.u32 %v985, 7
      %v987 = vsub.s32 0, %v986
      %v988 = vrot.slane %v981, %v987
      %v989 = vlaneseq
      %v990 = vshrl.u32 %v989, 7
      %v991 = vsub.s32 0, %v990
      %v992 = vrot.slane %v982, %v991
      %v993 = vlaneseq
      %v994 = vshrl.u32 %v993, 7
      %v995 = vsub.s32 0, %v994
      %v996 = vrot.slane %v983, %v995
      %v997 = vlaneseq
      %v998 = vshrl.u32 %v997, 7
      %v999 = vsub.s32 0, %v998
      %v1000 = vrot.slane %v984, %v999
      %vm1001 = vcmp.eq.s32.totalorder %v988, 1
      %vm1002 = vcmp.eq.s32.totalorder %v992, 1
      %vm1003 = vcmp.eq.s32.totalorder %v996, 1
      %vm1004 = vcmp.eq.s32.totalorder %v1000, 1
      %v1005 = vsel %vm1001, %v976, 0.0
      %v1006 = vsel %vm1002, %v975, 0.0
      %v1007 = vsel %vm1003, %v974, 0.0
      %v1008 = vsel %vm1004, %v973, 0.0
      %1009 = vst [vmem:[#allocation2 + $0x100] sm:$0xff] %v1005
      %1010 = vst [vmem:[#allocation2 + $0x108] sm:$0xff] %v1006
      %1011 = vst [vmem:[#allocation2 + $0x110] sm:$0xff] %v1007
      %1012 = vst [vmem:[#allocation2 + $0x118] sm:$0xff] %v1008
      %1013 = vrot.lane.b32.xlu0 %v343, 9
      %v1014 = vpop.permute.xlu0 %1013
      %1015 = vrot.lane.b32.xlu0 %v344, 9
      %v1016 = vpop.permute.xlu0 %1015
      %1017 = vrot.lane.b32.xlu0 %v345, 9
      %v1018 = vpop.permute.xlu0 %1017
      %1019 = vrot.lane.b32.xlu0 %v346, 9
      %v1020 = vpop.permute.xlu0 %1019
      %1021 = vrot.lane.b32.xlu0 %v347, 9
      %v1022 = vpop.permute.xlu0 %1021
      %vm1023 = vcmp.lt.s32.totalorder %v360, 9
      %v1024 = vsel %vm1023, %v1020, %v1022
      %v1025 = vsel %vm1023, %v1018, %v1020
      %v1026 = vsel %vm1023, %v1016, %v1018
      %v1027 = vsel %vm1023, %v1014, %v1016
      %v1028 = vlaneseq
      %v1029 = vshrl.u32 %v1028, 7
      %v1030 = vsub.s32 2, %v1029
      %v1031 = vrot.slane %v441, %v1030
      %v1032 = vlaneseq
      %v1033 = vshrl.u32 %v1032, 7
      %v1034 = vsub.s32 2, %v1033
      %v1035 = vrot.slane %v442, %v1034
      %v1036 = vlaneseq
      %v1037 = vshrl.u32 %v1036, 7
      %v1038 = vsub.s32 2, %v1037
      %v1039 = vrot.slane %v443, %v1038
      %v1040 = vlaneseq
      %v1041 = vshrl.u32 %v1040, 7
      %v1042 = vsub.s32 2, %v1041
      %v1043 = vrot.slane %v444, %v1042
      %vm1044 = vcmp.eq.s32.totalorder %v1031, 1
      %vm1045 = vcmp.eq.s32.totalorder %v1035, 1
      %vm1046 = vcmp.eq.s32.totalorder %v1039, 1
      %vm1047 = vcmp.eq.s32.totalorder %v1043, 1
      %v1048 = vsel %vm1044, %v1027, 0.0
      %v1049 = vsel %vm1045, %v1026, 0.0
      %v1050 = vsel %vm1046, %v1025, 0.0
      %v1051 = vsel %vm1047, %v1024, 0.0
      %1052 = vst [vmem:[#allocation2 + $0x120] sm:$0xff] %v1048
      %1053 = vst [vmem:[#allocation2 + $0x128] sm:$0xff] %v1049
      %1054 = vst [vmem:[#allocation2 + $0x130] sm:$0xff] %v1050
      %1055 = vst [vmem:[#allocation2 + $0x138] sm:$0xff] %v1051
      %1056 = vrot.lane.b32.xlu0 %v343, 8
      %v1057 = vpop.permute.xlu0 %1056
      %1058 = vrot.lane.b32.xlu0 %v344, 8
      %v1059 = vpop.permute.xlu0 %1058
      %1060 = vrot.lane.b32.xlu0 %v345, 8
      %v1061 = vpop.permute.xlu0 %1060
      %1062 = vrot.lane.b32.xlu0 %v346, 8
      %v1063 = vpop.permute.xlu0 %1062
      %1064 = vrot.lane.b32.xlu0 %v347, 8
      %v1065 = vpop.permute.xlu0 %1064
      %vm1066 = vcmp.lt.s32.totalorder %v360, 8
      %v1067 = vsel %vm1066, %v1063, %v1065
      %v1068 = vsel %vm1066, %v1061, %v1063
      %v1069 = vsel %vm1066, %v1059, %v1061
      %v1070 = vsel %vm1066, %v1057, %v1059
      %v1075 = vrot.slane %v1070, 6
      %v1076 = vrot.slane %v1069, 6
      %v1077 = vrot.slane %v1068, 6
      %v1078 = vrot.slane %v1067, 6
      %v1079 = vrot.slane %v1070, 7
      %v1080 = vrot.slane %v1069, 7
      %v1081 = vrot.slane %v1068, 7
      %v1082 = vrot.slane %v1067, 7
      %v1083 = vrot.slane %v1070, 1
      %v1084 = vrot.slane %v1069, 1
      %v1085 = vrot.slane %v1068, 1
      %v1086 = vrot.slane %v1067, 1
      %v1087 = vrot.slane %v1070, 2
      %v1088 = vrot.slane %v1069, 2
      %v1089 = vrot.slane %v1068, 2
      %v1090 = vrot.slane %v1067, 2
      %v1091 = vrot.slane %v1070, 3
      %v1092 = vrot.slane %v1069, 3
      %v1093 = vrot.slane %v1068, 3
      %v1094 = vrot.slane %v1067, 3
      %v1095 = vrot.slane %v1070, 4
      %v1096 = vrot.slane %v1069, 4
      %v1097 = vrot.slane %v1068, 4
      %v1098 = vrot.slane %v1067, 4
      %v1099 = vrot.slane %v1070, 5
      %v1100 = vrot.slane %v1069, 5
      %v1101 = vrot.slane %v1068, 5
      %v1102 = vrot.slane %v1067, 5
      %v1135 = vsel %vm598, %v1075, 0.0
      %v1136 = vsel %vm599, %v1076, 0.0
      %v1137 = vsel %vm600, %v1077, 0.0
      %v1138 = vsel %vm601, %v1078, 0.0
      %v1139 = vsel %vm598, %v1079, 0.0
      %v1140 = vsel %vm599, %v1080, 0.0
      %v1141 = vsel %vm600, %v1081, 0.0
      %v1142 = vsel %vm601, %v1082, 0.0
      %v1143 = vsel %vm598, %v1070, 0.0
      %v1144 = vsel %vm599, %v1069, 0.0
      %v1145 = vsel %vm600, %v1068, 0.0
      %v1146 = vsel %vm601, %v1067, 0.0
      %v1147 = vsel %vm598, %v1083, 0.0
      %v1148 = vsel %vm599, %v1084, 0.0
      %v1149 = vsel %vm600, %v1085, 0.0
      %v1150 = vsel %vm601, %v1086, 0.0
      %v1151 = vsel %vm598, %v1087, 0.0
      %v1152 = vsel %vm599, %v1088, 0.0
      %v1153 = vsel %vm600, %v1089, 0.0
      %v1154 = vsel %vm601, %v1090, 0.0
      %v1155 = vsel %vm598, %v1091, 0.0
      %v1156 = vsel %vm599, %v1092, 0.0
      %v1157 = vsel %vm600, %v1093, 0.0
      %v1158 = vsel %vm601, %v1094, 0.0
      %v1159 = vsel %vm598, %v1095, 0.0
      %v1160 = vsel %vm599, %v1096, 0.0
      %v1161 = vsel %vm600, %v1097, 0.0
      %v1162 = vsel %vm601, %v1098, 0.0
      %v1163 = vsel %vm598, %v1099, 0.0
      %v1164 = vsel %vm599, %v1100, 0.0
      %v1165 = vsel %vm600, %v1101, 0.0
      %v1166 = vsel %vm601, %v1102, 0.0
      %v1199 = vrot.slane %v1135, 2
      %v1200 = vrot.slane %v1139, 1
      %v1201 = vsel %vm731, %v1200, %v1199
      %v1202 = vsel %vm734, %v1143, %v1201
      %v1203 = vrot.slane %v1147, 7
      %v1204 = vsel %vm737, %v1203, %v1202
      %v1205 = vrot.slane %v1151, 6
      %v1206 = vsel %vm740, %v1205, %v1204
      %v1207 = vrot.slane %v1155, 5
      %v1208 = vsel %vm743, %v1207, %v1206
      %v1209 = vrot.slane %v1159, 4
      %v1210 = vsel %vm746, %v1209, %v1208
      %v1211 = vrot.slane %v1163, 3
      %v1212 = vsel %vm749, %v1211, %v1210
      %v1213 = vrot.slane %v1136, 2
      %v1214 = vrot.slane %v1140, 1
      %v1215 = vsel %vm731, %v1214, %v1213
      %v1216 = vsel %vm734, %v1144, %v1215
      %v1217 = vrot.slane %v1148, 7
      %v1218 = vsel %vm737, %v1217, %v1216
      %v1219 = vrot.slane %v1152, 6
      %v1220 = vsel %vm740, %v1219, %v1218
      %v1221 = vrot.slane %v1156, 5
      %v1222 = vsel %vm743, %v1221, %v1220
      %v1223 = vrot.slane %v1160, 4
      %v1224 = vsel %vm746, %v1223, %v1222
      %v1225 = vrot.slane %v1164, 3
      %v1226 = vsel %vm749, %v1225, %v1224
      %v1227 = vrot.slane %v1137, 2
      %v1228 = vrot.slane %v1141, 1
      %v1229 = vsel %vm731, %v1228, %v1227
      %v1230 = vsel %vm734, %v1145, %v1229
      %v1231 = vrot.slane %v1149, 7
      %v1232 = vsel %vm737, %v1231, %v1230
      %v1233 = vrot.slane %v1153, 6
      %v1234 = vsel %vm740, %v1233, %v1232
      %v1235 = vrot.slane %v1157, 5
      %v1236 = vsel %vm743, %v1235, %v1234
      %v1237 = vrot.slane %v1161, 4
      %v1238 = vsel %vm746, %v1237, %v1236
      %v1239 = vrot.slane %v1165, 3
      %v1240 = vsel %vm749, %v1239, %v1238
      %v1241 = vrot.slane %v1138, 2
      %v1242 = vrot.slane %v1142, 1
      %v1243 = vsel %vm731, %v1242, %v1241
      %v1244 = vsel %vm734, %v1146, %v1243
      %v1245 = vrot.slane %v1150, 7
      %v1246 = vsel %vm737, %v1245, %v1244
      %v1247 = vrot.slane %v1154, 6
      %v1248 = vsel %vm740, %v1247, %v1246
      %v1249 = vrot.slane %v1158, 5
      %v1250 = vsel %vm743, %v1249, %v1248
      %v1251 = vrot.slane %v1162, 4
      %v1252 = vsel %vm746, %v1251, %v1250
      %v1253 = vrot.slane %v1166, 3
      %v1254 = vsel %vm749, %v1253, %v1252
      %1259 = vst [vmem:[#allocation2 + $0x140] sm:$0xff] %v1212
      %1260 = vst [vmem:[#allocation2 + $0x148] sm:$0xff] %v1226
      %1261 = vst [vmem:[#allocation2 + $0x150] sm:$0xff] %v1240
      %1262 = vst [vmem:[#allocation2 + $0x158] sm:$0xff] %v1254
      %1263 = vrot.lane.b32.xlu0 %v343, 7
      %v1264 = vpop.permute.xlu0 %1263
      %1265 = vrot.lane.b32.xlu0 %v344, 7
      %v1266 = vpop.permute.xlu0 %1265
      %1267 = vrot.lane.b32.xlu0 %v345, 7
      %v1268 = vpop.permute.xlu0 %1267
      %1269 = vrot.lane.b32.xlu0 %v346, 7
      %v1270 = vpop.permute.xlu0 %1269
      %1271 = vrot.lane.b32.xlu0 %v347, 7
      %v1272 = vpop.permute.xlu0 %1271
      %vm1273 = vcmp.lt.s32.totalorder %v360, 7
      %v1274 = vsel %vm1273, %v1270, %v1272
      %v1275 = vsel %vm1273, %v1268, %v1270
      %v1276 = vsel %vm1273, %v1266, %v1268
      %v1277 = vsel %vm1273, %v1264, %v1266
      %v1278 = vlaneseq
      %v1279 = vshrl.u32 %v1278, 7
      %v1280 = vsub.s32 2, %v1279
      %v1281 = vrot.slane %v930, %v1280
      %v1282 = vlaneseq
      %v1283 = vshrl.u32 %v1282, 7
      %v1284 = vsub.s32 2, %v1283
      %v1285 = vrot.slane %v931, %v1284
      %v1286 = vlaneseq
      %v1287 = vshrl.u32 %v1286, 7
      %v1288 = vsub.s32 2, %v1287
      %v1289 = vrot.slane %v932, %v1288
      %v1290 = vlaneseq
      %v1291 = vshrl.u32 %v1290, 7
      %v1292 = vsub.s32 2, %v1291
      %v1293 = vrot.slane %v933, %v1292
      %vm1294 = vcmp.eq.s32.totalorder %v1281, 1
      %vm1295 = vcmp.eq.s32.totalorder %v1285, 1
      %vm1296 = vcmp.eq.s32.totalorder %v1289, 1
      %vm1297 = vcmp.eq.s32.totalorder %v1293, 1
      %v1298 = vsel %vm1294, %v1277, 0.0
      %v1299 = vsel %vm1295, %v1276, 0.0
      %v1300 = vsel %vm1296, %v1275, 0.0
      %v1301 = vsel %vm1297, %v1274, 0.0
      %1302 = vst [vmem:[#allocation2 + $0x160] sm:$0xff] %v1298
      %1303 = vst [vmem:[#allocation2 + $0x168] sm:$0xff] %v1299
      %1304 = vst [vmem:[#allocation2 + $0x170] sm:$0xff] %v1300
      %1305 = vst [vmem:[#allocation2 + $0x178] sm:$0xff] %v1301
      %1306 = vrot.lane.b32.xlu0 %v343, 1
      %v1307 = vpop.permute.xlu0 %1306
      %1308 = vrot.lane.b32.xlu0 %v344, 1
      %v1309 = vpop.permute.xlu0 %1308
      %1310 = vrot.lane.b32.xlu0 %v345, 1
      %v1311 = vpop.permute.xlu0 %1310
      %1312 = vrot.lane.b32.xlu0 %v346, 1
      %v1313 = vpop.permute.xlu0 %1312
      %1314 = vrot.lane.b32.xlu0 %v347, 1
      %v1315 = vpop.permute.xlu0 %1314
      %vm1316 = vcmp.lt.s32.totalorder %v360, 1
      %v1317 = vsel %vm1316, %v1313, %v1315
      %v1318 = vsel %vm1316, %v1311, %v1313
      %v1319 = vsel %vm1316, %v1309, %v1311
      %v1320 = vsel %vm1316, %v1307, %v1309
      %v1325 = vrot.slane %v1320, 4
      %v1326 = vrot.slane %v1319, 4
      %v1327 = vrot.slane %v1318, 4
      %v1328 = vrot.slane %v1317, 4
      %v1329 = vrot.slane %v1320, 5
      %v1330 = vrot.slane %v1319, 5
      %v1331 = vrot.slane %v1318, 5
      %v1332 = vrot.slane %v1317, 5
      %v1333 = vrot.slane %v1320, 6
      %v1334 = vrot.slane %v1319, 6
      %v1335 = vrot.slane %v1318, 6
      %v1336 = vrot.slane %v1317, 6
      %v1337 = vrot.slane %v1320, 7
      %v1338 = vrot.slane %v1319, 7
      %v1339 = vrot.slane %v1318, 7
      %v1340 = vrot.slane %v1317, 7
      %v1341 = vrot.slane %v1320, 1
      %v1342 = vrot.slane %v1319, 1
      %v1343 = vrot.slane %v1318, 1
      %v1344 = vrot.slane %v1317, 1
      %v1345 = vrot.slane %v1320, 2
      %v1346 = vrot.slane %v1319, 2
      %v1347 = vrot.slane %v1318, 2
      %v1348 = vrot.slane %v1317, 2
      %v1349 = vrot.slane %v1320, 3
      %v1350 = vrot.slane %v1319, 3
      %v1351 = vrot.slane %v1318, 3
      %v1352 = vrot.slane %v1317, 3
      %v1385 = vsel %vm598, %v1325, 0.0
      %v1386 = vsel %vm599, %v1326, 0.0
      %v1387 = vsel %vm600, %v1327, 0.0
      %v1388 = vsel %vm601, %v1328, 0.0
      %v1389 = vsel %vm598, %v1329, 0.0
      %v1390 = vsel %vm599, %v1330, 0.0
      %v1391 = vsel %vm600, %v1331, 0.0
      %v1392 = vsel %vm601, %v1332, 0.0
      %v1393 = vsel %vm598, %v1333, 0.0
      %v1394 = vsel %vm599, %v1334, 0.0
      %v1395 = vsel %vm600, %v1335, 0.0
      %v1396 = vsel %vm601, %v1336, 0.0
      %v1397 = vsel %vm598, %v1337, 0.0
      %v1398 = vsel %vm599, %v1338, 0.0
      %v1399 = vsel %vm600, %v1339, 0.0
      %v1400 = vsel %vm601, %v1340, 0.0
      %v1401 = vsel %vm598, %v1320, 0.0
      %v1402 = vsel %vm599, %v1319, 0.0
      %v1403 = vsel %vm600, %v1318, 0.0
      %v1404 = vsel %vm601, %v1317, 0.0
      %v1405 = vsel %vm598, %v1341, 0.0
      %v1406 = vsel %vm599, %v1342, 0.0
      %v1407 = vsel %vm600, %v1343, 0.0
      %v1408 = vsel %vm601, %v1344, 0.0
      %v1409 = vsel %vm598, %v1345, 0.0
      %v1410 = vsel %vm599, %v1346, 0.0
      %v1411 = vsel %vm600, %v1347, 0.0
      %v1412 = vsel %vm601, %v1348, 0.0
      %v1413 = vsel %vm598, %v1349, 0.0
      %v1414 = vsel %vm599, %v1350, 0.0
      %v1415 = vsel %vm600, %v1351, 0.0
      %v1416 = vsel %vm601, %v1352, 0.0
      %v1449 = vrot.slane %v1385, 4
      %v1450 = vrot.slane %v1389, 3
      %v1451 = vsel %vm731, %v1450, %v1449
      %v1452 = vrot.slane %v1393, 2
      %v1453 = vsel %vm734, %v1452, %v1451
      %v1454 = vrot.slane %v1397, 1
      %v1455 = vsel %vm737, %v1454, %v1453
      %v1456 = vsel %vm740, %v1401, %v1455
      %v1457 = vrot.slane %v1405, 7
      %v1458 = vsel %vm743, %v1457, %v1456
      %v1459 = vrot.slane %v1409, 6
      %v1460 = vsel %vm746, %v1459, %v1458
      %v1461 = vrot.slane %v1413, 5
      %v1462 = vsel %vm749, %v1461, %v1460
      %v1463 = vrot.slane %v1386, 4
      %v1464 = vrot.slane %v1390, 3
      %v1465 = vsel %vm731, %v1464, %v1463
      %v1466 = vrot.slane %v1394, 2
      %v1467 = vsel %vm734, %v1466, %v1465
      %v1468 = vrot.slane %v1398, 1
      %v1469 = vsel %vm737, %v1468, %v1467
      %v1470 = vsel %vm740, %v1402, %v1469
      %v1471 = vrot.slane %v1406, 7
      %v1472 = vsel %vm743, %v1471, %v1470
      %v1473 = vrot.slane %v1410, 6
      %v1474 = vsel %vm746, %v1473, %v1472
      %v1475 = vrot.slane %v1414, 5
      %v1476 = vsel %vm749, %v1475, %v1474
      %v1477 = vrot.slane %v1387, 4
      %v1478 = vrot.slane %v1391, 3
      %v1479 = vsel %vm731, %v1478, %v1477
      %v1480 = vrot.slane %v1395, 2
      %v1481 = vsel %vm734, %v1480, %v1479
      %v1482 = vrot.slane %v1399, 1
      %v1483 = vsel %vm737, %v1482, %v1481
      %v1484 = vsel %vm740, %v1403, %v1483
      %v1485 = vrot.slane %v1407, 7
      %v1486 = vsel %vm743, %v1485, %v1484
      %v1487 = vrot.slane %v1411, 6
      %v1488 = vsel %vm746, %v1487, %v1486
      %v1489 = vrot.slane %v1415, 5
      %v1490 = vsel %vm749, %v1489, %v1488
      %v1491 = vrot.slane %v1388, 4
      %v1492 = vrot.slane %v1392, 3
      %v1493 = vsel %vm731, %v1492, %v1491
      %v1494 = vrot.slane %v1396, 2
      %v1495 = vsel %vm734, %v1494, %v1493
      %v1496 = vrot.slane %v1400, 1
      %v1497 = vsel %vm737, %v1496, %v1495
      %v1498 = vsel %vm740, %v1404, %v1497
      %v1499 = vrot.slane %v1408, 7
      %v1500 = vsel %vm743, %v1499, %v1498
      %v1501 = vrot.slane %v1412, 6
      %v1502 = vsel %vm746, %v1501, %v1500
      %v1503 = vrot.slane %v1416, 5
      %v1504 = vsel %vm749, %v1503, %v1502
      %1509 = vst [vmem:[#allocation2 + $0x180] sm:$0xff] %v1462
      %1510 = vst [vmem:[#allocation2 + $0x188] sm:$0xff] %v1476
      %1511 = vst [vmem:[#allocation2 + $0x190] sm:$0xff] %v1490
      %1512 = vst [vmem:[#allocation2 + $0x198] sm:$0xff] %v1504
      %1513 = vst [vmem:[#allocation2 + $0x1a0] sm:$0xff] %v344
      %1514 = vst [vmem:[#allocation2 + $0x1a8] sm:$0xff] %v345
      %1515 = vst [vmem:[#allocation2 + $0x1b0] sm:$0xff] %v346
      %1516 = vst [vmem:[#allocation2 + $0x1b8] sm:$0xff] %v347
      %1517 = vrot.lane.b32.xlu0 %v344, 127
      %v1518 = vpop.permute.xlu0 %1517
      %1519 = vrot.lane.b32.xlu0 %v345, 127
      %v1520 = vpop.permute.xlu0 %1519
      %1521 = vrot.lane.b32.xlu0 %v346, 127
      %v1522 = vpop.permute.xlu0 %1521
      %1523 = vrot.lane.b32.xlu0 %v347, 127
      %v1524 = vpop.permute.xlu0 %1523
      %1525 = vrot.lane.b32.xlu0 %v348, 127
      %v1526 = vpop.permute.xlu0 %1525
      %vm1527 = vcmp.lt.s32.totalorder %v360, 127
      %v1528 = vsel %vm1527, %v1524, %v1526
      %v1529 = vsel %vm1527, %v1522, %v1524
      %v1530 = vsel %vm1527, %v1520, %v1522
      %v1531 = vsel %vm1527, %v1518, %v1520
      %v1536 = vrot.slane %v1531, 3
      %v1537 = vrot.slane %v1530, 3
      %v1538 = vrot.slane %v1529, 3
      %v1539 = vrot.slane %v1528, 3
      %v1540 = vrot.slane %v1531, 4
      %v1541 = vrot.slane %v1530, 4
      %v1542 = vrot.slane %v1529, 4
      %v1543 = vrot.slane %v1528, 4
      %v1544 = vrot.slane %v1531, 5
      %v1545 = vrot.slane %v1530, 5
      %v1546 = vrot.slane %v1529, 5
      %v1547 = vrot.slane %v1528, 5
      %v1548 = vrot.slane %v1531, 6
      %v1549 = vrot.slane %v1530, 6
      %v1550 = vrot.slane %v1529, 6
      %v1551 = vrot.slane %v1528, 6
      %v1552 = vrot.slane %v1531, 7
      %v1553 = vrot.slane %v1530, 7
      %v1554 = vrot.slane %v1529, 7
      %v1555 = vrot.slane %v1528, 7
      %v1556 = vrot.slane %v1531, 1
      %v1557 = vrot.slane %v1530, 1
      %v1558 = vrot.slane %v1529, 1
      %v1559 = vrot.slane %v1528, 1
      %v1560 = vrot.slane %v1531, 2
      %v1561 = vrot.slane %v1530, 2
      %v1562 = vrot.slane %v1529, 2
      %v1563 = vrot.slane %v1528, 2
      %v1596 = vsel %vm598, %v1536, 0.0
      %v1597 = vsel %vm599, %v1537, 0.0
      %v1598 = vsel %vm600, %v1538, 0.0
      %v1599 = vsel %vm601, %v1539, 0.0
      %v1600 = vsel %vm598, %v1540, 0.0
      %v1601 = vsel %vm599, %v1541, 0.0
      %v1602 = vsel %vm600, %v1542, 0.0
      %v1603 = vsel %vm601, %v1543, 0.0
      %v1604 = vsel %vm598, %v1544, 0.0
      %v1605 = vsel %vm599, %v1545, 0.0
      %v1606 = vsel %vm600, %v1546, 0.0
      %v1607 = vsel %vm601, %v1547, 0.0
      %v1608 = vsel %vm598, %v1548, 0.0
      %v1609 = vsel %vm599, %v1549, 0.0
      %v1610 = vsel %vm600, %v1550, 0.0
      %v1611 = vsel %vm601, %v1551, 0.0
      %v1612 = vsel %vm598, %v1552, 0.0
      %v1613 = vsel %vm599, %v1553, 0.0
      %v1614 = vsel %vm600, %v1554, 0.0
      %v1615 = vsel %vm601, %v1555, 0.0
      %v1616 = vsel %vm598, %v1531, 0.0
      %v1617 = vsel %vm599, %v1530, 0.0
      %v1618 = vsel %vm600, %v1529, 0.0
      %v1619 = vsel %vm601, %v1528, 0.0
      %v1620 = vsel %vm598, %v1556, 0.0
      %v1621 = vsel %vm599, %v1557, 0.0
      %v1622 = vsel %vm600, %v1558, 0.0
      %v1623 = vsel %vm601, %v1559, 0.0
      %v1624 = vsel %vm598, %v1560, 0.0
      %v1625 = vsel %vm599, %v1561, 0.0
      %v1626 = vsel %vm600, %v1562, 0.0
      %v1627 = vsel %vm601, %v1563, 0.0
      %v1660 = vrot.slane %v1596, 5
      %v1661 = vrot.slane %v1600, 4
      %v1662 = vsel %vm731, %v1661, %v1660
      %v1663 = vrot.slane %v1604, 3
      %v1664 = vsel %vm734, %v1663, %v1662
      %v1665 = vrot.slane %v1608, 2
      %v1666 = vsel %vm737, %v1665, %v1664
      %v1667 = vrot.slane %v1612, 1
      %v1668 = vsel %vm740, %v1667, %v1666
      %v1669 = vsel %vm743, %v1616, %v1668
      %v1670 = vrot.slane %v1620, 7
      %v1671 = vsel %vm746, %v1670, %v1669
      %v1672 = vrot.slane %v1624, 6
      %v1673 = vsel %vm749, %v1672, %v1671
      %v1674 = vrot.slane %v1597, 5
      %v1675 = vrot.slane %v1601, 4
      %v1676 = vsel %vm731, %v1675, %v1674
      %v1677 = vrot.slane %v1605, 3
      %v1678 = vsel %vm734, %v1677, %v1676
      %v1679 = vrot.slane %v1609, 2
      %v1680 = vsel %vm737, %v1679, %v1678
      %v1681 = vrot.slane %v1613, 1
      %v1682 = vsel %vm740, %v1681, %v1680
      %v1683 = vsel %vm743, %v1617, %v1682
      %v1684 = vrot.slane %v1621, 7
      %v1685 = vsel %vm746, %v1684, %v1683
      %v1686 = vrot.slane %v1625, 6
      %v1687 = vsel %vm749, %v1686, %v1685
      %v1688 = vrot.slane %v1598, 5
      %v1689 = vrot.slane %v1602, 4
      %v1690 = vsel %vm731, %v1689, %v1688
      %v1691 = vrot.slane %v1606, 3
      %v1692 = vsel %vm734, %v1691, %v1690
      %v1693 = vrot.slane %v1610, 2
      %v1694 = vsel %vm737, %v1693, %v1692
      %v1695 = vrot.slane %v1614, 1
      %v1696 = vsel %vm740, %v1695, %v1694
      %v1697 = vsel %vm743, %v1618, %v1696
      %v1698 = vrot.slane %v1622, 7
      %v1699 = vsel %vm746, %v1698, %v1697
      %v1700 = vrot.slane %v1626, 6
      %v1701 = vsel %vm749, %v1700, %v1699
      %v1702 = vrot.slane %v1599, 5
      %v1703 = vrot.slane %v1603, 4
      %v1704 = vsel %vm731, %v1703, %v1702
      %v1705 = vrot.slane %v1607, 3
      %v1706 = vsel %vm734, %v1705, %v1704
      %v1707 = vrot.slane %v1611, 2
      %v1708 = vsel %vm737, %v1707, %v1706
      %v1709 = vrot.slane %v1615, 1
      %v1710 = vsel %vm740, %v1709, %v1708
      %v1711 = vsel %vm743, %v1619, %v1710
      %v1712 = vrot.slane %v1623, 7
      %v1713 = vsel %vm746, %v1712, %v1711
      %v1714 = vrot.slane %v1627, 6
      %v1715 = vsel %vm749, %v1714, %v1713
      %1720 = vst [vmem:[#allocation2 + $0x1c0] sm:$0xff] %v1673
      %1721 = vst [vmem:[#allocation2 + $0x1c8] sm:$0xff] %v1687
      %1722 = vst [vmem:[#allocation2 + $0x1d0] sm:$0xff] %v1701
      %1723 = vst [vmem:[#allocation2 + $0x1d8] sm:$0xff] %v1715
      %1724 = vrot.lane.b32.xlu0 %v344, 121
      %v1725 = vpop.permute.xlu0 %1724
      %1726 = vrot.lane.b32.xlu0 %v345, 121
      %v1727 = vpop.permute.xlu0 %1726
      %1728 = vrot.lane.b32.xlu0 %v346, 121
      %v1729 = vpop.permute.xlu0 %1728
      %1730 = vrot.lane.b32.xlu0 %v347, 121
      %v1731 = vpop.permute.xlu0 %1730
      %1732 = vrot.lane.b32.xlu0 %v348, 121
      %v1733 = vpop.permute.xlu0 %1732
      %vm1734 = vcmp.lt.s32.totalorder %v360, 121
      %v1735 = vsel %vm1734, %v1731, %v1733
      %v1736 = vsel %vm1734, %v1729, %v1731
      %v1737 = vsel %vm1734, %v1727, %v1729
      %v1738 = vsel %vm1734, %v1725, %v1727
      %v1739 = vrot.slane %v366, 1
      %v1740 = vrot.slane %v367, 1
      %v1741 = vrot.slane %v368, 1
      %v1742 = vrot.slane %v369, 1
      %vm1743 = vcmp.ne.s32.totalorder %v1739, 0
      %vm1744 = vcmp.ne.s32.totalorder %v1740, 0
      %vm1745 = vcmp.ne.s32.totalorder %v1741, 0
      %vm1746 = vcmp.ne.s32.totalorder %v1742, 0
      %vm1747 = vmand %vm270, %vm1743
      %vm1748 = vmand %vm271, %vm1744
      %vm1749 = vmand %vm272, %vm1745
      %vm1750 = vmand %vm273, %vm1746
      %v1751 = vsel %vm1747, 1, 0
      %v1752 = vsel %vm1748, 1, 0
      %v1753 = vsel %vm1749, 1, 0
      %v1754 = vsel %vm1750, 1, 0
      %v1755 = vlaneseq
      %v1756 = vshrl.u32 %v1755, 7
      %v1757 = vsub.s32 3, %v1756
      %v1758 = vrot.slane %v1751, %v1757
      %v1759 = vlaneseq
      %v1760 = vshrl.u32 %v1759, 7
      %v1761 = vsub.s32 3, %v1760
      %v1762 = vrot.slane %v1752, %v1761
      %v1763 = vlaneseq
      %v1764 = vshrl.u32 %v1763, 7
      %v1765 = vsub.s32 3, %v1764
      %v1766 = vrot.slane %v1753, %v1765
      %v1767 = vlaneseq
      %v1768 = vshrl.u32 %v1767, 7
      %v1769 = vsub.s32 3, %v1768
      %v1770 = vrot.slane %v1754, %v1769
      %vm1771 = vcmp.eq.s32.totalorder %v1758, 1
      %vm1772 = vcmp.eq.s32.totalorder %v1762, 1
      %vm1773 = vcmp.eq.s32.totalorder %v1766, 1
      %vm1774 = vcmp.eq.s32.totalorder %v1770, 1
      %v1775 = vsel %vm1771, %v1738, 0.0
      %v1776 = vsel %vm1772, %v1737, 0.0
      %v1777 = vsel %vm1773, %v1736, 0.0
      %v1778 = vsel %vm1774, %v1735, 0.0
      %1779 = vst [vmem:[#allocation2 + $0x1e0] sm:$0xff] %v1775
      %1780 = vst [vmem:[#allocation2 + $0x1e8] sm:$0xff] %v1776
      %1781 = vst [vmem:[#allocation2 + $0x1f0] sm:$0xff] %v1777
      %1782 = vst [vmem:[#allocation2 + $0x1f8] sm:$0xff] %v1778
      %1783 = vrot.lane.b32.xlu0 %v344, 120
      %v1784 = vpop.permute.xlu0 %1783
      %1785 = vrot.lane.b32.xlu0 %v345, 120
      %v1786 = vpop.permute.xlu0 %1785
      %1787 = vrot.lane.b32.xlu0 %v346, 120
      %v1788 = vpop.permute.xlu0 %1787
      %1789 = vrot.lane.b32.xlu0 %v347, 120
      %v1790 = vpop.permute.xlu0 %1789
      %1791 = vrot.lane.b32.xlu0 %v348, 120
      %v1792 = vpop.permute.xlu0 %1791
      %vm1793 = vcmp.lt.s32.totalorder %v360, 120
      %v1794 = vsel %vm1793, %v1790, %v1792
      %v1795 = vsel %vm1793, %v1788, %v1790
      %v1796 = vsel %vm1793, %v1786, %v1788
      %v1797 = vsel %vm1793, %v1784, %v1786
      %v1802 = vrot.slane %v1797, 5
      %v1803 = vrot.slane %v1796, 5
      %v1804 = vrot.slane %v1795, 5
      %v1805 = vrot.slane %v1794, 5
      %v1806 = vrot.slane %v1797, 6
      %v1807 = vrot.slane %v1796, 6
      %v1808 = vrot.slane %v1795, 6
      %v1809 = vrot.slane %v1794, 6
      %v1810 = vrot.slane %v1797, 7
      %v1811 = vrot.slane %v1796, 7
      %v1812 = vrot.slane %v1795, 7
      %v1813 = vrot.slane %v1794, 7
      %v1814 = vrot.slane %v1797, 1
      %v1815 = vrot.slane %v1796, 1
      %v1816 = vrot.slane %v1795, 1
      %v1817 = vrot.slane %v1794, 1
      %v1818 = vrot.slane %v1797, 2
      %v1819 = vrot.slane %v1796, 2
      %v1820 = vrot.slane %v1795, 2
      %v1821 = vrot.slane %v1794, 2
      %v1822 = vrot.slane %v1797, 3
      %v1823 = vrot.slane %v1796, 3
      %v1824 = vrot.slane %v1795, 3
      %v1825 = vrot.slane %v1794, 3
      %v1826 = vrot.slane %v1797, 4
      %v1827 = vrot.slane %v1796, 4
      %v1828 = vrot.slane %v1795, 4
      %v1829 = vrot.slane %v1794, 4
      %v1862 = vsel %vm598, %v1802, 0.0
      %v1863 = vsel %vm599, %v1803, 0.0
      %v1864 = vsel %vm600, %v1804, 0.0
      %v1865 = vsel %vm601, %v1805, 0.0
      %v1866 = vsel %vm598, %v1806, 0.0
      %v1867 = vsel %vm599, %v1807, 0.0
      %v1868 = vsel %vm600, %v1808, 0.0
      %v1869 = vsel %vm601, %v1809, 0.0
      %v1870 = vsel %vm598, %v1810, 0.0
      %v1871 = vsel %vm599, %v1811, 0.0
      %v1872 = vsel %vm600, %v1812, 0.0
      %v1873 = vsel %vm601, %v1813, 0.0
      %v1874 = vsel %vm598, %v1797, 0.0
      %v1875 = vsel %vm599, %v1796, 0.0
      %v1876 = vsel %vm600, %v1795, 0.0
      %v1877 = vsel %vm601, %v1794, 0.0
      %v1878 = vsel %vm598, %v1814, 0.0
      %v1879 = vsel %vm599, %v1815, 0.0
      %v1880 = vsel %vm600, %v1816, 0.0
      %v1881 = vsel %vm601, %v1817, 0.0
      %v1882 = vsel %vm598, %v1818, 0.0
      %v1883 = vsel %vm599, %v1819, 0.0
      %v1884 = vsel %vm600, %v1820, 0.0
      %v1885 = vsel %vm601, %v1821, 0.0
      %v1886 = vsel %vm598, %v1822, 0.0
      %v1887 = vsel %vm599, %v1823, 0.0
      %v1888 = vsel %vm600, %v1824, 0.0
      %v1889 = vsel %vm601, %v1825, 0.0
      %v1890 = vsel %vm598, %v1826, 0.0
      %v1891 = vsel %vm599, %v1827, 0.0
      %v1892 = vsel %vm600, %v1828, 0.0
      %v1893 = vsel %vm601, %v1829, 0.0
      %v1926 = vrot.slane %v1862, 3
      %v1927 = vrot.slane %v1866, 2
      %v1928 = vsel %vm731, %v1927, %v1926
      %v1929 = vrot.slane %v1870, 1
      %v1930 = vsel %vm734, %v1929, %v1928
      %v1931 = vsel %vm737, %v1874, %v1930
      %v1932 = vrot.slane %v1878, 7
      %v1933 = vsel %vm740, %v1932, %v1931
      %v1934 = vrot.slane %v1882, 6
      %v1935 = vsel %vm743, %v1934, %v1933
      %v1936 = vrot.slane %v1886, 5
      %v1937 = vsel %vm746, %v1936, %v1935
      %v1938 = vrot.slane %v1890, 4
      %v1939 = vsel %vm749, %v1938, %v1937
      %v1940 = vrot.slane %v1863, 3
      %v1941 = vrot.slane %v1867, 2
      %v1942 = vsel %vm731, %v1941, %v1940
      %v1943 = vrot.slane %v1871, 1
      %v1944 = vsel %vm734, %v1943, %v1942
      %v1945 = vsel %vm737, %v1875, %v1944
      %v1946 = vrot.slane %v1879, 7
      %v1947 = vsel %vm740, %v1946, %v1945
      %v1948 = vrot.slane %v1883, 6
      %v1949 = vsel %vm743, %v1948, %v1947
      %v1950 = vrot.slane %v1887, 5
      %v1951 = vsel %vm746, %v1950, %v1949
      %v1952 = vrot.slane %v1891, 4
      %v1953 = vsel %vm749, %v1952, %v1951
      %v1954 = vrot.slane %v1864, 3
      %v1955 = vrot.slane %v1868, 2
      %v1956 = vsel %vm731, %v1955, %v1954
      %v1957 = vrot.slane %v1872, 1
      %v1958 = vsel %vm734, %v1957, %v1956
      %v1959 = vsel %vm737, %v1876, %v1958
      %v1960 = vrot.slane %v1880, 7
      %v1961 = vsel %vm740, %v1960, %v1959
      %v1962 = vrot.slane %v1884, 6
      %v1963 = vsel %vm743, %v1962, %v1961
      %v1964 = vrot.slane %v1888, 5
      %v1965 = vsel %vm746, %v1964, %v1963
      %v1966 = vrot.slane %v1892, 4
      %v1967 = vsel %vm749, %v1966, %v1965
      %v1968 = vrot.slane %v1865, 3
      %v1969 = vrot.slane %v1869, 2
      %v1970 = vsel %vm731, %v1969, %v1968
      %v1971 = vrot.slane %v1873, 1
      %v1972 = vsel %vm734, %v1971, %v1970
      %v1973 = vsel %vm737, %v1877, %v1972
      %v1974 = vrot.slane %v1881, 7
      %v1975 = vsel %vm740, %v1974, %v1973
      %v1976 = vrot.slane %v1885, 6
      %v1977 = vsel %vm743, %v1976, %v1975
      %v1978 = vrot.slane %v1889, 5
      %v1979 = vsel %vm746, %v1978, %v1977
      %v1980 = vrot.slane %v1893, 4
      %v1981 = vsel %vm749, %v1980, %v1979
      %1986 = vst [vmem:[#allocation2 + $0x200] sm:$0xff] %v1939
      %1987 = vst [vmem:[#allocation2 + $0x208] sm:$0xff] %v1953
      %1988 = vst [vmem:[#allocation2 + $0x210] sm:$0xff] %v1967
      %1989 = vst [vmem:[#allocation2 + $0x218] sm:$0xff] %v1981
      %1990 = vrot.lane.b32.xlu0 %v344, 119
      %v1991 = vpop.permute.xlu0 %1990
      %1992 = vrot.lane.b32.xlu0 %v345, 119
      %v1993 = vpop.permute.xlu0 %1992
      %1994 = vrot.lane.b32.xlu0 %v346, 119
      %v1995 = vpop.permute.xlu0 %1994
      %1996 = vrot.lane.b32.xlu0 %v347, 119
      %v1997 = vpop.permute.xlu0 %1996
      %1998 = vrot.lane.b32.xlu0 %v348, 119
      %v1999 = vpop.permute.xlu0 %1998
      %vm2000 = vcmp.lt.s32.totalorder %v360, 119
      %v2001 = vsel %vm2000, %v1997, %v1999
      %v2002 = vsel %vm2000, %v1995, %v1997
      %v2003 = vsel %vm2000, %v1993, %v1995
      %v2004 = vsel %vm2000, %v1991, %v1993
      %v2005 = vlaneseq
      %v2006 = vshrl.u32 %v2005, 7
      %v2007 = vsub.s32 3, %v2006
      %v2008 = vrot.slane %v441, %v2007
      %v2009 = vlaneseq
      %v2010 = vshrl.u32 %v2009, 7
      %v2011 = vsub.s32 3, %v2010
      %v2012 = vrot.slane %v442, %v2011
      %v2013 = vlaneseq
      %v2014 = vshrl.u32 %v2013, 7
      %v2015 = vsub.s32 3, %v2014
      %v2016 = vrot.slane %v443, %v2015
      %v2017 = vlaneseq
      %v2018 = vshrl.u32 %v2017, 7
      %v2019 = vsub.s32 3, %v2018
      %v2020 = vrot.slane %v444, %v2019
      %vm2021 = vcmp.eq.s32.totalorder %v2008, 1
      %vm2022 = vcmp.eq.s32.totalorder %v2012, 1
      %vm2023 = vcmp.eq.s32.totalorder %v2016, 1
      %vm2024 = vcmp.eq.s32.totalorder %v2020, 1
      %v2025 = vsel %vm2021, %v2004, 0.0
      %v2026 = vsel %vm2022, %v2003, 0.0
      %v2027 = vsel %vm2023, %v2002, 0.0
      %v2028 = vsel %vm2024, %v2001, 0.0
      %2029 = vst [vmem:[#allocation2 + $0x220] sm:$0xff] %v2025
      %2030 = vst [vmem:[#allocation2 + $0x228] sm:$0xff] %v2026
      %2031 = vst [vmem:[#allocation2 + $0x230] sm:$0xff] %v2027
      %2032 = vst [vmem:[#allocation2 + $0x238] sm:$0xff] %v2028
      %2033 = vrot.lane.b32.xlu0 %v348, 73
      %v2034 = vpop.permute.xlu0 %2033
      %v2035 = vsel %vm361, %v358, %v2034
      %vm2036 = vmand %vm1747, %vm871
      %vm2037 = vmand %vm1748, %vm872
      %vm2038 = vmand %vm1749, %vm873
      %vm2039 = vmand %vm1750, %vm874
      %v2040 = vsel %vm2036, 1, 0
      %v2041 = vsel %vm2037, 1, 0
      %v2042 = vsel %vm2038, 1, 0
      %v2043 = vsel %vm2039, 1, 0
      %v2044 = vlaneseq
      %v2045 = vshrl.u32 %v2044, 7
      %v2046 = vsub.s32 1, %v2045
      %v2047 = vrot.slane %v2040, %v2046
      %v2048 = vlaneseq
      %v2049 = vshrl.u32 %v2048, 7
      %v2050 = vsub.s32 1, %v2049
      %v2051 = vrot.slane %v2041, %v2050
      %v2052 = vlaneseq
      %v2053 = vshrl.u32 %v2052, 7
      %v2054 = vsub.s32 1, %v2053
      %v2055 = vrot.slane %v2042, %v2054
      %v2056 = vlaneseq
      %v2057 = vshrl.u32 %v2056, 7
      %v2058 = vsub.s32 1, %v2057
      %v2059 = vrot.slane %v2043, %v2058
      %vm2060 = vcmp.eq.s32.totalorder %v2047, 1
      %vm2061 = vcmp.eq.s32.totalorder %v2051, 1
      %vm2062 = vcmp.eq.s32.totalorder %v2055, 1
      %vm2063 = vcmp.eq.s32.totalorder %v2059, 1
      %v2064 = vsel %vm2060, %v364, 0.0
      %v2065 = vsel %vm2061, %v363, 0.0
      %v2066 = vsel %vm2062, %v362, 0.0
      %v2067 = vsel %vm2063, %v2035, 0.0
      %2068 = vst [vmem:[#allocation2 + $0x240] sm:$0xff] %v2064
      %2069 = vst [vmem:[#allocation2 + $0x248] sm:$0xff] %v2065
      %2070 = vst [vmem:[#allocation2 + $0x250] sm:$0xff] %v2066
      %2071 = vst [vmem:[#allocation2 + $0x258] sm:$0xff] %v2067
      %2072 = vrot.lane.b32.xlu0 %v348, 72
      %v2073 = vpop.permute.xlu0 %2072
      %v2074 = vsel %vm436, %v435, %v2073
      %v2075 = vlaneseq
      %v2076 = vshrl.u32 %v2075, 7
      %v2077 = vsub.s32 1, %v2076
      %v2078 = vrot.slane %v1751, %v2077
      %v2079 = vlaneseq
      %v2080 = vshrl.u32 %v2079, 7
      %v2081 = vsub.s32 1, %v2080
      %v2082 = vrot.slane %v1752, %v2081
      %v2083 = vlaneseq
      %v2084 = vshrl.u32 %v2083, 7
      %v2085 = vsub.s32 1, %v2084
      %v2086 = vrot.slane %v1753, %v2085
      %v2087 = vlaneseq
      %v2088 = vshrl.u32 %v2087, 7
      %v2089 = vsub.s32 1, %v2088
      %v2090 = vrot.slane %v1754, %v2089
      %vm2091 = vcmp.eq.s32.totalorder %v2078, 1
      %vm2092 = vcmp.eq.s32.totalorder %v2082, 1
      %vm2093 = vcmp.eq.s32.totalorder %v2086, 1
      %vm2094 = vcmp.eq.s32.totalorder %v2090, 1
      %v2095 = vsel %vm2091, %v439, 0.0
      %v2096 = vsel %vm2092, %v438, 0.0
      %v2097 = vsel %vm2093, %v437, 0.0
      %v2098 = vsel %vm2094, %v2074, 0.0
      %2099 = vst [vmem:[#allocation2 + $0x260] sm:$0xff] %v2095
      %2100 = vst [vmem:[#allocation2 + $0x268] sm:$0xff] %v2096
      %2101 = vst [vmem:[#allocation2 + $0x270] sm:$0xff] %v2097
      %2102 = vst [vmem:[#allocation2 + $0x278] sm:$0xff] %v2098
      %2103 = vrot.lane.b32.xlu0 %v348, 71
      %v2104 = vpop.permute.xlu0 %2103
      %v2105 = vsel %vm483, %v482, %v2104
      %vm2106 = vmand %vm1747, %vm386
      %vm2107 = vmand %vm1748, %vm387
      %vm2108 = vmand %vm1749, %vm388
      %vm2109 = vmand %vm1750, %vm389
      %v2110 = vsel %vm2106, 1, 0
      %v2111 = vsel %vm2107, 1, 0
      %v2112 = vsel %vm2108, 1, 0
      %v2113 = vsel %vm2109, 1, 0
      %v2114 = vlaneseq
      %v2115 = vshrl.u32 %v2114, 7
      %v2116 = vsub.s32 1, %v2115
      %v2117 = vrot.slane %v2110, %v2116
      %v2118 = vlaneseq
      %v2119 = vshrl.u32 %v2118, 7
      %v2120 = vsub.s32 1, %v2119
      %v2121 = vrot.slane %v2111, %v2120
      %v2122 = vlaneseq
      %v2123 = vshrl.u32 %v2122, 7
      %v2124 = vsub.s32 1, %v2123
      %v2125 = vrot.slane %v2112, %v2124
      %v2126 = vlaneseq
      %v2127 = vshrl.u32 %v2126, 7
      %v2128 = vsub.s32 1, %v2127
      %v2129 = vrot.slane %v2113, %v2128
      %vm2130 = vcmp.eq.s32.totalorder %v2117, 1
      %vm2131 = vcmp.eq.s32.totalorder %v2121, 1
      %vm2132 = vcmp.eq.s32.totalorder %v2125, 1
      %vm2133 = vcmp.eq.s32.totalorder %v2129, 1
      %v2134 = vsel %vm2130, %v486, 0.0
      %v2135 = vsel %vm2131, %v485, 0.0
      %v2136 = vsel %vm2132, %v484, 0.0
      %v2137 = vsel %vm2133, %v2105, 0.0
      %2138 = vst [vmem:[#allocation2 + $0x280] sm:$0xff] %v2134
      %2139 = vst [vmem:[#allocation2 + $0x288] sm:$0xff] %v2135
      %2140 = vst [vmem:[#allocation2 + $0x290] sm:$0xff] %v2136
      %2141 = vst [vmem:[#allocation2 + $0x298] sm:$0xff] %v2137
      %2142 = vrot.lane.b32.xlu0 %v348, 65
      %v2143 = vpop.permute.xlu0 %2142
      %v2144 = vsel %vm542, %v541, %v2143
      %v2145 = vlaneseq
      %v2146 = vshrl.u32 %v2145, 7
      %v2147 = vsub.s32 1, %v2146
      %v2148 = vrot.slane %v930, %v2147
      %v2149 = vlaneseq
      %v2150 = vshrl.u32 %v2149, 7
      %v2151 = vsub.s32 1, %v2150
      %v2152 = vrot.slane %v931, %v2151
      %v2153 = vlaneseq
      %v2154 = vshrl.u32 %v2153, 7
      %v2155 = vsub.s32 1, %v2154
      %v2156 = vrot.slane %v932, %v2155
      %v2157 = vlaneseq
      %v2158 = vshrl.u32 %v2157, 7
      %v2159 = vsub.s32 1, %v2158
      %v2160 = vrot.slane %v933, %v2159
      %vm2161 = vcmp.eq.s32.totalorder %v2148, 1
      %vm2162 = vcmp.eq.s32.totalorder %v2152, 1
      %vm2163 = vcmp.eq.s32.totalorder %v2156, 1
      %vm2164 = vcmp.eq.s32.totalorder %v2160, 1
      %v2165 = vsel %vm2161, %v545, 0.0
      %v2166 = vsel %vm2162, %v544, 0.0
      %v2167 = vsel %vm2163, %v543, 0.0
      %v2168 = vsel %vm2164, %v2144, 0.0
      %2169 = vst [vmem:[#allocation2 + $0x2a0] sm:$0xff] %v2165
      %2170 = vst [vmem:[#allocation2 + $0x2a8] sm:$0xff] %v2166
      %2171 = vst [vmem:[#allocation2 + $0x2b0] sm:$0xff] %v2167
      %2172 = vst [vmem:[#allocation2 + $0x2b8] sm:$0xff] %v2168
      %2173 = vrot.lane.b32.xlu0 %v348, 64
      %v2174 = vpop.permute.xlu0 %2173
      %v2175 = vsel %vm593, %v592, %v2174
      %v2177 = vrot.slane %v2175, 7
      %v2178 = vrot.slane %v2175, 1
      %v2179 = vrot.slane %v2175, 2
      %v2180 = vrot.slane %v2175, 3
      %v2181 = vrot.slane %v2175, 4
      %v2182 = vrot.slane %v2175, 5
      %v2183 = vrot.slane %v2175, 6
      %v2192 = vsel %vm598, %v631, 0.0
      %v2193 = vsel %vm599, %v632, 0.0
      %v2194 = vsel %vm600, %v633, 0.0
      %v2195 = vsel %vm601, %v2177, 0.0
      %v2196 = vsel %vm598, %v596, 0.0
      %v2197 = vsel %vm599, %v595, 0.0
      %v2198 = vsel %vm600, %v594, 0.0
      %v2199 = vsel %vm601, %v2175, 0.0
      %v2200 = vsel %vm598, %v607, 0.0
      %v2201 = vsel %vm599, %v608, 0.0
      %v2202 = vsel %vm600, %v609, 0.0
      %v2203 = vsel %vm601, %v2178, 0.0
      %v2204 = vsel %vm598, %v611, 0.0
      %v2205 = vsel %vm599, %v612, 0.0
      %v2206 = vsel %vm600, %v613, 0.0
      %v2207 = vsel %vm601, %v2179, 0.0
      %v2208 = vsel %vm598, %v615, 0.0
      %v2209 = vsel %vm599, %v616, 0.0
      %v2210 = vsel %vm600, %v617, 0.0
      %v2211 = vsel %vm601, %v2180, 0.0
      %v2212 = vsel %vm598, %v619, 0.0
      %v2213 = vsel %vm599, %v620, 0.0
      %v2214 = vsel %vm600, %v621, 0.0
      %v2215 = vsel %vm601, %v2181, 0.0
      %v2216 = vsel %vm598, %v623, 0.0
      %v2217 = vsel %vm599, %v624, 0.0
      %v2218 = vsel %vm600, %v625, 0.0
      %v2219 = vsel %vm601, %v2182, 0.0
      %v2220 = vsel %vm598, %v627, 0.0
      %v2221 = vsel %vm599, %v628, 0.0
      %v2222 = vsel %vm600, %v629, 0.0
      %v2223 = vsel %vm601, %v2183, 0.0
      %v2256 = vrot.slane %v2192, 1
      %v2257 = vsel %vm731, %v2196, %v2256
      %v2258 = vrot.slane %v2200, 7
      %v2259 = vsel %vm734, %v2258, %v2257
      %v2260 = vrot.slane %v2204, 6
      %v2261 = vsel %vm737, %v2260, %v2259
      %v2262 = vrot.slane %v2208, 5
      %v2263 = vsel %vm740, %v2262, %v2261
      %v2264 = vrot.slane %v2212, 4
      %v2265 = vsel %vm743, %v2264, %v2263
      %v2266 = vrot.slane %v2216, 3
      %v2267 = vsel %vm746, %v2266, %v2265
      %v2268 = vrot.slane %v2220, 2
      %v2269 = vsel %vm749, %v2268, %v2267
      %v2270 = vrot.slane %v2193, 1
      %v2271 = vsel %vm731, %v2197, %v2270
      %v2272 = vrot.slane %v2201, 7
      %v2273 = vsel %vm734, %v2272, %v2271
      %v2274 = vrot.slane %v2205, 6
      %v2275 = vsel %vm737, %v2274, %v2273
      %v2276 = vrot.slane %v2209, 5
      %v2277 = vsel %vm740, %v2276, %v2275
      %v2278 = vrot.slane %v2213, 4
      %v2279 = vsel %vm743, %v2278, %v2277
      %v2280 = vrot.slane %v2217, 3
      %v2281 = vsel %vm746, %v2280, %v2279
      %v2282 = vrot.slane %v2221, 2
      %v2283 = vsel %vm749, %v2282, %v2281
      %v2284 = vrot.slane %v2194, 1
      %v2285 = vsel %vm731, %v2198, %v2284
      %v2286 = vrot.slane %v2202, 7
      %v2287 = vsel %vm734, %v2286, %v2285
      %v2288 = vrot.slane %v2206, 6
      %v2289 = vsel %vm737, %v2288, %v2287
      %v2290 = vrot.slane %v2210, 5
      %v2291 = vsel %vm740, %v2290, %v2289
      %v2292 = vrot.slane %v2214, 4
      %v2293 = vsel %vm743, %v2292, %v2291
      %v2294 = vrot.slane %v2218, 3
      %v2295 = vsel %vm746, %v2294, %v2293
      %v2296 = vrot.slane %v2222, 2
      %v2297 = vsel %vm749, %v2296, %v2295
      %v2298 = vrot.slane %v2195, 1
      %v2299 = vsel %vm731, %v2199, %v2298
      %v2300 = vrot.slane %v2203, 7
      %v2301 = vsel %vm734, %v2300, %v2299
      %v2302 = vrot.slane %v2207, 6
      %v2303 = vsel %vm737, %v2302, %v2301
      %v2304 = vrot.slane %v2211, 5
      %v2305 = vsel %vm740, %v2304, %v2303
      %v2306 = vrot.slane %v2215, 4
      %v2307 = vsel %vm743, %v2306, %v2305
      %v2308 = vrot.slane %v2219, 3
      %v2309 = vsel %vm746, %v2308, %v2307
      %v2310 = vrot.slane %v2223, 2
      %v2311 = vsel %vm749, %v2310, %v2309
      %2316 = vst [vmem:[#allocation2 + $0x2c0] sm:$0xff] %v2269
      %2317 = vst [vmem:[#allocation2 + $0x2c8] sm:$0xff] %v2283
      %2318 = vst [vmem:[#allocation2 + $0x2d0] sm:$0xff] %v2297
      %2319 = vst [vmem:[#allocation2 + $0x2d8] sm:$0xff] %v2311
      %2320 = vrot.lane.b32.xlu0 %v348, 63
      %v2321 = vpop.permute.xlu0 %2320
      %v2322 = vsel %vm811, %v810, %v2321
      %v2323 = vlaneseq
      %v2324 = vshrl.u32 %v2323, 7
      %v2325 = vsub.s32 1, %v2324
      %v2326 = vrot.slane %v551, %v2325
      %v2327 = vlaneseq
      %v2328 = vshrl.u32 %v2327, 7
      %v2329 = vsub.s32 1, %v2328
      %v2330 = vrot.slane %v552, %v2329
      %v2331 = vlaneseq
      %v2332 = vshrl.u32 %v2331, 7
      %v2333 = vsub.s32 1, %v2332
      %v2334 = vrot.slane %v553, %v2333
      %v2335 = vlaneseq
      %v2336 = vshrl.u32 %v2335, 7
      %v2337 = vsub.s32 1, %v2336
      %v2338 = vrot.slane %v554, %v2337
      %vm2339 = vcmp.eq.s32.totalorder %v2326, 1
      %vm2340 = vcmp.eq.s32.totalorder %v2330, 1
      %vm2341 = vcmp.eq.s32.totalorder %v2334, 1
      %vm2342 = vcmp.eq.s32.totalorder %v2338, 1
      %v2343 = vsel %vm2339, %v814, 0.0
      %v2344 = vsel %vm2340, %v813, 0.0
      %v2345 = vsel %vm2341, %v812, 0.0
      %v2346 = vsel %vm2342, %v2322, 0.0
      %2347 = vst [vmem:[#allocation2 + $0x2e0] sm:$0xff] %v2343
      %2348 = vst [vmem:[#allocation2 + $0x2e8] sm:$0xff] %v2344
      %2349 = vst [vmem:[#allocation2 + $0x2f0] sm:$0xff] %v2345
      %2350 = vst [vmem:[#allocation2 + $0x2f8] sm:$0xff] %v2346
      %2351 = vrot.lane.b32.xlu0 %v348, 57
      %v2352 = vpop.permute.xlu0 %2351
      %v2353 = vsel %vm862, %v861, %v2352
      %vm2354 = vmand %vm378, %vm871
      %vm2355 = vmand %vm379, %vm872
      %vm2356 = vmand %vm380, %vm873
      %vm2357 = vmand %vm381, %vm874
      %v2358 = vsel %vm2354, 1, 0
      %v2359 = vsel %vm2355, 1, 0
      %v2360 = vsel %vm2356, 1, 0
      %v2361 = vsel %vm2357, 1, 0
      %v2362 = vlaneseq
      %v2363 = vshrl.u32 %v2362, 7
      %v2364 = vsub.s32 1, %v2363
      %v2365 = vrot.slane %v2358, %v2364
      %v2366 = vlaneseq
      %v2367 = vshrl.u32 %v2366, 7
      %v2368 = vsub.s32 1, %v2367
      %v2369 = vrot.slane %v2359, %v2368
      %v2370 = vlaneseq
      %v2371 = vshrl.u32 %v2370, 7
      %v2372 = vsub.s32 1, %v2371
      %v2373 = vrot.slane %v2360, %v2372
      %v2374 = vlaneseq
      %v2375 = vshrl.u32 %v2374, 7
      %v2376 = vsub.s32 1, %v2375
      %v2377 = vrot.slane %v2361, %v2376
      %vm2378 = vcmp.eq.s32.totalorder %v2365, 1
      %vm2379 = vcmp.eq.s32.totalorder %v2369, 1
      %vm2380 = vcmp.eq.s32.totalorder %v2373, 1
      %vm2381 = vcmp.eq.s32.totalorder %v2377, 1
      %v2382 = vsel %vm2378, %v865, 0.0
      %v2383 = vsel %vm2379, %v864, 0.0
      %v2384 = vsel %vm2380, %v863, 0.0
      %v2385 = vsel %vm2381, %v2353, 0.0
      %2386 = vst [vmem:[#allocation2 + $0x300] sm:$0xff] %v2382
      %2387 = vst [vmem:[#allocation2 + $0x308] sm:$0xff] %v2383
      %2388 = vst [vmem:[#allocation2 + $0x310] sm:$0xff] %v2384
      %2389 = vst [vmem:[#allocation2 + $0x318] sm:$0xff] %v2385
      %2390 = vrot.lane.b32.xlu0 %v348, 56
      %v2391 = vpop.permute.xlu0 %2390
      %v2392 = vsel %vm925, %v924, %v2391
      %v2393 = vlaneseq
      %v2394 = vshrl.u32 %v2393, 7
      %v2395 = vsub.s32 1, %v2394
      %v2396 = vrot.slane %v441, %v2395
      %v2397 = vlaneseq
      %v2398 = vshrl.u32 %v2397, 7
      %v2399 = vsub.s32 1, %v2398
      %v2400 = vrot.slane %v442, %v2399
      %v2401 = vlaneseq
      %v2402 = vshrl.u32 %v2401, 7
      %v2403 = vsub.s32 1, %v2402
      %v2404 = vrot.slane %v443, %v2403
      %v2405 = vlaneseq
      %v2406 = vshrl.u32 %v2405, 7
      %v2407 = vsub.s32 1, %v2406
      %v2408 = vrot.slane %v444, %v2407
      %vm2409 = vcmp.eq.s32.totalorder %v2396, 1
      %vm2410 = vcmp.eq.s32.totalorder %v2400, 1
      %vm2411 = vcmp.eq.s32.totalorder %v2404, 1
      %vm2412 = vcmp.eq.s32.totalorder %v2408, 1
      %v2413 = vsel %vm2409, %v928, 0.0
      %v2414 = vsel %vm2410, %v927, 0.0
      %v2415 = vsel %vm2411, %v926, 0.0
      %v2416 = vsel %vm2412, %v2392, 0.0
      %2417 = vst [vmem:[#allocation2 + $0x320] sm:$0xff] %v2413
      %2418 = vst [vmem:[#allocation2 + $0x328] sm:$0xff] %v2414
      %2419 = vst [vmem:[#allocation2 + $0x330] sm:$0xff] %v2415
      %2420 = vst [vmem:[#allocation2 + $0x338] sm:$0xff] %v2416
      %2421 = vrot.lane.b32.xlu0 %v348, 55
      %v2422 = vpop.permute.xlu0 %2421
      %v2423 = vsel %vm972, %v971, %v2422
      %v2424 = vlaneseq
      %v2425 = vshrl.u32 %v2424, 7
      %v2426 = vsub.s32 1, %v2425
      %v2427 = vrot.slane %v394, %v2426
      %v2428 = vlaneseq
      %v2429 = vshrl.u32 %v2428, 7
      %v2430 = vsub.s32 1, %v2429
      %v2431 = vrot.slane %v395, %v2430
      %v2432 = vlaneseq
      %v2433 = vshrl.u32 %v2432, 7
      %v2434 = vsub.s32 1, %v2433
      %v2435 = vrot.slane %v396, %v2434
      %v2436 = vlaneseq
      %v2437 = vshrl.u32 %v2436, 7
      %v2438 = vsub.s32 1, %v2437
      %v2439 = vrot.slane %v397, %v2438
      %vm2440 = vcmp.eq.s32.totalorder %v2427, 1
      %vm2441 = vcmp.eq.s32.totalorder %v2431, 1
      %vm2442 = vcmp.eq.s32.totalorder %v2435, 1
      %vm2443 = vcmp.eq.s32.totalorder %v2439, 1
      %v2444 = vsel %vm2440, %v975, 0.0
      %v2445 = vsel %vm2441, %v974, 0.0
      %v2446 = vsel %vm2442, %v973, 0.0
      %v2447 = vsel %vm2443, %v2423, 0.0
      %2448 = vst [vmem:[#allocation2 + $0x340] sm:$0xff] %v2444
      %2449 = vst [vmem:[#allocation2 + $0x348] sm:$0xff] %v2445
      %2450 = vst [vmem:[#allocation2 + $0x350] sm:$0xff] %v2446
      %2451 = vst [vmem:[#allocation2 + $0x358] sm:$0xff] %v2447
      %v2452 = vld [vmem:[%s3] sm:$0xff]
      %v2453 = vld [vmem:[%s3 + $0x8] sm:$0xff]
      %v2454 = vld [vmem:[#allocation2] sm:$0xff]
      %v2455 = vld [vmem:[#allocation2 + $0x8] sm:$0xff]
      %v2456 = vld [vmem:[#allocation2 + $0x10] sm:$0xff]
      %v2457 = vld [vmem:[#allocation2 + $0x18] sm:$0xff]
      %v2458 = vld [vmem:[#allocation2 + $0x20] sm:$0xff]
      %v2459 = vld [vmem:[#allocation2 + $0x28] sm:$0xff]
      %v2460 = vld [vmem:[#allocation2 + $0x30] sm:$0xff]
      %v2461 = vld [vmem:[#allocation2 + $0x38] sm:$0xff]
      %v2462 = vld [vmem:[#allocation2 + $0x40] sm:$0xff]
      %v2463 = vld [vmem:[#allocation2 + $0x48] sm:$0xff]
      %v2464 = vld [vmem:[#allocation2 + $0x50] sm:$0xff]
      %v2465 = vld [vmem:[#allocation2 + $0x58] sm:$0xff]
      %v2466 = vld [vmem:[#allocation2 + $0x60] sm:$0xff]
      %v2467 = vld [vmem:[#allocation2 + $0x68] sm:$0xff]
      %v2468 = vld [vmem:[#allocation2 + $0x70] sm:$0xff]
      %v2469 = vld [vmem:[#allocation2 + $0x78] sm:$0xff]
      %v2470 = vld [vmem:[#allocation2 + $0x80] sm:$0xff]
      %v2471 = vld [vmem:[#allocation2 + $0x88] sm:$0xff]
      %v2472 = vld [vmem:[#allocation2 + $0x90] sm:$0xff]
      %v2473 = vld [vmem:[#allocation2 + $0x98] sm:$0xff]
      %v2474 = vld [vmem:[#allocation2 + $0xa0] sm:$0xff]
      %v2475 = vld [vmem:[#allocation2 + $0xa8] sm:$0xff]
      %v2476 = vld [vmem:[#allocation2 + $0xb0] sm:$0xff]
      %v2477 = vld [vmem:[#allocation2 + $0xb8] sm:$0xff]
      %v2478 = vld [vmem:[#allocation2 + $0xc0] sm:$0xff]
      %v2479 = vld [vmem:[#allocation2 + $0xc8] sm:$0xff]
      %v2480 = vld [vmem:[#allocation2 + $0xd0] sm:$0xff]
      %v2481 = vld [vmem:[#allocation2 + $0xd8] sm:$0xff]
      %v2482 = vld [vmem:[#allocation2 + $0xe0] sm:$0xff]
      %v2483 = vld [vmem:[#allocation2 + $0xe8] sm:$0xff]
      %v2484 = vld [vmem:[#allocation2 + $0xf0] sm:$0xff]
      %v2485 = vld [vmem:[#allocation2 + $0xf8] sm:$0xff]
      %v2486 = vld [vmem:[#allocation2 + $0x100] sm:$0xff]
      %v2487 = vld [vmem:[#allocation2 + $0x108] sm:$0xff]
      %v2488 = vld [vmem:[#allocation2 + $0x110] sm:$0xff]
      %v2489 = vld [vmem:[#allocation2 + $0x118] sm:$0xff]
      %v2490 = vld [vmem:[#allocation2 + $0x120] sm:$0xff]
      %v2491 = vld [vmem:[#allocation2 + $0x128] sm:$0xff]
      %v2492 = vld [vmem:[#allocation2 + $0x130] sm:$0xff]
      %v2493 = vld [vmem:[#allocation2 + $0x138] sm:$0xff]
      %v2494 = vld [vmem:[#allocation2 + $0x140] sm:$0xff]
      %v2495 = vld [vmem:[#allocation2 + $0x148] sm:$0xff]
      %v2496 = vld [vmem:[#allocation2 + $0x150] sm:$0xff]
      %v2497 = vld [vmem:[#allocation2 + $0x158] sm:$0xff]
      %v2498 = vld [vmem:[#allocation2 + $0x160] sm:$0xff]
      %v2499 = vld [vmem:[#allocation2 + $0x168] sm:$0xff]
      %v2500 = vld [vmem:[#allocation2 + $0x170] sm:$0xff]
      %v2501 = vld [vmem:[#allocation2 + $0x178] sm:$0xff]
      %v2502 = vld [vmem:[#allocation2 + $0x180] sm:$0xff]
      %v2503 = vld [vmem:[#allocation2 + $0x188] sm:$0xff]
      %v2504 = vld [vmem:[#allocation2 + $0x190] sm:$0xff]
      %v2505 = vld [vmem:[#allocation2 + $0x198] sm:$0xff]
      %v2506 = vld [vmem:[#allocation2 + $0x1a0] sm:$0xff]
      %v2507 = vld [vmem:[#allocation2 + $0x1a8] sm:$0xff]
      %v2508 = vld [vmem:[#allocation2 + $0x1b0] sm:$0xff]
      %v2509 = vld [vmem:[#allocation2 + $0x1b8] sm:$0xff]
      %v2510 = vld [vmem:[#allocation2 + $0x1c0] sm:$0xff]
      %v2511 = vld [vmem:[#allocation2 + $0x1c8] sm:$0xff]
      %v2512 = vld [vmem:[#allocation2 + $0x1d0] sm:$0xff]
      %v2513 = vld [vmem:[#allocation2 + $0x1d8] sm:$0xff]
      %v2514 = vld [vmem:[#allocation2 + $0x1e0] sm:$0xff]
      %v2515 = vld [vmem:[#allocation2 + $0x1e8] sm:$0xff]
      %v2516 = vld [vmem:[#allocation2 + $0x1f0] sm:$0xff]
      %v2517 = vld [vmem:[#allocation2 + $0x1f8] sm:$0xff]
      %v2518 = vld [vmem:[#allocation2 + $0x200] sm:$0xff]
      %v2519 = vld [vmem:[#allocation2 + $0x208] sm:$0xff]
      %v2520 = vld [vmem:[#allocation2 + $0x210] sm:$0xff]
      %v2521 = vld [vmem:[#allocation2 + $0x218] sm:$0xff]
      %v2522 = vld [vmem:[#allocation2 + $0x220] sm:$0xff]
      %v2523 = vld [vmem:[#allocation2 + $0x228] sm:$0xff]
      %v2524 = vld [vmem:[#allocation2 + $0x230] sm:$0xff]
      %v2525 = vld [vmem:[#allocation2 + $0x238] sm:$0xff]
      %v2526 = vld [vmem:[#allocation2 + $0x240] sm:$0xff]
      %v2527 = vld [vmem:[#allocation2 + $0x248] sm:$0xff]
      %v2528 = vld [vmem:[#allocation2 + $0x250] sm:$0xff]
      %v2529 = vld [vmem:[#allocation2 + $0x258] sm:$0xff]
      %v2530 = vld [vmem:[#allocation2 + $0x260] sm:$0xff]
      %v2531 = vld [vmem:[#allocation2 + $0x268] sm:$0xff]
      %v2532 = vld [vmem:[#allocation2 + $0x270] sm:$0xff]
      %v2533 = vld [vmem:[#allocation2 + $0x278] sm:$0xff]
      %v2534 = vld [vmem:[#allocation2 + $0x280] sm:$0xff]
      %v2535 = vld [vmem:[#allocation2 + $0x288] sm:$0xff]
      %v2536 = vld [vmem:[#allocation2 + $0x290] sm:$0xff]
      %v2537 = vld [vmem:[#allocation2 + $0x298] sm:$0xff]
      %v2538 = vld [vmem:[#allocation2 + $0x2a0] sm:$0xff]
      %v2539 = vld [vmem:[#allocation2 + $0x2a8] sm:$0xff]
      %v2540 = vld [vmem:[#allocation2 + $0x2b0] sm:$0xff]
      %v2541 = vld [vmem:[#allocation2 + $0x2b8] sm:$0xff]
      %v2542 = vld [vmem:[#allocation2 + $0x2c0] sm:$0xff]
      %v2543 = vld [vmem:[#allocation2 + $0x2c8] sm:$0xff]
      %v2544 = vld [vmem:[#allocation2 + $0x2d0] sm:$0xff]
      %v2545 = vld [vmem:[#allocation2 + $0x2d8] sm:$0xff]
      %v2546 = vld [vmem:[#allocation2 + $0x2e0] sm:$0xff]
      %v2547 = vld [vmem:[#allocation2 + $0x2e8] sm:$0xff]
      %v2548 = vld [vmem:[#allocation2 + $0x2f0] sm:$0xff]
      %v2549 = vld [vmem:[#allocation2 + $0x2f8] sm:$0xff]
      %v2550 = vld [vmem:[#allocation2 + $0x300] sm:$0xff]
      %v2551 = vld [vmem:[#allocation2 + $0x308] sm:$0xff]
      %v2552 = vld [vmem:[#allocation2 + $0x310] sm:$0xff]
      %v2553 = vld [vmem:[#allocation2 + $0x318] sm:$0xff]
      %v2554 = vld [vmem:[#allocation2 + $0x320] sm:$0xff]
      %v2555 = vld [vmem:[#allocation2 + $0x328] sm:$0xff]
      %v2556 = vld [vmem:[#allocation2 + $0x330] sm:$0xff]
      %v2557 = vld [vmem:[#allocation2 + $0x338] sm:$0xff]
      %v2558 = vld [vmem:[#allocation2 + $0x340] sm:$0xff]
      %v2559 = vld [vmem:[#allocation2 + $0x348] sm:$0xff]
      %v2560 = vld [vmem:[#allocation2 + $0x350] sm:$0xff]
      %v2561 = vld [vmem:[#allocation2 + $0x358] sm:$0xff]
      %vm2562 = vcmask 719872
      %v2564 = vsel %vm2562, %v2453, 0
      %2566 = vmatprep.subr.mxu0 %v2455
      %2567 = vmatpush1.msra.mxu0 %v2454
      %2568 = vmatprep.subr.mxu0 %v2459
      %2569 = vmatpush1.msra.mxu0 %v2458
      %2570 = vmatprep.subr.mxu0 %v2463
      %2571 = vmatpush1.msra.mxu0 %v2462
      %2572 = vmatprep.subr.mxu0 %v2467
      %2573 = vmatpush1.msra.mxu0 %v2466
      %2574 = vmatprep.subr.mxu0 %v2471
      %2575 = vmatpush1.msra.mxu0 %v2470
      %2576 = vmatprep.subr.mxu0 %v2475
      %2577 = vmatpush1.msra.mxu0 %v2474
      %2578 = vmatprep.subr.mxu0 %v2479
      %2579 = vmatpush1.msra.mxu0 %v2478
      %2580 = vmatprep.subr.mxu0 %v2483
      %2581 = vmatpush1.msra.mxu0 %v2482
      %2582 = vmatprep.subr.mxu0 %v2487
      %2583 = vmatpush1.msra.mxu0 %v2486
      %2584 = vmatprep.subr.mxu0 %v2491
      %2585 = vmatpush1.msra.mxu0 %v2490
      %2586 = vmatprep.subr.mxu0 %v2495
      %2587 = vmatpush1.msra.mxu0 %v2494
      %2588 = vmatprep.subr.mxu0 %v2499
      %2589 = vmatpush1.msra.mxu0 %v2498
      %2590 = vmatprep.subr.mxu0 %v2503
      %2591 = vmatpush1.msra.mxu0 %v2502
      %2592 = vmatprep.subr.mxu0 %v2507
      %2593 = vmatpush1.msra.mxu0 %v2506
      %2594 = vmatprep.subr.mxu0 %v2511
      %2595 = vmatpush1.msra.mxu0 %v2510
      %2596 = vmatprep.subr.mxu0 %v2515
      %2597 = vmatpush1.msra.mxu0 %v2514
      %2598 = vmatprep.subr.mxu0 %v2519
      %2599 = vmatpush1.msra.mxu0 %v2518
      %2600 = vmatprep.subr.mxu0 %v2523
      %2601 = vmatpush1.msra.mxu0 %v2522
      %2602 = vmatprep.subr.mxu0 %v2527
      %2603 = vmatpush1.msra.mxu0 %v2526
      %2604 = vmatprep.subr.mxu0 %v2531
      %2605 = vmatpush1.msra.mxu0 %v2530
      %2606 = vmatprep.subr.mxu0 %v2535
      %2607 = vmatpush1.msra.mxu0 %v2534
      %2608 = vmatprep.subr.mxu0 %v2539
      %2609 = vmatpush1.msra.mxu0 %v2538
      %2610 = vmatprep.subr.mxu0 %v2543
      %2611 = vmatpush1.msra.mxu0 %v2542
      %2612 = vmatprep.subr.mxu0 %v2547
      %2613 = vmatpush1.msra.mxu0 %v2546
      %2614 = vmatprep.subr.mxu0 %v2551
      %2615 = vmatpush1.msra.mxu0 %v2550
      %2616 = vmatprep.subr.mxu0 %v2555
      %2617 = vmatpush1.msra.mxu0 %v2554
      %2618 = vmatprep.subr.mxu0 %v2559
      %2619 = vmatpush1.msra.mxu0 %v2558
      %2620 = vmatprep.subr.mxu0 0.0
      %2621 = vmatpush1.msra.mxu0 0.0
      %2622 = vmatprep.subr.mxu0 0.0
      %2623 = vmatpush1.msra.mxu0 0.0
      %2624 = vmatprep.subr.mxu0 0.0
      %2625 = vmatpush1.msra.mxu0 0.0
      %2626 = vmatprep.subr.mxu0 0.0
      %2627 = vmatpush1.msra.mxu0 0.0
      %2628 = vmatprep.subr.mxu0 0.0
      %2629 = vmatpush1.msra.mxu0 0.0
      %2630 = vmatprep.mubr.f32.mxu0 %v2564
      %2631 = vmatmul.mubr.f32.gmra.mrb[0].mxu0 %v2452
      %v2632 = vpop.f32.mrb[0].mxu0
      %v2633 = vadd.f32 0.0, %v2632
      %v2634 = vpop.f32.mrb[0].mxu0
      %v2635 = vadd.f32 0.0, %v2634
      %2636 = vdwg.mxu0
      %2637 = vmatprep.subr.mxu0 %v2457
      %2638 = vmatpush1.msra.mxu0 %v2456
      %2639 = vmatprep.subr.mxu0 %v2461
      %2640 = vmatpush1.msra.mxu0 %v2460
      %2641 = vmatprep.subr.mxu0 %v2465
      %2642 = vmatpush1.msra.mxu0 %v2464
      %2643 = vmatprep.subr.mxu0 %v2469
      %2644 = vmatpush1.msra.mxu0 %v2468
      %2645 = vmatprep.subr.mxu0 %v2473
      %2646 = vmatpush1.msra.mxu0 %v2472
      %2647 = vmatprep.subr.mxu0 %v2477
      %2648 = vmatpush1.msra.mxu0 %v2476
      %2649 = vmatprep.subr.mxu0 %v2481
      %2650 = vmatpush1.msra.mxu0 %v2480
      %2651 = vmatprep.subr.mxu0 %v2485
      %2652 = vmatpush1.msra.mxu0 %v2484
      %2653 = vmatprep.subr.mxu0 %v2489
      %2654 = vmatpush1.msra.mxu0 %v2488
      %2655 = vmatprep.subr.mxu0 %v2493
      %2656 = vmatpush1.msra.mxu0 %v2492
      %2657 = vmatprep.subr.mxu0 %v2497
      %2658 = vmatpush1.msra.mxu0 %v2496
      %2659 = vmatprep.subr.mxu0 %v2501
      %2660 = vmatpush1.msra.mxu0 %v2500
      %2661 = vmatprep.subr.mxu0 %v2505
      %2662 = vmatpush1.msra.mxu0 %v2504
      %2663 = vmatprep.subr.mxu0 %v2509
      %2664 = vmatpush1.msra.mxu0 %v2508
      %2665 = vmatprep.subr.mxu0 %v2513
      %2666 = vmatpush1.msra.mxu0 %v2512
      %2667 = vmatprep.subr.mxu0 %v2517
      %2668 = vmatpush1.msra.mxu0 %v2516
      %2669 = vmatprep.subr.mxu0 %v2521
      %2670 = vmatpush1.msra.mxu0 %v2520
      %2671 = vmatprep.subr.mxu0 %v2525
      %2672 = vmatpush1.msra.mxu0 %v2524
      %2673 = vmatprep.subr.mxu0 %v2529
      %2674 = vmatpush1.msra.mxu0 %v2528
      %2675 = vmatprep.subr.mxu0 %v2533
      %2676 = vmatpush1.msra.mxu0 %v2532
      %2677 = vmatprep.subr.mxu0 %v2537
      %2678 = vmatpush1.msra.mxu0 %v2536
      %2679 = vmatprep.subr.mxu0 %v2541
      %2680 = vmatpush1.msra.mxu0 %v2540
      %2681 = vmatprep.subr.mxu0 %v2545
      %2682 = vmatpush1.msra.mxu0 %v2544
      %2683 = vmatprep.subr.mxu0 %v2549
      %2684 = vmatpush1.msra.mxu0 %v2548
      %2685 = vmatprep.subr.mxu0 %v2553
      %2686 = vmatpush1.msra.mxu0 %v2552
      %2687 = vmatprep.subr.mxu0 %v2557
      %2688 = vmatpush1.msra.mxu0 %v2556
      %2689 = vmatprep.subr.mxu0 %v2561
      %2690 = vmatpush1.msra.mxu0 %v2560
      %2691 = vmatprep.subr.mxu0 0.0
      %2692 = vmatpush1.msra.mxu0 0.0
      %2693 = vmatprep.subr.mxu0 0.0
      %2694 = vmatpush1.msra.mxu0 0.0
      %2695 = vmatprep.subr.mxu0 0.0
      %2696 = vmatpush1.msra.mxu0 0.0
      %2697 = vmatprep.subr.mxu0 0.0
      %2698 = vmatpush1.msra.mxu0 0.0
      %2699 = vmatprep.subr.mxu0 0.0
      %2700 = vmatpush1.msra.mxu0 0.0
      %2701 = vmatprep.mubr.f32.mxu0 %v2564
      %2702 = vmatmul.mubr.f32.gmra.mrb[0].mxu0 %v2452
      %v2703 = vpop.f32.mrb[0].mxu0
      %v2704 = vadd.f32 0.0, %v2703
      %v2705 = vpop.f32.mrb[0].mxu0
      %v2706 = vadd.f32 0.0, %v2705
      %2707 = vdwg.mxu0
      %v2708 = vpack.c.bf16 %v2633, %v2633
      %v2709 = vpack.c.bf16 %v2635, %v2635
      %v2710 = vpack.c.bf16 %v2704, %v2704
      %v2711 = vpack.c.bf16 %v2706, %v2706
      %v2716 = vunpack.c.l.b16 %v2708
      %v2717 = vunpack.c.l.b16 %v2709
      %v2718 = vunpack.c.l.b16 %v2710
      %v2719 = vunpack.c.l.b16 %v2711
      %v2720 = vpack.c.b16 %v2717, %v2716
      %v2721 = vpack.c.b16 %v2719, %v2718
      %2724 = vst [vmem:[%s260] sm:$0xff] %v2720
      %2725 = vst [vmem:[%s260 + $0x8] sm:$0xff] %v2721
      %v2726 = vadd.f32 %v2633, %v2635
      %v2727 = vadd.f32 %v2726, %v2704
      %v2728 = vadd.f32 %v2727, %v2706
      %2729 = vadd.xlane.f32.xlu0 %v2728
      %v2730 = vpop.xlane.xlu0 %2729
      %v2731 = vmul.f32 %v2730, 0.001953125
      %v2732 = vsub.f32 %v2633, %v2731
      %v2733 = vsub.f32 %v2635, %v2731
      %v2734 = vsub.f32 %v2704, %v2731
      %v2735 = vsub.f32 %v2706, %v2731
      %v2736 = vmul.f32 %v2732, %v2732
      %v2737 = vmul.f32 %v2733, %v2733
      %v2738 = vmul.f32 %v2734, %v2734
      %v2739 = vmul.f32 %v2735, %v2735
      %v2740 = vadd.f32 %v2736, %v2737
      %v2741 = vadd.f32 %v2740, %v2738
      %v2742 = vadd.f32 %v2741, %v2739
      %2743 = vadd.xlane.f32.xlu0 %v2742
      %v2744 = vpop.xlane.xlu0 %2743
      %vm2745 = vcmask 7168
      %v2746 = vsel %vm2745, %v2730, %v2744
      %vm2747 = vcmask 15360
      %2748 = vst.msk [vmem:[%s265] sm:$0xff] %vm2747, %v2746
      %s2749 = smul.u32 4, %s18
      %p2750 = scmp.lt.s32.totalorder %s2749, 7
      %s2751 = scalar_select %p2750, %s2749, 7
      %s2752 = smul.addr %s2751, 4
      %s2753 = scalar_lea.vmem %s5, %s2752
      %p2754 = scmp.lt.s32.totalorder %s18, 1
      %s2755 = scalar_select %p2754, %s18, 1
      %s2756 = smul.addr %s2755, 8
      %s2757 = scalar_lea.vmem %s6, %s2756
      // Predicated region
      $region41: #{single_decoder3d_forward.6} parent=39 // pred_check
        %p2758 = pneg %p146
      $region42: #{single_decoder3d_forward.6} parent=39 // pred_check_branch
        %2760 = sbr.rel (%p2758) target = $region44
      $region43: #{single_decoder3d_forward.6} parent=39 // pred_region
        %s2761 = smul.u32 4, %s18
      $region44: #{single_decoder3d_forward.6} parent=39 // pred_fallthru
        _
      // Predicated region
      $region45: #{single_decoder3d_forward.6} parent=39 // pred_check
        %p2762 = pneg %p172
      $region46: #{single_decoder3d_forward.6} parent=39 // pred_check_branch
        %2764 = sbr.rel (%p2762) target = $region48
      $region47: #{single_decoder3d_forward.6} parent=39 // pred_region
        _
      $region48: #{single_decoder3d_forward.6} parent=39 // pred_fallthru
        _
    $region40: #{single_decoder3d_forward.6} parent=5 // pred_fallthru
      _
    %p2765 = scmp.le.s32.totalorder 2, %s13
    // Predicated region
    $region49: #{single_decoder3d_forward.6} parent=5 // pred_check
      %p2766 = pneg %p2765
    $region50: #{single_decoder3d_forward.6} parent=5 // pred_check_branch
      %2768 = sbr.rel (%p2766) target = $region52
    $region51: #{single_decoder3d_forward.6} parent=5 // pred_region
      %s2769 = ssub.s32 %s13, 2
      // Predicated region
      $region53: #{single_decoder3d_forward.6} parent=51 // pred_check
        %p2770 = pneg %p152
      $region54: #{single_decoder3d_forward.6} parent=51 // pred_check_branch
        %2772 = sbr.rel (%p2770) target = $region56
      $region55: #{single_decoder3d_forward.6} parent=51 // pred_region
        %s2773 = smul.u32 4, %s19
        %p2774 = scmp.lt.s32.totalorder %s2773, 7
        %s2775 = scalar_select %p2774, %s2773, 7
        %s2776 = smul.addr %s2775, 4
        %s2777 = scalar_lea.vmem %s5, %s2776
      $region56: #{single_decoder3d_forward.6} parent=51 // pred_fallthru
        _
      // Predicated region
      $region57: #{single_decoder3d_forward.6} parent=51 // pred_check
        %p2778 = pneg %p178
      $region58: #{single_decoder3d_forward.6} parent=51 // pred_check_branch
        %2780 = sbr.rel (%p2778) target = $region60
      $region59: #{single_decoder3d_forward.6} parent=51 // pred_region
        %p2781 = scmp.lt.s32.totalorder %s19, 1
        %s2782 = scalar_select %p2781, %s19, 1
        %s2783 = smul.addr %s2782, 8
        %s2784 = scalar_lea.vmem %s6, %s2783
      $region60: #{single_decoder3d_forward.6} parent=51 // pred_fallthru
        _
    $region52: #{single_decoder3d_forward.6} parent=5 // pred_fallthru
      _
  $region6: #{single_decoder3d_forward.6} parent=0 // loop_footer
    %s17 = sadd.s32 1, %s13
  $region7: #{single_decoder3d_forward.6} parent=0 // loop_footer_branch
    %12 = sbr.rel target = $region3
  $region8: #{single_decoder3d_forward.6} parent=0 // loop_exit
    _

</llo_original>
